<compile_context>
chip_gen: v7x
topology: tpu7x:2x2x1
jax: 0.10.0
libtpu: 0.0.40
codegen_flags: <defaults>
</compile_context>

<pallas_src>
import functools

import jax
import jax.numpy as jnp
from jax.experimental import pallas as pl
from jax.experimental.pallas import tpu as pltpu


TH = 8  # spatial rows of the conv output computed per grid step (band height)


# ----------------------------------------------------------------------------
# 3x3 "same" conv + ReLU (+ optional fused 2x2 max-pool), one 8-row band per
# grid step.  The wrapper pre-gathers the dx window onto the lane axis so the
# kernel only does `taps` (1 or 3) large-K matmuls per band.
# ----------------------------------------------------------------------------
def _conv_band_kernel(x_ref, w_ref, b_ref, o_ref):
    # w_ref: (taps, K, Cout) bf16     b_ref: (1, Cout) f32
    # x_ref (no pool): (R, W, K) bf16,      o_ref: (TH*W, Cout)
    # x_ref (pooled) : (R, 2, W/2, K) bf16, o_ref: ((TH//2)*(W//2), Cout)
    taps, K, Cout = w_ref.shape
    hb = pl.program_id(1)
    pooled = x_ref.ndim == 4

    if not pooled:
        W = x_ref.shape[1]
        acc = jnp.zeros((TH * W, Cout), jnp.float32)
        for dy in range(taps):
            slab = x_ref[pl.ds(hb * TH + dy, TH), :, :]            # (TH, W, K)
            acc = acc + jnp.dot(slab.reshape(TH * W, K), w_ref[dy],
                                preferred_element_type=jnp.float32)
        o_ref[...] = jnp.maximum(acc + b_ref[...], 0.0).astype(o_ref.dtype)
    else:
        Wo = x_ref.shape[2]
        acc_e = jnp.zeros((TH * Wo, Cout), jnp.float32)            # even output cols
        acc_o = jnp.zeros((TH * Wo, Cout), jnp.float32)            # odd output cols
        for dy in range(taps):
            se = x_ref[pl.ds(hb * TH + dy, TH), 0, :, :]           # (TH, Wo, K)
            so = x_ref[pl.ds(hb * TH + dy, TH), 1, :, :]
            acc_e = acc_e + jnp.dot(se.reshape(TH * Wo, K), w_ref[dy],
                                    preferred_element_type=jnp.float32)
            acc_o = acc_o + jnp.dot(so.reshape(TH * Wo, K), w_ref[dy],
                                    preferred_element_type=jnp.float32)
        b = b_ref[...]
        # horizontal half of the 2x2 pool: element-wise max of even/odd columns
        hmax = jnp.maximum(jnp.maximum(acc_e + b, 0.0),
                           jnp.maximum(acc_o + b, 0.0))            # (TH*Wo, Cout)
        # vertical half: max of adjacent row pairs (tile-aligned static slices)
        for s in range(TH // 2):
            top = hmax[(2 * s) * Wo:(2 * s + 1) * Wo, :]
            bot = hmax[(2 * s + 1) * Wo:(2 * s + 2) * Wo, :]
            o_ref[s * Wo:(s + 1) * Wo, :] = jnp.maximum(top, bot).astype(o_ref.dtype)


def conv3x3_relu(x_nhwc, w_dy, b, *, pool=False):
    """x_nhwc: (N,H,W,Cin) bf16; w_dy: (1, 9*Cin, Cout) or (3, 3*Cin, Cout) bf16;
    b: (1, Cout) f32.  Returns (N,H,W,Cout) or, with pool=True, (N,H/2,W/2,Cout)."""
    N, H, W, Cin = x_nhwc.shape
    taps, K, Cout = w_dy.shape
    assert H % TH == 0 and W % 8 == 0

    xp = jnp.pad(x_nhwc, ((0, 0), (1, 1), (1, 1), (0, 0)))         # zero pad (glue)
    if taps == 1:
        # full im2col (tiny Cin): single matmul per band, K = 9*Cin
        assert K == 9 * Cin
        xg = jnp.concatenate([xp[:, dy:dy + H, dx:dx + W, :]
                              for dy in range(3) for dx in range(3)], axis=-1)
        R = H
    else:
        # dx window pre-gathered on lanes: 3 matmuls per band, K = 3*Cin
        assert taps == 3 and K == 3 * Cin
        xg = jnp.concatenate([xp[:, :, dx:dx + W, :] for dx in range(3)], axis=-1)
        R = H + 2

    if pool:
        Ho, Wo = H // 2, W // 2
        # split even/odd output columns so the fused pool is pure element-wise max
        xg = xg.reshape(N, R, Wo, 2, K).transpose(0, 1, 3, 2, 4)   # (N, R, 2, Wo, K)
        x_spec = pl.BlockSpec((None, R, 2, Wo, K), lambda n, hb: (n, 0, 0, 0, 0))
        rows_band, rows_out = (TH // 2) * Wo, Ho * Wo
    else:
        x_spec = pl.BlockSpec((None, R, W, K), lambda n, hb: (n, 0, 0, 0))
        rows_band, rows_out = TH * W, H * W

    out = pl.pallas_call(
        _conv_band_kernel,
        out_shape=jax.ShapeDtypeStruct((N, rows_out, Cout), jnp.bfloat16),
        grid=(N, H // TH),
        in_specs=[
            x_spec,
            pl.BlockSpec((taps, K, Cout), lambda n, hb: (0, 0, 0)),
            pl.BlockSpec((1, Cout), lambda n, hb: (0, 0)),
        ],
        out_specs=pl.BlockSpec((None, rows_band, Cout), lambda n, hb: (n, hb, 0)),
        compiler_params=pltpu.CompilerParams(
            dimension_semantics=("parallel", "parallel")),
    )(xg, w_dy, b)
    if pool:
        return out.reshape(N, H // 2, W // 2, Cout)
    return out.reshape(N, H, W, Cout)


# ----------------------------------------------------------------------------
# Dense layer: (output-tile, K-tile) grid, f32 VMEM accumulator, bias +
# optional ReLU on the last K step.  Output tiles are a "parallel" axis.
# ----------------------------------------------------------------------------
def _linear_kernel(x_ref, w_ref, b_ref, o_ref, acc_ref, *, relu):
    k = pl.program_id(1)

    @pl.when(k == 0)
    def _():
        acc_ref[...] = jnp.zeros_like(acc_ref)

    acc_ref[...] += jnp.dot(x_ref[...], w_ref[...],
                            preferred_element_type=jnp.float32)

    @pl.when(k == pl.num_programs(1) - 1)
    def _():
        y = acc_ref[...] + b_ref[...]
        if relu:
            y = jnp.maximum(y, 0.0)
        o_ref[...] = y.astype(o_ref.dtype)


def linear(x, w, b, *, relu, out_dtype=jnp.bfloat16, tk=2048, tn=128):
    B, K = x.shape
    Kw, Nf = w.shape
    assert K == Kw
    tk, tn = min(tk, K), min(tn, Nf)
    assert K % tk == 0 and Nf % tn == 0
    return pl.pallas_call(
        functools.partial(_linear_kernel, relu=relu),
        out_shape=jax.ShapeDtypeStruct((B, Nf), out_dtype),
        grid=(Nf // tn, K // tk),                    # reduction axis last
        in_specs=[
            pl.BlockSpec((B, tk), lambda j, k: (0, k)),
            pl.BlockSpec((tk, tn), lambda j, k: (k, j)),
            pl.BlockSpec((1, tn), lambda j, k: (0, j)),
        ],
        out_specs=pl.BlockSpec((B, tn), lambda j, k: (0, j)),
        scratch_shapes=[pltpu.VMEM((B, tn), jnp.float32)],
        compiler_params=pltpu.CompilerParams(
            dimension_semantics=("parallel", "arbitrary")),
    )(x, w, b)


# ----------------------------------------------------------------------------
# Parameters (deterministic synthetic init matching the nn.Module shapes).
# Conv weights are stored per-dy with the dx taps concatenated on the K axis
# (full im2col layout for conv1); fc1 rows are permuted once so the NHWC
# flatten matches torch's NCHW `view(-1, 512*4*4)` order.
# ----------------------------------------------------------------------------
def init_params(key):
    ks = jax.random.split(key, 14)

    def conv_w(k, cin, cout, taps):
        w = jax.random.normal(k, (3, 3, cin, cout), jnp.float32) * (2.0 / (9 * cin)) ** 0.5
        if taps == 1:
            w = w.reshape(1, 9 * cin, cout)        # rows ordered (dy, dx, ci)
        else:
            w = w.reshape(3, 3 * cin, cout)        # per dy, rows ordered (dx, ci)
        return w.astype(jnp.bfloat16)

    def lin_w(k, fin, fout):
        return jax.random.normal(k, (fin, fout), jnp.float32) * (2.0 / fin) ** 0.5

    def bias(k, n):
        return jax.random.normal(k, (1, n), jnp.float32) * 0.01

    wd1 = lin_w(ks[8], 8192, 256)
    # fold torch's NCHW flatten (c*64 + h*8 + w) into the weight rows so the
    # kernel side can flatten the NHWC activation directly ((h*8+w)*128 + c).
    wd1 = wd1.reshape(128, 8, 8, 256).transpose(1, 2, 0, 3).reshape(8192, 256)

    return dict(
        w1=conv_w(ks[0], 3, 64, 1),     b1=bias(ks[1], 64),
        w2=conv_w(ks[2], 64, 64, 3),    b2=bias(ks[3], 64),
        w3=conv_w(ks[4], 64, 128, 3),   b3=bias(ks[5], 128),
        w4=conv_w(ks[6], 128, 128, 3),  b4=bias(ks[7], 128),
        wd1=wd1.astype(jnp.bfloat16),   bd1=bias(ks[9], 256),
        wd2=lin_w(ks[10], 256, 256).astype(jnp.bfloat16), bd2=bias(ks[11], 256),
        wd3=lin_w(ks[12], 256, 10).astype(jnp.bfloat16),  bd3=bias(ks[13], 10),
    )


def apricot_cnn1_forward(params, x_nchw):
    x = jnp.transpose(x_nchw, (0, 2, 3, 1)).astype(jnp.bfloat16)    # NCHW -> NHWC
    x = conv3x3_relu(x, params["w1"], params["b1"], pool=False)     # (N,32,32, 64)
    x = conv3x3_relu(x, params["w2"], params["b2"], pool=True)      # (N,16,16, 64) conv+relu+pool
    x = conv3x3_relu(x, params["w3"], params["b3"], pool=False)     # (N,16,16,128)
    x = conv3x3_relu(x, params["w4"], params["b4"], pool=True)      # (N, 8, 8,128) conv+relu+pool
    n = x.shape[0]
    x = x.reshape(n, -1)          # NHWC flatten; NCHW permutation folded into wd1
    x = linear(x, params["wd1"], params["bd1"], relu=True)                           # (N,256)
    x = linear(x, params["wd2"], params["bd2"], relu=True)                           # (N,256)
    x = linear(x, params["wd3"], params["bd3"], relu=False, out_dtype=jnp.float32)   # (N, 10)
    return x


if __name__ == "__main__":
    key = jax.random.PRNGKey(0)
    pkey, xkey = jax.random.split(key)
    params = init_params(pkey)
    # img_size=32 is required by the module's hard-coded flatten (512*4*4).
    x = jax.random.normal(xkey, (2, 3, 32, 32), jnp.float32)

    fwd = jax.jit(apricot_cnn1_forward)
    out = fwd(params, x)
    jax.block_until_ready(out)
    assert out.shape == (2, 10) and out.dtype == jnp.float32
    print("KERNEL_OK")
</pallas_src>

<mosaic_0001>
module attributes {stable_mosaic.version = 11 : i64} {
  func.func @_conv_band_kernel(%arg0: i32, %arg1: i32, %arg2: memref<1x32x32x27xbf16, #tpu.memory_space<vmem>>, %arg3: memref<1x27x64xbf16, #tpu.memory_space<vmem>>, %arg4: memref<1x64xf32, #tpu.memory_space<vmem>>, %arg5: memref<1x256x64xbf16, #tpu.memory_space<vmem>>) attributes {dimension_semantics = [#tpu.dimension_semantics<parallel>, #tpu.dimension_semantics<parallel>], iteration_bounds = array<i64: 2, 4>, scalar_prefetch = 0 : i64, scratch_operands = 0 : i64, tpu.core_type = #tpu.core_type<tc>, window_params = [{transform_indices = @transform_0, window_bounds = array<i64: 1, 32, 32, 27>}, {pipeline_mode = #tpu.pipeline_mode<synchronous>, transform_indices = @transform_1, window_bounds = array<i64: 1, 27, 64>}, {pipeline_mode = #tpu.pipeline_mode<synchronous>, transform_indices = @transform_2, window_bounds = array<i64: 1, 64>}, {transform_indices = @transform_3, window_bounds = array<i64: 1, 256, 64>}]} {
    %cst = arith.constant 0.000000e+00 : f32
    %0 = vector.broadcast %cst : f32 to vector<256x64xf32>
    %c8_i32 = arith.constant 8 : i32
    %1 = arith.muli %arg1, %c8_i32 : i32
    %c0_i32 = arith.constant 0 : i32
    %2 = arith.addi %1, %c0_i32 : i32
    %c0 = arith.constant 0 : index
    %3 = arith.index_cast %2 : i32 to index
    %c0_0 = arith.constant 0 : index
    %c0_1 = arith.constant 0 : index
    %4 = vector.load %arg2[%c0, %3, %c0_0, %c0_1] : memref<1x32x32x27xbf16, #tpu.memory_space<vmem>>, vector<1x8x32x27xbf16>
    %5 = vector.shape_cast %4 : vector<1x8x32x27xbf16> to vector<8x32x27xbf16>
    %6 = vector.shape_cast %5 : vector<8x32x27xbf16> to vector<256x27xbf16>
    %c0_2 = arith.constant 0 : index
    %c0_3 = arith.constant 0 : index
    %c0_4 = arith.constant 0 : index
    %7 = vector.load %arg3[%c0_2, %c0_3, %c0_4] : memref<1x27x64xbf16, #tpu.memory_space<vmem>>, vector<1x27x64xbf16>
    %8 = vector.shape_cast %7 : vector<1x27x64xbf16> to vector<27x64xbf16>
    %cst_5 = arith.constant dense<0.000000e+00> : vector<256x64xf32>
    %9 = tpu.matmul %6, %8, %cst_5 {dimension_numbers = #tpu.dot_dimension_numbers<[1], [0], [0], [1], [0, 0, 1, 1], [], []>} : vector<256x27xbf16>, vector<27x64xbf16>, vector<256x64xf32> -> vector<256x64xf32>
    %10 = arith.addf %0, %9 : vector<256x64xf32>
    %c0_6 = arith.constant 0 : index
    %c0_7 = arith.constant 0 : index
    %11 = vector.load %arg4[%c0_6, %c0_7] : memref<1x64xf32, #tpu.memory_space<vmem>>, vector<1x64xf32>
    %12 = vector.broadcast %11 : vector<1x64xf32> to vector<256x64xf32>
    %13 = arith.addf %10, %12 : vector<256x64xf32>
    %cst_8 = arith.constant 0.000000e+00 : f32
    %14 = vector.broadcast %cst_8 : f32 to vector<256x64xf32>
    %15 = arith.maximumf %13, %14 : vector<256x64xf32>
    %16 = arith.truncf %15 : vector<256x64xf32> to vector<256x64xbf16>
    %c0_9 = arith.constant 0 : index
    %c0_10 = arith.constant 0 : index
    %c0_11 = arith.constant 0 : index
    %17 = vector.load %arg5[%c0_9, %c0_10, %c0_11] : memref<1x256x64xbf16, #tpu.memory_space<vmem>>, vector<1x256x64xbf16>
    %18 = vector.shape_cast %17 : vector<1x256x64xbf16> to vector<256x64xbf16>
    %19 = vector.shape_cast %16 : vector<256x64xbf16> to vector<1x256x64xbf16>
    tpu.vector_store %arg5[%c0_9, %c0_10, %c0_11], %19 {strides = array<i32>} : memref<1x256x64xbf16, #tpu.memory_space<vmem>>, vector<1x256x64xbf16>,
    return
  }
  func.func @transform_0(%arg0: i32, %arg1: i32) -> (i32, i32, i32, i32) {
    %c0_i32 = arith.constant 0 : i32
    %c0_i32_0 = arith.constant 0 : i32
    %c0_i32_1 = arith.constant 0 : i32
    %c0_i32_2 = arith.constant 0 : i32
    return %arg0, %c0_i32, %c0_i32_0, %c0_i32_1 : i32, i32, i32, i32
  }
  func.func @transform_1(%arg0: i32, %arg1: i32) -> (i32, i32, i32) {
    %c0_i32 = arith.constant 0 : i32
    %c0_i32_0 = arith.constant 0 : i32
    %c0_i32_1 = arith.constant 0 : i32
    %c0_i32_2 = arith.constant 0 : i32
    return %c0_i32, %c0_i32_0, %c0_i32_1 : i32, i32, i32
  }
  func.func @transform_2(%arg0: i32, %arg1: i32) -> (i32, i32) {
    %c0_i32 = arith.constant 0 : i32
    %c0_i32_0 = arith.constant 0 : i32
    %c0_i32_1 = arith.constant 0 : i32
    return %c0_i32, %c0_i32_0 : i32, i32
  }
  func.func @transform_3(%arg0: i32, %arg1: i32) -> (i32, i32, i32) {
    %c0_i32 = arith.constant 0 : i32
    %c0_i32_0 = arith.constant 0 : i32
    return %arg0, %arg1, %c0_i32 : i32, i32, i32
  }
}

module attributes {stable_mosaic.version = 11 : i64} {
  func.func @_conv_band_kernel(%arg0: i32, %arg1: i32, %arg2: memref<1x34x2x16x192xbf16, #tpu.memory_space<vmem>>, %arg3: memref<3x192x64xbf16, #tpu.memory_space<vmem>>, %arg4: memref<1x64xf32, #tpu.memory_space<vmem>>, %arg5: memref<1x64x64xbf16, #tpu.memory_space<vmem>>) attributes {dimension_semantics = [#tpu.dimension_semantics<parallel>, #tpu.dimension_semantics<parallel>], iteration_bounds = array<i64: 2, 4>, scalar_prefetch = 0 : i64, scratch_operands = 0 : i64, tpu.core_type = #tpu.core_type<tc>, window_params = [{transform_indices = @transform_0, window_bounds = array<i64: 1, 34, 2, 16, 192>}, {pipeline_mode = #tpu.pipeline_mode<synchronous>, transform_indices = @transform_1, window_bounds = array<i64: 3, 192, 64>}, {pipeline_mode = #tpu.pipeline_mode<synchronous>, transform_indices = @transform_2, window_bounds = array<i64: 1, 64>}, {transform_indices = @transform_3, window_bounds = array<i64: 1, 64, 64>}]} {
    %cst = arith.constant 0.000000e+00 : f32
    %0 = vector.broadcast %cst : f32 to vector<128x64xf32>
    %cst_0 = arith.constant 0.000000e+00 : f32
    %1 = vector.broadcast %cst_0 : f32 to vector<128x64xf32>
    %c8_i32 = arith.constant 8 : i32
    %2 = arith.muli %arg1, %c8_i32 : i32
    %c0_i32 = arith.constant 0 : i32
    %3 = arith.addi %2, %c0_i32 : i32
    %c0 = arith.constant 0 : index
    %4 = arith.index_cast %3 : i32 to index
    %c0_1 = arith.constant 0 : index
    %c0_2 = arith.constant 0 : index
    %c0_3 = arith.constant 0 : index
    %5 = vector.load %arg2[%c0, %4, %c0_1, %c0_2, %c0_3] : memref<1x34x2x16x192xbf16, #tpu.memory_space<vmem>>, vector<1x8x1x16x192xbf16>
    %6 = vector.shape_cast %5 : vector<1x8x1x16x192xbf16> to vector<8x16x192xbf16>
    %c8_i32_4 = arith.constant 8 : i32
    %7 = arith.muli %arg1, %c8_i32_4 : i32
    %c0_i32_5 = arith.constant 0 : i32
    %8 = arith.addi %7, %c0_i32_5 : i32
    %c0_6 = arith.constant 0 : index
    %9 = arith.index_cast %8 : i32 to index
    %c1 = arith.constant 1 : index
    %c0_7 = arith.constant 0 : index
    %c0_8 = arith.constant 0 : index
    %10 = vector.load %arg2[%c0_6, %9, %c1, %c0_7, %c0_8] : memref<1x34x2x16x192xbf16, #tpu.memory_space<vmem>>, vector<1x8x1x16x192xbf16>
    %11 = vector.shape_cast %10 : vector<1x8x1x16x192xbf16> to vector<8x16x192xbf16>
    %12 = vector.shape_cast %6 : vector<8x16x192xbf16> to vector<128x192xbf16>
    %c0_9 = arith.constant 0 : index
    %c0_10 = arith.constant 0 : index
    %c0_11 = arith.constant 0 : index
    %13 = vector.load %arg3[%c0_9, %c0_10, %c0_11] : memref<3x192x64xbf16, #tpu.memory_space<vmem>>, vector<1x192x64xbf16>
    %14 = vector.shape_cast %13 : vector<1x192x64xbf16> to vector<192x64xbf16>
    %cst_12 = arith.constant dense<0.000000e+00> : vector<128x64xf32>
    %15 = tpu.matmul %12, %14, %cst_12 {dimension_numbers = #tpu.dot_dimension_numbers<[1], [0], [0], [1], [0, 0, 1, 1], [], []>} : vector<128x192xbf16>, vector<192x64xbf16>, vector<128x64xf32> -> vector<128x64xf32>
    %16 = arith.addf %0, %15 : vector<128x64xf32>
    %17 = vector.shape_cast %11 : vector<8x16x192xbf16> to vector<128x192xbf16>
    %c0_13 = arith.constant 0 : index
    %c0_14 = arith.constant 0 : index
    %c0_15 = arith.constant 0 : index
    %18 = vector.load %arg3[%c0_13, %c0_14, %c0_15] : memref<3x192x64xbf16, #tpu.memory_space<vmem>>, vector<1x192x64xbf16>
    %19 = vector.shape_cast %18 : vector<1x192x64xbf16> to vector<192x64xbf16>
    %cst_16 = arith.constant dense<0.000000e+00> : vector<128x64xf32>
    %20 = tpu.matmul %17, %19, %cst_16 {dimension_numbers = #tpu.dot_dimension_numbers<[1], [0], [0], [1], [0, 0, 1, 1], [], []>} : vector<128x192xbf16>, vector<192x64xbf16>, vector<128x64xf32> -> vector<128x64xf32>
    %21 = arith.addf %1, %20 : vector<128x64xf32>
    %c8_i32_17 = arith.constant 8 : i32
    %22 = arith.muli %arg1, %c8_i32_17 : i32
    %c1_i32 = arith.constant 1 : i32
    %23 = arith.addi %22, %c1_i32 : i32
    %c0_18 = arith.constant 0 : index
    %24 = arith.index_cast %23 : i32 to index
    %c0_19 = arith.constant 0 : index
    %c0_20 = arith.constant 0 : index
    %c0_21 = arith.constant 0 : index
    %25 = vector.load %arg2[%c0_18, %24, %c0_19, %c0_20, %c0_21] : memref<1x34x2x16x192xbf16, #tpu.memory_space<vmem>>, vector<1x8x1x16x192xbf16>
    %26 = vector.shape_cast %25 : vector<1x8x1x16x192xbf16> to vector<8x16x192xbf16>
    %c8_i32_22 = arith.constant 8 : i32
    %27 = arith.muli %arg1, %c8_i32_22 : i32
    %c1_i32_23 = arith.constant 1 : i32
    %28 = arith.addi %27, %c1_i32_23 : i32
    %c0_24 = arith.constant 0 : index
    %29 = arith.index_cast %28 : i32 to index
    %c1_25 = arith.constant 1 : index
    %c0_26 = arith.constant 0 : index
    %c0_27 = arith.constant 0 : index
    %30 = vector.load %arg2[%c0_24, %29, %c1_25, %c0_26, %c0_27] : memref<1x34x2x16x192xbf16, #tpu.memory_space<vmem>>, vector<1x8x1x16x192xbf16>
    %31 = vector.shape_cast %30 : vector<1x8x1x16x192xbf16> to vector<8x16x192xbf16>
    %32 = vector.shape_cast %26 : vector<8x16x192xbf16> to vector<128x192xbf16>
    %c1_28 = arith.constant 1 : index
    %c0_29 = arith.constant 0 : index
    %c0_30 = arith.constant 0 : index
    %33 = vector.load %arg3[%c1_28, %c0_29, %c0_30] : memref<3x192x64xbf16, #tpu.memory_space<vmem>>, vector<1x192x64xbf16>
    %34 = vector.shape_cast %33 : vector<1x192x64xbf16> to vector<192x64xbf16>
    %cst_31 = arith.constant dense<0.000000e+00> : vector<128x64xf32>
    %35 = tpu.matmul %32, %34, %cst_31 {dimension_numbers = #tpu.dot_dimension_numbers<[1], [0], [0], [1], [0, 0, 1, 1], [], []>} : vector<128x192xbf16>, vector<192x64xbf16>, vector<128x64xf32> -> vector<128x64xf32>
    %36 = arith.addf %16, %35 : vector<128x64xf32>
    %37 = vector.shape_cast %31 : vector<8x16x192xbf16> to vector<128x192xbf16>
    %c1_32 = arith.constant 1 : index
    %c0_33 = arith.constant 0 : index
    %c0_34 = arith.constant 0 : index
    %38 = vector.load %arg3[%c1_32, %c0_33, %c0_34] : memref<3x192x64xbf16, #tpu.memory_space<vmem>>, vector<1x192x64xbf16>
    %39 = vector.shape_cast %38 : vector<1x192x64xbf16> to vector<192x64xbf16>
    %cst_35 = arith.constant dense<0.000000e+00> : vector<128x64xf32>
    %40 = tpu.matmul %37, %39, %cst_35 {dimension_numbers = #tpu.dot_dimension_numbers<[1], [0], [0], [1], [0, 0, 1, 1], [], []>} : vector<128x192xbf16>, vector<192x64xbf16>, vector<128x64xf32> -> vector<128x64xf32>
    %41 = arith.addf %21, %40 : vector<128x64xf32>
    %c8_i32_36 = arith.constant 8 : i32
    %42 = arith.muli %arg1, %c8_i32_36 : i32
    %c2_i32 = arith.constant 2 : i32
    %43 = arith.addi %42, %c2_i32 : i32
    %c0_37 = arith.constant 0 : index
    %44 = arith.index_cast %43 : i32 to index
    %c0_38 = arith.constant 0 : index
    %c0_39 = arith.constant 0 : index
    %c0_40 = arith.constant 0 : index
    %45 = vector.load %arg2[%c0_37, %44, %c0_38, %c0_39, %c0_40] : memref<1x34x2x16x192xbf16, #tpu.memory_space<vmem>>, vector<1x8x1x16x192xbf16>
    %46 = vector.shape_cast %45 : vector<1x8x1x16x192xbf16> to vector<8x16x192xbf16>
    %c8_i32_41 = arith.constant 8 : i32
    %47 = arith.muli %arg1, %c8_i32_41 : i32
    %c2_i32_42 = arith.constant 2 : i32
    %48 = arith.addi %47, %c2_i32_42 : i32
    %c0_43 = arith.constant 0 : index
    %49 = arith.index_cast %48 : i32 to index
    %c1_44 = arith.constant 1 : index
    %c0_45 = arith.constant 0 : index
    %c0_46 = arith.constant 0 : index
    %50 = vector.load %arg2[%c0_43, %49, %c1_44, %c0_45, %c0_46] : memref<1x34x2x16x192xbf16, #tpu.memory_space<vmem>>, vector<1x8x1x16x192xbf16>
    %51 = vector.shape_cast %50 : vector<1x8x1x16x192xbf16> to vector<8x16x192xbf16>
    %52 = vector.shape_cast %46 : vector<8x16x192xbf16> to vector<128x192xbf16>
    %c2 = arith.constant 2 : index
    %c0_47 = arith.constant 0 : index
    %c0_48 = arith.constant 0 : index
    %53 = vector.load %arg3[%c2, %c0_47, %c0_48] : memref<3x192x64xbf16, #tpu.memory_space<vmem>>, vector<1x192x64xbf16>
    %54 = vector.shape_cast %53 : vector<1x192x64xbf16> to vector<192x64xbf16>
    %cst_49 = arith.constant dense<0.000000e+00> : vector<128x64xf32>
    %55 = tpu.matmul %52, %54, %cst_49 {dimension_numbers = #tpu.dot_dimension_numbers<[1], [0], [0], [1], [0, 0, 1, 1], [], []>} : vector<128x192xbf16>, vector<192x64xbf16>, vector<128x64xf32> -> vector<128x64xf32>
    %56 = arith.addf %36, %55 : vector<128x64xf32>
    %57 = vector.shape_cast %51 : vector<8x16x192xbf16> to vector<128x192xbf16>
    %c2_50 = arith.constant 2 : index
    %c0_51 = arith.constant 0 : index
    %c0_52 = arith.constant 0 : index
    %58 = vector.load %arg3[%c2_50, %c0_51, %c0_52] : memref<3x192x64xbf16, #tpu.memory_space<vmem>>, vector<1x192x64xbf16>
    %59 = vector.shape_cast %58 : vector<1x192x64xbf16> to vector<192x64xbf16>
    %cst_53 = arith.constant dense<0.000000e+00> : vector<128x64xf32>
    %60 = tpu.matmul %57, %59, %cst_53 {dimension_numbers = #tpu.dot_dimension_numbers<[1], [0], [0], [1], [0, 0, 1, 1], [], []>} : vector<128x192xbf16>, vector<192x64xbf16>, vector<128x64xf32> -> vector<128x64xf32>
    %61 = arith.addf %41, %60 : vector<128x64xf32>
    %c0_54 = arith.constant 0 : index
    %c0_55 = arith.constant 0 : index
    %62 = vector.load %arg4[%c0_54, %c0_55] : memref<1x64xf32, #tpu.memory_space<vmem>>, vector<1x64xf32>
    %63 = vector.broadcast %62 : vector<1x64xf32> to vector<128x64xf32>
    %64 = arith.addf %56, %63 : vector<128x64xf32>
    %cst_56 = arith.constant 0.000000e+00 : f32
    %65 = vector.broadcast %cst_56 : f32 to vector<128x64xf32>
    %66 = arith.maximumf %64, %65 : vector<128x64xf32>
    %67 = vector.broadcast %62 : vector<1x64xf32> to vector<128x64xf32>
    %68 = arith.addf %61, %67 : vector<128x64xf32>
    %cst_57 = arith.constant 0.000000e+00 : f32
    %69 = vector.broadcast %cst_57 : f32 to vector<128x64xf32>
    %70 = arith.maximumf %68, %69 : vector<128x64xf32>
    %71 = arith.maximumf %66, %70 : vector<128x64xf32>
    %72 = vector.extract_strided_slice %71 {offsets = [0, 0], sizes = [16, 64], strides = [1, 1]} : vector<128x64xf32> to vector<16x64xf32>
    %73 = vector.extract_strided_slice %71 {offsets = [16, 0], sizes = [16, 64], strides = [1, 1]} : vector<128x64xf32> to vector<16x64xf32>
    %74 = arith.maximumf %72, %73 : vector<16x64xf32>
    %75 = arith.truncf %74 : vector<16x64xf32> to vector<16x64xbf16>
    %c0_58 = arith.constant 0 : index
    %c0_59 = arith.constant 0 : index
    %c0_60 = arith.constant 0 : index
    %76 = vector.load %arg5[%c0_58, %c0_59, %c0_60] : memref<1x64x64xbf16, #tpu.memory_space<vmem>>, vector<1x16x64xbf16>
    %77 = vector.shape_cast %76 : vector<1x16x64xbf16> to vector<16x64xbf16>
    %78 = vector.shape_cast %75 : vector<16x64xbf16> to vector<1x16x64xbf16>
    tpu.vector_store %arg5[%c0_58, %c0_59, %c0_60], %78 {strides = array<i32>} : memref<1x64x64xbf16, #tpu.memory_space<vmem>>, vector<1x16x64xbf16>,
    %79 = vector.extract_strided_slice %71 {offsets = [32, 0], sizes = [16, 64], strides = [1, 1]} : vector<128x64xf32> to vector<16x64xf32>
    %80 = vector.extract_strided_slice %71 {offsets = [48, 0], sizes = [16, 64], strides = [1, 1]} : vector<128x64xf32> to vector<16x64xf32>
    %81 = arith.maximumf %79, %80 : vector<16x64xf32>
    %82 = arith.truncf %81 : vector<16x64xf32> to vector<16x64xbf16>
    %c0_61 = arith.constant 0 : index
    %c16 = arith.constant 16 : index
    %c0_62 = arith.constant 0 : index
    %83 = vector.load %arg5[%c0_61, %c16, %c0_62] : memref<1x64x64xbf16, #tpu.memory_space<vmem>>, vector<1x16x64xbf16>
    %84 = vector.shape_cast %83 : vector<1x16x64xbf16> to vector<16x64xbf16>
    %85 = vector.shape_cast %82 : vector<16x64xbf16> to vector<1x16x64xbf16>
    tpu.vector_store %arg5[%c0_61, %c16, %c0_62], %85 {strides = array<i32>} : memref<1x64x64xbf16, #tpu.memory_space<vmem>>, vector<1x16x64xbf16>,
    %86 = vector.extract_strided_slice %71 {offsets = [64, 0], sizes = [16, 64], strides = [1, 1]} : vector<128x64xf32> to vector<16x64xf32>
    %87 = vector.extract_strided_slice %71 {offsets = [80, 0], sizes = [16, 64], strides = [1, 1]} : vector<128x64xf32> to vector<16x64xf32>
    %88 = arith.maximumf %86, %87 : vector<16x64xf32>
    %89 = arith.truncf %88 : vector<16x64xf32> to vector<16x64xbf16>
    %c0_63 = arith.constant 0 : index
    %c32 = arith.constant 32 : index
    %c0_64 = arith.constant 0 : index
    %90 = vector.load %arg5[%c0_63, %c32, %c0_64] : memref<1x64x64xbf16, #tpu.memory_space<vmem>>, vector<1x16x64xbf16>
    %91 = vector.shape_cast %90 : vector<1x16x64xbf16> to vector<16x64xbf16>
    %92 = vector.shape_cast %89 : vector<16x64xbf16> to vector<1x16x64xbf16>
    tpu.vector_store %arg5[%c0_63, %c32, %c0_64], %92 {strides = array<i32>} : memref<1x64x64xbf16, #tpu.memory_space<vmem>>, vector<1x16x64xbf16>,
    %93 = vector.extract_strided_slice %71 {offsets = [96, 0], sizes = [16, 64], strides = [1, 1]} : vector<128x64xf32> to vector<16x64xf32>
    %94 = vector.extract_strided_slice %71 {offsets = [112, 0], sizes = [16, 64], strides = [1, 1]} : vector<128x64xf32> to vector<16x64xf32>
    %95 = arith.maximumf %93, %94 : vector<16x64xf32>
    %96 = arith.truncf %95 : vector<16x64xf32> to vector<16x64xbf16>
    %c0_65 = arith.constant 0 : index
    %c48 = arith.constant 48 : index
    %c0_66 = arith.constant 0 : index
    %97 = vector.load %arg5[%c0_65, %c48, %c0_66] : memref<1x64x64xbf16, #tpu.memory_space<vmem>>, vector<1x16x64xbf16>
    %98 = vector.shape_cast %97 : vector<1x16x64xbf16> to vector<16x64xbf16>
    %99 = vector.shape_cast %96 : vector<16x64xbf16> to vector<1x16x64xbf16>
    tpu.vector_store %arg5[%c0_65, %c48, %c0_66], %99 {strides = array<i32>} : memref<1x64x64xbf16, #tpu.memory_space<vmem>>, vector<1x16x64xbf16>,
    return
  }
  func.func @transform_0(%arg0: i32, %arg1: i32) -> (i32, i32, i32, i32, i32) {
    %c0_i32 = arith.constant 0 : i32
    %c0_i32_0 = arith.constant 0 : i32
    %c0_i32_1 = arith.constant 0 : i32
    %c0_i32_2 = arith.constant 0 : i32
    %c0_i32_3 = arith.constant 0 : i32
    return %arg0, %c0_i32, %c0_i32_0, %c0_i32_1, %c0_i32_2 : i32, i32, i32, i32, i32
  }
  func.func @transform_1(%arg0: i32, %arg1: i32) -> (i32, i32, i32) {
    %c0_i32 = arith.constant 0 : i32
    %c0_i32_0 = arith.constant 0 : i32
    %c0_i32_1 = arith.constant 0 : i32
    %c0_i32_2 = arith.constant 0 : i32
    return %c0_i32, %c0_i32_0, %c0_i32_1 : i32, i32, i32
  }
  func.func @transform_2(%arg0: i32, %arg1: i32) -> (i32, i32) {
    %c0_i32 = arith.constant 0 : i32
    %c0_i32_0 = arith.constant 0 : i32
    %c0_i32_1 = arith.constant 0 : i32
    return %c0_i32, %c0_i32_0 : i32, i32
  }
  func.func @transform_3(%arg0: i32, %arg1: i32) -> (i32, i32, i32) {
    %c0_i32 = arith.constant 0 : i32
    %c0_i32_0 = arith.constant 0 : i32
    return %arg0, %arg1, %c0_i32 : i32, i32, i32
  }
}

module attributes {stable_mosaic.version = 11 : i64} {
  func.func @_conv_band_kernel(%arg0: i32, %arg1: i32, %arg2: memref<1x18x16x192xbf16, #tpu.memory_space<vmem>>, %arg3: memref<3x192x128xbf16, #tpu.memory_space<vmem>>, %arg4: memref<1x128xf32, #tpu.memory_space<vmem>>, %arg5: memref<1x128x128xbf16, #tpu.memory_space<vmem>>) attributes {dimension_semantics = [#tpu.dimension_semantics<parallel>, #tpu.dimension_semantics<parallel>], iteration_bounds = array<i64: 2, 2>, scalar_prefetch = 0 : i64, scratch_operands = 0 : i64, tpu.core_type = #tpu.core_type<tc>, window_params = [{transform_indices = @transform_0, window_bounds = array<i64: 1, 18, 16, 192>}, {pipeline_mode = #tpu.pipeline_mode<synchronous>, transform_indices = @transform_1, window_bounds = array<i64: 3, 192, 128>}, {pipeline_mode = #tpu.pipeline_mode<synchronous>, transform_indices = @transform_2, window_bounds = array<i64: 1, 128>}, {transform_indices = @transform_3, window_bounds = array<i64: 1, 128, 128>}]} {
    %cst = arith.constant 0.000000e+00 : f32
    %0 = vector.broadcast %cst : f32 to vector<128x128xf32>
    %c8_i32 = arith.constant 8 : i32
    %1 = arith.muli %arg1, %c8_i32 : i32
    %c0_i32 = arith.constant 0 : i32
    %2 = arith.addi %1, %c0_i32 : i32
    %c0 = arith.constant 0 : index
    %3 = arith.index_cast %2 : i32 to index
    %c0_0 = arith.constant 0 : index
    %c0_1 = arith.constant 0 : index
    %4 = vector.load %arg2[%c0, %3, %c0_0, %c0_1] : memref<1x18x16x192xbf16, #tpu.memory_space<vmem>>, vector<1x8x16x192xbf16>
    %5 = vector.shape_cast %4 : vector<1x8x16x192xbf16> to vector<8x16x192xbf16>
    %6 = vector.shape_cast %5 : vector<8x16x192xbf16> to vector<128x192xbf16>
    %c0_2 = arith.constant 0 : index
    %c0_3 = arith.constant 0 : index
    %c0_4 = arith.constant 0 : index
    %7 = vector.load %arg3[%c0_2, %c0_3, %c0_4] : memref<3x192x128xbf16, #tpu.memory_space<vmem>>, vector<1x192x128xbf16>
    %8 = vector.shape_cast %7 : vector<1x192x128xbf16> to vector<192x128xbf16>
    %cst_5 = arith.constant dense<0.000000e+00> : vector<128x128xf32>
    %9 = tpu.matmul %6, %8, %cst_5 {dimension_numbers = #tpu.dot_dimension_numbers<[1], [0], [0], [1], [0, 0, 1, 1], [], []>} : vector<128x192xbf16>, vector<192x128xbf16>, vector<128x128xf32> -> vector<128x128xf32>
    %10 = arith.addf %0, %9 : vector<128x128xf32>
    %c8_i32_6 = arith.constant 8 : i32
    %11 = arith.muli %arg1, %c8_i32_6 : i32
    %c1_i32 = arith.constant 1 : i32
    %12 = arith.addi %11, %c1_i32 : i32
    %c0_7 = arith.constant 0 : index
    %13 = arith.index_cast %12 : i32 to index
    %c0_8 = arith.constant 0 : index
    %c0_9 = arith.constant 0 : index
    %14 = vector.load %arg2[%c0_7, %13, %c0_8, %c0_9] : memref<1x18x16x192xbf16, #tpu.memory_space<vmem>>, vector<1x8x16x192xbf16>
    %15 = vector.shape_cast %14 : vector<1x8x16x192xbf16> to vector<8x16x192xbf16>
    %16 = vector.shape_cast %15 : vector<8x16x192xbf16> to vector<128x192xbf16>
    %c1 = arith.constant 1 : index
    %c0_10 = arith.constant 0 : index
    %c0_11 = arith.constant 0 : index
    %17 = vector.load %arg3[%c1, %c0_10, %c0_11] : memref<3x192x128xbf16, #tpu.memory_space<vmem>>, vector<1x192x128xbf16>
    %18 = vector.shape_cast %17 : vector<1x192x128xbf16> to vector<192x128xbf16>
    %cst_12 = arith.constant dense<0.000000e+00> : vector<128x128xf32>
    %19 = tpu.matmul %16, %18, %cst_12 {dimension_numbers = #tpu.dot_dimension_numbers<[1], [0], [0], [1], [0, 0, 1, 1], [], []>} : vector<128x192xbf16>, vector<192x128xbf16>, vector<128x128xf32> -> vector<128x128xf32>
    %20 = arith.addf %10, %19 : vector<128x128xf32>
    %c8_i32_13 = arith.constant 8 : i32
    %21 = arith.muli %arg1, %c8_i32_13 : i32
    %c2_i32 = arith.constant 2 : i32
    %22 = arith.addi %21, %c2_i32 : i32
    %c0_14 = arith.constant 0 : index
    %23 = arith.index_cast %22 : i32 to index
    %c0_15 = arith.constant 0 : index
    %c0_16 = arith.constant 0 : index
    %24 = vector.load %arg2[%c0_14, %23, %c0_15, %c0_16] : memref<1x18x16x192xbf16, #tpu.memory_space<vmem>>, vector<1x8x16x192xbf16>
    %25 = vector.shape_cast %24 : vector<1x8x16x192xbf16> to vector<8x16x192xbf16>
    %26 = vector.shape_cast %25 : vector<8x16x192xbf16> to vector<128x192xbf16>
    %c2 = arith.constant 2 : index
    %c0_17 = arith.constant 0 : index
    %c0_18 = arith.constant 0 : index
    %27 = vector.load %arg3[%c2, %c0_17, %c0_18] : memref<3x192x128xbf16, #tpu.memory_space<vmem>>, vector<1x192x128xbf16>
    %28 = vector.shape_cast %27 : vector<1x192x128xbf16> to vector<192x128xbf16>
    %cst_19 = arith.constant dense<0.000000e+00> : vector<128x128xf32>
    %29 = tpu.matmul %26, %28, %cst_19 {dimension_numbers = #tpu.dot_dimension_numbers<[1], [0], [0], [1], [0, 0, 1, 1], [], []>} : vector<128x192xbf16>, vector<192x128xbf16>, vector<128x128xf32> -> vector<128x128xf32>
    %30 = arith.addf %20, %29 : vector<128x128xf32>
    %c0_20 = arith.constant 0 : index
    %c0_21 = arith.constant 0 : index
    %31 = vector.load %arg4[%c0_20, %c0_21] : memref<1x128xf32, #tpu.memory_space<vmem>>, vector<1x128xf32>
    %32 = vector.broadcast %31 : vector<1x128xf32> to vector<128x128xf32>
    %33 = arith.addf %30, %32 : vector<128x128xf32>
    %cst_22 = arith.constant 0.000000e+00 : f32
    %34 = vector.broadcast %cst_22 : f32 to vector<128x128xf32>
    %35 = arith.maximumf %33, %34 : vector<128x128xf32>
    %36 = arith.truncf %35 : vector<128x128xf32> to vector<128x128xbf16>
    %c0_23 = arith.constant 0 : index
    %c0_24 = arith.constant 0 : index
    %c0_25 = arith.constant 0 : index
    %37 = vector.load %arg5[%c0_23, %c0_24, %c0_25] : memref<1x128x128xbf16, #tpu.memory_space<vmem>>, vector<1x128x128xbf16>
    %38 = vector.shape_cast %37 : vector<1x128x128xbf16> to vector<128x128xbf16>
    %39 = vector.shape_cast %36 : vector<128x128xbf16> to vector<1x128x128xbf16>
    tpu.vector_store %arg5[%c0_23, %c0_24, %c0_25], %39 {strides = array<i32>} : memref<1x128x128xbf16, #tpu.memory_space<vmem>>, vector<1x128x128xbf16>,
    return
  }
  func.func @transform_0(%arg0: i32, %arg1: i32) -> (i32, i32, i32, i32) {
    %c0_i32 = arith.constant 0 : i32
    %c0_i32_0 = arith.constant 0 : i32
    %c0_i32_1 = arith.constant 0 : i32
    %c0_i32_2 = arith.constant 0 : i32
    return %arg0, %c0_i32, %c0_i32_0, %c0_i32_1 : i32, i32, i32, i32
  }
  func.func @transform_1(%arg0: i32, %arg1: i32) -> (i32, i32, i32) {
    %c0_i32 = arith.constant 0 : i32
    %c0_i32_0 = arith.constant 0 : i32
    %c0_i32_1 = arith.constant 0 : i32
    %c0_i32_2 = arith.constant 0 : i32
    return %c0_i32, %c0_i32_0, %c0_i32_1 : i32, i32, i32
  }
  func.func @transform_2(%arg0: i32, %arg1: i32) -> (i32, i32) {
    %c0_i32 = arith.constant 0 : i32
    %c0_i32_0 = arith.constant 0 : i32
    %c0_i32_1 = arith.constant 0 : i32
    return %c0_i32, %c0_i32_0 : i32, i32
  }
  func.func @transform_3(%arg0: i32, %arg1: i32) -> (i32, i32, i32) {
    %c0_i32 = arith.constant 0 : i32
    %c0_i32_0 = arith.constant 0 : i32
    return %arg0, %arg1, %c0_i32 : i32, i32, i32
  }
}

module attributes {stable_mosaic.version = 11 : i64} {
  func.func @_conv_band_kernel(%arg0: i32, %arg1: i32, %arg2: memref<1x18x2x8x384xbf16, #tpu.memory_space<vmem>>, %arg3: memref<3x384x128xbf16, #tpu.memory_space<vmem>>, %arg4: memref<1x128xf32, #tpu.memory_space<vmem>>, %arg5: memref<1x32x128xbf16, #tpu.memory_space<vmem>>) attributes {dimension_semantics = [#tpu.dimension_semantics<parallel>, #tpu.dimension_semantics<parallel>], iteration_bounds = array<i64: 2, 2>, scalar_prefetch = 0 : i64, scratch_operands = 0 : i64, tpu.core_type = #tpu.core_type<tc>, window_params = [{transform_indices = @transform_0, window_bounds = array<i64: 1, 18, 2, 8, 384>}, {pipeline_mode = #tpu.pipeline_mode<synchronous>, transform_indices = @transform_1, window_bounds = array<i64: 3, 384, 128>}, {pipeline_mode = #tpu.pipeline_mode<synchronous>, transform_indices = @transform_2, window_bounds = array<i64: 1, 128>}, {transform_indices = @transform_3, window_bounds = array<i64: 1, 32, 128>}]} {
    %cst = arith.constant 0.000000e+00 : f32
    %0 = vector.broadcast %cst : f32 to vector<64x128xf32>
    %cst_0 = arith.constant 0.000000e+00 : f32
    %1 = vector.broadcast %cst_0 : f32 to vector<64x128xf32>
    %c8_i32 = arith.constant 8 : i32
    %2 = arith.muli %arg1, %c8_i32 : i32
    %c0_i32 = arith.constant 0 : i32
    %3 = arith.addi %2, %c0_i32 : i32
    %c0 = arith.constant 0 : index
    %4 = arith.index_cast %3 : i32 to index
    %c0_1 = arith.constant 0 : index
    %c0_2 = arith.constant 0 : index
    %c0_3 = arith.constant 0 : index
    %5 = vector.load %arg2[%c0, %4, %c0_1, %c0_2, %c0_3] : memref<1x18x2x8x384xbf16, #tpu.memory_space<vmem>>, vector<1x8x1x8x384xbf16>
    %6 = vector.shape_cast %5 : vector<1x8x1x8x384xbf16> to vector<8x8x384xbf16>
    %c8_i32_4 = arith.constant 8 : i32
    %7 = arith.muli %arg1, %c8_i32_4 : i32
    %c0_i32_5 = arith.constant 0 : i32
    %8 = arith.addi %7, %c0_i32_5 : i32
    %c0_6 = arith.constant 0 : index
    %9 = arith.index_cast %8 : i32 to index
    %c1 = arith.constant 1 : index
    %c0_7 = arith.constant 0 : index
    %c0_8 = arith.constant 0 : index
    %10 = vector.load %arg2[%c0_6, %9, %c1, %c0_7, %c0_8] : memref<1x18x2x8x384xbf16, #tpu.memory_space<vmem>>, vector<1x8x1x8x384xbf16>
    %11 = vector.shape_cast %10 : vector<1x8x1x8x384xbf16> to vector<8x8x384xbf16>
    %12 = vector.shape_cast %6 : vector<8x8x384xbf16> to vector<64x384xbf16>
    %c0_9 = arith.constant 0 : index
    %c0_10 = arith.constant 0 : index
    %c0_11 = arith.constant 0 : index
    %13 = vector.load %arg3[%c0_9, %c0_10, %c0_11] : memref<3x384x128xbf16, #tpu.memory_space<vmem>>, vector<1x384x128xbf16>
    %14 = vector.shape_cast %13 : vector<1x384x128xbf16> to vector<384x128xbf16>
    %cst_12 = arith.constant dense<0.000000e+00> : vector<64x128xf32>
    %15 = tpu.matmul %12, %14, %cst_12 {dimension_numbers = #tpu.dot_dimension_numbers<[1], [0], [0], [1], [0, 0, 1, 1], [], []>} : vector<64x384xbf16>, vector<384x128xbf16>, vector<64x128xf32> -> vector<64x128xf32>
    %16 = arith.addf %0, %15 : vector<64x128xf32>
    %17 = vector.shape_cast %11 : vector<8x8x384xbf16> to vector<64x384xbf16>
    %c0_13 = arith.constant 0 : index
    %c0_14 = arith.constant 0 : index
    %c0_15 = arith.constant 0 : index
    %18 = vector.load %arg3[%c0_13, %c0_14, %c0_15] : memref<3x384x128xbf16, #tpu.memory_space<vmem>>, vector<1x384x128xbf16>
    %19 = vector.shape_cast %18 : vector<1x384x128xbf16> to vector<384x128xbf16>
    %cst_16 = arith.constant dense<0.000000e+00> : vector<64x128xf32>
    %20 = tpu.matmul %17, %19, %cst_16 {dimension_numbers = #tpu.dot_dimension_numbers<[1], [0], [0], [1], [0, 0, 1, 1], [], []>} : vector<64x384xbf16>, vector<384x128xbf16>, vector<64x128xf32> -> vector<64x128xf32>
    %21 = arith.addf %1, %20 : vector<64x128xf32>
    %c8_i32_17 = arith.constant 8 : i32
    %22 = arith.muli %arg1, %c8_i32_17 : i32
    %c1_i32 = arith.constant 1 : i32
    %23 = arith.addi %22, %c1_i32 : i32
    %c0_18 = arith.constant 0 : index
    %24 = arith.index_cast %23 : i32 to index
    %c0_19 = arith.constant 0 : index
    %c0_20 = arith.constant 0 : index
    %c0_21 = arith.constant 0 : index
    %25 = vector.load %arg2[%c0_18, %24, %c0_19, %c0_20, %c0_21] : memref<1x18x2x8x384xbf16, #tpu.memory_space<vmem>>, vector<1x8x1x8x384xbf16>
    %26 = vector.shape_cast %25 : vector<1x8x1x8x384xbf16> to vector<8x8x384xbf16>
    %c8_i32_22 = arith.constant 8 : i32
    %27 = arith.muli %arg1, %c8_i32_22 : i32
    %c1_i32_23 = arith.constant 1 : i32
    %28 = arith.addi %27, %c1_i32_23 : i32
    %c0_24 = arith.constant 0 : index
    %29 = arith.index_cast %28 : i32 to index
    %c1_25 = arith.constant 1 : index
    %c0_26 = arith.constant 0 : index
    %c0_27 = arith.constant 0 : index
    %30 = vector.load %arg2[%c0_24, %29, %c1_25, %c0_26, %c0_27] : memref<1x18x2x8x384xbf16, #tpu.memory_space<vmem>>, vector<1x8x1x8x384xbf16>
    %31 = vector.shape_cast %30 : vector<1x8x1x8x384xbf16> to vector<8x8x384xbf16>
    %32 = vector.shape_cast %26 : vector<8x8x384xbf16> to vector<64x384xbf16>
    %c1_28 = arith.constant 1 : index
    %c0_29 = arith.constant 0 : index
    %c0_30 = arith.constant 0 : index
    %33 = vector.load %arg3[%c1_28, %c0_29, %c0_30] : memref<3x384x128xbf16, #tpu.memory_space<vmem>>, vector<1x384x128xbf16>
    %34 = vector.shape_cast %33 : vector<1x384x128xbf16> to vector<384x128xbf16>
    %cst_31 = arith.constant dense<0.000000e+00> : vector<64x128xf32>
    %35 = tpu.matmul %32, %34, %cst_31 {dimension_numbers = #tpu.dot_dimension_numbers<[1], [0], [0], [1], [0, 0, 1, 1], [], []>} : vector<64x384xbf16>, vector<384x128xbf16>, vector<64x128xf32> -> vector<64x128xf32>
    %36 = arith.addf %16, %35 : vector<64x128xf32>
    %37 = vector.shape_cast %31 : vector<8x8x384xbf16> to vector<64x384xbf16>
    %c1_32 = arith.constant 1 : index
    %c0_33 = arith.constant 0 : index
    %c0_34 = arith.constant 0 : index
    %38 = vector.load %arg3[%c1_32, %c0_33, %c0_34] : memref<3x384x128xbf16, #tpu.memory_space<vmem>>, vector<1x384x128xbf16>
    %39 = vector.shape_cast %38 : vector<1x384x128xbf16> to vector<384x128xbf16>
    %cst_35 = arith.constant dense<0.000000e+00> : vector<64x128xf32>
    %40 = tpu.matmul %37, %39, %cst_35 {dimension_numbers = #tpu.dot_dimension_numbers<[1], [0], [0], [1], [0, 0, 1, 1], [], []>} : vector<64x384xbf16>, vector<384x128xbf16>, vector<64x128xf32> -> vector<64x128xf32>
    %41 = arith.addf %21, %40 : vector<64x128xf32>
    %c8_i32_36 = arith.constant 8 : i32
    %42 = arith.muli %arg1, %c8_i32_36 : i32
    %c2_i32 = arith.constant 2 : i32
    %43 = arith.addi %42, %c2_i32 : i32
    %c0_37 = arith.constant 0 : index
    %44 = arith.index_cast %43 : i32 to index
    %c0_38 = arith.constant 0 : index
    %c0_39 = arith.constant 0 : index
    %c0_40 = arith.constant 0 : index
    %45 = vector.load %arg2[%c0_37, %44, %c0_38, %c0_39, %c0_40] : memref<1x18x2x8x384xbf16, #tpu.memory_space<vmem>>, vector<1x8x1x8x384xbf16>
    %46 = vector.shape_cast %45 : vector<1x8x1x8x384xbf16> to vector<8x8x384xbf16>
    %c8_i32_41 = arith.constant 8 : i32
    %47 = arith.muli %arg1, %c8_i32_41 : i32
    %c2_i32_42 = arith.constant 2 : i32
    %48 = arith.addi %47, %c2_i32_42 : i32
    %c0_43 = arith.constant 0 : index
    %49 = arith.index_cast %48 : i32 to index
    %c1_44 = arith.constant 1 : index
    %c0_45 = arith.constant 0 : index
    %c0_46 = arith.constant 0 : index
    %50 = vector.load %arg2[%c0_43, %49, %c1_44, %c0_45, %c0_46] : memref<1x18x2x8x384xbf16, #tpu.memory_space<vmem>>, vector<1x8x1x8x384xbf16>
    %51 = vector.shape_cast %50 : vector<1x8x1x8x384xbf16> to vector<8x8x384xbf16>
    %52 = vector.shape_cast %46 : vector<8x8x384xbf16> to vector<64x384xbf16>
    %c2 = arith.constant 2 : index
    %c0_47 = arith.constant 0 : index
    %c0_48 = arith.constant 0 : index
    %53 = vector.load %arg3[%c2, %c0_47, %c0_48] : memref<3x384x128xbf16, #tpu.memory_space<vmem>>, vector<1x384x128xbf16>
    %54 = vector.shape_cast %53 : vector<1x384x128xbf16> to vector<384x128xbf16>
    %cst_49 = arith.constant dense<0.000000e+00> : vector<64x128xf32>
    %55 = tpu.matmul %52, %54, %cst_49 {dimension_numbers = #tpu.dot_dimension_numbers<[1], [0], [0], [1], [0, 0, 1, 1], [], []>} : vector<64x384xbf16>, vector<384x128xbf16>, vector<64x128xf32> -> vector<64x128xf32>
    %56 = arith.addf %36, %55 : vector<64x128xf32>
    %57 = vector.shape_cast %51 : vector<8x8x384xbf16> to vector<64x384xbf16>
    %c2_50 = arith.constant 2 : index
    %c0_51 = arith.constant 0 : index
    %c0_52 = arith.constant 0 : index
    %58 = vector.load %arg3[%c2_50, %c0_51, %c0_52] : memref<3x384x128xbf16, #tpu.memory_space<vmem>>, vector<1x384x128xbf16>
    %59 = vector.shape_cast %58 : vector<1x384x128xbf16> to vector<384x128xbf16>
    %cst_53 = arith.constant dense<0.000000e+00> : vector<64x128xf32>
    %60 = tpu.matmul %57, %59, %cst_53 {dimension_numbers = #tpu.dot_dimension_numbers<[1], [0], [0], [1], [0, 0, 1, 1], [], []>} : vector<64x384xbf16>, vector<384x128xbf16>, vector<64x128xf32> -> vector<64x128xf32>
    %61 = arith.addf %41, %60 : vector<64x128xf32>
    %c0_54 = arith.constant 0 : index
    %c0_55 = arith.constant 0 : index
    %62 = vector.load %arg4[%c0_54, %c0_55] : memref<1x128xf32, #tpu.memory_space<vmem>>, vector<1x128xf32>
    %63 = vector.broadcast %62 : vector<1x128xf32> to vector<64x128xf32>
    %64 = arith.addf %56, %63 : vector<64x128xf32>
    %cst_56 = arith.constant 0.000000e+00 : f32
    %65 = vector.broadcast %cst_56 : f32 to vector<64x128xf32>
    %66 = arith.maximumf %64, %65 : vector<64x128xf32>
    %67 = vector.broadcast %62 : vector<1x128xf32> to vector<64x128xf32>
    %68 = arith.addf %61, %67 : vector<64x128xf32>
    %cst_57 = arith.constant 0.000000e+00 : f32
    %69 = vector.broadcast %cst_57 : f32 to vector<64x128xf32>
    %70 = arith.maximumf %68, %69 : vector<64x128xf32>
    %71 = arith.maximumf %66, %70 : vector<64x128xf32>
    %72 = vector.extract_strided_slice %71 {offsets = [0, 0], sizes = [8, 128], strides = [1, 1]} : vector<64x128xf32> to vector<8x128xf32>
    %73 = vector.extract_strided_slice %71 {offsets = [8, 0], sizes = [8, 128], strides = [1, 1]} : vector<64x128xf32> to vector<8x128xf32>
    %74 = arith.maximumf %72, %73 : vector<8x128xf32>
    %75 = arith.truncf %74 : vector<8x128xf32> to vector<8x128xbf16>
    %c0_58 = arith.constant 0 : index
    %c0_59 = arith.constant 0 : index
    %c0_60 = arith.constant 0 : index
    %76 = vector.load %arg5[%c0_58, %c0_59, %c0_60] : memref<1x32x128xbf16, #tpu.memory_space<vmem>>, vector<1x8x128xbf16>
    %77 = vector.shape_cast %76 : vector<1x8x128xbf16> to vector<8x128xbf16>
    %78 = vector.shape_cast %75 : vector<8x128xbf16> to vector<1x8x128xbf16>
    tpu.vector_store %arg5[%c0_58, %c0_59, %c0_60], %78 {strides = array<i32>} : memref<1x32x128xbf16, #tpu.memory_space<vmem>>, vector<1x8x128xbf16>,
    %79 = vector.extract_strided_slice %71 {offsets = [16, 0], sizes = [8, 128], strides = [1, 1]} : vector<64x128xf32> to vector<8x128xf32>
    %80 = vector.extract_strided_slice %71 {offsets = [24, 0], sizes = [8, 128], strides = [1, 1]} : vector<64x128xf32> to vector<8x128xf32>
    %81 = arith.maximumf %79, %80 : vector<8x128xf32>
    %82 = arith.truncf %81 : vector<8x128xf32> to vector<8x128xbf16>
    %c0_61 = arith.constant 0 : index
    %c8 = arith.constant 8 : index
    %c0_62 = arith.constant 0 : index
    %83 = vector.load %arg5[%c0_61, %c8, %c0_62] : memref<1x32x128xbf16, #tpu.memory_space<vmem>>, vector<1x8x128xbf16>
    %84 = vector.shape_cast %83 : vector<1x8x128xbf16> to vector<8x128xbf16>
    %85 = vector.shape_cast %82 : vector<8x128xbf16> to vector<1x8x128xbf16>
    tpu.vector_store %arg5[%c0_61, %c8, %c0_62], %85 {strides = array<i32>} : memref<1x32x128xbf16, #tpu.memory_space<vmem>>, vector<1x8x128xbf16>,
    %86 = vector.extract_strided_slice %71 {offsets = [32, 0], sizes = [8, 128], strides = [1, 1]} : vector<64x128xf32> to vector<8x128xf32>
    %87 = vector.extract_strided_slice %71 {offsets = [40, 0], sizes = [8, 128], strides = [1, 1]} : vector<64x128xf32> to vector<8x128xf32>
    %88 = arith.maximumf %86, %87 : vector<8x128xf32>
    %89 = arith.truncf %88 : vector<8x128xf32> to vector<8x128xbf16>
    %c0_63 = arith.constant 0 : index
    %c16 = arith.constant 16 : index
    %c0_64 = arith.constant 0 : index
    %90 = vector.load %arg5[%c0_63, %c16, %c0_64] : memref<1x32x128xbf16, #tpu.memory_space<vmem>>, vector<1x8x128xbf16>
    %91 = vector.shape_cast %90 : vector<1x8x128xbf16> to vector<8x128xbf16>
    %92 = vector.shape_cast %89 : vector<8x128xbf16> to vector<1x8x128xbf16>
    tpu.vector_store %arg5[%c0_63, %c16, %c0_64], %92 {strides = array<i32>} : memref<1x32x128xbf16, #tpu.memory_space<vmem>>, vector<1x8x128xbf16>,
    %93 = vector.extract_strided_slice %71 {offsets = [48, 0], sizes = [8, 128], strides = [1, 1]} : vector<64x128xf32> to vector<8x128xf32>
    %94 = vector.extract_strided_slice %71 {offsets = [56, 0], sizes = [8, 128], strides = [1, 1]} : vector<64x128xf32> to vector<8x128xf32>
    %95 = arith.maximumf %93, %94 : vector<8x128xf32>
    %96 = arith.truncf %95 : vector<8x128xf32> to vector<8x128xbf16>
    %c0_65 = arith.constant 0 : index
    %c24 = arith.constant 24 : index
    %c0_66 = arith.constant 0 : index
    %97 = vector.load %arg5[%c0_65, %c24, %c0_66] : memref<1x32x128xbf16, #tpu.memory_space<vmem>>, vector<1x8x128xbf16>
    %98 = vector.shape_cast %97 : vector<1x8x128xbf16> to vector<8x128xbf16>
    %99 = vector.shape_cast %96 : vector<8x128xbf16> to vector<1x8x128xbf16>
    tpu.vector_store %arg5[%c0_65, %c24, %c0_66], %99 {strides = array<i32>} : memref<1x32x128xbf16, #tpu.memory_space<vmem>>, vector<1x8x128xbf16>,
    return
  }
  func.func @transform_0(%arg0: i32, %arg1: i32) -> (i32, i32, i32, i32, i32) {
    %c0_i32 = arith.constant 0 : i32
    %c0_i32_0 = arith.constant 0 : i32
    %c0_i32_1 = arith.constant 0 : i32
    %c0_i32_2 = arith.constant 0 : i32
    %c0_i32_3 = arith.constant 0 : i32
    return %arg0, %c0_i32, %c0_i32_0, %c0_i32_1, %c0_i32_2 : i32, i32, i32, i32, i32
  }
  func.func @transform_1(%arg0: i32, %arg1: i32) -> (i32, i32, i32) {
    %c0_i32 = arith.constant 0 : i32
    %c0_i32_0 = arith.constant 0 : i32
    %c0_i32_1 = arith.constant 0 : i32
    %c0_i32_2 = arith.constant 0 : i32
    return %c0_i32, %c0_i32_0, %c0_i32_1 : i32, i32, i32
  }
  func.func @transform_2(%arg0: i32, %arg1: i32) -> (i32, i32) {
    %c0_i32 = arith.constant 0 : i32
    %c0_i32_0 = arith.constant 0 : i32
    %c0_i32_1 = arith.constant 0 : i32
    return %c0_i32, %c0_i32_0 : i32, i32
  }
  func.func @transform_3(%arg0: i32, %arg1: i32) -> (i32, i32, i32) {
    %c0_i32 = arith.constant 0 : i32
    %c0_i32_0 = arith.constant 0 : i32
    return %arg0, %arg1, %c0_i32 : i32, i32, i32
  }
}

module attributes {stable_mosaic.version = 11 : i64} {
  func.func @_linear_kernel(%arg0: i32, %arg1: i32, %arg2: memref<2x2048xbf16, #tpu.memory_space<vmem>>, %arg3: memref<2048x128xbf16, #tpu.memory_space<vmem>>, %arg4: memref<1x128xf32, #tpu.memory_space<vmem>>, %arg5: memref<2x128xbf16, #tpu.memory_space<vmem>>, %arg6: memref<2x128xf32, #tpu.memory_space<vmem>>) attributes {dimension_semantics = [#tpu.dimension_semantics<parallel>, #tpu.dimension_semantics<arbitrary>], iteration_bounds = array<i64: 2, 4>, scalar_prefetch = 0 : i64, scratch_operands = 1 : i64, tpu.core_type = #tpu.core_type<tc>, window_params = [{transform_indices = @transform_0, window_bounds = array<i64: 2, 2048>}, {transform_indices = @transform_1, window_bounds = array<i64: 2048, 128>}, {transform_indices = @transform_2, window_bounds = array<i64: 1, 128>}, {transform_indices = @transform_3, window_bounds = array<i64: 2, 128>}]} {
    %c0_i32 = arith.constant 0 : i32
    %0 = arith.cmpi eq, %arg1, %c0_i32 : i32
    %1 = arith.extui %0 : i1 to i32
    %c0_i32_0 = arith.constant 0 : i32
    %2 = arith.cmpi ne, %1, %c0_i32_0 : i32
    scf.if %2 {
      %cst_9 = arith.constant 0.000000e+00 : f32
      %12 = vector.broadcast %cst_9 : f32 to vector<2x128xf32>
      %c0_10 = arith.constant 0 : index
      %c0_11 = arith.constant 0 : index
      %13 = vector.load %arg6[%c0_10, %c0_11] : memref<2x128xf32, #tpu.memory_space<vmem>>, vector<2x128xf32>
      tpu.vector_store %arg6[%c0_10, %c0_11], %12 {strides = array<i32>} : memref<2x128xf32, #tpu.memory_space<vmem>>, vector<2x128xf32>,
    } else {
    }
    %c0 = arith.constant 0 : index
    %c0_1 = arith.constant 0 : index
    %3 = vector.load %arg6[%c0, %c0_1] : memref<2x128xf32, #tpu.memory_space<vmem>>, vector<2x128xf32>
    %c0_2 = arith.constant 0 : index
    %c0_3 = arith.constant 0 : index
    %4 = vector.load %arg2[%c0_2, %c0_3] : memref<2x2048xbf16, #tpu.memory_space<vmem>>, vector<2x2048xbf16>
    %c0_4 = arith.constant 0 : index
    %c0_5 = arith.constant 0 : index
    %5 = vector.load %arg3[%c0_4, %c0_5] : memref<2048x128xbf16, #tpu.memory_space<vmem>>, vector<2048x128xbf16>
    %cst = arith.constant dense<0.000000e+00> : vector<2x128xf32>
    %6 = tpu.matmul %4, %5, %cst {dimension_numbers = #tpu.dot_dimension_numbers<[1], [0], [0], [1], [0, 0, 1, 1], [], []>} : vector<2x2048xbf16>, vector<2048x128xbf16>, vector<2x128xf32> -> vector<2x128xf32>
    %7 = arith.addf %3, %6 : vector<2x128xf32>
    %c0_6 = arith.constant 0 : index
    %c0_7 = arith.constant 0 : index
    %8 = vector.load %arg6[%c0_6, %c0_7] : memref<2x128xf32, #tpu.memory_space<vmem>>, vector<2x128xf32>
    tpu.vector_store %arg6[%c0_6, %c0_7], %7 {strides = array<i32>} : memref<2x128xf32, #tpu.memory_space<vmem>>, vector<2x128xf32>,
    %c3_i32 = arith.constant 3 : i32
    %9 = arith.cmpi eq, %arg1, %c3_i32 : i32
    %10 = arith.extui %9 : i1 to i32
    %c0_i32_8 = arith.constant 0 : i32
    %11 = arith.cmpi ne, %10, %c0_i32_8 : i32
    scf.if %11 {
      %c0_9 = arith.constant 0 : index
      %c0_10 = arith.constant 0 : index
      %12 = vector.load %arg6[%c0_9, %c0_10] : memref<2x128xf32, #tpu.memory_space<vmem>>, vector<2x128xf32>
      %c0_11 = arith.constant 0 : index
      %c0_12 = arith.constant 0 : index
      %13 = vector.load %arg4[%c0_11, %c0_12] : memref<1x128xf32, #tpu.memory_space<vmem>>, vector<1x128xf32>
      %14 = vector.broadcast %13 : vector<1x128xf32> to vector<2x128xf32>
      %15 = arith.addf %12, %14 : vector<2x128xf32>
      %cst_13 = arith.constant 0.000000e+00 : f32
      %16 = vector.broadcast %cst_13 : f32 to vector<2x128xf32>
      %17 = arith.maximumf %15, %16 : vector<2x128xf32>
      %18 = arith.truncf %17 : vector<2x128xf32> to vector<2x128xbf16>
      %c0_14 = arith.constant 0 : index
      %c0_15 = arith.constant 0 : index
      %19 = vector.load %arg5[%c0_14, %c0_15] : memref<2x128xbf16, #tpu.memory_space<vmem>>, vector<2x128xbf16>
      tpu.vector_store %arg5[%c0_14, %c0_15], %18 {strides = array<i32>} : memref<2x128xbf16, #tpu.memory_space<vmem>>, vector<2x128xbf16>,
    } else {
    }
    return
  }
  func.func @transform_0(%arg0: i32, %arg1: i32) -> (i32, i32) {
    %c0_i32 = arith.constant 0 : i32
    %c0_i32_0 = arith.constant 0 : i32
    return %c0_i32, %arg1 : i32, i32
  }
  func.func @transform_1(%arg0: i32, %arg1: i32) -> (i32, i32) {
    %c0_i32 = arith.constant 0 : i32
    return %arg1, %arg0 : i32, i32
  }
  func.func @transform_2(%arg0: i32, %arg1: i32) -> (i32, i32) {
    %c0_i32 = arith.constant 0 : i32
    %c0_i32_0 = arith.constant 0 : i32
    return %c0_i32, %arg0 : i32, i32
  }
  func.func @transform_3(%arg0: i32, %arg1: i32) -> (i32, i32) {
    %c0_i32 = arith.constant 0 : i32
    %c0_i32_0 = arith.constant 0 : i32
    return %c0_i32, %arg0 : i32, i32
  }
}

module attributes {stable_mosaic.version = 11 : i64} {
  func.func @_linear_kernel(%arg0: i32, %arg1: i32, %arg2: memref<2x256xbf16, #tpu.memory_space<vmem>>, %arg3: memref<256x128xbf16, #tpu.memory_space<vmem>>, %arg4: memref<1x128xf32, #tpu.memory_space<vmem>>, %arg5: memref<2x128xbf16, #tpu.memory_space<vmem>>, %arg6: memref<2x128xf32, #tpu.memory_space<vmem>>) attributes {dimension_semantics = [#tpu.dimension_semantics<parallel>, #tpu.dimension_semantics<arbitrary>], iteration_bounds = array<i64: 2, 1>, scalar_prefetch = 0 : i64, scratch_operands = 1 : i64, tpu.core_type = #tpu.core_type<tc>, window_params = [{transform_indices = @transform_0, window_bounds = array<i64: 2, 256>}, {transform_indices = @transform_1, window_bounds = array<i64: 256, 128>}, {transform_indices = @transform_2, window_bounds = array<i64: 1, 128>}, {transform_indices = @transform_3, window_bounds = array<i64: 2, 128>}]} {
    %c0_i32 = arith.constant 0 : i32
    %0 = arith.cmpi eq, %arg1, %c0_i32 : i32
    %1 = arith.extui %0 : i1 to i32
    %c0_i32_0 = arith.constant 0 : i32
    %2 = arith.cmpi ne, %1, %c0_i32_0 : i32
    scf.if %2 {
      %cst_10 = arith.constant 0.000000e+00 : f32
      %12 = vector.broadcast %cst_10 : f32 to vector<2x128xf32>
      %c0_11 = arith.constant 0 : index
      %c0_12 = arith.constant 0 : index
      %13 = vector.load %arg6[%c0_11, %c0_12] : memref<2x128xf32, #tpu.memory_space<vmem>>, vector<2x128xf32>
      tpu.vector_store %arg6[%c0_11, %c0_12], %12 {strides = array<i32>} : memref<2x128xf32, #tpu.memory_space<vmem>>, vector<2x128xf32>,
    } else {
    }
    %c0 = arith.constant 0 : index
    %c0_1 = arith.constant 0 : index
    %3 = vector.load %arg6[%c0, %c0_1] : memref<2x128xf32, #tpu.memory_space<vmem>>, vector<2x128xf32>
    %c0_2 = arith.constant 0 : index
    %c0_3 = arith.constant 0 : index
    %4 = vector.load %arg2[%c0_2, %c0_3] : memref<2x256xbf16, #tpu.memory_space<vmem>>, vector<2x256xbf16>
    %c0_4 = arith.constant 0 : index
    %c0_5 = arith.constant 0 : index
    %5 = vector.load %arg3[%c0_4, %c0_5] : memref<256x128xbf16, #tpu.memory_space<vmem>>, vector<256x128xbf16>
    %cst = arith.constant dense<0.000000e+00> : vector<2x128xf32>
    %6 = tpu.matmul %4, %5, %cst {dimension_numbers = #tpu.dot_dimension_numbers<[1], [0], [0], [1], [0, 0, 1, 1], [], []>} : vector<2x256xbf16>, vector<256x128xbf16>, vector<2x128xf32> -> vector<2x128xf32>
    %7 = arith.addf %3, %6 : vector<2x128xf32>
    %c0_6 = arith.constant 0 : index
    %c0_7 = arith.constant 0 : index
    %8 = vector.load %arg6[%c0_6, %c0_7] : memref<2x128xf32, #tpu.memory_space<vmem>>, vector<2x128xf32>
    tpu.vector_store %arg6[%c0_6, %c0_7], %7 {strides = array<i32>} : memref<2x128xf32, #tpu.memory_space<vmem>>, vector<2x128xf32>,
    %c0_i32_8 = arith.constant 0 : i32
    %9 = arith.cmpi eq, %arg1, %c0_i32_8 : i32
    %10 = arith.extui %9 : i1 to i32
    %c0_i32_9 = arith.constant 0 : i32
    %11 = arith.cmpi ne, %10, %c0_i32_9 : i32
    scf.if %11 {
      %c0_10 = arith.constant 0 : index
      %c0_11 = arith.constant 0 : index
      %12 = vector.load %arg6[%c0_10, %c0_11] : memref<2x128xf32, #tpu.memory_space<vmem>>, vector<2x128xf32>
      %c0_12 = arith.constant 0 : index
      %c0_13 = arith.constant 0 : index
      %13 = vector.load %arg4[%c0_12, %c0_13] : memref<1x128xf32, #tpu.memory_space<vmem>>, vector<1x128xf32>
      %14 = vector.broadcast %13 : vector<1x128xf32> to vector<2x128xf32>
      %15 = arith.addf %12, %14 : vector<2x128xf32>
      %cst_14 = arith.constant 0.000000e+00 : f32
      %16 = vector.broadcast %cst_14 : f32 to vector<2x128xf32>
      %17 = arith.maximumf %15, %16 : vector<2x128xf32>
      %18 = arith.truncf %17 : vector<2x128xf32> to vector<2x128xbf16>
      %c0_15 = arith.constant 0 : index
      %c0_16 = arith.constant 0 : index
      %19 = vector.load %arg5[%c0_15, %c0_16] : memref<2x128xbf16, #tpu.memory_space<vmem>>, vector<2x128xbf16>
      tpu.vector_store %arg5[%c0_15, %c0_16], %18 {strides = array<i32>} : memref<2x128xbf16, #tpu.memory_space<vmem>>, vector<2x128xbf16>,
    } else {
    }
    return
  }
  func.func @transform_0(%arg0: i32, %arg1: i32) -> (i32, i32) {
    %c0_i32 = arith.constant 0 : i32
    %c0_i32_0 = arith.constant 0 : i32
    return %c0_i32, %arg1 : i32, i32
  }
  func.func @transform_1(%arg0: i32, %arg1: i32) -> (i32, i32) {
    %c0_i32 = arith.constant 0 : i32
    return %arg1, %arg0 : i32, i32
  }
  func.func @transform_2(%arg0: i32, %arg1: i32) -> (i32, i32) {
    %c0_i32 = arith.constant 0 : i32
    %c0_i32_0 = arith.constant 0 : i32
    return %c0_i32, %arg0 : i32, i32
  }
  func.func @transform_3(%arg0: i32, %arg1: i32) -> (i32, i32) {
    %c0_i32 = arith.constant 0 : i32
    %c0_i32_0 = arith.constant 0 : i32
    return %c0_i32, %arg0 : i32, i32
  }
}

module attributes {stable_mosaic.version = 11 : i64} {
  func.func @_linear_kernel(%arg0: i32, %arg1: i32, %arg2: memref<2x256xbf16, #tpu.memory_space<vmem>>, %arg3: memref<256x10xbf16, #tpu.memory_space<vmem>>, %arg4: memref<1x10xf32, #tpu.memory_space<vmem>>, %arg5: memref<2x10xf32, #tpu.memory_space<vmem>>, %arg6: memref<2x10xf32, #tpu.memory_space<vmem>>) attributes {dimension_semantics = [#tpu.dimension_semantics<parallel>, #tpu.dimension_semantics<arbitrary>], iteration_bounds = array<i64: 1, 1>, scalar_prefetch = 0 : i64, scratch_operands = 1 : i64, tpu.core_type = #tpu.core_type<tc>, window_params = [{transform_indices = @transform_0, window_bounds = array<i64: 2, 256>}, {transform_indices = @transform_1, window_bounds = array<i64: 256, 10>}, {transform_indices = @transform_2, window_bounds = array<i64: 1, 10>}, {transform_indices = @transform_3, window_bounds = array<i64: 2, 10>}]} {
    %c0_i32 = arith.constant 0 : i32
    %0 = arith.cmpi eq, %arg1, %c0_i32 : i32
    %1 = arith.extui %0 : i1 to i32
    %c0_i32_0 = arith.constant 0 : i32
    %2 = arith.cmpi ne, %1, %c0_i32_0 : i32
    scf.if %2 {
      %cst_10 = arith.constant 0.000000e+00 : f32
      %12 = vector.broadcast %cst_10 : f32 to vector<2x10xf32>
      %c0_11 = arith.constant 0 : index
      %c0_12 = arith.constant 0 : index
      %13 = vector.load %arg6[%c0_11, %c0_12] : memref<2x10xf32, #tpu.memory_space<vmem>>, vector<2x10xf32>
      tpu.vector_store %arg6[%c0_11, %c0_12], %12 {strides = array<i32>} : memref<2x10xf32, #tpu.memory_space<vmem>>, vector<2x10xf32>,
    } else {
    }
    %c0 = arith.constant 0 : index
    %c0_1 = arith.constant 0 : index
    %3 = vector.load %arg6[%c0, %c0_1] : memref<2x10xf32, #tpu.memory_space<vmem>>, vector<2x10xf32>
    %c0_2 = arith.constant 0 : index
    %c0_3 = arith.constant 0 : index
    %4 = vector.load %arg2[%c0_2, %c0_3] : memref<2x256xbf16, #tpu.memory_space<vmem>>, vector<2x256xbf16>
    %c0_4 = arith.constant 0 : index
    %c0_5 = arith.constant 0 : index
    %5 = vector.load %arg3[%c0_4, %c0_5] : memref<256x10xbf16, #tpu.memory_space<vmem>>, vector<256x10xbf16>
    %cst = arith.constant dense<0.000000e+00> : vector<2x10xf32>
    %6 = tpu.matmul %4, %5, %cst {dimension_numbers = #tpu.dot_dimension_numbers<[1], [0], [0], [1], [0, 0, 1, 1], [], []>} : vector<2x256xbf16>, vector<256x10xbf16>, vector<2x10xf32> -> vector<2x10xf32>
    %7 = arith.addf %3, %6 : vector<2x10xf32>
    %c0_6 = arith.constant 0 : index
    %c0_7 = arith.constant 0 : index
    %8 = vector.load %arg6[%c0_6, %c0_7] : memref<2x10xf32, #tpu.memory_space<vmem>>, vector<2x10xf32>
    tpu.vector_store %arg6[%c0_6, %c0_7], %7 {strides = array<i32>} : memref<2x10xf32, #tpu.memory_space<vmem>>, vector<2x10xf32>,
    %c0_i32_8 = arith.constant 0 : i32
    %9 = arith.cmpi eq, %arg1, %c0_i32_8 : i32
    %10 = arith.extui %9 : i1 to i32
    %c0_i32_9 = arith.constant 0 : i32
    %11 = arith.cmpi ne, %10, %c0_i32_9 : i32
    scf.if %11 {
      %c0_10 = arith.constant 0 : index
      %c0_11 = arith.constant 0 : index
      %12 = vector.load %arg6[%c0_10, %c0_11] : memref<2x10xf32, #tpu.memory_space<vmem>>, vector<2x10xf32>
      %c0_12 = arith.constant 0 : index
      %c0_13 = arith.constant 0 : index
      %13 = vector.load %arg4[%c0_12, %c0_13] : memref<1x10xf32, #tpu.memory_space<vmem>>, vector<1x10xf32>
      %14 = vector.broadcast %13 : vector<1x10xf32> to vector<2x10xf32>
      %15 = arith.addf %12, %14 : vector<2x10xf32>
      %c0_14 = arith.constant 0 : index
      %c0_15 = arith.constant 0 : index
      %16 = vector.load %arg5[%c0_14, %c0_15] : memref<2x10xf32, #tpu.memory_space<vmem>>, vector<2x10xf32>
      tpu.vector_store %arg5[%c0_14, %c0_15], %15 {strides = array<i32>} : memref<2x10xf32, #tpu.memory_space<vmem>>, vector<2x10xf32>,
    } else {
    }
    return
  }
  func.func @transform_0(%arg0: i32, %arg1: i32) -> (i32, i32) {
    %c0_i32 = arith.constant 0 : i32
    %c0_i32_0 = arith.constant 0 : i32
    return %c0_i32, %arg1 : i32, i32
  }
  func.func @transform_1(%arg0: i32, %arg1: i32) -> (i32, i32) {
    %c0_i32 = arith.constant 0 : i32
    return %arg1, %arg0 : i32, i32
  }
  func.func @transform_2(%arg0: i32, %arg1: i32) -> (i32, i32) {
    %c0_i32 = arith.constant 0 : i32
    %c0_i32_0 = arith.constant 0 : i32
    return %c0_i32, %arg0 : i32, i32
  }
  func.func @transform_3(%arg0: i32, %arg1: i32) -> (i32, i32) {
    %c0_i32 = arith.constant 0 : i32
    %c0_i32_0 = arith.constant 0 : i32
    return %c0_i32, %arg0 : i32, i32
  }
}

</mosaic_0001>

<llo_original>
// kernel: apricot_cnn1_forward.7
$region0: #{apricot_cnn1_forward.7}
  #allocation0 [shape = 'u32[]', space=smem, size = 0x4, offset = 0x4, fixed_abs, tag = 'smem constant byte address 0x4 - core index']
  #allocation1 [shape = 'u32[144,128]{1,0:T(1,128)}', space=vmem, size = 0x12000, scoped, tag = 'internal scratch']
  %s0 = inlined_call_operand.vmem [shape: bf16[2,32,32,27], index: 0, kind: input, shape index: {}]
  %s1 = inlined_call_operand.vmem [shape: bf16[1,27,64], index: 1, kind: input, shape index: {}]
  %s2 = inlined_call_operand.vmem [shape: f32[1,64], index: 2, kind: input, shape index: {}]
  %s3 = inlined_call_operand.vmem [shape: bf16[2,1024,64], index: 3, kind: output, shape index: {}]
  %s4 = sld [smem:[#allocation0]]
  $region45: #{apricot_cnn1_forward.7} parent=0
    _
  %s6 = ssub.s32 1, %s4
  %s7 = scalar_select 0, %s6, %s4
  loop: start=0, step=1, limit=10
  $region2: #{apricot_cnn1_forward.7} parent=0 // loop_pre_header
    _
  $region3: #{apricot_cnn1_forward.7} parent=0 // loop_header
    %s9 = sphi 0, %s13
    %p10 = scmp.ge.s32.totalorder %s9, 10
    %s16 = sphi 0, %s28
    %s17 = sphi 0, %s24
    %s18 = sphi 0, %s16
    %s19 = sphi 0, %s17
    %s20 = sphi 0, %s18
    %s21 = sphi 0, %s19
    %s31 = sphi 0, %s33
    %s34 = sphi 0, %s31
    %s35 = sphi 0, %s34
    %s51 = sphi 0, %s35
    %s55 = sphi 0, %s55
    %s57 = sphi 0, %s55
    %s58 = sphi 0, %s57
    %s72 = sphi 0, %s58
    %s76 = sphi 0, %s76
    %s78 = sphi 0, %s76
    %s79 = sphi 0, %s78
    %s93 = sphi 0, %s79
    %s101 = sphi 0, %s103
    %s104 = sphi 0, %s101
    %s105 = sphi 0, %s104
    %s121 = sphi 0, %s105
  $region4: #{apricot_cnn1_forward.7} parent=0 // loop_header_branch
    %12 = sbr.rel (%p10) target = $region8
  $region5: #{apricot_cnn1_forward.7} parent=0 // loop_body
    %s14 = ssub.s32 %s9, 1
    %s15 = ssub.s32 %s9, 2
    %s22 = sadd.s32 1, %s17
    %p23 = scmp.ge.s32.totalorder %s22, 4
    %s24 = scalar_select %p23, 0, %s22
    %s25 = sadd.s32 1, %s16
    %s26 = scalar_select %p23, %s25, %s16
    %p27 = scmp.ge.s32.totalorder %s26, 2
    %s28 = scalar_select %p27, 0, %s26
    %s29 = ssub.s32 %s16, %s28
    %p30 = scmp.eq.s32.totalorder %s29, 0
    %s32 = sadd.s32 %s31, 1
    %s33 = scalar_select %p30, %s31, %s32
    %p36 = pneg %p30
    %p37 = scmp.eq.s32.totalorder %s9, 7
    %p38 = por %p36, %p37
    %p39 = scmp.ne.s32.totalorder %s31, %s34
    %p40 = scmp.eq.s32.totalorder %s9, 0
    %p41 = por %p39, %p40
    %p42 = scmp.ne.s32.totalorder %s31, %s34
    %p43 = scmp.eq.s32.totalorder %s14, 7
    %p44 = por %p42, %p43
    %p45 = scmp.ne.s32.totalorder %s34, %s35
    %p46 = scmp.eq.s32.totalorder %s14, 0
    %p47 = por %p45, %p46
    %p48 = scmp.ne.s32.totalorder %s34, %s35
    %p49 = scmp.eq.s32.totalorder %s15, 7
    %p50 = por %p48, %p49
    %p52 = scmp.ne.s32.totalorder %s35, %s51
    %p53 = scmp.eq.s32.totalorder %s15, 0
    %p54 = por %p52, %p53
    %s56 = sadd.s32 %s55, 1
    %p59 = scmp.eq.s32.totalorder %s9, 7
    %p60 = scmp.ne.s32.totalorder %s55, %s57
    %p61 = scmp.eq.s32.totalorder %s9, 0
    %p62 = por %p60, %p61
    %p63 = scmp.ne.s32.totalorder %s55, %s57
    %p64 = scmp.eq.s32.totalorder %s14, 7
    %p65 = por %p63, %p64
    %p66 = scmp.ne.s32.totalorder %s57, %s58
    %p67 = scmp.eq.s32.totalorder %s14, 0
    %p68 = por %p66, %p67
    %p69 = scmp.ne.s32.totalorder %s57, %s58
    %p70 = scmp.eq.s32.totalorder %s15, 7
    %p71 = por %p69, %p70
    %p73 = scmp.ne.s32.totalorder %s58, %s72
    %p74 = scmp.eq.s32.totalorder %s15, 0
    %p75 = por %p73, %p74
    %s77 = sadd.s32 %s76, 1
    %p80 = scmp.eq.s32.totalorder %s9, 7
    %p81 = scmp.ne.s32.totalorder %s76, %s78
    %p82 = scmp.eq.s32.totalorder %s9, 0
    %p83 = por %p81, %p82
    %p84 = scmp.ne.s32.totalorder %s76, %s78
    %p85 = scmp.eq.s32.totalorder %s14, 7
    %p86 = por %p84, %p85
    %p87 = scmp.ne.s32.totalorder %s78, %s79
    %p88 = scmp.eq.s32.totalorder %s14, 0
    %p89 = por %p87, %p88
    %p90 = scmp.ne.s32.totalorder %s78, %s79
    %p91 = scmp.eq.s32.totalorder %s15, 7
    %p92 = por %p90, %p91
    %p94 = scmp.ne.s32.totalorder %s79, %s93
    %p95 = scmp.eq.s32.totalorder %s15, 0
    %p96 = por %p94, %p95
    %s97 = ssub.s32 %s16, %s28
    %s98 = ssub.s32 %s17, %s24
    %s99 = sor.u32 %s97, %s98
    %p100 = scmp.eq.s32.totalorder %s99, 0
    %s102 = sadd.s32 %s101, 1
    %s103 = scalar_select %p100, %s101, %s102
    %p106 = pneg %p100
    %p107 = scmp.eq.s32.totalorder %s9, 7
    %p108 = por %p106, %p107
    %p109 = scmp.ne.s32.totalorder %s101, %s104
    %p110 = scmp.eq.s32.totalorder %s9, 0
    %p111 = por %p109, %p110
    %p112 = scmp.ne.s32.totalorder %s101, %s104
    %p113 = scmp.eq.s32.totalorder %s14, 7
    %p114 = por %p112, %p113
    %p115 = scmp.ne.s32.totalorder %s104, %s105
    %p116 = scmp.eq.s32.totalorder %s14, 0
    %p117 = por %p115, %p116
    %p118 = scmp.ne.s32.totalorder %s104, %s105
    %p119 = scmp.eq.s32.totalorder %s15, 7
    %p120 = por %p118, %p119
    %p122 = scmp.ne.s32.totalorder %s105, %s121
    %p123 = scmp.eq.s32.totalorder %s15, 0
    %p124 = por %p122, %p123
    %p125 = scmp.le.s32.totalorder 1, %s9
    %p126 = scmp.lt.s32.totalorder %s9, 9
    %p127 = pnand %p125, %p126
    %p128 = pneg %p127
    // Predicated region
    $region9: #{apricot_cnn1_forward.7} parent=5 // pred_check
      _
    $region10: #{apricot_cnn1_forward.7} parent=5 // pred_check_branch
      %130 = sbr.rel (%p127) target = $region12
    $region11: #{apricot_cnn1_forward.7} parent=5 // pred_region
      %s131 = ssub.s32 %s9, 1
      // Predicated region
      $region13: #{apricot_cnn1_forward.7} parent=11 // pred_check
        %p132 = pneg %p68
      $region14: #{apricot_cnn1_forward.7} parent=11 // pred_check_branch
        %134 = sbr.rel (%p132) target = $region16
      $region15: #{apricot_cnn1_forward.7} parent=11 // pred_region
        _
      $region16: #{apricot_cnn1_forward.7} parent=11 // pred_fallthru
        _
      // Predicated region
      $region17: #{apricot_cnn1_forward.7} parent=11 // pred_check
        %p135 = pneg %p89
      $region18: #{apricot_cnn1_forward.7} parent=11 // pred_check_branch
        %137 = sbr.rel (%p135) target = $region20
      $region19: #{apricot_cnn1_forward.7} parent=11 // pred_region
        _
      $region20: #{apricot_cnn1_forward.7} parent=11 // pred_fallthru
        _
    $region12: #{apricot_cnn1_forward.7} parent=5 // pred_fallthru
      _
    %p138 = scmp.lt.s32.totalorder %s9, 8
    // Predicated region
    $region21: #{apricot_cnn1_forward.7} parent=5 // pred_check
      %p139 = pneg %p138
    $region22: #{apricot_cnn1_forward.7} parent=5 // pred_check_branch
      %141 = sbr.rel (%p139) target = $region24
    $region23: #{apricot_cnn1_forward.7} parent=5 // pred_region
      // Predicated region
      $region25: #{apricot_cnn1_forward.7} parent=23 // pred_check
        %p142 = pneg %p41
      $region26: #{apricot_cnn1_forward.7} parent=23 // pred_check_branch
        %144 = sbr.rel (%p142) target = $region28
      $region27: #{apricot_cnn1_forward.7} parent=23 // pred_region
        %p145 = scmp.lt.s32.totalorder %s16, 1
        %s146 = scalar_select %p145, %s16, 1
        %s147 = smul.addr %s146, 128
        %s148 = smul.addr %s147, 4
        %s149 = scalar_lea.vmem %s0, %s148
      $region28: #{apricot_cnn1_forward.7} parent=23 // pred_fallthru
        _
    $region24: #{apricot_cnn1_forward.7} parent=5 // pred_fallthru
      _
    %p150 = scmp.le.s32.totalorder 1, %s9
    %p151 = scmp.lt.s32.totalorder %s9, 9
    %p152 = pnand %p150, %p151
    %p153 = pneg %p152
    // Predicated region
    $region29: #{apricot_cnn1_forward.7} parent=5 // pred_check
      _
    $region30: #{apricot_cnn1_forward.7} parent=5 // pred_check_branch
      %155 = sbr.rel (%p152) target = $region32
    $region31: #{apricot_cnn1_forward.7} parent=5 // pred_region
      %s156 = ssub.s32 %s9, 1
      %p157 = scmp.lt.s32.totalorder %s18, 1
      %s158 = scalar_select %p157, %s18, 1
      %s159 = smul.addr %s158, 128
      %s160 = smul.addr %s159, 4
      %s161 = scalar_lea.vmem %s0, %s160
      %p162 = pneg %p47
      %p163 = pneg %p44
      %p164 = pneg %p68
      %p165 = pneg %p65
      %p166 = pneg %p89
      %p167 = pneg %p86
      %p168 = pneg %p117
      %p169 = pneg %p114
      %s170 = smul.u32 32, %s19
      %p171 = scmp.lt.s32.totalorder %s18, 1
      %s172 = scalar_select %p171, %s18, 1
      %p173 = scmp.lt.s32.totalorder %s170, 127
      %s174 = scalar_select %p173, %s170, 127
      %s175 = smul.addr %s172, 128
      %s176 = sadd.s32 %s174, %s175
      %s177 = smul.addr %s176, 4
      %s178 = scalar_lea.vmem %s3, %s177
      %p179 = scmp.lt.s32.totalorder %s18, 1
      %s180 = scalar_select %p179, %s18, 1
      %s181 = smul.addr %s180, 128
      %s182 = smul.addr %s181, 4
      %s183 = scalar_lea.vmem %s0, %s182
      %s184 = smul.u32 32, %s19
      %p185 = scmp.lt.s32.totalorder %s18, 1
      %s186 = scalar_select %p185, %s18, 1
      %p187 = scmp.lt.s32.totalorder %s184, 127
      %s188 = scalar_select %p187, %s184, 127
      %s189 = smul.addr %s186, 128
      %s190 = sadd.s32 %s188, %s189
      %s191 = smul.addr %s190, 4
      %s192 = scalar_lea.vmem %s3, %s191
      %s193 = smul.u32 32, %s19
      %s195 = smul.u32 %s19, 8
      %s196 = smul.u32 %s195, 4
      %s197 = smul.addr %s196, 4
      %s198 = scalar_lea.vmem %s183, %s197
      %v199 = vld [vmem:[%s198] sm:$0xf]
      %v200 = vld [vmem:[%s198 + $0x4] sm:$0xf]
      %v201 = vld [vmem:[%s198 + $0x8] sm:$0xf]
      %v202 = vld [vmem:[%s198 + $0xc] sm:$0xf]
      %v203 = vld [vmem:[%s198 + $0x10] sm:$0xf]
      %v204 = vld [vmem:[%s198 + $0x14] sm:$0xf]
      %v205 = vld [vmem:[%s198 + $0x18] sm:$0xf]
      %v206 = vld [vmem:[%s198 + $0x1c] sm:$0xf]
      %v207 = vld [vmem:[%s198 + $0x20] sm:$0xf]
      %v208 = vld [vmem:[%s198 + $0x24] sm:$0xf]
      %v209 = vld [vmem:[%s198 + $0x28] sm:$0xf]
      %v210 = vld [vmem:[%s198 + $0x2c] sm:$0xf]
      %v211 = vld [vmem:[%s198 + $0x30] sm:$0xf]
      %v212 = vld [vmem:[%s198 + $0x34] sm:$0xf]
      %v213 = vld [vmem:[%s198 + $0x38] sm:$0xf]
      %v214 = vld [vmem:[%s198 + $0x3c] sm:$0xf]
      %v215 = vld [vmem:[%s198 + $0x40] sm:$0xf]
      %v216 = vld [vmem:[%s198 + $0x44] sm:$0xf]
      %v217 = vld [vmem:[%s198 + $0x48] sm:$0xf]
      %v218 = vld [vmem:[%s198 + $0x4c] sm:$0xf]
      %v219 = vld [vmem:[%s198 + $0x50] sm:$0xf]
      %v220 = vld [vmem:[%s198 + $0x54] sm:$0xf]
      %v221 = vld [vmem:[%s198 + $0x58] sm:$0xf]
      %v222 = vld [vmem:[%s198 + $0x5c] sm:$0xf]
      %v223 = vld [vmem:[%s198 + $0x60] sm:$0xf]
      %v224 = vld [vmem:[%s198 + $0x64] sm:$0xf]
      %v225 = vld [vmem:[%s198 + $0x68] sm:$0xf]
      %v226 = vld [vmem:[%s198 + $0x6c] sm:$0xf]
      %v227 = vld [vmem:[%s198 + $0x70] sm:$0xf]
      %v228 = vld [vmem:[%s198 + $0x74] sm:$0xf]
      %v229 = vld [vmem:[%s198 + $0x78] sm:$0xf]
      %v230 = vld [vmem:[%s198 + $0x7c] sm:$0xf]
      %v231 = vld [vmem:[%s1] sm:$0xf]
      %v232 = vld [vmem:[%s1 + $0x4] sm:$0xf]
      %v233 = vld [vmem:[%s1 + $0x8] sm:$0xf]
      %v234 = vld [vmem:[%s1 + $0xc] sm:$0x3]
      %v235 = vld [vmem:[%s2] sm:$0x1]
      %v237 = vlaneseq
      %v238 = vshrl.u32 %v237, 7
      %v239 = vsub.s32 0, %v238
      %v240 = vrot.slane %v235, %v239
      %v274 = vunpack.c.l.b16 %v199
      %v275 = vunpack.c.l.b16 %v200
      %v276 = vunpack.c.l.b16 %v201
      %v277 = vunpack.c.l.b16 %v202
      %v278 = vunpack.c.l.b16 %v203
      %v279 = vunpack.c.l.b16 %v204
      %v280 = vunpack.c.l.b16 %v205
      %v281 = vunpack.c.l.b16 %v206
      %v282 = vunpack.c.l.b16 %v207
      %v283 = vunpack.c.l.b16 %v208
      %v284 = vunpack.c.l.b16 %v209
      %v285 = vunpack.c.l.b16 %v210
      %v286 = vunpack.c.l.b16 %v211
      %v287 = vunpack.c.l.b16 %v212
      %v288 = vunpack.c.l.b16 %v213
      %v289 = vunpack.c.l.b16 %v214
      %v290 = vunpack.c.l.b16 %v215
      %v291 = vunpack.c.l.b16 %v216
      %v292 = vunpack.c.l.b16 %v217
      %v293 = vunpack.c.l.b16 %v218
      %v294 = vunpack.c.l.b16 %v219
      %v295 = vunpack.c.l.b16 %v220
      %v296 = vunpack.c.l.b16 %v221
      %v297 = vunpack.c.l.b16 %v222
      %v298 = vunpack.c.l.b16 %v223
      %v299 = vunpack.c.l.b16 %v224
      %v300 = vunpack.c.l.b16 %v225
      %v301 = vunpack.c.l.b16 %v226
      %v302 = vunpack.c.l.b16 %v227
      %v303 = vunpack.c.l.b16 %v228
      %v304 = vunpack.c.l.b16 %v229
      %v305 = vunpack.c.l.b16 %v230
      %v306 = vpack.c.b16 %v275, %v274
      %v307 = vpack.c.b16 %v277, %v276
      %v308 = vpack.c.b16 %v279, %v278
      %v309 = vpack.c.b16 %v281, %v280
      %v310 = vpack.c.b16 %v283, %v282
      %v311 = vpack.c.b16 %v285, %v284
      %v312 = vpack.c.b16 %v287, %v286
      %v313 = vpack.c.b16 %v289, %v288
      %v314 = vpack.c.b16 %v291, %v290
      %v315 = vpack.c.b16 %v293, %v292
      %v316 = vpack.c.b16 %v295, %v294
      %v317 = vpack.c.b16 %v297, %v296
      %v318 = vpack.c.b16 %v299, %v298
      %v319 = vpack.c.b16 %v301, %v300
      %v320 = vpack.c.b16 %v303, %v302
      %v321 = vpack.c.b16 %v305, %v304
      %v326 = vunpack.c.l.b16 %v231
      %v327 = vunpack.c.l.b16 %v232
      %v328 = vunpack.c.l.b16 %v233
      %v329 = vunpack.c.l.b16 %v234
      %v330 = vpack.c.b16 %v327, %v326
      %v331 = vpack.c.b16 %v329, %v328
      %vm333 = vcmask 220160
      %v335 = vsel %vm333, %v306, 0
      %v338 = vsel %vm333, %v307, 0
      %v341 = vsel %vm333, %v308, 0
      %v344 = vsel %vm333, %v309, 0
      %v347 = vsel %vm333, %v310, 0
      %v350 = vsel %vm333, %v311, 0
      %v353 = vsel %vm333, %v312, 0
      %v356 = vsel %vm333, %v313, 0
      %v359 = vsel %vm333, %v314, 0
      %v362 = vsel %vm333, %v315, 0
      %v365 = vsel %vm333, %v316, 0
      %v368 = vsel %vm333, %v317, 0
      %v371 = vsel %vm333, %v318, 0
      %v374 = vsel %vm333, %v319, 0
      %v377 = vsel %vm333, %v320, 0
      %v380 = vsel %vm333, %v321, 0
      %vm382 = vcmask 1044480
      %vm383 = vcmask 1045504
      %v384 = vsel %vm382, 4294967295, 65535
      %v385 = vsel %vm383, %v384, 0
      %v387 = vand.u32 %v331, %v385
      %389 = vmatprep.subr.bf16.mxu0 0
      %390 = vmatpush1.bf16.msra.mxu0 %v330
      %391 = vmatprep.subr.bf16.mxu0 0
      %392 = vmatpush1.bf16.msra.mxu0 %v387
      %393 = vmatprep.subr.bf16.mxu0 0
      %394 = vmatpush1.bf16.msra.mxu0 0
      %395 = vmatprep.subr.bf16.mxu0 0
      %396 = vmatpush1.bf16.msra.mxu0 0
      %397 = vmatprep.subr.bf16.mxu0 0
      %398 = vmatpush1.bf16.msra.mxu0 0
      %399 = vmatprep.subr.bf16.mxu0 0
      %400 = vmatpush1.bf16.msra.mxu0 0
      %401 = vmatprep.subr.bf16.mxu0 0
      %402 = vmatpush1.bf16.msra.mxu0 0
      %403 = vmatprep.subr.bf16.mxu0 0
      %404 = vmatpush1.bf16.msra.mxu0 0
      %405 = vmatprep.subr.bf16.mxu0 0
      %406 = vmatpush1.bf16.msra.mxu0 0
      %407 = vmatprep.subr.bf16.mxu0 0
      %408 = vmatpush1.bf16.msra.mxu0 0
      %409 = vmatprep.subr.bf16.mxu0 0
      %410 = vmatpush1.bf16.msra.mxu0 0
      %411 = vmatprep.subr.bf16.mxu0 0
      %412 = vmatpush1.bf16.msra.mxu0 0
      %413 = vmatprep.subr.bf16.mxu0 0
      %414 = vmatpush1.bf16.msra.mxu0 0
      %415 = vmatprep.subr.bf16.mxu0 0
      %416 = vmatpush1.bf16.msra.mxu0 0
      %417 = vmatprep.subr.bf16.mxu0 0
      %418 = vmatpush1.bf16.msra.mxu0 0
      %419 = vmatprep.subr.bf16.mxu0 0
      %420 = vmatpush1.bf16.msra.mxu0 0
      %421 = vmatprep.mubr.bf16.mxu0 0
      %422 = vmatmul.mubr.bf16.gmra.mrb[0].mxu0 %v335
      %v423 = vpop.f32.mrb[0].mxu0
      %v424 = vadd.f32 %v240, %v423
      %v425 = vpop.f32.mrb[0].mxu0
      %v426 = vpop.f32.mrb[0].mxu0
      %v427 = vadd.f32 %v240, %v426
      %v428 = vpop.f32.mrb[0].mxu0
      %429 = vmatprep.mubr.bf16.mxu0 0
      %430 = vmatmul.mubr.bf16.gmra.mrb[0].mxu0 %v338
      %v431 = vpop.f32.mrb[0].mxu0
      %v432 = vadd.f32 %v240, %v431
      %v433 = vpop.f32.mrb[0].mxu0
      %v434 = vpop.f32.mrb[0].mxu0
      %v435 = vadd.f32 %v240, %v434
      %v436 = vpop.f32.mrb[0].mxu0
      %437 = vmatprep.mubr.bf16.mxu0 0
      %438 = vmatmul.mubr.bf16.gmra.mrb[0].mxu0 %v341
      %v439 = vpop.f32.mrb[0].mxu0
      %v440 = vadd.f32 %v240, %v439
      %v441 = vpop.f32.mrb[0].mxu0
      %v442 = vpop.f32.mrb[0].mxu0
      %v443 = vadd.f32 %v240, %v442
      %v444 = vpop.f32.mrb[0].mxu0
      %445 = vmatprep.mubr.bf16.mxu0 0
      %446 = vmatmul.mubr.bf16.gmra.mrb[0].mxu0 %v344
      %v447 = vpop.f32.mrb[0].mxu0
      %v448 = vadd.f32 %v240, %v447
      %v449 = vpop.f32.mrb[0].mxu0
      %v450 = vpop.f32.mrb[0].mxu0
      %v451 = vadd.f32 %v240, %v450
      %v452 = vpop.f32.mrb[0].mxu0
      %453 = vmatprep.mubr.bf16.mxu0 0
      %454 = vmatmul.mubr.bf16.gmra.mrb[0].mxu0 %v347
      %v455 = vpop.f32.mrb[0].mxu0
      %v456 = vadd.f32 %v240, %v455
      %v457 = vpop.f32.mrb[0].mxu0
      %v458 = vpop.f32.mrb[0].mxu0
      %v459 = vadd.f32 %v240, %v458
      %v460 = vpop.f32.mrb[0].mxu0
      %461 = vmatprep.mubr.bf16.mxu0 0
      %462 = vmatmul.mubr.bf16.gmra.mrb[0].mxu0 %v350
      %v463 = vpop.f32.mrb[0].mxu0
      %v464 = vadd.f32 %v240, %v463
      %v465 = vpop.f32.mrb[0].mxu0
      %v466 = vpop.f32.mrb[0].mxu0
      %v467 = vadd.f32 %v240, %v466
      %v468 = vpop.f32.mrb[0].mxu0
      %469 = vmatprep.mubr.bf16.mxu0 0
      %470 = vmatmul.mubr.bf16.gmra.mrb[0].mxu0 %v353
      %v471 = vpop.f32.mrb[0].mxu0
      %v472 = vadd.f32 %v240, %v471
      %v473 = vpop.f32.mrb[0].mxu0
      %v474 = vpop.f32.mrb[0].mxu0
      %v475 = vadd.f32 %v240, %v474
      %v476 = vpop.f32.mrb[0].mxu0
      %477 = vmatprep.mubr.bf16.mxu0 0
      %478 = vmatmul.mubr.bf16.gmra.mrb[0].mxu0 %v356
      %v479 = vpop.f32.mrb[0].mxu0
      %v480 = vadd.f32 %v240, %v479
      %v481 = vpop.f32.mrb[0].mxu0
      %v482 = vpop.f32.mrb[0].mxu0
      %v483 = vadd.f32 %v240, %v482
      %v484 = vpop.f32.mrb[0].mxu0
      %485 = vmatprep.mubr.bf16.mxu0 0
      %486 = vmatmul.mubr.bf16.gmra.mrb[0].mxu0 %v359
      %v487 = vpop.f32.mrb[0].mxu0
      %v488 = vadd.f32 %v240, %v487
      %v489 = vpop.f32.mrb[0].mxu0
      %v490 = vpop.f32.mrb[0].mxu0
      %v491 = vadd.f32 %v240, %v490
      %v492 = vpop.f32.mrb[0].mxu0
      %493 = vmatprep.mubr.bf16.mxu0 0
      %494 = vmatmul.mubr.bf16.gmra.mrb[0].mxu0 %v362
      %v495 = vpop.f32.mrb[0].mxu0
      %v496 = vadd.f32 %v240, %v495
      %v497 = vpop.f32.mrb[0].mxu0
      %v498 = vpop.f32.mrb[0].mxu0
      %v499 = vadd.f32 %v240, %v498
      %v500 = vpop.f32.mrb[0].mxu0
      %501 = vmatprep.mubr.bf16.mxu0 0
      %502 = vmatmul.mubr.bf16.gmra.mrb[0].mxu0 %v365
      %v503 = vpop.f32.mrb[0].mxu0
      %v504 = vadd.f32 %v240, %v503
      %v505 = vpop.f32.mrb[0].mxu0
      %v506 = vpop.f32.mrb[0].mxu0
      %v507 = vadd.f32 %v240, %v506
      %v508 = vpop.f32.mrb[0].mxu0
      %509 = vmatprep.mubr.bf16.mxu0 0
      %510 = vmatmul.mubr.bf16.gmra.mrb[0].mxu0 %v368
      %v511 = vpop.f32.mrb[0].mxu0
      %v512 = vadd.f32 %v240, %v511
      %v513 = vpop.f32.mrb[0].mxu0
      %v514 = vpop.f32.mrb[0].mxu0
      %v515 = vadd.f32 %v240, %v514
      %v516 = vpop.f32.mrb[0].mxu0
      %517 = vmatprep.mubr.bf16.mxu0 0
      %518 = vmatmul.mubr.bf16.gmra.mrb[0].mxu0 %v371
      %v519 = vpop.f32.mrb[0].mxu0
      %v520 = vadd.f32 %v240, %v519
      %v521 = vpop.f32.mrb[0].mxu0
      %v522 = vpop.f32.mrb[0].mxu0
      %v523 = vadd.f32 %v240, %v522
      %v524 = vpop.f32.mrb[0].mxu0
      %525 = vmatprep.mubr.bf16.mxu0 0
      %526 = vmatmul.mubr.bf16.gmra.mrb[0].mxu0 %v374
      %v527 = vpop.f32.mrb[0].mxu0
      %v528 = vadd.f32 %v240, %v527
      %v529 = vpop.f32.mrb[0].mxu0
      %v530 = vpop.f32.mrb[0].mxu0
      %v531 = vadd.f32 %v240, %v530
      %v532 = vpop.f32.mrb[0].mxu0
      %533 = vmatprep.mubr.bf16.mxu0 0
      %534 = vmatmul.mubr.bf16.gmra.mrb[0].mxu0 %v377
      %v535 = vpop.f32.mrb[0].mxu0
      %v536 = vadd.f32 %v240, %v535
      %v537 = vpop.f32.mrb[0].mxu0
      %v538 = vpop.f32.mrb[0].mxu0
      %v539 = vadd.f32 %v240, %v538
      %v540 = vpop.f32.mrb[0].mxu0
      %541 = vmatprep.mubr.bf16.mxu0 0
      %542 = vmatmul.mubr.bf16.gmra.mrb[0].mxu0 %v380
      %v543 = vpop.f32.mrb[0].mxu0
      %v544 = vadd.f32 %v240, %v543
      %v545 = vpop.f32.mrb[0].mxu0
      %v546 = vpop.f32.mrb[0].mxu0
      %v547 = vadd.f32 %v240, %v546
      %v548 = vpop.f32.mrb[0].mxu0
      %549 = vdwg.mxu0
      %v550 = vmax.f32 %v424, 0.0
      %v551 = vmax.f32 %v427, 0.0
      %v552 = vmax.f32 %v432, 0.0
      %v553 = vmax.f32 %v435, 0.0
      %v554 = vmax.f32 %v440, 0.0
      %v555 = vmax.f32 %v443, 0.0
      %v556 = vmax.f32 %v448, 0.0
      %v557 = vmax.f32 %v451, 0.0
      %v558 = vmax.f32 %v456, 0.0
      %v559 = vmax.f32 %v459, 0.0
      %v560 = vmax.f32 %v464, 0.0
      %v561 = vmax.f32 %v467, 0.0
      %v562 = vmax.f32 %v472, 0.0
      %v563 = vmax.f32 %v475, 0.0
      %v564 = vmax.f32 %v480, 0.0
      %v565 = vmax.f32 %v483, 0.0
      %v566 = vmax.f32 %v488, 0.0
      %v567 = vmax.f32 %v491, 0.0
      %v568 = vmax.f32 %v496, 0.0
      %v569 = vmax.f32 %v499, 0.0
      %v570 = vmax.f32 %v504, 0.0
      %v571 = vmax.f32 %v507, 0.0
      %v572 = vmax.f32 %v512, 0.0
      %v573 = vmax.f32 %v515, 0.0
      %v574 = vmax.f32 %v520, 0.0
      %v575 = vmax.f32 %v523, 0.0
      %v576 = vmax.f32 %v528, 0.0
      %v577 = vmax.f32 %v531, 0.0
      %v578 = vmax.f32 %v536, 0.0
      %v579 = vmax.f32 %v539, 0.0
      %v580 = vmax.f32 %v544, 0.0
      %v581 = vmax.f32 %v547, 0.0
      %v582 = vpack.c.bf16 %v551, %v550
      %v583 = vpack.c.bf16 %v553, %v552
      %v584 = vpack.c.bf16 %v555, %v554
      %v585 = vpack.c.bf16 %v557, %v556
      %v586 = vpack.c.bf16 %v559, %v558
      %v587 = vpack.c.bf16 %v561, %v560
      %v588 = vpack.c.bf16 %v563, %v562
      %v589 = vpack.c.bf16 %v565, %v564
      %v590 = vpack.c.bf16 %v567, %v566
      %v591 = vpack.c.bf16 %v569, %v568
      %v592 = vpack.c.bf16 %v571, %v570
      %v593 = vpack.c.bf16 %v573, %v572
      %v594 = vpack.c.bf16 %v575, %v574
      %v595 = vpack.c.bf16 %v577, %v576
      %v596 = vpack.c.bf16 %v579, %v578
      %v597 = vpack.c.bf16 %v581, %v580
      %v614 = vunpack.c.l.b16 %v582
      %v615 = vunpack.c.h.b16 %v582
      %v616 = vunpack.c.l.b16 %v583
      %v617 = vunpack.c.h.b16 %v583
      %v618 = vunpack.c.l.b16 %v584
      %v619 = vunpack.c.h.b16 %v584
      %v620 = vunpack.c.l.b16 %v585
      %v621 = vunpack.c.h.b16 %v585
      %v622 = vunpack.c.l.b16 %v586
      %v623 = vunpack.c.h.b16 %v586
      %v624 = vunpack.c.l.b16 %v587
      %v625 = vunpack.c.h.b16 %v587
      %v626 = vunpack.c.l.b16 %v588
      %v627 = vunpack.c.h.b16 %v588
      %v628 = vunpack.c.l.b16 %v589
      %v629 = vunpack.c.h.b16 %v589
      %v630 = vunpack.c.l.b16 %v590
      %v631 = vunpack.c.h.b16 %v590
      %v632 = vunpack.c.l.b16 %v591
      %v633 = vunpack.c.h.b16 %v591
      %v634 = vunpack.c.l.b16 %v592
      %v635 = vunpack.c.h.b16 %v592
      %v636 = vunpack.c.l.b16 %v593
      %v637 = vunpack.c.h.b16 %v593
      %v638 = vunpack.c.l.b16 %v594
      %v639 = vunpack.c.h.b16 %v594
      %v640 = vunpack.c.l.b16 %v595
      %v641 = vunpack.c.h.b16 %v595
      %v642 = vunpack.c.l.b16 %v596
      %v643 = vunpack.c.h.b16 %v596
      %v644 = vunpack.c.l.b16 %v597
      %v645 = vunpack.c.h.b16 %v597
      %v646 = vpack.c.b16 %v614, %v614
      %v647 = vpack.c.b16 %v615, %v615
      %v648 = vpack.c.b16 %v616, %v616
      %v649 = vpack.c.b16 %v617, %v617
      %v650 = vpack.c.b16 %v618, %v618
      %v651 = vpack.c.b16 %v619, %v619
      %v652 = vpack.c.b16 %v620, %v620
      %v653 = vpack.c.b16 %v621, %v621
      %v654 = vpack.c.b16 %v622, %v622
      %v655 = vpack.c.b16 %v623, %v623
      %v656 = vpack.c.b16 %v624, %v624
      %v657 = vpack.c.b16 %v625, %v625
      %v658 = vpack.c.b16 %v626, %v626
      %v659 = vpack.c.b16 %v627, %v627
      %v660 = vpack.c.b16 %v628, %v628
      %v661 = vpack.c.b16 %v629, %v629
      %v662 = vpack.c.b16 %v630, %v630
      %v663 = vpack.c.b16 %v631, %v631
      %v664 = vpack.c.b16 %v632, %v632
      %v665 = vpack.c.b16 %v633, %v633
      %v666 = vpack.c.b16 %v634, %v634
      %v667 = vpack.c.b16 %v635, %v635
      %v668 = vpack.c.b16 %v636, %v636
      %v669 = vpack.c.b16 %v637, %v637
      %v670 = vpack.c.b16 %v638, %v638
      %v671 = vpack.c.b16 %v639, %v639
      %v672 = vpack.c.b16 %v640, %v640
      %v673 = vpack.c.b16 %v641, %v641
      %v674 = vpack.c.b16 %v642, %v642
      %v675 = vpack.c.b16 %v643, %v643
      %v676 = vpack.c.b16 %v644, %v644
      %v677 = vpack.c.b16 %v645, %v645
      %vm710 = vcmask 519168
      %711 = vst.msk [vmem:[%s192] sm:$0xf] %vm710, %v646
      %712 = vst.msk [vmem:[%s192 + $0x4] sm:$0xf] %vm710, %v647
      %713 = vst.msk [vmem:[%s192 + $0x8] sm:$0xf] %vm710, %v648
      %714 = vst.msk [vmem:[%s192 + $0xc] sm:$0xf] %vm710, %v649
      %715 = vst.msk [vmem:[%s192 + $0x10] sm:$0xf] %vm710, %v650
      %716 = vst.msk [vmem:[%s192 + $0x14] sm:$0xf] %vm710, %v651
      %717 = vst.msk [vmem:[%s192 + $0x18] sm:$0xf] %vm710, %v652
      %718 = vst.msk [vmem:[%s192 + $0x1c] sm:$0xf] %vm710, %v653
      %719 = vst.msk [vmem:[%s192 + $0x20] sm:$0xf] %vm710, %v654
      %720 = vst.msk [vmem:[%s192 + $0x24] sm:$0xf] %vm710, %v655
      %721 = vst.msk [vmem:[%s192 + $0x28] sm:$0xf] %vm710, %v656
      %722 = vst.msk [vmem:[%s192 + $0x2c] sm:$0xf] %vm710, %v657
      %723 = vst.msk [vmem:[%s192 + $0x30] sm:$0xf] %vm710, %v658
      %724 = vst.msk [vmem:[%s192 + $0x34] sm:$0xf] %vm710, %v659
      %725 = vst.msk [vmem:[%s192 + $0x38] sm:$0xf] %vm710, %v660
      %726 = vst.msk [vmem:[%s192 + $0x3c] sm:$0xf] %vm710, %v661
      %727 = vst.msk [vmem:[%s192 + $0x40] sm:$0xf] %vm710, %v662
      %728 = vst.msk [vmem:[%s192 + $0x44] sm:$0xf] %vm710, %v663
      %729 = vst.msk [vmem:[%s192 + $0x48] sm:$0xf] %vm710, %v664
      %730 = vst.msk [vmem:[%s192 + $0x4c] sm:$0xf] %vm710, %v665
      %731 = vst.msk [vmem:[%s192 + $0x50] sm:$0xf] %vm710, %v666
      %732 = vst.msk [vmem:[%s192 + $0x54] sm:$0xf] %vm710, %v667
      %733 = vst.msk [vmem:[%s192 + $0x58] sm:$0xf] %vm710, %v668
      %734 = vst.msk [vmem:[%s192 + $0x5c] sm:$0xf] %vm710, %v669
      %735 = vst.msk [vmem:[%s192 + $0x60] sm:$0xf] %vm710, %v670
      %736 = vst.msk [vmem:[%s192 + $0x64] sm:$0xf] %vm710, %v671
      %737 = vst.msk [vmem:[%s192 + $0x68] sm:$0xf] %vm710, %v672
      %738 = vst.msk [vmem:[%s192 + $0x6c] sm:$0xf] %vm710, %v673
      %739 = vst.msk [vmem:[%s192 + $0x70] sm:$0xf] %vm710, %v674
      %740 = vst.msk [vmem:[%s192 + $0x74] sm:$0xf] %vm710, %v675
      %741 = vst.msk [vmem:[%s192 + $0x78] sm:$0xf] %vm710, %v676
      %742 = vst.msk [vmem:[%s192 + $0x7c] sm:$0xf] %vm710, %v677
      %s743 = smul.u32 32, %s19
      %p744 = scmp.lt.s32.totalorder %s18, 1
      %s745 = scalar_select %p744, %s18, 1
      %p746 = scmp.lt.s32.totalorder %s743, 127
      %s747 = scalar_select %p746, %s743, 127
      %s748 = smul.addr %s745, 128
      %s749 = sadd.s32 %s747, %s748
      %s750 = smul.addr %s749, 4
      %s751 = scalar_lea.vmem %s3, %s750
      // Predicated region
      $region33: #{apricot_cnn1_forward.7} parent=31 // pred_check
        %p752 = pneg %p114
      $region34: #{apricot_cnn1_forward.7} parent=31 // pred_check_branch
        %754 = sbr.rel (%p752) target = $region36
      $region35: #{apricot_cnn1_forward.7} parent=31 // pred_region
        %s755 = smul.u32 32, %s19
      $region36: #{apricot_cnn1_forward.7} parent=31 // pred_fallthru
        _
    $region32: #{apricot_cnn1_forward.7} parent=5 // pred_fallthru
      _
    %p756 = scmp.le.s32.totalorder 2, %s9
    // Predicated region
    $region37: #{apricot_cnn1_forward.7} parent=5 // pred_check
      %p757 = pneg %p756
    $region38: #{apricot_cnn1_forward.7} parent=5 // pred_check_branch
      %759 = sbr.rel (%p757) target = $region40
    $region39: #{apricot_cnn1_forward.7} parent=5 // pred_region
      %s760 = ssub.s32 %s9, 2
      // Predicated region
      $region41: #{apricot_cnn1_forward.7} parent=39 // pred_check
        %p761 = pneg %p120
      $region42: #{apricot_cnn1_forward.7} parent=39 // pred_check_branch
        %763 = sbr.rel (%p761) target = $region44
      $region43: #{apricot_cnn1_forward.7} parent=39 // pred_region
        %s764 = smul.u32 32, %s21
        %p765 = scmp.lt.s32.totalorder %s20, 1
        %s766 = scalar_select %p765, %s20, 1
        %p767 = scmp.lt.s32.totalorder %s764, 127
        %s768 = scalar_select %p767, %s764, 127
        %s769 = smul.addr %s766, 128
        %s770 = sadd.s32 %s768, %s769
        %s771 = smul.addr %s770, 4
        %s772 = scalar_lea.vmem %s3, %s771
      $region44: #{apricot_cnn1_forward.7} parent=39 // pred_fallthru
        _
    $region40: #{apricot_cnn1_forward.7} parent=5 // pred_fallthru
      _
  $region6: #{apricot_cnn1_forward.7} parent=0 // loop_footer
    %s13 = sadd.s32 1, %s9
  $region7: #{apricot_cnn1_forward.7} parent=0 // loop_footer_branch
    %8 = sbr.rel target = $region3
  $region8: #{apricot_cnn1_forward.7} parent=0 // loop_exit
    _

// kernel: apricot_cnn1_forward.8
$region0: #{apricot_cnn1_forward.8}
  #allocation0 [shape = 'u32[]', space=smem, size = 0x4, offset = 0x4, fixed_abs, tag = 'smem constant byte address 0x4 - core index']
  #allocation1 [shape = 'u32[144,128]{1,0:T(1,128)}', space=vmem, size = 0x12000, scoped, tag = 'internal scratch']
  %s0 = inlined_call_operand.vmem [shape: bf16[2,34,2,16,192], index: 0, kind: input, shape index: {}]
  %s1 = inlined_call_operand.vmem [shape: bf16[3,192,64], index: 1, kind: input, shape index: {}]
  %s2 = inlined_call_operand.vmem [shape: f32[1,64], index: 2, kind: input, shape index: {}]
  %s3 = inlined_call_operand.vmem [shape: bf16[2,256,64], index: 3, kind: output, shape index: {}]
  %s4 = sld [smem:[#allocation0]]
  $region45: #{apricot_cnn1_forward.8} parent=0
    _
  %s6 = ssub.s32 1, %s4
  %s7 = scalar_select 0, %s6, %s4
  loop: start=0, step=1, limit=10
  $region2: #{apricot_cnn1_forward.8} parent=0 // loop_pre_header
    _
  $region3: #{apricot_cnn1_forward.8} parent=0 // loop_header
    %s9 = sphi 0, %s13
    %p10 = scmp.ge.s32.totalorder %s9, 10
    %s16 = sphi 0, %s28
    %s17 = sphi 0, %s24
    %s18 = sphi 0, %s16
    %s19 = sphi 0, %s17
    %s20 = sphi 0, %s18
    %s21 = sphi 0, %s19
    %s31 = sphi 0, %s33
    %s34 = sphi 0, %s31
    %s35 = sphi 0, %s34
    %s51 = sphi 0, %s35
    %s55 = sphi 0, %s55
    %s57 = sphi 0, %s55
    %s58 = sphi 0, %s57
    %s72 = sphi 0, %s58
    %s76 = sphi 0, %s76
    %s78 = sphi 0, %s76
    %s79 = sphi 0, %s78
    %s93 = sphi 0, %s79
    %s101 = sphi 0, %s103
    %s104 = sphi 0, %s101
    %s105 = sphi 0, %s104
    %s121 = sphi 0, %s105
  $region4: #{apricot_cnn1_forward.8} parent=0 // loop_header_branch
    %12 = sbr.rel (%p10) target = $region8
  $region5: #{apricot_cnn1_forward.8} parent=0 // loop_body
    %s14 = ssub.s32 %s9, 1
    %s15 = ssub.s32 %s9, 2
    %s22 = sadd.s32 1, %s17
    %p23 = scmp.ge.s32.totalorder %s22, 4
    %s24 = scalar_select %p23, 0, %s22
    %s25 = sadd.s32 1, %s16
    %s26 = scalar_select %p23, %s25, %s16
    %p27 = scmp.ge.s32.totalorder %s26, 2
    %s28 = scalar_select %p27, 0, %s26
    %s29 = ssub.s32 %s16, %s28
    %p30 = scmp.eq.s32.totalorder %s29, 0
    %s32 = sadd.s32 %s31, 1
    %s33 = scalar_select %p30, %s31, %s32
    %p36 = pneg %p30
    %p37 = scmp.eq.s32.totalorder %s9, 7
    %p38 = por %p36, %p37
    %p39 = scmp.ne.s32.totalorder %s31, %s34
    %p40 = scmp.eq.s32.totalorder %s9, 0
    %p41 = por %p39, %p40
    %p42 = scmp.ne.s32.totalorder %s31, %s34
    %p43 = scmp.eq.s32.totalorder %s14, 7
    %p44 = por %p42, %p43
    %p45 = scmp.ne.s32.totalorder %s34, %s35
    %p46 = scmp.eq.s32.totalorder %s14, 0
    %p47 = por %p45, %p46
    %p48 = scmp.ne.s32.totalorder %s34, %s35
    %p49 = scmp.eq.s32.totalorder %s15, 7
    %p50 = por %p48, %p49
    %p52 = scmp.ne.s32.totalorder %s35, %s51
    %p53 = scmp.eq.s32.totalorder %s15, 0
    %p54 = por %p52, %p53
    %s56 = sadd.s32 %s55, 1
    %p59 = scmp.eq.s32.totalorder %s9, 7
    %p60 = scmp.ne.s32.totalorder %s55, %s57
    %p61 = scmp.eq.s32.totalorder %s9, 0
    %p62 = por %p60, %p61
    %p63 = scmp.ne.s32.totalorder %s55, %s57
    %p64 = scmp.eq.s32.totalorder %s14, 7
    %p65 = por %p63, %p64
    %p66 = scmp.ne.s32.totalorder %s57, %s58
    %p67 = scmp.eq.s32.totalorder %s14, 0
    %p68 = por %p66, %p67
    %p69 = scmp.ne.s32.totalorder %s57, %s58
    %p70 = scmp.eq.s32.totalorder %s15, 7
    %p71 = por %p69, %p70
    %p73 = scmp.ne.s32.totalorder %s58, %s72
    %p74 = scmp.eq.s32.totalorder %s15, 0
    %p75 = por %p73, %p74
    %s77 = sadd.s32 %s76, 1
    %p80 = scmp.eq.s32.totalorder %s9, 7
    %p81 = scmp.ne.s32.totalorder %s76, %s78
    %p82 = scmp.eq.s32.totalorder %s9, 0
    %p83 = por %p81, %p82
    %p84 = scmp.ne.s32.totalorder %s76, %s78
    %p85 = scmp.eq.s32.totalorder %s14, 7
    %p86 = por %p84, %p85
    %p87 = scmp.ne.s32.totalorder %s78, %s79
    %p88 = scmp.eq.s32.totalorder %s14, 0
    %p89 = por %p87, %p88
    %p90 = scmp.ne.s32.totalorder %s78, %s79
    %p91 = scmp.eq.s32.totalorder %s15, 7
    %p92 = por %p90, %p91
    %p94 = scmp.ne.s32.totalorder %s79, %s93
    %p95 = scmp.eq.s32.totalorder %s15, 0
    %p96 = por %p94, %p95
    %s97 = ssub.s32 %s16, %s28
    %s98 = ssub.s32 %s17, %s24
    %s99 = sor.u32 %s97, %s98
    %p100 = scmp.eq.s32.totalorder %s99, 0
    %s102 = sadd.s32 %s101, 1
    %s103 = scalar_select %p100, %s101, %s102
    %p106 = pneg %p100
    %p107 = scmp.eq.s32.totalorder %s9, 7
    %p108 = por %p106, %p107
    %p109 = scmp.ne.s32.totalorder %s101, %s104
    %p110 = scmp.eq.s32.totalorder %s9, 0
    %p111 = por %p109, %p110
    %p112 = scmp.ne.s32.totalorder %s101, %s104
    %p113 = scmp.eq.s32.totalorder %s14, 7
    %p114 = por %p112, %p113
    %p115 = scmp.ne.s32.totalorder %s104, %s105
    %p116 = scmp.eq.s32.totalorder %s14, 0
    %p117 = por %p115, %p116
    %p118 = scmp.ne.s32.totalorder %s104, %s105
    %p119 = scmp.eq.s32.totalorder %s15, 7
    %p120 = por %p118, %p119
    %p122 = scmp.ne.s32.totalorder %s105, %s121
    %p123 = scmp.eq.s32.totalorder %s15, 0
    %p124 = por %p122, %p123
    %p125 = scmp.le.s32.totalorder 1, %s9
    %p126 = scmp.lt.s32.totalorder %s9, 9
    %p127 = pnand %p125, %p126
    %p128 = pneg %p127
    // Predicated region
    $region9: #{apricot_cnn1_forward.8} parent=5 // pred_check
      _
    $region10: #{apricot_cnn1_forward.8} parent=5 // pred_check_branch
      %130 = sbr.rel (%p127) target = $region12
    $region11: #{apricot_cnn1_forward.8} parent=5 // pred_region
      %s131 = ssub.s32 %s9, 1
      // Predicated region
      $region13: #{apricot_cnn1_forward.8} parent=11 // pred_check
        %p132 = pneg %p68
      $region14: #{apricot_cnn1_forward.8} parent=11 // pred_check_branch
        %134 = sbr.rel (%p132) target = $region16
      $region15: #{apricot_cnn1_forward.8} parent=11 // pred_region
        _
      $region16: #{apricot_cnn1_forward.8} parent=11 // pred_fallthru
        _
      // Predicated region
      $region17: #{apricot_cnn1_forward.8} parent=11 // pred_check
        %p135 = pneg %p89
      $region18: #{apricot_cnn1_forward.8} parent=11 // pred_check_branch
        %137 = sbr.rel (%p135) target = $region20
      $region19: #{apricot_cnn1_forward.8} parent=11 // pred_region
        _
      $region20: #{apricot_cnn1_forward.8} parent=11 // pred_fallthru
        _
    $region12: #{apricot_cnn1_forward.8} parent=5 // pred_fallthru
      _
    %p138 = scmp.lt.s32.totalorder %s9, 8
    // Predicated region
    $region21: #{apricot_cnn1_forward.8} parent=5 // pred_check
      %p139 = pneg %p138
    $region22: #{apricot_cnn1_forward.8} parent=5 // pred_check_branch
      %141 = sbr.rel (%p139) target = $region24
    $region23: #{apricot_cnn1_forward.8} parent=5 // pred_region
      // Predicated region
      $region25: #{apricot_cnn1_forward.8} parent=23 // pred_check
        %p142 = pneg %p41
      $region26: #{apricot_cnn1_forward.8} parent=23 // pred_check_branch
        %144 = sbr.rel (%p142) target = $region28
      $region27: #{apricot_cnn1_forward.8} parent=23 // pred_region
        %p145 = scmp.lt.s32.totalorder %s16, 1
        %s146 = scalar_select %p145, %s16, 1
        %s147 = smul.addr %s146, 272
        %s148 = smul.addr %s147, 4
        %s149 = scalar_lea.vmem %s0, %s148
      $region28: #{apricot_cnn1_forward.8} parent=23 // pred_fallthru
        _
    $region24: #{apricot_cnn1_forward.8} parent=5 // pred_fallthru
      _
    %p150 = scmp.le.s32.totalorder 1, %s9
    %p151 = scmp.lt.s32.totalorder %s9, 9
    %p152 = pnand %p150, %p151
    %p153 = pneg %p152
    // Predicated region
    $region29: #{apricot_cnn1_forward.8} parent=5 // pred_check
      _
    $region30: #{apricot_cnn1_forward.8} parent=5 // pred_check_branch
      %155 = sbr.rel (%p152) target = $region32
    $region31: #{apricot_cnn1_forward.8} parent=5 // pred_region
      %s156 = ssub.s32 %s9, 1
      %p157 = scmp.lt.s32.totalorder %s18, 1
      %s158 = scalar_select %p157, %s18, 1
      %s159 = smul.addr %s158, 272
      %s160 = smul.addr %s159, 4
      %s161 = scalar_lea.vmem %s0, %s160
      %p162 = pneg %p47
      %p163 = pneg %p44
      %p164 = pneg %p68
      %p165 = pneg %p65
      %p166 = pneg %p89
      %p167 = pneg %p86
      %p168 = pneg %p117
      %p169 = pneg %p114
      %s170 = smul.u32 8, %s19
      %p171 = scmp.lt.s32.totalorder %s18, 1
      %s172 = scalar_select %p171, %s18, 1
      %p173 = scmp.lt.s32.totalorder %s170, 31
      %s174 = scalar_select %p173, %s170, 31
      %s175 = smul.addr %s172, 32
      %s176 = sadd.s32 %s174, %s175
      %s177 = smul.addr %s176, 4
      %s178 = scalar_lea.vmem %s3, %s177
      %p179 = scmp.lt.s32.totalorder %s18, 1
      %s180 = scalar_select %p179, %s18, 1
      %s181 = smul.addr %s180, 272
      %s182 = smul.addr %s181, 4
      %s183 = scalar_lea.vmem %s0, %s182
      %s184 = smul.u32 8, %s19
      %p185 = scmp.lt.s32.totalorder %s18, 1
      %s186 = scalar_select %p185, %s18, 1
      %p187 = scmp.lt.s32.totalorder %s184, 31
      %s188 = scalar_select %p187, %s184, 31
      %s189 = smul.addr %s186, 32
      %s190 = sadd.s32 %s188, %s189
      %s191 = smul.addr %s190, 4
      %s192 = scalar_lea.vmem %s3, %s191
      %s193 = smul.u32 8, %s19
      %s195 = smul.u32 %s19, 8
      %s196 = smul.u32 %s195, 8
      %s197 = smul.addr %s196, 4
      %s198 = scalar_lea.vmem %s183, %s197
      %v199 = vld [vmem:[%s198] sm:$0xff]
      %v200 = vld [vmem:[%s198 + $0x8] sm:$0xff]
      %v201 = vld [vmem:[%s198 + $0x20] sm:$0xff]
      %v202 = vld [vmem:[%s198 + $0x28] sm:$0xff]
      %v203 = vld [vmem:[%s198 + $0x40] sm:$0xff]
      %v204 = vld [vmem:[%s198 + $0x48] sm:$0xff]
      %v205 = vld [vmem:[%s198 + $0x60] sm:$0xff]
      %v206 = vld [vmem:[%s198 + $0x68] sm:$0xff]
      %v207 = vld [vmem:[%s198 + $0x80] sm:$0xff]
      %v208 = vld [vmem:[%s198 + $0x88] sm:$0xff]
      %v209 = vld [vmem:[%s198 + $0xa0] sm:$0xff]
      %v210 = vld [vmem:[%s198 + $0xa8] sm:$0xff]
      %v211 = vld [vmem:[%s198 + $0xc0] sm:$0xff]
      %v212 = vld [vmem:[%s198 + $0xc8] sm:$0xff]
      %v213 = vld [vmem:[%s198 + $0xe0] sm:$0xff]
      %v214 = vld [vmem:[%s198 + $0xe8] sm:$0xff]
      %s215 = sadd.s32 4, %s196
      %s216 = smul.addr %s215, 4
      %s217 = scalar_lea.vmem %s183, %s216
      %v218 = vld [vmem:[%s217] sm:$0xff]
      %v219 = vld [vmem:[%s217 + $0x8] sm:$0xff]
      %v220 = vld [vmem:[%s217 + $0x20] sm:$0xff]
      %v221 = vld [vmem:[%s217 + $0x28] sm:$0xff]
      %v222 = vld [vmem:[%s217 + $0x40] sm:$0xff]
      %v223 = vld [vmem:[%s217 + $0x48] sm:$0xff]
      %v224 = vld [vmem:[%s217 + $0x60] sm:$0xff]
      %v225 = vld [vmem:[%s217 + $0x68] sm:$0xff]
      %v226 = vld [vmem:[%s217 + $0x80] sm:$0xff]
      %v227 = vld [vmem:[%s217 + $0x88] sm:$0xff]
      %v228 = vld [vmem:[%s217 + $0xa0] sm:$0xff]
      %v229 = vld [vmem:[%s217 + $0xa8] sm:$0xff]
      %v230 = vld [vmem:[%s217 + $0xc0] sm:$0xff]
      %v231 = vld [vmem:[%s217 + $0xc8] sm:$0xff]
      %v232 = vld [vmem:[%s217 + $0xe0] sm:$0xff]
      %v233 = vld [vmem:[%s217 + $0xe8] sm:$0xff]
      %v234 = vld [vmem:[%s1] sm:$0xf]
      %v235 = vld [vmem:[%s1 + $0x4] sm:$0xf]
      %v236 = vld [vmem:[%s1 + $0x8] sm:$0xf]
      %v237 = vld [vmem:[%s1 + $0xc] sm:$0xf]
      %v238 = vld [vmem:[%s1 + $0x10] sm:$0xf]
      %v239 = vld [vmem:[%s1 + $0x14] sm:$0xf]
      %v240 = vld [vmem:[%s1 + $0x18] sm:$0xf]
      %v241 = vld [vmem:[%s1 + $0x1c] sm:$0xf]
      %v242 = vld [vmem:[%s1 + $0x20] sm:$0xf]
      %v243 = vld [vmem:[%s1 + $0x24] sm:$0xf]
      %v244 = vld [vmem:[%s1 + $0x28] sm:$0xf]
      %v245 = vld [vmem:[%s1 + $0x2c] sm:$0xf]
      %v246 = vld [vmem:[%s1 + $0x30] sm:$0xf]
      %v247 = vld [vmem:[%s1 + $0x34] sm:$0xf]
      %v248 = vld [vmem:[%s1 + $0x38] sm:$0xf]
      %v249 = vld [vmem:[%s1 + $0x3c] sm:$0xf]
      %v250 = vld [vmem:[%s1 + $0x40] sm:$0xf]
      %v251 = vld [vmem:[%s1 + $0x44] sm:$0xf]
      %v252 = vld [vmem:[%s1 + $0x48] sm:$0xf]
      %v253 = vld [vmem:[%s1 + $0x4c] sm:$0xf]
      %v254 = vld [vmem:[%s1 + $0x50] sm:$0xf]
      %v255 = vld [vmem:[%s1 + $0x54] sm:$0xf]
      %v256 = vld [vmem:[%s1 + $0x58] sm:$0xf]
      %v257 = vld [vmem:[%s1 + $0x5c] sm:$0xf]
      %s258 = sadd.s32 %s195, 1
      %s259 = smul.u32 %s258, 8
      %s260 = smul.addr %s259, 4
      %s261 = scalar_lea.vmem %s183, %s260
      %v262 = vld [vmem:[%s261] sm:$0xff]
      %v263 = vld [vmem:[%s261 + $0x8] sm:$0xff]
      %v264 = vld [vmem:[%s261 + $0x20] sm:$0xff]
      %v265 = vld [vmem:[%s261 + $0x28] sm:$0xff]
      %v266 = vld [vmem:[%s261 + $0x40] sm:$0xff]
      %v267 = vld [vmem:[%s261 + $0x48] sm:$0xff]
      %v268 = vld [vmem:[%s261 + $0x60] sm:$0xff]
      %v269 = vld [vmem:[%s261 + $0x68] sm:$0xff]
      %v270 = vld [vmem:[%s261 + $0x80] sm:$0xff]
      %v271 = vld [vmem:[%s261 + $0x88] sm:$0xff]
      %v272 = vld [vmem:[%s261 + $0xa0] sm:$0xff]
      %v273 = vld [vmem:[%s261 + $0xa8] sm:$0xff]
      %v274 = vld [vmem:[%s261 + $0xc0] sm:$0xff]
      %v275 = vld [vmem:[%s261 + $0xc8] sm:$0xff]
      %v276 = vld [vmem:[%s261 + $0xe0] sm:$0xff]
      %v277 = vld [vmem:[%s261 + $0xe8] sm:$0xff]
      %s278 = sadd.s32 4, %s259
      %s279 = smul.addr %s278, 4
      %s280 = scalar_lea.vmem %s183, %s279
      %v281 = vld [vmem:[%s280] sm:$0xff]
      %v282 = vld [vmem:[%s280 + $0x8] sm:$0xff]
      %v283 = vld [vmem:[%s280 + $0x20] sm:$0xff]
      %v284 = vld [vmem:[%s280 + $0x28] sm:$0xff]
      %v285 = vld [vmem:[%s280 + $0x40] sm:$0xff]
      %v286 = vld [vmem:[%s280 + $0x48] sm:$0xff]
      %v287 = vld [vmem:[%s280 + $0x60] sm:$0xff]
      %v288 = vld [vmem:[%s280 + $0x68] sm:$0xff]
      %v289 = vld [vmem:[%s280 + $0x80] sm:$0xff]
      %v290 = vld [vmem:[%s280 + $0x88] sm:$0xff]
      %v291 = vld [vmem:[%s280 + $0xa0] sm:$0xff]
      %v292 = vld [vmem:[%s280 + $0xa8] sm:$0xff]
      %v293 = vld [vmem:[%s280 + $0xc0] sm:$0xff]
      %v294 = vld [vmem:[%s280 + $0xc8] sm:$0xff]
      %v295 = vld [vmem:[%s280 + $0xe0] sm:$0xff]
      %v296 = vld [vmem:[%s280 + $0xe8] sm:$0xff]
      %s297 = scalar_lea.vmem %s1, 96
      %v298 = vld [vmem:[%s297] sm:$0xf]
      %v299 = vld [vmem:[%s297 + $0x4] sm:$0xf]
      %v300 = vld [vmem:[%s297 + $0x8] sm:$0xf]
      %v301 = vld [vmem:[%s297 + $0xc] sm:$0xf]
      %v302 = vld [vmem:[%s297 + $0x10] sm:$0xf]
      %v303 = vld [vmem:[%s297 + $0x14] sm:$0xf]
      %v304 = vld [vmem:[%s297 + $0x18] sm:$0xf]
      %v305 = vld [vmem:[%s297 + $0x1c] sm:$0xf]
      %v306 = vld [vmem:[%s297 + $0x20] sm:$0xf]
      %v307 = vld [vmem:[%s297 + $0x24] sm:$0xf]
      %v308 = vld [vmem:[%s297 + $0x28] sm:$0xf]
      %v309 = vld [vmem:[%s297 + $0x2c] sm:$0xf]
      %v310 = vld [vmem:[%s297 + $0x30] sm:$0xf]
      %v311 = vld [vmem:[%s297 + $0x34] sm:$0xf]
      %v312 = vld [vmem:[%s297 + $0x38] sm:$0xf]
      %v313 = vld [vmem:[%s297 + $0x3c] sm:$0xf]
      %v314 = vld [vmem:[%s297 + $0x40] sm:$0xf]
      %v315 = vld [vmem:[%s297 + $0x44] sm:$0xf]
      %v316 = vld [vmem:[%s297 + $0x48] sm:$0xf]
      %v317 = vld [vmem:[%s297 + $0x4c] sm:$0xf]
      %v318 = vld [vmem:[%s297 + $0x50] sm:$0xf]
      %v319 = vld [vmem:[%s297 + $0x54] sm:$0xf]
      %v320 = vld [vmem:[%s297 + $0x58] sm:$0xf]
      %v321 = vld [vmem:[%s297 + $0x5c] sm:$0xf]
      %v338 = vunpack.c.l.b16 %v262
      %v339 = vunpack.c.h.b16 %v262
      %v340 = vunpack.c.l.b16 %v263
      %v341 = vunpack.c.h.b16 %v263
      %v342 = vunpack.c.l.b16 %v264
      %v343 = vunpack.c.h.b16 %v264
      %v344 = vunpack.c.l.b16 %v265
      %v345 = vunpack.c.h.b16 %v265
      %v346 = vunpack.c.l.b16 %v266
      %v347 = vunpack.c.h.b16 %v266
      %v348 = vunpack.c.l.b16 %v267
      %v349 = vunpack.c.h.b16 %v267
      %v350 = vunpack.c.l.b16 %v268
      %v351 = vunpack.c.h.b16 %v268
      %v352 = vunpack.c.l.b16 %v269
      %v353 = vunpack.c.h.b16 %v269
      %v354 = vunpack.c.l.b16 %v270
      %v355 = vunpack.c.h.b16 %v270
      %v356 = vunpack.c.l.b16 %v271
      %v357 = vunpack.c.h.b16 %v271
      %v358 = vunpack.c.l.b16 %v272
      %v359 = vunpack.c.h.b16 %v272
      %v360 = vunpack.c.l.b16 %v273
      %v361 = vunpack.c.h.b16 %v273
      %v362 = vunpack.c.l.b16 %v274
      %v363 = vunpack.c.h.b16 %v274
      %v364 = vunpack.c.l.b16 %v275
      %v365 = vunpack.c.h.b16 %v275
      %v366 = vunpack.c.l.b16 %v276
      %v367 = vunpack.c.h.b16 %v276
      %v368 = vunpack.c.l.b16 %v277
      %v369 = vunpack.c.h.b16 %v277
      %v370 = vpack.c.b16 %v340, %v338
      %v371 = vpack.c.b16 %v341, %v339
      %v372 = vpack.c.b16 %v344, %v342
      %v373 = vpack.c.b16 %v345, %v343
      %v374 = vpack.c.b16 %v348, %v346
      %v375 = vpack.c.b16 %v349, %v347
      %v376 = vpack.c.b16 %v352, %v350
      %v377 = vpack.c.b16 %v353, %v351
      %v378 = vpack.c.b16 %v356, %v354
      %v379 = vpack.c.b16 %v357, %v355
      %v380 = vpack.c.b16 %v360, %v358
      %v381 = vpack.c.b16 %v361, %v359
      %v382 = vpack.c.b16 %v364, %v362
      %v383 = vpack.c.b16 %v365, %v363
      %v384 = vpack.c.b16 %v368, %v366
      %v385 = vpack.c.b16 %v369, %v367
      %v418 = vunpack.c.l.b16 %v298
      %v419 = vunpack.c.l.b16 %v299
      %v420 = vunpack.c.l.b16 %v300
      %v421 = vunpack.c.l.b16 %v301
      %v422 = vunpack.c.l.b16 %v302
      %v423 = vunpack.c.l.b16 %v303
      %v424 = vunpack.c.l.b16 %v304
      %v425 = vunpack.c.l.b16 %v305
      %v426 = vunpack.c.l.b16 %v306
      %v427 = vunpack.c.l.b16 %v307
      %v428 = vunpack.c.l.b16 %v308
      %v429 = vunpack.c.l.b16 %v309
      %v430 = vunpack.c.l.b16 %v310
      %v431 = vunpack.c.l.b16 %v311
      %v432 = vunpack.c.l.b16 %v312
      %v433 = vunpack.c.l.b16 %v313
      %v434 = vunpack.c.l.b16 %v314
      %v435 = vunpack.c.l.b16 %v315
      %v436 = vunpack.c.l.b16 %v316
      %v437 = vunpack.c.l.b16 %v317
      %v438 = vunpack.c.l.b16 %v318
      %v439 = vunpack.c.l.b16 %v319
      %v440 = vunpack.c.l.b16 %v320
      %v441 = vunpack.c.l.b16 %v321
      %v442 = vpack.c.b16 %v419, %v418
      %v443 = vpack.c.b16 %v421, %v420
      %v444 = vpack.c.b16 %v423, %v422
      %v445 = vpack.c.b16 %v425, %v424
      %v446 = vpack.c.b16 %v427, %v426
      %v447 = vpack.c.b16 %v429, %v428
      %v448 = vpack.c.b16 %v431, %v430
      %v449 = vpack.c.b16 %v433, %v432
      %v450 = vpack.c.b16 %v435, %v434
      %v451 = vpack.c.b16 %v437, %v436
      %v452 = vpack.c.b16 %v439, %v438
      %v453 = vpack.c.b16 %v441, %v440
      %vm466 = vcmask 523264
      %v468 = vsel %vm466, %v371, 0
      %v471 = vsel %vm466, %v373, 0
      %v474 = vsel %vm466, %v375, 0
      %v477 = vsel %vm466, %v377, 0
      %v480 = vsel %vm466, %v379, 0
      %v483 = vsel %vm466, %v381, 0
      %v486 = vsel %vm466, %v383, 0
      %v489 = vsel %vm466, %v385, 0
      %491 = vmatprep.subr.bf16.mxu0 0
      %492 = vmatpush1.bf16.msra.mxu0 %v442
      %493 = vmatprep.subr.bf16.mxu0 0
      %494 = vmatpush1.bf16.msra.mxu0 %v443
      %495 = vmatprep.subr.bf16.mxu0 0
      %496 = vmatpush1.bf16.msra.mxu0 %v444
      %497 = vmatprep.subr.bf16.mxu0 0
      %498 = vmatpush1.bf16.msra.mxu0 %v445
      %499 = vmatprep.subr.bf16.mxu0 0
      %500 = vmatpush1.bf16.msra.mxu0 %v446
      %501 = vmatprep.subr.bf16.mxu0 0
      %502 = vmatpush1.bf16.msra.mxu0 %v447
      %503 = vmatprep.subr.bf16.mxu0 0
      %504 = vmatpush1.bf16.msra.mxu0 %v448
      %505 = vmatprep.subr.bf16.mxu0 0
      %506 = vmatpush1.bf16.msra.mxu0 %v449
      %507 = vmatprep.subr.bf16.mxu0 0
      %508 = vmatpush1.bf16.msra.mxu0 %v450
      %509 = vmatprep.subr.bf16.mxu0 0
      %510 = vmatpush1.bf16.msra.mxu0 %v451
      %511 = vmatprep.subr.bf16.mxu0 0
      %512 = vmatpush1.bf16.msra.mxu0 %v452
      %513 = vmatprep.subr.bf16.mxu0 0
      %514 = vmatpush1.bf16.msra.mxu0 %v453
      %515 = vmatprep.subr.bf16.mxu0 0
      %516 = vmatpush1.bf16.msra.mxu0 0
      %517 = vmatprep.subr.bf16.mxu0 0
      %518 = vmatpush1.bf16.msra.mxu0 0
      %519 = vmatprep.subr.bf16.mxu0 0
      %520 = vmatpush1.bf16.msra.mxu0 0
      %521 = vmatprep.subr.bf16.mxu0 0
      %522 = vmatpush1.bf16.msra.mxu0 0
      %523 = vmatprep.mubr.bf16.mxu0 %v468
      %524 = vmatmul.mubr.bf16.gmra.mrb[0].mxu0 %v370
      %v525 = vpop.f32.mrb[0].mxu0
      %v526 = vadd.f32 0.0, %v525
      %v527 = vpop.f32.mrb[0].mxu0
      %v528 = vpop.f32.mrb[0].mxu0
      %v529 = vadd.f32 0.0, %v528
      %v530 = vpop.f32.mrb[0].mxu0
      %531 = vmatprep.mubr.bf16.mxu0 %v471
      %532 = vmatmul.mubr.bf16.gmra.mrb[0].mxu0 %v372
      %v533 = vpop.f32.mrb[0].mxu0
      %v534 = vadd.f32 0.0, %v533
      %v535 = vpop.f32.mrb[0].mxu0
      %v536 = vpop.f32.mrb[0].mxu0
      %v537 = vadd.f32 0.0, %v536
      %v538 = vpop.f32.mrb[0].mxu0
      %539 = vmatprep.mubr.bf16.mxu0 %v474
      %540 = vmatmul.mubr.bf16.gmra.mrb[0].mxu0 %v374
      %v541 = vpop.f32.mrb[0].mxu0
      %v542 = vadd.f32 0.0, %v541
      %v543 = vpop.f32.mrb[0].mxu0
      %v544 = vpop.f32.mrb[0].mxu0
      %v545 = vadd.f32 0.0, %v544
      %v546 = vpop.f32.mrb[0].mxu0
      %547 = vmatprep.mubr.bf16.mxu0 %v477
      %548 = vmatmul.mubr.bf16.gmra.mrb[0].mxu0 %v376
      %v549 = vpop.f32.mrb[0].mxu0
      %v550 = vadd.f32 0.0, %v549
      %v551 = vpop.f32.mrb[0].mxu0
      %v552 = vpop.f32.mrb[0].mxu0
      %v553 = vadd.f32 0.0, %v552
      %v554 = vpop.f32.mrb[0].mxu0
      %555 = vmatprep.mubr.bf16.mxu0 %v480
      %556 = vmatmul.mubr.bf16.gmra.mrb[0].mxu0 %v378
      %v557 = vpop.f32.mrb[0].mxu0
      %v558 = vadd.f32 0.0, %v557
      %v559 = vpop.f32.mrb[0].mxu0
      %v560 = vpop.f32.mrb[0].mxu0
      %v561 = vadd.f32 0.0, %v560
      %v562 = vpop.f32.mrb[0].mxu0
      %563 = vmatprep.mubr.bf16.mxu0 %v483
      %564 = vmatmul.mubr.bf16.gmra.mrb[0].mxu0 %v380
      %v565 = vpop.f32.mrb[0].mxu0
      %v566 = vadd.f32 0.0, %v565
      %v567 = vpop.f32.mrb[0].mxu0
      %v568 = vpop.f32.mrb[0].mxu0
      %v569 = vadd.f32 0.0, %v568
      %v570 = vpop.f32.mrb[0].mxu0
      %571 = vmatprep.mubr.bf16.mxu0 %v486
      %572 = vmatmul.mubr.bf16.gmra.mrb[0].mxu0 %v382
      %v573 = vpop.f32.mrb[0].mxu0
      %v574 = vadd.f32 0.0, %v573
      %v575 = vpop.f32.mrb[0].mxu0
      %v576 = vpop.f32.mrb[0].mxu0
      %v577 = vadd.f32 0.0, %v576
      %v578 = vpop.f32.mrb[0].mxu0
      %579 = vmatprep.mubr.bf16.mxu0 %v489
      %580 = vmatmul.mubr.bf16.gmra.mrb[0].mxu0 %v384
      %v581 = vpop.f32.mrb[0].mxu0
      %v582 = vadd.f32 0.0, %v581
      %v583 = vpop.f32.mrb[0].mxu0
      %v584 = vpop.f32.mrb[0].mxu0
      %v585 = vadd.f32 0.0, %v584
      %v586 = vpop.f32.mrb[0].mxu0
      %587 = vdwg.mxu0
      %v604 = vunpack.c.l.b16 %v199
      %v605 = vunpack.c.h.b16 %v199
      %v606 = vunpack.c.l.b16 %v200
      %v607 = vunpack.c.h.b16 %v200
      %v608 = vunpack.c.l.b16 %v201
      %v609 = vunpack.c.h.b16 %v201
      %v610 = vunpack.c.l.b16 %v202
      %v611 = vunpack.c.h.b16 %v202
      %v612 = vunpack.c.l.b16 %v203
      %v613 = vunpack.c.h.b16 %v203
      %v614 = vunpack.c.l.b16 %v204
      %v615 = vunpack.c.h.b16 %v204
      %v616 = vunpack.c.l.b16 %v205
      %v617 = vunpack.c.h.b16 %v205
      %v618 = vunpack.c.l.b16 %v206
      %v619 = vunpack.c.h.b16 %v206
      %v620 = vunpack.c.l.b16 %v207
      %v621 = vunpack.c.h.b16 %v207
      %v622 = vunpack.c.l.b16 %v208
      %v623 = vunpack.c.h.b16 %v208
      %v624 = vunpack.c.l.b16 %v209
      %v625 = vunpack.c.h.b16 %v209
      %v626 = vunpack.c.l.b16 %v210
      %v627 = vunpack.c.h.b16 %v210
      %v628 = vunpack.c.l.b16 %v211
      %v629 = vunpack.c.h.b16 %v211
      %v630 = vunpack.c.l.b16 %v212
      %v631 = vunpack.c.h.b16 %v212
      %v632 = vunpack.c.l.b16 %v213
      %v633 = vunpack.c.h.b16 %v213
      %v634 = vunpack.c.l.b16 %v214
      %v635 = vunpack.c.h.b16 %v214
      %v636 = vpack.c.b16 %v606, %v604
      %v637 = vpack.c.b16 %v607, %v605
      %v638 = vpack.c.b16 %v610, %v608
      %v639 = vpack.c.b16 %v611, %v609
      %v640 = vpack.c.b16 %v614, %v612
      %v641 = vpack.c.b16 %v615, %v613
      %v642 = vpack.c.b16 %v618, %v616
      %v643 = vpack.c.b16 %v619, %v617
      %v644 = vpack.c.b16 %v622, %v620
      %v645 = vpack.c.b16 %v623, %v621
      %v646 = vpack.c.b16 %v626, %v624
      %v647 = vpack.c.b16 %v627, %v625
      %v648 = vpack.c.b16 %v630, %v628
      %v649 = vpack.c.b16 %v631, %v629
      %v650 = vpack.c.b16 %v634, %v632
      %v651 = vpack.c.b16 %v635, %v633
      %v684 = vunpack.c.l.b16 %v234
      %v685 = vunpack.c.l.b16 %v235
      %v686 = vunpack.c.l.b16 %v236
      %v687 = vunpack.c.l.b16 %v237
      %v688 = vunpack.c.l.b16 %v238
      %v689 = vunpack.c.l.b16 %v239
      %v690 = vunpack.c.l.b16 %v240
      %v691 = vunpack.c.l.b16 %v241
      %v692 = vunpack.c.l.b16 %v242
      %v693 = vunpack.c.l.b16 %v243
      %v694 = vunpack.c.l.b16 %v244
      %v695 = vunpack.c.l.b16 %v245
      %v696 = vunpack.c.l.b16 %v246
      %v697 = vunpack.c.l.b16 %v247
      %v698 = vunpack.c.l.b16 %v248
      %v699 = vunpack.c.l.b16 %v249
      %v700 = vunpack.c.l.b16 %v250
      %v701 = vunpack.c.l.b16 %v251
      %v702 = vunpack.c.l.b16 %v252
      %v703 = vunpack.c.l.b16 %v253
      %v704 = vunpack.c.l.b16 %v254
      %v705 = vunpack.c.l.b16 %v255
      %v706 = vunpack.c.l.b16 %v256
      %v707 = vunpack.c.l.b16 %v257
      %v708 = vpack.c.b16 %v685, %v684
      %v709 = vpack.c.b16 %v687, %v686
      %v710 = vpack.c.b16 %v689, %v688
      %v711 = vpack.c.b16 %v691, %v690
      %v712 = vpack.c.b16 %v693, %v692
      %v713 = vpack.c.b16 %v695, %v694
      %v714 = vpack.c.b16 %v697, %v696
      %v715 = vpack.c.b16 %v699, %v698
      %v716 = vpack.c.b16 %v701, %v700
      %v717 = vpack.c.b16 %v703, %v702
      %v718 = vpack.c.b16 %v705, %v704
      %v719 = vpack.c.b16 %v707, %v706
      %v733 = vsel %vm466, %v637, 0
      %v736 = vsel %vm466, %v639, 0
      %v739 = vsel %vm466, %v641, 0
      %v742 = vsel %vm466, %v643, 0
      %v745 = vsel %vm466, %v645, 0
      %v748 = vsel %vm466, %v647, 0
      %v751 = vsel %vm466, %v649, 0
      %v754 = vsel %vm466, %v651, 0
      %756 = vmatprep.subr.bf16.mxu0 0
      %757 = vmatpush1.bf16.msra.mxu0 %v708
      %758 = vmatprep.subr.bf16.mxu0 0
      %759 = vmatpush1.bf16.msra.mxu0 %v709
      %760 = vmatprep.subr.bf16.mxu0 0
      %761 = vmatpush1.bf16.msra.mxu0 %v710
      %762 = vmatprep.subr.bf16.mxu0 0
      %763 = vmatpush1.bf16.msra.mxu0 %v711
      %764 = vmatprep.subr.bf16.mxu0 0
      %765 = vmatpush1.bf16.msra.mxu0 %v712
      %766 = vmatprep.subr.bf16.mxu0 0
      %767 = vmatpush1.bf16.msra.mxu0 %v713
      %768 = vmatprep.subr.bf16.mxu0 0
      %769 = vmatpush1.bf16.msra.mxu0 %v714
      %770 = vmatprep.subr.bf16.mxu0 0
      %771 = vmatpush1.bf16.msra.mxu0 %v715
      %772 = vmatprep.subr.bf16.mxu0 0
      %773 = vmatpush1.bf16.msra.mxu0 %v716
      %774 = vmatprep.subr.bf16.mxu0 0
      %775 = vmatpush1.bf16.msra.mxu0 %v717
      %776 = vmatprep.subr.bf16.mxu0 0
      %777 = vmatpush1.bf16.msra.mxu0 %v718
      %778 = vmatprep.subr.bf16.mxu0 0
      %779 = vmatpush1.bf16.msra.mxu0 %v719
      %780 = vmatprep.subr.bf16.mxu0 0
      %781 = vmatpush1.bf16.msra.mxu0 0
      %782 = vmatprep.subr.bf16.mxu0 0
      %783 = vmatpush1.bf16.msra.mxu0 0
      %784 = vmatprep.subr.bf16.mxu0 0
      %785 = vmatpush1.bf16.msra.mxu0 0
      %786 = vmatprep.subr.bf16.mxu0 0
      %787 = vmatpush1.bf16.msra.mxu0 0
      %788 = vmatprep.mubr.bf16.mxu0 %v733
      %789 = vmatmul.mubr.bf16.gmra.mrb[0].mxu0 %v636
      %v790 = vpop.f32.mrb[0].mxu0
      %v791 = vadd.f32 %v526, %v790
      %v792 = vpop.f32.mrb[0].mxu0
      %v793 = vpop.f32.mrb[0].mxu0
      %v794 = vadd.f32 %v529, %v793
      %v795 = vpop.f32.mrb[0].mxu0
      %796 = vmatprep.mubr.bf16.mxu0 %v736
      %797 = vmatmul.mubr.bf16.gmra.mrb[0].mxu0 %v638
      %v798 = vpop.f32.mrb[0].mxu0
      %v799 = vadd.f32 %v534, %v798
      %v800 = vpop.f32.mrb[0].mxu0
      %v801 = vpop.f32.mrb[0].mxu0
      %v802 = vadd.f32 %v537, %v801
      %v803 = vpop.f32.mrb[0].mxu0
      %804 = vmatprep.mubr.bf16.mxu0 %v739
      %805 = vmatmul.mubr.bf16.gmra.mrb[0].mxu0 %v640
      %v806 = vpop.f32.mrb[0].mxu0
      %v807 = vadd.f32 %v542, %v806
      %v808 = vpop.f32.mrb[0].mxu0
      %v809 = vpop.f32.mrb[0].mxu0
      %v810 = vadd.f32 %v545, %v809
      %v811 = vpop.f32.mrb[0].mxu0
      %812 = vmatprep.mubr.bf16.mxu0 %v742
      %813 = vmatmul.mubr.bf16.gmra.mrb[0].mxu0 %v642
      %v814 = vpop.f32.mrb[0].mxu0
      %v815 = vadd.f32 %v550, %v814
      %v816 = vpop.f32.mrb[0].mxu0
      %v817 = vpop.f32.mrb[0].mxu0
      %v818 = vadd.f32 %v553, %v817
      %v819 = vpop.f32.mrb[0].mxu0
      %820 = vmatprep.mubr.bf16.mxu0 %v745
      %821 = vmatmul.mubr.bf16.gmra.mrb[0].mxu0 %v644
      %v822 = vpop.f32.mrb[0].mxu0
      %v823 = vadd.f32 %v558, %v822
      %v824 = vpop.f32.mrb[0].mxu0
      %v825 = vpop.f32.mrb[0].mxu0
      %v826 = vadd.f32 %v561, %v825
      %v827 = vpop.f32.mrb[0].mxu0
      %828 = vmatprep.mubr.bf16.mxu0 %v748
      %829 = vmatmul.mubr.bf16.gmra.mrb[0].mxu0 %v646
      %v830 = vpop.f32.mrb[0].mxu0
      %v831 = vadd.f32 %v566, %v830
      %v832 = vpop.f32.mrb[0].mxu0
      %v833 = vpop.f32.mrb[0].mxu0
      %v834 = vadd.f32 %v569, %v833
      %v835 = vpop.f32.mrb[0].mxu0
      %836 = vmatprep.mubr.bf16.mxu0 %v751
      %837 = vmatmul.mubr.bf16.gmra.mrb[0].mxu0 %v648
      %v838 = vpop.f32.mrb[0].mxu0
      %v839 = vadd.f32 %v574, %v838
      %v840 = vpop.f32.mrb[0].mxu0
      %v841 = vpop.f32.mrb[0].mxu0
      %v842 = vadd.f32 %v577, %v841
      %v843 = vpop.f32.mrb[0].mxu0
      %844 = vmatprep.mubr.bf16.mxu0 %v754
      %845 = vmatmul.mubr.bf16.gmra.mrb[0].mxu0 %v650
      %v846 = vpop.f32.mrb[0].mxu0
      %v847 = vadd.f32 %v582, %v846
      %v848 = vpop.f32.mrb[0].mxu0
      %v849 = vpop.f32.mrb[0].mxu0
      %v850 = vadd.f32 %v585, %v849
      %v851 = vpop.f32.mrb[0].mxu0
      %852 = vdwg.mxu0
      %v869 = vunpack.c.l.b16 %v281
      %v870 = vunpack.c.h.b16 %v281
      %v871 = vunpack.c.l.b16 %v282
      %v872 = vunpack.c.h.b16 %v282
      %v873 = vunpack.c.l.b16 %v283
      %v874 = vunpack.c.h.b16 %v283
      %v875 = vunpack.c.l.b16 %v284
      %v876 = vunpack.c.h.b16 %v284
      %v877 = vunpack.c.l.b16 %v285
      %v878 = vunpack.c.h.b16 %v285
      %v879 = vunpack.c.l.b16 %v286
      %v880 = vunpack.c.h.b16 %v286
      %v881 = vunpack.c.l.b16 %v287
      %v882 = vunpack.c.h.b16 %v287
      %v883 = vunpack.c.l.b16 %v288
      %v884 = vunpack.c.h.b16 %v288
      %v885 = vunpack.c.l.b16 %v289
      %v886 = vunpack.c.h.b16 %v289
      %v887 = vunpack.c.l.b16 %v290
      %v888 = vunpack.c.h.b16 %v290
      %v889 = vunpack.c.l.b16 %v291
      %v890 = vunpack.c.h.b16 %v291
      %v891 = vunpack.c.l.b16 %v292
      %v892 = vunpack.c.h.b16 %v292
      %v893 = vunpack.c.l.b16 %v293
      %v894 = vunpack.c.h.b16 %v293
      %v895 = vunpack.c.l.b16 %v294
      %v896 = vunpack.c.h.b16 %v294
      %v897 = vunpack.c.l.b16 %v295
      %v898 = vunpack.c.h.b16 %v295
      %v899 = vunpack.c.l.b16 %v296
      %v900 = vunpack.c.h.b16 %v296
      %v901 = vpack.c.b16 %v871, %v869
      %v902 = vpack.c.b16 %v872, %v870
      %v903 = vpack.c.b16 %v875, %v873
      %v904 = vpack.c.b16 %v876, %v874
      %v905 = vpack.c.b16 %v879, %v877
      %v906 = vpack.c.b16 %v880, %v878
      %v907 = vpack.c.b16 %v883, %v881
      %v908 = vpack.c.b16 %v884, %v882
      %v909 = vpack.c.b16 %v887, %v885
      %v910 = vpack.c.b16 %v888, %v886
      %v911 = vpack.c.b16 %v891, %v889
      %v912 = vpack.c.b16 %v892, %v890
      %v913 = vpack.c.b16 %v895, %v893
      %v914 = vpack.c.b16 %v896, %v894
      %v915 = vpack.c.b16 %v899, %v897
      %v916 = vpack.c.b16 %v900, %v898
      %v926 = vsel %vm466, %v902, 0
      %v929 = vsel %vm466, %v904, 0
      %v932 = vsel %vm466, %v906, 0
      %v935 = vsel %vm466, %v908, 0
      %v938 = vsel %vm466, %v910, 0
      %v941 = vsel %vm466, %v912, 0
      %v944 = vsel %vm466, %v914, 0
      %v947 = vsel %vm466, %v916, 0
      %949 = vmatprep.subr.bf16.mxu0 0
      %950 = vmatpush1.bf16.msra.mxu0 %v442
      %951 = vmatprep.subr.bf16.mxu0 0
      %952 = vmatpush1.bf16.msra.mxu0 %v443
      %953 = vmatprep.subr.bf16.mxu0 0
      %954 = vmatpush1.bf16.msra.mxu0 %v444
      %955 = vmatprep.subr.bf16.mxu0 0
      %956 = vmatpush1.bf16.msra.mxu0 %v445
      %957 = vmatprep.subr.bf16.mxu0 0
      %958 = vmatpush1.bf16.msra.mxu0 %v446
      %959 = vmatprep.subr.bf16.mxu0 0
      %960 = vmatpush1.bf16.msra.mxu0 %v447
      %961 = vmatprep.subr.bf16.mxu0 0
      %962 = vmatpush1.bf16.msra.mxu0 %v448
      %963 = vmatprep.subr.bf16.mxu0 0
      %964 = vmatpush1.bf16.msra.mxu0 %v449
      %965 = vmatprep.subr.bf16.mxu0 0
      %966 = vmatpush1.bf16.msra.mxu0 %v450
      %967 = vmatprep.subr.bf16.mxu0 0
      %968 = vmatpush1.bf16.msra.mxu0 %v451
      %969 = vmatprep.subr.bf16.mxu0 0
      %970 = vmatpush1.bf16.msra.mxu0 %v452
      %971 = vmatprep.subr.bf16.mxu0 0
      %972 = vmatpush1.bf16.msra.mxu0 %v453
      %973 = vmatprep.subr.bf16.mxu0 0
      %974 = vmatpush1.bf16.msra.mxu0 0
      %975 = vmatprep.subr.bf16.mxu0 0
      %976 = vmatpush1.bf16.msra.mxu0 0
      %977 = vmatprep.subr.bf16.mxu0 0
      %978 = vmatpush1.bf16.msra.mxu0 0
      %979 = vmatprep.subr.bf16.mxu0 0
      %980 = vmatpush1.bf16.msra.mxu0 0
      %981 = vmatprep.mubr.bf16.mxu0 %v926
      %982 = vmatmul.mubr.bf16.gmra.mrb[0].mxu0 %v901
      %v983 = vpop.f32.mrb[0].mxu0
      %v984 = vadd.f32 0.0, %v983
      %v985 = vpop.f32.mrb[0].mxu0
      %v986 = vpop.f32.mrb[0].mxu0
      %v987 = vadd.f32 0.0, %v986
      %v988 = vpop.f32.mrb[0].mxu0
      %989 = vmatprep.mubr.bf16.mxu0 %v929
      %990 = vmatmul.mubr.bf16.gmra.mrb[0].mxu0 %v903
      %v991 = vpop.f32.mrb[0].mxu0
      %v992 = vadd.f32 0.0, %v991
      %v993 = vpop.f32.mrb[0].mxu0
      %v994 = vpop.f32.mrb[0].mxu0
      %v995 = vadd.f32 0.0, %v994
      %v996 = vpop.f32.mrb[0].mxu0
      %997 = vmatprep.mubr.bf16.mxu0 %v932
      %998 = vmatmul.mubr.bf16.gmra.mrb[0].mxu0 %v905
      %v999 = vpop.f32.mrb[0].mxu0
      %v1000 = vadd.f32 0.0, %v999
      %v1001 = vpop.f32.mrb[0].mxu0
      %v1002 = vpop.f32.mrb[0].mxu0
      %v1003 = vadd.f32 0.0, %v1002
      %v1004 = vpop.f32.mrb[0].mxu0
      %1005 = vmatprep.mubr.bf16.mxu0 %v935
      %1006 = vmatmul.mubr.bf16.gmra.mrb[0].mxu0 %v907
      %v1007 = vpop.f32.mrb[0].mxu0
      %v1008 = vadd.f32 0.0, %v1007
      %v1009 = vpop.f32.mrb[0].mxu0
      %v1010 = vpop.f32.mrb[0].mxu0
      %v1011 = vadd.f32 0.0, %v1010
      %v1012 = vpop.f32.mrb[0].mxu0
      %1013 = vmatprep.mubr.bf16.mxu0 %v938
      %1014 = vmatmul.mubr.bf16.gmra.mrb[0].mxu0 %v909
      %v1015 = vpop.f32.mrb[0].mxu0
      %v1016 = vadd.f32 0.0, %v1015
      %v1017 = vpop.f32.mrb[0].mxu0
      %v1018 = vpop.f32.mrb[0].mxu0
      %v1019 = vadd.f32 0.0, %v1018
      %v1020 = vpop.f32.mrb[0].mxu0
      %1021 = vmatprep.mubr.bf16.mxu0 %v941
      %1022 = vmatmul.mubr.bf16.gmra.mrb[0].mxu0 %v911
      %v1023 = vpop.f32.mrb[0].mxu0
      %v1024 = vadd.f32 0.0, %v1023
      %v1025 = vpop.f32.mrb[0].mxu0
      %v1026 = vpop.f32.mrb[0].mxu0
      %v1027 = vadd.f32 0.0, %v1026
      %v1028 = vpop.f32.mrb[0].mxu0
      %1029 = vmatprep.mubr.bf16.mxu0 %v944
      %1030 = vmatmul.mubr.bf16.gmra.mrb[0].mxu0 %v913
      %v1031 = vpop.f32.mrb[0].mxu0
      %v1032 = vadd.f32 0.0, %v1031
      %v1033 = vpop.f32.mrb[0].mxu0
      %v1034 = vpop.f32.mrb[0].mxu0
      %v1035 = vadd.f32 0.0, %v1034
      %v1036 = vpop.f32.mrb[0].mxu0
      %1037 = vmatprep.mubr.bf16.mxu0 %v947
      %1038 = vmatmul.mubr.bf16.gmra.mrb[0].mxu0 %v915
      %v1039 = vpop.f32.mrb[0].mxu0
      %v1040 = vadd.f32 0.0, %v1039
      %v1041 = vpop.f32.mrb[0].mxu0
      %v1042 = vpop.f32.mrb[0].mxu0
      %v1043 = vadd.f32 0.0, %v1042
      %v1044 = vpop.f32.mrb[0].mxu0
      %1045 = vdwg.mxu0
      %v1062 = vunpack.c.l.b16 %v218
      %v1063 = vunpack.c.h.b16 %v218
      %v1064 = vunpack.c.l.b16 %v219
      %v1065 = vunpack.c.h.b16 %v219
      %v1066 = vunpack.c.l.b16 %v220
      %v1067 = vunpack.c.h.b16 %v220
      %v1068 = vunpack.c.l.b16 %v221
      %v1069 = vunpack.c.h.b16 %v221
      %v1070 = vunpack.c.l.b16 %v222
      %v1071 = vunpack.c.h.b16 %v222
      %v1072 = vunpack.c.l.b16 %v223
      %v1073 = vunpack.c.h.b16 %v223
      %v1074 = vunpack.c.l.b16 %v224
      %v1075 = vunpack.c.h.b16 %v224
      %v1076 = vunpack.c.l.b16 %v225
      %v1077 = vunpack.c.h.b16 %v225
      %v1078 = vunpack.c.l.b16 %v226
      %v1079 = vunpack.c.h.b16 %v226
      %v1080 = vunpack.c.l.b16 %v227
      %v1081 = vunpack.c.h.b16 %v227
      %v1082 = vunpack.c.l.b16 %v228
      %v1083 = vunpack.c.h.b16 %v228
      %v1084 = vunpack.c.l.b16 %v229
      %v1085 = vunpack.c.h.b16 %v229
      %v1086 = vunpack.c.l.b16 %v230
      %v1087 = vunpack.c.h.b16 %v230
      %v1088 = vunpack.c.l.b16 %v231
      %v1089 = vunpack.c.h.b16 %v231
      %v1090 = vunpack.c.l.b16 %v232
      %v1091 = vunpack.c.h.b16 %v232
      %v1092 = vunpack.c.l.b16 %v233
      %v1093 = vunpack.c.h.b16 %v233
      %v1094 = vpack.c.b16 %v1064, %v1062
      %v1095 = vpack.c.b16 %v1065, %v1063
      %v1096 = vpack.c.b16 %v1068, %v1066
      %v1097 = vpack.c.b16 %v1069, %v1067
      %v1098 = vpack.c.b16 %v1072, %v1070
      %v1099 = vpack.c.b16 %v1073, %v1071
      %v1100 = vpack.c.b16 %v1076, %v1074
      %v1101 = vpack.c.b16 %v1077, %v1075
      %v1102 = vpack.c.b16 %v1080, %v1078
      %v1103 = vpack.c.b16 %v1081, %v1079
      %v1104 = vpack.c.b16 %v1084, %v1082
      %v1105 = vpack.c.b16 %v1085, %v1083
      %v1106 = vpack.c.b16 %v1088, %v1086
      %v1107 = vpack.c.b16 %v1089, %v1087
      %v1108 = vpack.c.b16 %v1092, %v1090
      %v1109 = vpack.c.b16 %v1093, %v1091
      %v1119 = vsel %vm466, %v1095, 0
      %v1122 = vsel %vm466, %v1097, 0
      %v1125 = vsel %vm466, %v1099, 0
      %v1128 = vsel %vm466, %v1101, 0
      %v1131 = vsel %vm466, %v1103, 0
      %v1134 = vsel %vm466, %v1105, 0
      %v1137 = vsel %vm466, %v1107, 0
      %v1140 = vsel %vm466, %v1109, 0
      %1142 = vmatprep.subr.bf16.mxu0 0
      %1143 = vmatpush1.bf16.msra.mxu0 %v708
      %1144 = vmatprep.subr.bf16.mxu0 0
      %1145 = vmatpush1.bf16.msra.mxu0 %v709
      %1146 = vmatprep.subr.bf16.mxu0 0
      %1147 = vmatpush1.bf16.msra.mxu0 %v710
      %1148 = vmatprep.subr.bf16.mxu0 0
      %1149 = vmatpush1.bf16.msra.mxu0 %v711
      %1150 = vmatprep.subr.bf16.mxu0 0
      %1151 = vmatpush1.bf16.msra.mxu0 %v712
      %1152 = vmatprep.subr.bf16.mxu0 0
      %1153 = vmatpush1.bf16.msra.mxu0 %v713
      %1154 = vmatprep.subr.bf16.mxu0 0
      %1155 = vmatpush1.bf16.msra.mxu0 %v714
      %1156 = vmatprep.subr.bf16.mxu0 0
      %1157 = vmatpush1.bf16.msra.mxu0 %v715
      %1158 = vmatprep.subr.bf16.mxu0 0
      %1159 = vmatpush1.bf16.msra.mxu0 %v716
      %1160 = vmatprep.subr.bf16.mxu0 0
      %1161 = vmatpush1.bf16.msra.mxu0 %v717
      %1162 = vmatprep.subr.bf16.mxu0 0
      %1163 = vmatpush1.bf16.msra.mxu0 %v718
      %1164 = vmatprep.subr.bf16.mxu0 0
      %1165 = vmatpush1.bf16.msra.mxu0 %v719
      %1166 = vmatprep.subr.bf16.mxu0 0
      %1167 = vmatpush1.bf16.msra.mxu0 0
      %1168 = vmatprep.subr.bf16.mxu0 0
      %1169 = vmatpush1.bf16.msra.mxu0 0
      %1170 = vmatprep.subr.bf16.mxu0 0
      %1171 = vmatpush1.bf16.msra.mxu0 0
      %1172 = vmatprep.subr.bf16.mxu0 0
      %1173 = vmatpush1.bf16.msra.mxu0 0
      %1174 = vmatprep.mubr.bf16.mxu0 %v1119
      %1175 = vmatmul.mubr.bf16.gmra.mrb[0].mxu0 %v1094
      %v1176 = vpop.f32.mrb[0].mxu0
      %v1177 = vadd.f32 %v984, %v1176
      %v1178 = vpop.f32.mrb[0].mxu0
      %v1179 = vpop.f32.mrb[0].mxu0
      %v1180 = vadd.f32 %v987, %v1179
      %v1181 = vpop.f32.mrb[0].mxu0
      %1182 = vmatprep.mubr.bf16.mxu0 %v1122
      %1183 = vmatmul.mubr.bf16.gmra.mrb[0].mxu0 %v1096
      %v1184 = vpop.f32.mrb[0].mxu0
      %v1185 = vadd.f32 %v992, %v1184
      %v1186 = vpop.f32.mrb[0].mxu0
      %v1187 = vpop.f32.mrb[0].mxu0
      %v1188 = vadd.f32 %v995, %v1187
      %v1189 = vpop.f32.mrb[0].mxu0
      %1190 = vmatprep.mubr.bf16.mxu0 %v1125
      %1191 = vmatmul.mubr.bf16.gmra.mrb[0].mxu0 %v1098
      %v1192 = vpop.f32.mrb[0].mxu0
      %v1193 = vadd.f32 %v1000, %v1192
      %v1194 = vpop.f32.mrb[0].mxu0
      %v1195 = vpop.f32.mrb[0].mxu0
      %v1196 = vadd.f32 %v1003, %v1195
      %v1197 = vpop.f32.mrb[0].mxu0
      %1198 = vmatprep.mubr.bf16.mxu0 %v1128
      %1199 = vmatmul.mubr.bf16.gmra.mrb[0].mxu0 %v1100
      %v1200 = vpop.f32.mrb[0].mxu0
      %v1201 = vadd.f32 %v1008, %v1200
      %v1202 = vpop.f32.mrb[0].mxu0
      %v1203 = vpop.f32.mrb[0].mxu0
      %v1204 = vadd.f32 %v1011, %v1203
      %v1205 = vpop.f32.mrb[0].mxu0
      %1206 = vmatprep.mubr.bf16.mxu0 %v1131
      %1207 = vmatmul.mubr.bf16.gmra.mrb[0].mxu0 %v1102
      %v1208 = vpop.f32.mrb[0].mxu0
      %v1209 = vadd.f32 %v1016, %v1208
      %v1210 = vpop.f32.mrb[0].mxu0
      %v1211 = vpop.f32.mrb[0].mxu0
      %v1212 = vadd.f32 %v1019, %v1211
      %v1213 = vpop.f32.mrb[0].mxu0
      %1214 = vmatprep.mubr.bf16.mxu0 %v1134
      %1215 = vmatmul.mubr.bf16.gmra.mrb[0].mxu0 %v1104
      %v1216 = vpop.f32.mrb[0].mxu0
      %v1217 = vadd.f32 %v1024, %v1216
      %v1218 = vpop.f32.mrb[0].mxu0
      %v1219 = vpop.f32.mrb[0].mxu0
      %v1220 = vadd.f32 %v1027, %v1219
      %v1221 = vpop.f32.mrb[0].mxu0
      %1222 = vmatprep.mubr.bf16.mxu0 %v1137
      %1223 = vmatmul.mubr.bf16.gmra.mrb[0].mxu0 %v1106
      %v1224 = vpop.f32.mrb[0].mxu0
      %v1225 = vadd.f32 %v1032, %v1224
      %v1226 = vpop.f32.mrb[0].mxu0
      %v1227 = vpop.f32.mrb[0].mxu0
      %v1228 = vadd.f32 %v1035, %v1227
      %v1229 = vpop.f32.mrb[0].mxu0
      %1230 = vmatprep.mubr.bf16.mxu0 %v1140
      %1231 = vmatmul.mubr.bf16.gmra.mrb[0].mxu0 %v1108
      %v1232 = vpop.f32.mrb[0].mxu0
      %v1233 = vadd.f32 %v1040, %v1232
      %v1234 = vpop.f32.mrb[0].mxu0
      %v1235 = vpop.f32.mrb[0].mxu0
      %v1236 = vadd.f32 %v1043, %v1235
      %v1237 = vpop.f32.mrb[0].mxu0
      %1238 = vdwg.mxu0
      %s1239 = sadd.s32 %s195, 2
      %s1240 = smul.u32 %s1239, 8
      %s1241 = smul.addr %s1240, 4
      %s1242 = scalar_lea.vmem %s183, %s1241
      %v1243 = vld [vmem:[%s1242] sm:$0xff]
      %v1244 = vld [vmem:[%s1242 + $0x8] sm:$0xff]
      %v1245 = vld [vmem:[%s1242 + $0x20] sm:$0xff]
      %v1246 = vld [vmem:[%s1242 + $0x28] sm:$0xff]
      %v1247 = vld [vmem:[%s1242 + $0x40] sm:$0xff]
      %v1248 = vld [vmem:[%s1242 + $0x48] sm:$0xff]
      %v1249 = vld [vmem:[%s1242 + $0x60] sm:$0xff]
      %v1250 = vld [vmem:[%s1242 + $0x68] sm:$0xff]
      %v1251 = vld [vmem:[%s1242 + $0x80] sm:$0xff]
      %v1252 = vld [vmem:[%s1242 + $0x88] sm:$0xff]
      %v1253 = vld [vmem:[%s1242 + $0xa0] sm:$0xff]
      %v1254 = vld [vmem:[%s1242 + $0xa8] sm:$0xff]
      %v1255 = vld [vmem:[%s1242 + $0xc0] sm:$0xff]
      %v1256 = vld [vmem:[%s1242 + $0xc8] sm:$0xff]
      %v1257 = vld [vmem:[%s1242 + $0xe0] sm:$0xff]
      %v1258 = vld [vmem:[%s1242 + $0xe8] sm:$0xff]
      %s1259 = sadd.s32 4, %s1240
      %s1260 = smul.addr %s1259, 4
      %s1261 = scalar_lea.vmem %s183, %s1260
      %v1262 = vld [vmem:[%s1261] sm:$0xff]
      %v1263 = vld [vmem:[%s1261 + $0x8] sm:$0xff]
      %v1264 = vld [vmem:[%s1261 + $0x20] sm:$0xff]
      %v1265 = vld [vmem:[%s1261 + $0x28] sm:$0xff]
      %v1266 = vld [vmem:[%s1261 + $0x40] sm:$0xff]
      %v1267 = vld [vmem:[%s1261 + $0x48] sm:$0xff]
      %v1268 = vld [vmem:[%s1261 + $0x60] sm:$0xff]
      %v1269 = vld [vmem:[%s1261 + $0x68] sm:$0xff]
      %v1270 = vld [vmem:[%s1261 + $0x80] sm:$0xff]
      %v1271 = vld [vmem:[%s1261 + $0x88] sm:$0xff]
      %v1272 = vld [vmem:[%s1261 + $0xa0] sm:$0xff]
      %v1273 = vld [vmem:[%s1261 + $0xa8] sm:$0xff]
      %v1274 = vld [vmem:[%s1261 + $0xc0] sm:$0xff]
      %v1275 = vld [vmem:[%s1261 + $0xc8] sm:$0xff]
      %v1276 = vld [vmem:[%s1261 + $0xe0] sm:$0xff]
      %v1277 = vld [vmem:[%s1261 + $0xe8] sm:$0xff]
      %s1278 = scalar_lea.vmem %s1, 192
      %v1279 = vld [vmem:[%s1278] sm:$0xf]
      %v1280 = vld [vmem:[%s1278 + $0x4] sm:$0xf]
      %v1281 = vld [vmem:[%s1278 + $0x8] sm:$0xf]
      %v1282 = vld [vmem:[%s1278 + $0xc] sm:$0xf]
      %v1283 = vld [vmem:[%s1278 + $0x10] sm:$0xf]
      %v1284 = vld [vmem:[%s1278 + $0x14] sm:$0xf]
      %v1285 = vld [vmem:[%s1278 + $0x18] sm:$0xf]
      %v1286 = vld [vmem:[%s1278 + $0x1c] sm:$0xf]
      %v1287 = vld [vmem:[%s1278 + $0x20] sm:$0xf]
      %v1288 = vld [vmem:[%s1278 + $0x24] sm:$0xf]
      %v1289 = vld [vmem:[%s1278 + $0x28] sm:$0xf]
      %v1290 = vld [vmem:[%s1278 + $0x2c] sm:$0xf]
      %v1291 = vld [vmem:[%s1278 + $0x30] sm:$0xf]
      %v1292 = vld [vmem:[%s1278 + $0x34] sm:$0xf]
      %v1293 = vld [vmem:[%s1278 + $0x38] sm:$0xf]
      %v1294 = vld [vmem:[%s1278 + $0x3c] sm:$0xf]
      %v1295 = vld [vmem:[%s1278 + $0x40] sm:$0xf]
      %v1296 = vld [vmem:[%s1278 + $0x44] sm:$0xf]
      %v1297 = vld [vmem:[%s1278 + $0x48] sm:$0xf]
      %v1298 = vld [vmem:[%s1278 + $0x4c] sm:$0xf]
      %v1299 = vld [vmem:[%s1278 + $0x50] sm:$0xf]
      %v1300 = vld [vmem:[%s1278 + $0x54] sm:$0xf]
      %v1301 = vld [vmem:[%s1278 + $0x58] sm:$0xf]
      %v1302 = vld [vmem:[%s1278 + $0x5c] sm:$0xf]
      %v1319 = vunpack.c.l.b16 %v1243
      %v1320 = vunpack.c.h.b16 %v1243
      %v1321 = vunpack.c.l.b16 %v1244
      %v1322 = vunpack.c.h.b16 %v1244
      %v1323 = vunpack.c.l.b16 %v1245
      %v1324 = vunpack.c.h.b16 %v1245
      %v1325 = vunpack.c.l.b16 %v1246
      %v1326 = vunpack.c.h.b16 %v1246
      %v1327 = vunpack.c.l.b16 %v1247
      %v1328 = vunpack.c.h.b16 %v1247
      %v1329 = vunpack.c.l.b16 %v1248
      %v1330 = vunpack.c.h.b16 %v1248
      %v1331 = vunpack.c.l.b16 %v1249
      %v1332 = vunpack.c.h.b16 %v1249
      %v1333 = vunpack.c.l.b16 %v1250
      %v1334 = vunpack.c.h.b16 %v1250
      %v1335 = vunpack.c.l.b16 %v1251
      %v1336 = vunpack.c.h.b16 %v1251
      %v1337 = vunpack.c.l.b16 %v1252
      %v1338 = vunpack.c.h.b16 %v1252
      %v1339 = vunpack.c.l.b16 %v1253
      %v1340 = vunpack.c.h.b16 %v1253
      %v1341 = vunpack.c.l.b16 %v1254
      %v1342 = vunpack.c.h.b16 %v1254
      %v1343 = vunpack.c.l.b16 %v1255
      %v1344 = vunpack.c.h.b16 %v1255
      %v1345 = vunpack.c.l.b16 %v1256
      %v1346 = vunpack.c.h.b16 %v1256
      %v1347 = vunpack.c.l.b16 %v1257
      %v1348 = vunpack.c.h.b16 %v1257
      %v1349 = vunpack.c.l.b16 %v1258
      %v1350 = vunpack.c.h.b16 %v1258
      %v1351 = vpack.c.b16 %v1321, %v1319
      %v1352 = vpack.c.b16 %v1322, %v1320
      %v1353 = vpack.c.b16 %v1325, %v1323
      %v1354 = vpack.c.b16 %v1326, %v1324
      %v1355 = vpack.c.b16 %v1329, %v1327
      %v1356 = vpack.c.b16 %v1330, %v1328
      %v1357 = vpack.c.b16 %v1333, %v1331
      %v1358 = vpack.c.b16 %v1334, %v1332
      %v1359 = vpack.c.b16 %v1337, %v1335
      %v1360 = vpack.c.b16 %v1338, %v1336
      %v1361 = vpack.c.b16 %v1341, %v1339
      %v1362 = vpack.c.b16 %v1342, %v1340
      %v1363 = vpack.c.b16 %v1345, %v1343
      %v1364 = vpack.c.b16 %v1346, %v1344
      %v1365 = vpack.c.b16 %v1349, %v1347
      %v1366 = vpack.c.b16 %v1350, %v1348
      %v1399 = vunpack.c.l.b16 %v1279
      %v1400 = vunpack.c.l.b16 %v1280
      %v1401 = vunpack.c.l.b16 %v1281
      %v1402 = vunpack.c.l.b16 %v1282
      %v1403 = vunpack.c.l.b16 %v1283
      %v1404 = vunpack.c.l.b16 %v1284
      %v1405 = vunpack.c.l.b16 %v1285
      %v1406 = vunpack.c.l.b16 %v1286
      %v1407 = vunpack.c.l.b16 %v1287
      %v1408 = vunpack.c.l.b16 %v1288
      %v1409 = vunpack.c.l.b16 %v1289
      %v1410 = vunpack.c.l.b16 %v1290
      %v1411 = vunpack.c.l.b16 %v1291
      %v1412 = vunpack.c.l.b16 %v1292
      %v1413 = vunpack.c.l.b16 %v1293
      %v1414 = vunpack.c.l.b16 %v1294
      %v1415 = vunpack.c.l.b16 %v1295
      %v1416 = vunpack.c.l.b16 %v1296
      %v1417 = vunpack.c.l.b16 %v1297
      %v1418 = vunpack.c.l.b16 %v1298
      %v1419 = vunpack.c.l.b16 %v1299
      %v1420 = vunpack.c.l.b16 %v1300
      %v1421 = vunpack.c.l.b16 %v1301
      %v1422 = vunpack.c.l.b16 %v1302
      %v1423 = vpack.c.b16 %v1400, %v1399
      %v1424 = vpack.c.b16 %v1402, %v1401
      %v1425 = vpack.c.b16 %v1404, %v1403
      %v1426 = vpack.c.b16 %v1406, %v1405
      %v1427 = vpack.c.b16 %v1408, %v1407
      %v1428 = vpack.c.b16 %v1410, %v1409
      %v1429 = vpack.c.b16 %v1412, %v1411
      %v1430 = vpack.c.b16 %v1414, %v1413
      %v1431 = vpack.c.b16 %v1416, %v1415
      %v1432 = vpack.c.b16 %v1418, %v1417
      %v1433 = vpack.c.b16 %v1420, %v1419
      %v1434 = vpack.c.b16 %v1422, %v1421
      %v1448 = vsel %vm466, %v1352, 0
      %v1451 = vsel %vm466, %v1354, 0
      %v1454 = vsel %vm466, %v1356, 0
      %v1457 = vsel %vm466, %v1358, 0
      %v1460 = vsel %vm466, %v1360, 0
      %v1463 = vsel %vm466, %v1362, 0
      %v1466 = vsel %vm466, %v1364, 0
      %v1469 = vsel %vm466, %v1366, 0
      %1471 = vmatprep.subr.bf16.mxu0 0
      %1472 = vmatpush1.bf16.msra.mxu0 %v1423
      %1473 = vmatprep.subr.bf16.mxu0 0
      %1474 = vmatpush1.bf16.msra.mxu0 %v1424
      %1475 = vmatprep.subr.bf16.mxu0 0
      %1476 = vmatpush1.bf16.msra.mxu0 %v1425
      %1477 = vmatprep.subr.bf16.mxu0 0
      %1478 = vmatpush1.bf16.msra.mxu0 %v1426
      %1479 = vmatprep.subr.bf16.mxu0 0
      %1480 = vmatpush1.bf16.msra.mxu0 %v1427
      %1481 = vmatprep.subr.bf16.mxu0 0
      %1482 = vmatpush1.bf16.msra.mxu0 %v1428
      %1483 = vmatprep.subr.bf16.mxu0 0
      %1484 = vmatpush1.bf16.msra.mxu0 %v1429
      %1485 = vmatprep.subr.bf16.mxu0 0
      %1486 = vmatpush1.bf16.msra.mxu0 %v1430
      %1487 = vmatprep.subr.bf16.mxu0 0
      %1488 = vmatpush1.bf16.msra.mxu0 %v1431
      %1489 = vmatprep.subr.bf16.mxu0 0
      %1490 = vmatpush1.bf16.msra.mxu0 %v1432
      %1491 = vmatprep.subr.bf16.mxu0 0
      %1492 = vmatpush1.bf16.msra.mxu0 %v1433
      %1493 = vmatprep.subr.bf16.mxu0 0
      %1494 = vmatpush1.bf16.msra.mxu0 %v1434
      %1495 = vmatprep.subr.bf16.mxu0 0
      %1496 = vmatpush1.bf16.msra.mxu0 0
      %1497 = vmatprep.subr.bf16.mxu0 0
      %1498 = vmatpush1.bf16.msra.mxu0 0
      %1499 = vmatprep.subr.bf16.mxu0 0
      %1500 = vmatpush1.bf16.msra.mxu0 0
      %1501 = vmatprep.subr.bf16.mxu0 0
      %1502 = vmatpush1.bf16.msra.mxu0 0
      %1503 = vmatprep.mubr.bf16.mxu0 %v1448
      %1504 = vmatmul.mubr.bf16.gmra.mrb[0].mxu0 %v1351
      %v1505 = vpop.f32.mrb[0].mxu0
      %v1506 = vadd.f32 0.0, %v1505
      %v1507 = vpop.f32.mrb[0].mxu0
      %v1508 = vpop.f32.mrb[0].mxu0
      %v1509 = vadd.f32 0.0, %v1508
      %v1510 = vpop.f32.mrb[0].mxu0
      %1511 = vmatprep.mubr.bf16.mxu0 %v1451
      %1512 = vmatmul.mubr.bf16.gmra.mrb[0].mxu0 %v1353
      %v1513 = vpop.f32.mrb[0].mxu0
      %v1514 = vadd.f32 0.0, %v1513
      %v1515 = vpop.f32.mrb[0].mxu0
      %v1516 = vpop.f32.mrb[0].mxu0
      %v1517 = vadd.f32 0.0, %v1516
      %v1518 = vpop.f32.mrb[0].mxu0
      %1519 = vmatprep.mubr.bf16.mxu0 %v1454
      %1520 = vmatmul.mubr.bf16.gmra.mrb[0].mxu0 %v1355
      %v1521 = vpop.f32.mrb[0].mxu0
      %v1522 = vadd.f32 0.0, %v1521
      %v1523 = vpop.f32.mrb[0].mxu0
      %v1524 = vpop.f32.mrb[0].mxu0
      %v1525 = vadd.f32 0.0, %v1524
      %v1526 = vpop.f32.mrb[0].mxu0
      %1527 = vmatprep.mubr.bf16.mxu0 %v1457
      %1528 = vmatmul.mubr.bf16.gmra.mrb[0].mxu0 %v1357
      %v1529 = vpop.f32.mrb[0].mxu0
      %v1530 = vadd.f32 0.0, %v1529
      %v1531 = vpop.f32.mrb[0].mxu0
      %v1532 = vpop.f32.mrb[0].mxu0
      %v1533 = vadd.f32 0.0, %v1532
      %v1534 = vpop.f32.mrb[0].mxu0
      %1535 = vmatprep.mubr.bf16.mxu0 %v1460
      %1536 = vmatmul.mubr.bf16.gmra.mrb[0].mxu0 %v1359
      %v1537 = vpop.f32.mrb[0].mxu0
      %v1538 = vadd.f32 0.0, %v1537
      %v1539 = vpop.f32.mrb[0].mxu0
      %v1540 = vpop.f32.mrb[0].mxu0
      %v1541 = vadd.f32 0.0, %v1540
      %v1542 = vpop.f32.mrb[0].mxu0
      %1543 = vmatprep.mubr.bf16.mxu0 %v1463
      %1544 = vmatmul.mubr.bf16.gmra.mrb[0].mxu0 %v1361
      %v1545 = vpop.f32.mrb[0].mxu0
      %v1546 = vadd.f32 0.0, %v1545
      %v1547 = vpop.f32.mrb[0].mxu0
      %v1548 = vpop.f32.mrb[0].mxu0
      %v1549 = vadd.f32 0.0, %v1548
      %v1550 = vpop.f32.mrb[0].mxu0
      %1551 = vmatprep.mubr.bf16.mxu0 %v1466
      %1552 = vmatmul.mubr.bf16.gmra.mrb[0].mxu0 %v1363
      %v1553 = vpop.f32.mrb[0].mxu0
      %v1554 = vadd.f32 0.0, %v1553
      %v1555 = vpop.f32.mrb[0].mxu0
      %v1556 = vpop.f32.mrb[0].mxu0
      %v1557 = vadd.f32 0.0, %v1556
      %v1558 = vpop.f32.mrb[0].mxu0
      %1559 = vmatprep.mubr.bf16.mxu0 %v1469
      %1560 = vmatmul.mubr.bf16.gmra.mrb[0].mxu0 %v1365
      %v1561 = vpop.f32.mrb[0].mxu0
      %v1562 = vadd.f32 0.0, %v1561
      %v1563 = vpop.f32.mrb[0].mxu0
      %v1564 = vpop.f32.mrb[0].mxu0
      %v1565 = vadd.f32 0.0, %v1564
      %v1566 = vpop.f32.mrb[0].mxu0
      %1567 = vdwg.mxu0
      %v1568 = vadd.f32 %v791, %v1506
      %v1569 = vadd.f32 %v794, %v1509
      %v1570 = vadd.f32 %v799, %v1514
      %v1571 = vadd.f32 %v802, %v1517
      %v1572 = vadd.f32 %v807, %v1522
      %v1573 = vadd.f32 %v810, %v1525
      %v1574 = vadd.f32 %v815, %v1530
      %v1575 = vadd.f32 %v818, %v1533
      %v1576 = vadd.f32 %v823, %v1538
      %v1577 = vadd.f32 %v826, %v1541
      %v1578 = vadd.f32 %v831, %v1546
      %v1579 = vadd.f32 %v834, %v1549
      %v1580 = vadd.f32 %v839, %v1554
      %v1581 = vadd.f32 %v842, %v1557
      %v1582 = vadd.f32 %v847, %v1562
      %v1583 = vadd.f32 %v850, %v1565
      %v1600 = vunpack.c.l.b16 %v1262
      %v1601 = vunpack.c.h.b16 %v1262
      %v1602 = vunpack.c.l.b16 %v1263
      %v1603 = vunpack.c.h.b16 %v1263
      %v1604 = vunpack.c.l.b16 %v1264
      %v1605 = vunpack.c.h.b16 %v1264
      %v1606 = vunpack.c.l.b16 %v1265
      %v1607 = vunpack.c.h.b16 %v1265
      %v1608 = vunpack.c.l.b16 %v1266
      %v1609 = vunpack.c.h.b16 %v1266
      %v1610 = vunpack.c.l.b16 %v1267
      %v1611 = vunpack.c.h.b16 %v1267
      %v1612 = vunpack.c.l.b16 %v1268
      %v1613 = vunpack.c.h.b16 %v1268
      %v1614 = vunpack.c.l.b16 %v1269
      %v1615 = vunpack.c.h.b16 %v1269
      %v1616 = vunpack.c.l.b16 %v1270
      %v1617 = vunpack.c.h.b16 %v1270
      %v1618 = vunpack.c.l.b16 %v1271
      %v1619 = vunpack.c.h.b16 %v1271
      %v1620 = vunpack.c.l.b16 %v1272
      %v1621 = vunpack.c.h.b16 %v1272
      %v1622 = vunpack.c.l.b16 %v1273
      %v1623 = vunpack.c.h.b16 %v1273
      %v1624 = vunpack.c.l.b16 %v1274
      %v1625 = vunpack.c.h.b16 %v1274
      %v1626 = vunpack.c.l.b16 %v1275
      %v1627 = vunpack.c.h.b16 %v1275
      %v1628 = vunpack.c.l.b16 %v1276
      %v1629 = vunpack.c.h.b16 %v1276
      %v1630 = vunpack.c.l.b16 %v1277
      %v1631 = vunpack.c.h.b16 %v1277
      %v1632 = vpack.c.b16 %v1602, %v1600
      %v1633 = vpack.c.b16 %v1603, %v1601
      %v1634 = vpack.c.b16 %v1606, %v1604
      %v1635 = vpack.c.b16 %v1607, %v1605
      %v1636 = vpack.c.b16 %v1610, %v1608
      %v1637 = vpack.c.b16 %v1611, %v1609
      %v1638 = vpack.c.b16 %v1614, %v1612
      %v1639 = vpack.c.b16 %v1615, %v1613
      %v1640 = vpack.c.b16 %v1618, %v1616
      %v1641 = vpack.c.b16 %v1619, %v1617
      %v1642 = vpack.c.b16 %v1622, %v1620
      %v1643 = vpack.c.b16 %v1623, %v1621
      %v1644 = vpack.c.b16 %v1626, %v1624
      %v1645 = vpack.c.b16 %v1627, %v1625
      %v1646 = vpack.c.b16 %v1630, %v1628
      %v1647 = vpack.c.b16 %v1631, %v1629
      %v1657 = vsel %vm466, %v1633, 0
      %v1660 = vsel %vm466, %v1635, 0
      %v1663 = vsel %vm466, %v1637, 0
      %v1666 = vsel %vm466, %v1639, 0
      %v1669 = vsel %vm466, %v1641, 0
      %v1672 = vsel %vm466, %v1643, 0
      %v1675 = vsel %vm466, %v1645, 0
      %v1678 = vsel %vm466, %v1647, 0
      %1680 = vmatprep.subr.bf16.mxu0 0
      %1681 = vmatpush1.bf16.msra.mxu0 %v1423
      %1682 = vmatprep.subr.bf16.mxu0 0
      %1683 = vmatpush1.bf16.msra.mxu0 %v1424
      %1684 = vmatprep.subr.bf16.mxu0 0
      %1685 = vmatpush1.bf16.msra.mxu0 %v1425
      %1686 = vmatprep.subr.bf16.mxu0 0
      %1687 = vmatpush1.bf16.msra.mxu0 %v1426
      %1688 = vmatprep.subr.bf16.mxu0 0
      %1689 = vmatpush1.bf16.msra.mxu0 %v1427
      %1690 = vmatprep.subr.bf16.mxu0 0
      %1691 = vmatpush1.bf16.msra.mxu0 %v1428
      %1692 = vmatprep.subr.bf16.mxu0 0
      %1693 = vmatpush1.bf16.msra.mxu0 %v1429
      %1694 = vmatprep.subr.bf16.mxu0 0
      %1695 = vmatpush1.bf16.msra.mxu0 %v1430
      %1696 = vmatprep.subr.bf16.mxu0 0
      %1697 = vmatpush1.bf16.msra.mxu0 %v1431
      %1698 = vmatprep.subr.bf16.mxu0 0
      %1699 = vmatpush1.bf16.msra.mxu0 %v1432
      %1700 = vmatprep.subr.bf16.mxu0 0
      %1701 = vmatpush1.bf16.msra.mxu0 %v1433
      %1702 = vmatprep.subr.bf16.mxu0 0
      %1703 = vmatpush1.bf16.msra.mxu0 %v1434
      %1704 = vmatprep.subr.bf16.mxu0 0
      %1705 = vmatpush1.bf16.msra.mxu0 0
      %1706 = vmatprep.subr.bf16.mxu0 0
      %1707 = vmatpush1.bf16.msra.mxu0 0
      %1708 = vmatprep.subr.bf16.mxu0 0
      %1709 = vmatpush1.bf16.msra.mxu0 0
      %1710 = vmatprep.subr.bf16.mxu0 0
      %1711 = vmatpush1.bf16.msra.mxu0 0
      %1712 = vmatprep.mubr.bf16.mxu0 %v1657
      %1713 = vmatmul.mubr.bf16.gmra.mrb[0].mxu0 %v1632
      %v1714 = vpop.f32.mrb[0].mxu0
      %v1715 = vadd.f32 0.0, %v1714
      %v1716 = vpop.f32.mrb[0].mxu0
      %v1717 = vpop.f32.mrb[0].mxu0
      %v1718 = vadd.f32 0.0, %v1717
      %v1719 = vpop.f32.mrb[0].mxu0
      %1720 = vmatprep.mubr.bf16.mxu0 %v1660
      %1721 = vmatmul.mubr.bf16.gmra.mrb[0].mxu0 %v1634
      %v1722 = vpop.f32.mrb[0].mxu0
      %v1723 = vadd.f32 0.0, %v1722
      %v1724 = vpop.f32.mrb[0].mxu0
      %v1725 = vpop.f32.mrb[0].mxu0
      %v1726 = vadd.f32 0.0, %v1725
      %v1727 = vpop.f32.mrb[0].mxu0
      %1728 = vmatprep.mubr.bf16.mxu0 %v1663
      %1729 = vmatmul.mubr.bf16.gmra.mrb[0].mxu0 %v1636
      %v1730 = vpop.f32.mrb[0].mxu0
      %v1731 = vadd.f32 0.0, %v1730
      %v1732 = vpop.f32.mrb[0].mxu0
      %v1733 = vpop.f32.mrb[0].mxu0
      %v1734 = vadd.f32 0.0, %v1733
      %v1735 = vpop.f32.mrb[0].mxu0
      %1736 = vmatprep.mubr.bf16.mxu0 %v1666
      %1737 = vmatmul.mubr.bf16.gmra.mrb[0].mxu0 %v1638
      %v1738 = vpop.f32.mrb[0].mxu0
      %v1739 = vadd.f32 0.0, %v1738
      %v1740 = vpop.f32.mrb[0].mxu0
      %v1741 = vpop.f32.mrb[0].mxu0
      %v1742 = vadd.f32 0.0, %v1741
      %v1743 = vpop.f32.mrb[0].mxu0
      %1744 = vmatprep.mubr.bf16.mxu0 %v1669
      %1745 = vmatmul.mubr.bf16.gmra.mrb[0].mxu0 %v1640
      %v1746 = vpop.f32.mrb[0].mxu0
      %v1747 = vadd.f32 0.0, %v1746
      %v1748 = vpop.f32.mrb[0].mxu0
      %v1749 = vpop.f32.mrb[0].mxu0
      %v1750 = vadd.f32 0.0, %v1749
      %v1751 = vpop.f32.mrb[0].mxu0
      %1752 = vmatprep.mubr.bf16.mxu0 %v1672
      %1753 = vmatmul.mubr.bf16.gmra.mrb[0].mxu0 %v1642
      %v1754 = vpop.f32.mrb[0].mxu0
      %v1755 = vadd.f32 0.0, %v1754
      %v1756 = vpop.f32.mrb[0].mxu0
      %v1757 = vpop.f32.mrb[0].mxu0
      %v1758 = vadd.f32 0.0, %v1757
      %v1759 = vpop.f32.mrb[0].mxu0
      %1760 = vmatprep.mubr.bf16.mxu0 %v1675
      %1761 = vmatmul.mubr.bf16.gmra.mrb[0].mxu0 %v1644
      %v1762 = vpop.f32.mrb[0].mxu0
      %v1763 = vadd.f32 0.0, %v1762
      %v1764 = vpop.f32.mrb[0].mxu0
      %v1765 = vpop.f32.mrb[0].mxu0
      %v1766 = vadd.f32 0.0, %v1765
      %v1767 = vpop.f32.mrb[0].mxu0
      %1768 = vmatprep.mubr.bf16.mxu0 %v1678
      %1769 = vmatmul.mubr.bf16.gmra.mrb[0].mxu0 %v1646
      %v1770 = vpop.f32.mrb[0].mxu0
      %v1771 = vadd.f32 0.0, %v1770
      %v1772 = vpop.f32.mrb[0].mxu0
      %v1773 = vpop.f32.mrb[0].mxu0
      %v1774 = vadd.f32 0.0, %v1773
      %v1775 = vpop.f32.mrb[0].mxu0
      %1776 = vdwg.mxu0
      %v1777 = vadd.f32 %v1177, %v1715
      %v1778 = vadd.f32 %v1180, %v1718
      %v1779 = vadd.f32 %v1185, %v1723
      %v1780 = vadd.f32 %v1188, %v1726
      %v1781 = vadd.f32 %v1193, %v1731
      %v1782 = vadd.f32 %v1196, %v1734
      %v1783 = vadd.f32 %v1201, %v1739
      %v1784 = vadd.f32 %v1204, %v1742
      %v1785 = vadd.f32 %v1209, %v1747
      %v1786 = vadd.f32 %v1212, %v1750
      %v1787 = vadd.f32 %v1217, %v1755
      %v1788 = vadd.f32 %v1220, %v1758
      %v1789 = vadd.f32 %v1225, %v1763
      %v1790 = vadd.f32 %v1228, %v1766
      %v1791 = vadd.f32 %v1233, %v1771
      %v1792 = vadd.f32 %v1236, %v1774
      %v1793 = vld [vmem:[%s2] sm:$0x1]
      %v1795 = vlaneseq
      %v1796 = vshrl.u32 %v1795, 7
      %v1797 = vsub.s32 0, %v1796
      %v1798 = vrot.slane %v1793, %v1797
      %v1800 = vadd.f32 %v1568, %v1798
      %v1801 = vadd.f32 %v1569, %v1798
      %v1802 = vadd.f32 %v1570, %v1798
      %v1803 = vadd.f32 %v1571, %v1798
      %v1804 = vadd.f32 %v1572, %v1798
      %v1805 = vadd.f32 %v1573, %v1798
      %v1806 = vadd.f32 %v1574, %v1798
      %v1807 = vadd.f32 %v1575, %v1798
      %v1808 = vadd.f32 %v1576, %v1798
      %v1809 = vadd.f32 %v1577, %v1798
      %v1810 = vadd.f32 %v1578, %v1798
      %v1811 = vadd.f32 %v1579, %v1798
      %v1812 = vadd.f32 %v1580, %v1798
      %v1813 = vadd.f32 %v1581, %v1798
      %v1814 = vadd.f32 %v1582, %v1798
      %v1815 = vadd.f32 %v1583, %v1798
      %v1816 = vmax.f32 %v1800, 0.0
      %v1817 = vmax.f32 %v1801, 0.0
      %v1818 = vmax.f32 %v1802, 0.0
      %v1819 = vmax.f32 %v1803, 0.0
      %v1820 = vmax.f32 %v1804, 0.0
      %v1821 = vmax.f32 %v1805, 0.0
      %v1822 = vmax.f32 %v1806, 0.0
      %v1823 = vmax.f32 %v1807, 0.0
      %v1824 = vmax.f32 %v1808, 0.0
      %v1825 = vmax.f32 %v1809, 0.0
      %v1826 = vmax.f32 %v1810, 0.0
      %v1827 = vmax.f32 %v1811, 0.0
      %v1828 = vmax.f32 %v1812, 0.0
      %v1829 = vmax.f32 %v1813, 0.0
      %v1830 = vmax.f32 %v1814, 0.0
      %v1831 = vmax.f32 %v1815, 0.0
      %v1832 = vadd.f32 %v1777, %v1798
      %v1833 = vadd.f32 %v1778, %v1798
      %v1834 = vadd.f32 %v1779, %v1798
      %v1835 = vadd.f32 %v1780, %v1798
      %v1836 = vadd.f32 %v1781, %v1798
      %v1837 = vadd.f32 %v1782, %v1798
      %v1838 = vadd.f32 %v1783, %v1798
      %v1839 = vadd.f32 %v1784, %v1798
      %v1840 = vadd.f32 %v1785, %v1798
      %v1841 = vadd.f32 %v1786, %v1798
      %v1842 = vadd.f32 %v1787, %v1798
      %v1843 = vadd.f32 %v1788, %v1798
      %v1844 = vadd.f32 %v1789, %v1798
      %v1845 = vadd.f32 %v1790, %v1798
      %v1846 = vadd.f32 %v1791, %v1798
      %v1847 = vadd.f32 %v1792, %v1798
      %v1848 = vmax.f32 %v1832, 0.0
      %v1849 = vmax.f32 %v1833, 0.0
      %v1850 = vmax.f32 %v1834, 0.0
      %v1851 = vmax.f32 %v1835, 0.0
      %v1852 = vmax.f32 %v1836, 0.0
      %v1853 = vmax.f32 %v1837, 0.0
      %v1854 = vmax.f32 %v1838, 0.0
      %v1855 = vmax.f32 %v1839, 0.0
      %v1856 = vmax.f32 %v1840, 0.0
      %v1857 = vmax.f32 %v1841, 0.0
      %v1858 = vmax.f32 %v1842, 0.0
      %v1859 = vmax.f32 %v1843, 0.0
      %v1860 = vmax.f32 %v1844, 0.0
      %v1861 = vmax.f32 %v1845, 0.0
      %v1862 = vmax.f32 %v1846, 0.0
      %v1863 = vmax.f32 %v1847, 0.0
      %v1864 = vmax.f32 %v1816, %v1848
      %v1865 = vmax.f32 %v1817, %v1849
      %v1866 = vmax.f32 %v1818, %v1850
      %v1867 = vmax.f32 %v1819, %v1851
      %v1868 = vmax.f32 %v1820, %v1852
      %v1869 = vmax.f32 %v1821, %v1853
      %v1870 = vmax.f32 %v1822, %v1854
      %v1871 = vmax.f32 %v1823, %v1855
      %v1872 = vmax.f32 %v1824, %v1856
      %v1873 = vmax.f32 %v1825, %v1857
      %v1874 = vmax.f32 %v1826, %v1858
      %v1875 = vmax.f32 %v1827, %v1859
      %v1876 = vmax.f32 %v1828, %v1860
      %v1877 = vmax.f32 %v1829, %v1861
      %v1878 = vmax.f32 %v1830, %v1862
      %v1879 = vmax.f32 %v1831, %v1863
      %v1880 = vmax.f32 %v1864, %v1866
      %v1881 = vmax.f32 %v1865, %v1867
      %v1882 = vpack.c.bf16 %v1881, %v1880
      %v1884 = vunpack.c.l.b16 %v1882
      %v1885 = vunpack.c.h.b16 %v1882
      %v1886 = vpack.c.b16 %v1884, %v1884
      %v1887 = vpack.c.b16 %v1885, %v1885
      %vm1890 = vcmask 519168
      %1891 = vst.msk [vmem:[%s192] sm:$0xf] %vm1890, %v1886
      %1892 = vst.msk [vmem:[%s192 + $0x4] sm:$0xf] %vm1890, %v1887
      %v1893 = vmax.f32 %v1868, %v1870
      %v1894 = vmax.f32 %v1869, %v1871
      %v1895 = vpack.c.bf16 %v1894, %v1893
      %v1897 = vunpack.c.l.b16 %v1895
      %v1898 = vunpack.c.h.b16 %v1895
      %v1899 = vpack.c.b16 %v1897, %v1897
      %v1900 = vpack.c.b16 %v1898, %v1898
      %1903 = vst.msk [vmem:[%s192 + $0x8] sm:$0xf] %vm1890, %v1899
      %1904 = vst.msk [vmem:[%s192 + $0xc] sm:$0xf] %vm1890, %v1900
      %v1905 = vmax.f32 %v1872, %v1874
      %v1906 = vmax.f32 %v1873, %v1875
      %v1907 = vpack.c.bf16 %v1906, %v1905
      %v1909 = vunpack.c.l.b16 %v1907
      %v1910 = vunpack.c.h.b16 %v1907
      %v1911 = vpack.c.b16 %v1909, %v1909
      %v1912 = vpack.c.b16 %v1910, %v1910
      %1915 = vst.msk [vmem:[%s192 + $0x10] sm:$0xf] %vm1890, %v1911
      %1916 = vst.msk [vmem:[%s192 + $0x14] sm:$0xf] %vm1890, %v1912
      %v1917 = vmax.f32 %v1876, %v1878
      %v1918 = vmax.f32 %v1877, %v1879
      %v1919 = vpack.c.bf16 %v1918, %v1917
      %v1921 = vunpack.c.l.b16 %v1919
      %v1922 = vunpack.c.h.b16 %v1919
      %v1923 = vpack.c.b16 %v1921, %v1921
      %v1924 = vpack.c.b16 %v1922, %v1922
      %1927 = vst.msk [vmem:[%s192 + $0x18] sm:$0xf] %vm1890, %v1923
      %1928 = vst.msk [vmem:[%s192 + $0x1c] sm:$0xf] %vm1890, %v1924
      %s1929 = smul.u32 8, %s19
      %p1930 = scmp.lt.s32.totalorder %s18, 1
      %s1931 = scalar_select %p1930, %s18, 1
      %p1932 = scmp.lt.s32.totalorder %s1929, 31
      %s1933 = scalar_select %p1932, %s1929, 31
      %s1934 = smul.addr %s1931, 32
      %s1935 = sadd.s32 %s1933, %s1934
      %s1936 = smul.addr %s1935, 4
      %s1937 = scalar_lea.vmem %s3, %s1936
      // Predicated region
      $region33: #{apricot_cnn1_forward.8} parent=31 // pred_check
        %p1938 = pneg %p114
      $region34: #{apricot_cnn1_forward.8} parent=31 // pred_check_branch
        %1940 = sbr.rel (%p1938) target = $region36
      $region35: #{apricot_cnn1_forward.8} parent=31 // pred_region
        %s1941 = smul.u32 8, %s19
      $region36: #{apricot_cnn1_forward.8} parent=31 // pred_fallthru
        _
    $region32: #{apricot_cnn1_forward.8} parent=5 // pred_fallthru
      _
    %p1942 = scmp.le.s32.totalorder 2, %s9
    // Predicated region
    $region37: #{apricot_cnn1_forward.8} parent=5 // pred_check
      %p1943 = pneg %p1942
    $region38: #{apricot_cnn1_forward.8} parent=5 // pred_check_branch
      %1945 = sbr.rel (%p1943) target = $region40
    $region39: #{apricot_cnn1_forward.8} parent=5 // pred_region
      %s1946 = ssub.s32 %s9, 2
      // Predicated region
      $region41: #{apricot_cnn1_forward.8} parent=39 // pred_check
        %p1947 = pneg %p120
      $region42: #{apricot_cnn1_forward.8} parent=39 // pred_check_branch
        %1949 = sbr.rel (%p1947) target = $region44
      $region43: #{apricot_cnn1_forward.8} parent=39 // pred_region
        %s1950 = smul.u32 8, %s21
        %p1951 = scmp.lt.s32.totalorder %s20, 1
        %s1952 = scalar_select %p1951, %s20, 1
        %p1953 = scmp.lt.s32.totalorder %s1950, 31
        %s1954 = scalar_select %p1953, %s1950, 31
        %s1955 = smul.addr %s1952, 32
        %s1956 = sadd.s32 %s1954, %s1955
        %s1957 = smul.addr %s1956, 4
        %s1958 = scalar_lea.vmem %s3, %s1957
      $region44: #{apricot_cnn1_forward.8} parent=39 // pred_fallthru
        _
    $region40: #{apricot_cnn1_forward.8} parent=5 // pred_fallthru
      _
  $region6: #{apricot_cnn1_forward.8} parent=0 // loop_footer
    %s13 = sadd.s32 1, %s9
  $region7: #{apricot_cnn1_forward.8} parent=0 // loop_footer_branch
    %8 = sbr.rel target = $region3
  $region8: #{apricot_cnn1_forward.8} parent=0 // loop_exit
    _

// kernel: apricot_cnn1_forward.9
$region0: #{apricot_cnn1_forward.9}
  #allocation0 [shape = 'u32[]', space=smem, size = 0x4, offset = 0x4, fixed_abs, tag = 'smem constant byte address 0x4 - core index']
  #allocation1 [shape = 'u32[144,128]{1,0:T(1,128)}', space=vmem, size = 0x12000, scoped, tag = 'internal scratch']
  %s0 = inlined_call_operand.vmem [shape: bf16[2,18,16,192], index: 0, kind: input, shape index: {}]
  %s1 = inlined_call_operand.vmem [shape: bf16[3,192,128], index: 1, kind: input, shape index: {}]
  %s2 = inlined_call_operand.vmem [shape: f32[1,128], index: 2, kind: input, shape index: {}]
  %s3 = inlined_call_operand.vmem [shape: bf16[2,256,128], index: 3, kind: output, shape index: {}]
  %s4 = sld [smem:[#allocation0]]
  $region45: #{apricot_cnn1_forward.9} parent=0
    _
  %s6 = ssub.s32 1, %s4
  %s7 = scalar_select 0, %s6, %s4
  loop: start=0, step=1, limit=6
  $region2: #{apricot_cnn1_forward.9} parent=0 // loop_pre_header
    _
  $region3: #{apricot_cnn1_forward.9} parent=0 // loop_header
    %s9 = sphi 0, %s13
    %p10 = scmp.ge.s32.totalorder %s9, 6
    %s16 = sphi 0, %s28
    %s17 = sphi 0, %s24
    %s18 = sphi 0, %s16
    %s19 = sphi 0, %s17
    %s20 = sphi 0, %s18
    %s21 = sphi 0, %s19
    %s31 = sphi 0, %s33
    %s34 = sphi 0, %s31
    %s35 = sphi 0, %s34
    %s51 = sphi 0, %s35
    %s55 = sphi 0, %s55
    %s57 = sphi 0, %s55
    %s58 = sphi 0, %s57
    %s72 = sphi 0, %s58
    %s76 = sphi 0, %s76
    %s78 = sphi 0, %s76
    %s79 = sphi 0, %s78
    %s93 = sphi 0, %s79
    %s101 = sphi 0, %s103
    %s104 = sphi 0, %s101
    %s105 = sphi 0, %s104
    %s121 = sphi 0, %s105
  $region4: #{apricot_cnn1_forward.9} parent=0 // loop_header_branch
    %12 = sbr.rel (%p10) target = $region8
  $region5: #{apricot_cnn1_forward.9} parent=0 // loop_body
    %s14 = ssub.s32 %s9, 1
    %s15 = ssub.s32 %s9, 2
    %s22 = sadd.s32 1, %s17
    %p23 = scmp.ge.s32.totalorder %s22, 2
    %s24 = scalar_select %p23, 0, %s22
    %s25 = sadd.s32 1, %s16
    %s26 = scalar_select %p23, %s25, %s16
    %p27 = scmp.ge.s32.totalorder %s26, 2
    %s28 = scalar_select %p27, 0, %s26
    %s29 = ssub.s32 %s16, %s28
    %p30 = scmp.eq.s32.totalorder %s29, 0
    %s32 = sadd.s32 %s31, 1
    %s33 = scalar_select %p30, %s31, %s32
    %p36 = pneg %p30
    %p37 = scmp.eq.s32.totalorder %s9, 3
    %p38 = por %p36, %p37
    %p39 = scmp.ne.s32.totalorder %s31, %s34
    %p40 = scmp.eq.s32.totalorder %s9, 0
    %p41 = por %p39, %p40
    %p42 = scmp.ne.s32.totalorder %s31, %s34
    %p43 = scmp.eq.s32.totalorder %s14, 3
    %p44 = por %p42, %p43
    %p45 = scmp.ne.s32.totalorder %s34, %s35
    %p46 = scmp.eq.s32.totalorder %s14, 0
    %p47 = por %p45, %p46
    %p48 = scmp.ne.s32.totalorder %s34, %s35
    %p49 = scmp.eq.s32.totalorder %s15, 3
    %p50 = por %p48, %p49
    %p52 = scmp.ne.s32.totalorder %s35, %s51
    %p53 = scmp.eq.s32.totalorder %s15, 0
    %p54 = por %p52, %p53
    %s56 = sadd.s32 %s55, 1
    %p59 = scmp.eq.s32.totalorder %s9, 3
    %p60 = scmp.ne.s32.totalorder %s55, %s57
    %p61 = scmp.eq.s32.totalorder %s9, 0
    %p62 = por %p60, %p61
    %p63 = scmp.ne.s32.totalorder %s55, %s57
    %p64 = scmp.eq.s32.totalorder %s14, 3
    %p65 = por %p63, %p64
    %p66 = scmp.ne.s32.totalorder %s57, %s58
    %p67 = scmp.eq.s32.totalorder %s14, 0
    %p68 = por %p66, %p67
    %p69 = scmp.ne.s32.totalorder %s57, %s58
    %p70 = scmp.eq.s32.totalorder %s15, 3
    %p71 = por %p69, %p70
    %p73 = scmp.ne.s32.totalorder %s58, %s72
    %p74 = scmp.eq.s32.totalorder %s15, 0
    %p75 = por %p73, %p74
    %s77 = sadd.s32 %s76, 1
    %p80 = scmp.eq.s32.totalorder %s9, 3
    %p81 = scmp.ne.s32.totalorder %s76, %s78
    %p82 = scmp.eq.s32.totalorder %s9, 0
    %p83 = por %p81, %p82
    %p84 = scmp.ne.s32.totalorder %s76, %s78
    %p85 = scmp.eq.s32.totalorder %s14, 3
    %p86 = por %p84, %p85
    %p87 = scmp.ne.s32.totalorder %s78, %s79
    %p88 = scmp.eq.s32.totalorder %s14, 0
    %p89 = por %p87, %p88
    %p90 = scmp.ne.s32.totalorder %s78, %s79
    %p91 = scmp.eq.s32.totalorder %s15, 3
    %p92 = por %p90, %p91
    %p94 = scmp.ne.s32.totalorder %s79, %s93
    %p95 = scmp.eq.s32.totalorder %s15, 0
    %p96 = por %p94, %p95
    %s97 = ssub.s32 %s16, %s28
    %s98 = ssub.s32 %s17, %s24
    %s99 = sor.u32 %s97, %s98
    %p100 = scmp.eq.s32.totalorder %s99, 0
    %s102 = sadd.s32 %s101, 1
    %s103 = scalar_select %p100, %s101, %s102
    %p106 = pneg %p100
    %p107 = scmp.eq.s32.totalorder %s9, 3
    %p108 = por %p106, %p107
    %p109 = scmp.ne.s32.totalorder %s101, %s104
    %p110 = scmp.eq.s32.totalorder %s9, 0
    %p111 = por %p109, %p110
    %p112 = scmp.ne.s32.totalorder %s101, %s104
    %p113 = scmp.eq.s32.totalorder %s14, 3
    %p114 = por %p112, %p113
    %p115 = scmp.ne.s32.totalorder %s104, %s105
    %p116 = scmp.eq.s32.totalorder %s14, 0
    %p117 = por %p115, %p116
    %p118 = scmp.ne.s32.totalorder %s104, %s105
    %p119 = scmp.eq.s32.totalorder %s15, 3
    %p120 = por %p118, %p119
    %p122 = scmp.ne.s32.totalorder %s105, %s121
    %p123 = scmp.eq.s32.totalorder %s15, 0
    %p124 = por %p122, %p123
    %p125 = scmp.le.s32.totalorder 1, %s9
    %p126 = scmp.lt.s32.totalorder %s9, 5
    %p127 = pnand %p125, %p126
    %p128 = pneg %p127
    // Predicated region
    $region9: #{apricot_cnn1_forward.9} parent=5 // pred_check
      _
    $region10: #{apricot_cnn1_forward.9} parent=5 // pred_check_branch
      %130 = sbr.rel (%p127) target = $region12
    $region11: #{apricot_cnn1_forward.9} parent=5 // pred_region
      %s131 = ssub.s32 %s9, 1
      // Predicated region
      $region13: #{apricot_cnn1_forward.9} parent=11 // pred_check
        %p132 = pneg %p68
      $region14: #{apricot_cnn1_forward.9} parent=11 // pred_check_branch
        %134 = sbr.rel (%p132) target = $region16
      $region15: #{apricot_cnn1_forward.9} parent=11 // pred_region
        _
      $region16: #{apricot_cnn1_forward.9} parent=11 // pred_fallthru
        _
      // Predicated region
      $region17: #{apricot_cnn1_forward.9} parent=11 // pred_check
        %p135 = pneg %p89
      $region18: #{apricot_cnn1_forward.9} parent=11 // pred_check_branch
        %137 = sbr.rel (%p135) target = $region20
      $region19: #{apricot_cnn1_forward.9} parent=11 // pred_region
        _
      $region20: #{apricot_cnn1_forward.9} parent=11 // pred_fallthru
        _
    $region12: #{apricot_cnn1_forward.9} parent=5 // pred_fallthru
      _
    %p138 = scmp.lt.s32.totalorder %s9, 4
    // Predicated region
    $region21: #{apricot_cnn1_forward.9} parent=5 // pred_check
      %p139 = pneg %p138
    $region22: #{apricot_cnn1_forward.9} parent=5 // pred_check_branch
      %141 = sbr.rel (%p139) target = $region24
    $region23: #{apricot_cnn1_forward.9} parent=5 // pred_region
      // Predicated region
      $region25: #{apricot_cnn1_forward.9} parent=23 // pred_check
        %p142 = pneg %p41
      $region26: #{apricot_cnn1_forward.9} parent=23 // pred_check_branch
        %144 = sbr.rel (%p142) target = $region28
      $region27: #{apricot_cnn1_forward.9} parent=23 // pred_region
        %p145 = scmp.lt.s32.totalorder %s16, 1
        %s146 = scalar_select %p145, %s16, 1
        %s147 = smul.addr %s146, 72
        %s148 = smul.addr %s147, 4
        %s149 = scalar_lea.vmem %s0, %s148
      $region28: #{apricot_cnn1_forward.9} parent=23 // pred_fallthru
        _
    $region24: #{apricot_cnn1_forward.9} parent=5 // pred_fallthru
      _
    %p150 = scmp.le.s32.totalorder 1, %s9
    %p151 = scmp.lt.s32.totalorder %s9, 5
    %p152 = pnand %p150, %p151
    %p153 = pneg %p152
    // Predicated region
    $region29: #{apricot_cnn1_forward.9} parent=5 // pred_check
      _
    $region30: #{apricot_cnn1_forward.9} parent=5 // pred_check_branch
      %155 = sbr.rel (%p152) target = $region32
    $region31: #{apricot_cnn1_forward.9} parent=5 // pred_region
      %s156 = ssub.s32 %s9, 1
      %p157 = scmp.lt.s32.totalorder %s18, 1
      %s158 = scalar_select %p157, %s18, 1
      %s159 = smul.addr %s158, 72
      %s160 = smul.addr %s159, 4
      %s161 = scalar_lea.vmem %s0, %s160
      %p162 = pneg %p47
      %p163 = pneg %p44
      %p164 = pneg %p68
      %p165 = pneg %p65
      %p166 = pneg %p89
      %p167 = pneg %p86
      %p168 = pneg %p117
      %p169 = pneg %p114
      %s170 = smul.u32 16, %s19
      %p171 = scmp.lt.s32.totalorder %s18, 1
      %s172 = scalar_select %p171, %s18, 1
      %p173 = scmp.lt.s32.totalorder %s170, 31
      %s174 = scalar_select %p173, %s170, 31
      %s175 = smul.addr %s172, 32
      %s176 = sadd.s32 %s174, %s175
      %s177 = smul.addr %s176, 4
      %s178 = scalar_lea.vmem %s3, %s177
      %p179 = scmp.lt.s32.totalorder %s18, 1
      %s180 = scalar_select %p179, %s18, 1
      %s181 = smul.addr %s180, 72
      %s182 = smul.addr %s181, 4
      %s183 = scalar_lea.vmem %s0, %s182
      %s184 = smul.u32 16, %s19
      %p185 = scmp.lt.s32.totalorder %s18, 1
      %s186 = scalar_select %p185, %s18, 1
      %p187 = scmp.lt.s32.totalorder %s184, 31
      %s188 = scalar_select %p187, %s184, 31
      %s189 = smul.addr %s186, 32
      %s190 = sadd.s32 %s188, %s189
      %s191 = smul.addr %s190, 4
      %s192 = scalar_lea.vmem %s3, %s191
      %s193 = smul.u32 16, %s19
      %s195 = smul.u32 %s19, 8
      %s196 = smul.u32 %s195, 4
      %s197 = smul.addr %s196, 4
      %s198 = scalar_lea.vmem %s183, %s197
      %v199 = vld [vmem:[%s198] sm:$0xff]
      %v200 = vld [vmem:[%s198 + $0x8] sm:$0xff]
      %v201 = vld [vmem:[%s198 + $0x10] sm:$0xff]
      %v202 = vld [vmem:[%s198 + $0x18] sm:$0xff]
      %v203 = vld [vmem:[%s198 + $0x20] sm:$0xff]
      %v204 = vld [vmem:[%s198 + $0x28] sm:$0xff]
      %v205 = vld [vmem:[%s198 + $0x30] sm:$0xff]
      %v206 = vld [vmem:[%s198 + $0x38] sm:$0xff]
      %v207 = vld [vmem:[%s198 + $0x40] sm:$0xff]
      %v208 = vld [vmem:[%s198 + $0x48] sm:$0xff]
      %v209 = vld [vmem:[%s198 + $0x50] sm:$0xff]
      %v210 = vld [vmem:[%s198 + $0x58] sm:$0xff]
      %v211 = vld [vmem:[%s198 + $0x60] sm:$0xff]
      %v212 = vld [vmem:[%s198 + $0x68] sm:$0xff]
      %v213 = vld [vmem:[%s198 + $0x70] sm:$0xff]
      %v214 = vld [vmem:[%s198 + $0x78] sm:$0xff]
      %v215 = vld [vmem:[%s1] sm:$0xf]
      %v216 = vld [vmem:[%s1 + $0x4] sm:$0xf]
      %v217 = vld [vmem:[%s1 + $0x8] sm:$0xf]
      %v218 = vld [vmem:[%s1 + $0xc] sm:$0xf]
      %v219 = vld [vmem:[%s1 + $0x10] sm:$0xf]
      %v220 = vld [vmem:[%s1 + $0x14] sm:$0xf]
      %v221 = vld [vmem:[%s1 + $0x18] sm:$0xf]
      %v222 = vld [vmem:[%s1 + $0x1c] sm:$0xf]
      %v223 = vld [vmem:[%s1 + $0x20] sm:$0xf]
      %v224 = vld [vmem:[%s1 + $0x24] sm:$0xf]
      %v225 = vld [vmem:[%s1 + $0x28] sm:$0xf]
      %v226 = vld [vmem:[%s1 + $0x2c] sm:$0xf]
      %v227 = vld [vmem:[%s1 + $0x30] sm:$0xf]
      %v228 = vld [vmem:[%s1 + $0x34] sm:$0xf]
      %v229 = vld [vmem:[%s1 + $0x38] sm:$0xf]
      %v230 = vld [vmem:[%s1 + $0x3c] sm:$0xf]
      %v231 = vld [vmem:[%s1 + $0x40] sm:$0xf]
      %v232 = vld [vmem:[%s1 + $0x44] sm:$0xf]
      %v233 = vld [vmem:[%s1 + $0x48] sm:$0xf]
      %v234 = vld [vmem:[%s1 + $0x4c] sm:$0xf]
      %v235 = vld [vmem:[%s1 + $0x50] sm:$0xf]
      %v236 = vld [vmem:[%s1 + $0x54] sm:$0xf]
      %v237 = vld [vmem:[%s1 + $0x58] sm:$0xf]
      %v238 = vld [vmem:[%s1 + $0x5c] sm:$0xf]
      %s239 = sadd.s32 %s195, 1
      %s240 = smul.u32 %s239, 4
      %s241 = smul.addr %s240, 4
      %s242 = scalar_lea.vmem %s183, %s241
      %v243 = vld [vmem:[%s242] sm:$0xff]
      %v244 = vld [vmem:[%s242 + $0x8] sm:$0xff]
      %v245 = vld [vmem:[%s242 + $0x10] sm:$0xff]
      %v246 = vld [vmem:[%s242 + $0x18] sm:$0xff]
      %v247 = vld [vmem:[%s242 + $0x20] sm:$0xff]
      %v248 = vld [vmem:[%s242 + $0x28] sm:$0xff]
      %v249 = vld [vmem:[%s242 + $0x30] sm:$0xff]
      %v250 = vld [vmem:[%s242 + $0x38] sm:$0xff]
      %v251 = vld [vmem:[%s242 + $0x40] sm:$0xff]
      %v252 = vld [vmem:[%s242 + $0x48] sm:$0xff]
      %v253 = vld [vmem:[%s242 + $0x50] sm:$0xff]
      %v254 = vld [vmem:[%s242 + $0x58] sm:$0xff]
      %v255 = vld [vmem:[%s242 + $0x60] sm:$0xff]
      %v256 = vld [vmem:[%s242 + $0x68] sm:$0xff]
      %v257 = vld [vmem:[%s242 + $0x70] sm:$0xff]
      %v258 = vld [vmem:[%s242 + $0x78] sm:$0xff]
      %s259 = scalar_lea.vmem %s1, 96
      %v260 = vld [vmem:[%s259] sm:$0xf]
      %v261 = vld [vmem:[%s259 + $0x4] sm:$0xf]
      %v262 = vld [vmem:[%s259 + $0x8] sm:$0xf]
      %v263 = vld [vmem:[%s259 + $0xc] sm:$0xf]
      %v264 = vld [vmem:[%s259 + $0x10] sm:$0xf]
      %v265 = vld [vmem:[%s259 + $0x14] sm:$0xf]
      %v266 = vld [vmem:[%s259 + $0x18] sm:$0xf]
      %v267 = vld [vmem:[%s259 + $0x1c] sm:$0xf]
      %v268 = vld [vmem:[%s259 + $0x20] sm:$0xf]
      %v269 = vld [vmem:[%s259 + $0x24] sm:$0xf]
      %v270 = vld [vmem:[%s259 + $0x28] sm:$0xf]
      %v271 = vld [vmem:[%s259 + $0x2c] sm:$0xf]
      %v272 = vld [vmem:[%s259 + $0x30] sm:$0xf]
      %v273 = vld [vmem:[%s259 + $0x34] sm:$0xf]
      %v274 = vld [vmem:[%s259 + $0x38] sm:$0xf]
      %v275 = vld [vmem:[%s259 + $0x3c] sm:$0xf]
      %v276 = vld [vmem:[%s259 + $0x40] sm:$0xf]
      %v277 = vld [vmem:[%s259 + $0x44] sm:$0xf]
      %v278 = vld [vmem:[%s259 + $0x48] sm:$0xf]
      %v279 = vld [vmem:[%s259 + $0x4c] sm:$0xf]
      %v280 = vld [vmem:[%s259 + $0x50] sm:$0xf]
      %v281 = vld [vmem:[%s259 + $0x54] sm:$0xf]
      %v282 = vld [vmem:[%s259 + $0x58] sm:$0xf]
      %v283 = vld [vmem:[%s259 + $0x5c] sm:$0xf]
      %v300 = vunpack.c.l.b16 %v243
      %v301 = vunpack.c.h.b16 %v243
      %v302 = vunpack.c.l.b16 %v244
      %v303 = vunpack.c.h.b16 %v244
      %v304 = vunpack.c.l.b16 %v245
      %v305 = vunpack.c.h.b16 %v245
      %v306 = vunpack.c.l.b16 %v246
      %v307 = vunpack.c.h.b16 %v246
      %v308 = vunpack.c.l.b16 %v247
      %v309 = vunpack.c.h.b16 %v247
      %v310 = vunpack.c.l.b16 %v248
      %v311 = vunpack.c.h.b16 %v248
      %v312 = vunpack.c.l.b16 %v249
      %v313 = vunpack.c.h.b16 %v249
      %v314 = vunpack.c.l.b16 %v250
      %v315 = vunpack.c.h.b16 %v250
      %v316 = vunpack.c.l.b16 %v251
      %v317 = vunpack.c.h.b16 %v251
      %v318 = vunpack.c.l.b16 %v252
      %v319 = vunpack.c.h.b16 %v252
      %v320 = vunpack.c.l.b16 %v253
      %v321 = vunpack.c.h.b16 %v253
      %v322 = vunpack.c.l.b16 %v254
      %v323 = vunpack.c.h.b16 %v254
      %v324 = vunpack.c.l.b16 %v255
      %v325 = vunpack.c.h.b16 %v255
      %v326 = vunpack.c.l.b16 %v256
      %v327 = vunpack.c.h.b16 %v256
      %v328 = vunpack.c.l.b16 %v257
      %v329 = vunpack.c.h.b16 %v257
      %v330 = vunpack.c.l.b16 %v258
      %v331 = vunpack.c.h.b16 %v258
      %v332 = vpack.c.b16 %v302, %v300
      %v333 = vpack.c.b16 %v303, %v301
      %v334 = vpack.c.b16 %v306, %v304
      %v335 = vpack.c.b16 %v307, %v305
      %v336 = vpack.c.b16 %v310, %v308
      %v337 = vpack.c.b16 %v311, %v309
      %v338 = vpack.c.b16 %v314, %v312
      %v339 = vpack.c.b16 %v315, %v313
      %v340 = vpack.c.b16 %v318, %v316
      %v341 = vpack.c.b16 %v319, %v317
      %v342 = vpack.c.b16 %v322, %v320
      %v343 = vpack.c.b16 %v323, %v321
      %v344 = vpack.c.b16 %v326, %v324
      %v345 = vpack.c.b16 %v327, %v325
      %v346 = vpack.c.b16 %v330, %v328
      %v347 = vpack.c.b16 %v331, %v329
      %v380 = vunpack.c.l.b16 %v260
      %v381 = vunpack.c.l.b16 %v261
      %v382 = vunpack.c.l.b16 %v262
      %v383 = vunpack.c.l.b16 %v263
      %v384 = vunpack.c.l.b16 %v264
      %v385 = vunpack.c.l.b16 %v265
      %v386 = vunpack.c.l.b16 %v266
      %v387 = vunpack.c.l.b16 %v267
      %v388 = vunpack.c.l.b16 %v268
      %v389 = vunpack.c.l.b16 %v269
      %v390 = vunpack.c.l.b16 %v270
      %v391 = vunpack.c.l.b16 %v271
      %v392 = vunpack.c.l.b16 %v272
      %v393 = vunpack.c.l.b16 %v273
      %v394 = vunpack.c.l.b16 %v274
      %v395 = vunpack.c.l.b16 %v275
      %v396 = vunpack.c.l.b16 %v276
      %v397 = vunpack.c.l.b16 %v277
      %v398 = vunpack.c.l.b16 %v278
      %v399 = vunpack.c.l.b16 %v279
      %v400 = vunpack.c.l.b16 %v280
      %v401 = vunpack.c.l.b16 %v281
      %v402 = vunpack.c.l.b16 %v282
      %v403 = vunpack.c.l.b16 %v283
      %v404 = vpack.c.b16 %v381, %v380
      %v405 = vpack.c.b16 %v383, %v382
      %v406 = vpack.c.b16 %v385, %v384
      %v407 = vpack.c.b16 %v387, %v386
      %v408 = vpack.c.b16 %v389, %v388
      %v409 = vpack.c.b16 %v391, %v390
      %v410 = vpack.c.b16 %v393, %v392
      %v411 = vpack.c.b16 %v395, %v394
      %v412 = vpack.c.b16 %v397, %v396
      %v413 = vpack.c.b16 %v399, %v398
      %v414 = vpack.c.b16 %v401, %v400
      %v415 = vpack.c.b16 %v403, %v402
      %vm428 = vcmask 523264
      %v430 = vsel %vm428, %v333, 0
      %v433 = vsel %vm428, %v335, 0
      %v436 = vsel %vm428, %v337, 0
      %v439 = vsel %vm428, %v339, 0
      %v442 = vsel %vm428, %v341, 0
      %v445 = vsel %vm428, %v343, 0
      %v448 = vsel %vm428, %v345, 0
      %v451 = vsel %vm428, %v347, 0
      %453 = vmatprep.subr.bf16.mxu0 0
      %454 = vmatpush1.bf16.msra.mxu0 %v404
      %455 = vmatprep.subr.bf16.mxu0 0
      %456 = vmatpush1.bf16.msra.mxu0 %v405
      %457 = vmatprep.subr.bf16.mxu0 0
      %458 = vmatpush1.bf16.msra.mxu0 %v406
      %459 = vmatprep.subr.bf16.mxu0 0
      %460 = vmatpush1.bf16.msra.mxu0 %v407
      %461 = vmatprep.subr.bf16.mxu0 0
      %462 = vmatpush1.bf16.msra.mxu0 %v408
      %463 = vmatprep.subr.bf16.mxu0 0
      %464 = vmatpush1.bf16.msra.mxu0 %v409
      %465 = vmatprep.subr.bf16.mxu0 0
      %466 = vmatpush1.bf16.msra.mxu0 %v410
      %467 = vmatprep.subr.bf16.mxu0 0
      %468 = vmatpush1.bf16.msra.mxu0 %v411
      %469 = vmatprep.subr.bf16.mxu0 0
      %470 = vmatpush1.bf16.msra.mxu0 %v412
      %471 = vmatprep.subr.bf16.mxu0 0
      %472 = vmatpush1.bf16.msra.mxu0 %v413
      %473 = vmatprep.subr.bf16.mxu0 0
      %474 = vmatpush1.bf16.msra.mxu0 %v414
      %475 = vmatprep.subr.bf16.mxu0 0
      %476 = vmatpush1.bf16.msra.mxu0 %v415
      %477 = vmatprep.subr.bf16.mxu0 0
      %478 = vmatpush1.bf16.msra.mxu0 0
      %479 = vmatprep.subr.bf16.mxu0 0
      %480 = vmatpush1.bf16.msra.mxu0 0
      %481 = vmatprep.subr.bf16.mxu0 0
      %482 = vmatpush1.bf16.msra.mxu0 0
      %483 = vmatprep.subr.bf16.mxu0 0
      %484 = vmatpush1.bf16.msra.mxu0 0
      %485 = vmatprep.mubr.bf16.mxu0 %v430
      %486 = vmatmul.mubr.bf16.gmra.mrb[0].mxu0 %v332
      %v487 = vpop.f32.mrb[0].mxu0
      %v488 = vadd.f32 0.0, %v487
      %v489 = vpop.f32.mrb[0].mxu0
      %v490 = vpop.f32.mrb[0].mxu0
      %v491 = vadd.f32 0.0, %v490
      %v492 = vpop.f32.mrb[0].mxu0
      %493 = vmatprep.mubr.bf16.mxu0 %v433
      %494 = vmatmul.mubr.bf16.gmra.mrb[0].mxu0 %v334
      %v495 = vpop.f32.mrb[0].mxu0
      %v496 = vadd.f32 0.0, %v495
      %v497 = vpop.f32.mrb[0].mxu0
      %v498 = vpop.f32.mrb[0].mxu0
      %v499 = vadd.f32 0.0, %v498
      %v500 = vpop.f32.mrb[0].mxu0
      %501 = vmatprep.mubr.bf16.mxu0 %v436
      %502 = vmatmul.mubr.bf16.gmra.mrb[0].mxu0 %v336
      %v503 = vpop.f32.mrb[0].mxu0
      %v504 = vadd.f32 0.0, %v503
      %v505 = vpop.f32.mrb[0].mxu0
      %v506 = vpop.f32.mrb[0].mxu0
      %v507 = vadd.f32 0.0, %v506
      %v508 = vpop.f32.mrb[0].mxu0
      %509 = vmatprep.mubr.bf16.mxu0 %v439
      %510 = vmatmul.mubr.bf16.gmra.mrb[0].mxu0 %v338
      %v511 = vpop.f32.mrb[0].mxu0
      %v512 = vadd.f32 0.0, %v511
      %v513 = vpop.f32.mrb[0].mxu0
      %v514 = vpop.f32.mrb[0].mxu0
      %v515 = vadd.f32 0.0, %v514
      %v516 = vpop.f32.mrb[0].mxu0
      %517 = vmatprep.mubr.bf16.mxu0 %v442
      %518 = vmatmul.mubr.bf16.gmra.mrb[0].mxu0 %v340
      %v519 = vpop.f32.mrb[0].mxu0
      %v520 = vadd.f32 0.0, %v519
      %v521 = vpop.f32.mrb[0].mxu0
      %v522 = vpop.f32.mrb[0].mxu0
      %v523 = vadd.f32 0.0, %v522
      %v524 = vpop.f32.mrb[0].mxu0
      %525 = vmatprep.mubr.bf16.mxu0 %v445
      %526 = vmatmul.mubr.bf16.gmra.mrb[0].mxu0 %v342
      %v527 = vpop.f32.mrb[0].mxu0
      %v528 = vadd.f32 0.0, %v527
      %v529 = vpop.f32.mrb[0].mxu0
      %v530 = vpop.f32.mrb[0].mxu0
      %v531 = vadd.f32 0.0, %v530
      %v532 = vpop.f32.mrb[0].mxu0
      %533 = vmatprep.mubr.bf16.mxu0 %v448
      %534 = vmatmul.mubr.bf16.gmra.mrb[0].mxu0 %v344
      %v535 = vpop.f32.mrb[0].mxu0
      %v536 = vadd.f32 0.0, %v535
      %v537 = vpop.f32.mrb[0].mxu0
      %v538 = vpop.f32.mrb[0].mxu0
      %v539 = vadd.f32 0.0, %v538
      %v540 = vpop.f32.mrb[0].mxu0
      %541 = vmatprep.mubr.bf16.mxu0 %v451
      %542 = vmatmul.mubr.bf16.gmra.mrb[0].mxu0 %v346
      %v543 = vpop.f32.mrb[0].mxu0
      %v544 = vadd.f32 0.0, %v543
      %v545 = vpop.f32.mrb[0].mxu0
      %v546 = vpop.f32.mrb[0].mxu0
      %v547 = vadd.f32 0.0, %v546
      %v548 = vpop.f32.mrb[0].mxu0
      %549 = vdwg.mxu0
      %v566 = vunpack.c.l.b16 %v199
      %v567 = vunpack.c.h.b16 %v199
      %v568 = vunpack.c.l.b16 %v200
      %v569 = vunpack.c.h.b16 %v200
      %v570 = vunpack.c.l.b16 %v201
      %v571 = vunpack.c.h.b16 %v201
      %v572 = vunpack.c.l.b16 %v202
      %v573 = vunpack.c.h.b16 %v202
      %v574 = vunpack.c.l.b16 %v203
      %v575 = vunpack.c.h.b16 %v203
      %v576 = vunpack.c.l.b16 %v204
      %v577 = vunpack.c.h.b16 %v204
      %v578 = vunpack.c.l.b16 %v205
      %v579 = vunpack.c.h.b16 %v205
      %v580 = vunpack.c.l.b16 %v206
      %v581 = vunpack.c.h.b16 %v206
      %v582 = vunpack.c.l.b16 %v207
      %v583 = vunpack.c.h.b16 %v207
      %v584 = vunpack.c.l.b16 %v208
      %v585 = vunpack.c.h.b16 %v208
      %v586 = vunpack.c.l.b16 %v209
      %v587 = vunpack.c.h.b16 %v209
      %v588 = vunpack.c.l.b16 %v210
      %v589 = vunpack.c.h.b16 %v210
      %v590 = vunpack.c.l.b16 %v211
      %v591 = vunpack.c.h.b16 %v211
      %v592 = vunpack.c.l.b16 %v212
      %v593 = vunpack.c.h.b16 %v212
      %v594 = vunpack.c.l.b16 %v213
      %v595 = vunpack.c.h.b16 %v213
      %v596 = vunpack.c.l.b16 %v214
      %v597 = vunpack.c.h.b16 %v214
      %v598 = vpack.c.b16 %v568, %v566
      %v599 = vpack.c.b16 %v569, %v567
      %v600 = vpack.c.b16 %v572, %v570
      %v601 = vpack.c.b16 %v573, %v571
      %v602 = vpack.c.b16 %v576, %v574
      %v603 = vpack.c.b16 %v577, %v575
      %v604 = vpack.c.b16 %v580, %v578
      %v605 = vpack.c.b16 %v581, %v579
      %v606 = vpack.c.b16 %v584, %v582
      %v607 = vpack.c.b16 %v585, %v583
      %v608 = vpack.c.b16 %v588, %v586
      %v609 = vpack.c.b16 %v589, %v587
      %v610 = vpack.c.b16 %v592, %v590
      %v611 = vpack.c.b16 %v593, %v591
      %v612 = vpack.c.b16 %v596, %v594
      %v613 = vpack.c.b16 %v597, %v595
      %v646 = vunpack.c.l.b16 %v215
      %v647 = vunpack.c.l.b16 %v216
      %v648 = vunpack.c.l.b16 %v217
      %v649 = vunpack.c.l.b16 %v218
      %v650 = vunpack.c.l.b16 %v219
      %v651 = vunpack.c.l.b16 %v220
      %v652 = vunpack.c.l.b16 %v221
      %v653 = vunpack.c.l.b16 %v222
      %v654 = vunpack.c.l.b16 %v223
      %v655 = vunpack.c.l.b16 %v224
      %v656 = vunpack.c.l.b16 %v225
      %v657 = vunpack.c.l.b16 %v226
      %v658 = vunpack.c.l.b16 %v227
      %v659 = vunpack.c.l.b16 %v228
      %v660 = vunpack.c.l.b16 %v229
      %v661 = vunpack.c.l.b16 %v230
      %v662 = vunpack.c.l.b16 %v231
      %v663 = vunpack.c.l.b16 %v232
      %v664 = vunpack.c.l.b16 %v233
      %v665 = vunpack.c.l.b16 %v234
      %v666 = vunpack.c.l.b16 %v235
      %v667 = vunpack.c.l.b16 %v236
      %v668 = vunpack.c.l.b16 %v237
      %v669 = vunpack.c.l.b16 %v238
      %v670 = vpack.c.b16 %v647, %v646
      %v671 = vpack.c.b16 %v649, %v648
      %v672 = vpack.c.b16 %v651, %v650
      %v673 = vpack.c.b16 %v653, %v652
      %v674 = vpack.c.b16 %v655, %v654
      %v675 = vpack.c.b16 %v657, %v656
      %v676 = vpack.c.b16 %v659, %v658
      %v677 = vpack.c.b16 %v661, %v660
      %v678 = vpack.c.b16 %v663, %v662
      %v679 = vpack.c.b16 %v665, %v664
      %v680 = vpack.c.b16 %v667, %v666
      %v681 = vpack.c.b16 %v669, %v668
      %v695 = vsel %vm428, %v599, 0
      %v698 = vsel %vm428, %v601, 0
      %v701 = vsel %vm428, %v603, 0
      %v704 = vsel %vm428, %v605, 0
      %v707 = vsel %vm428, %v607, 0
      %v710 = vsel %vm428, %v609, 0
      %v713 = vsel %vm428, %v611, 0
      %v716 = vsel %vm428, %v613, 0
      %718 = vmatprep.subr.bf16.mxu0 0
      %719 = vmatpush1.bf16.msra.mxu0 %v670
      %720 = vmatprep.subr.bf16.mxu0 0
      %721 = vmatpush1.bf16.msra.mxu0 %v671
      %722 = vmatprep.subr.bf16.mxu0 0
      %723 = vmatpush1.bf16.msra.mxu0 %v672
      %724 = vmatprep.subr.bf16.mxu0 0
      %725 = vmatpush1.bf16.msra.mxu0 %v673
      %726 = vmatprep.subr.bf16.mxu0 0
      %727 = vmatpush1.bf16.msra.mxu0 %v674
      %728 = vmatprep.subr.bf16.mxu0 0
      %729 = vmatpush1.bf16.msra.mxu0 %v675
      %730 = vmatprep.subr.bf16.mxu0 0
      %731 = vmatpush1.bf16.msra.mxu0 %v676
      %732 = vmatprep.subr.bf16.mxu0 0
      %733 = vmatpush1.bf16.msra.mxu0 %v677
      %734 = vmatprep.subr.bf16.mxu0 0
      %735 = vmatpush1.bf16.msra.mxu0 %v678
      %736 = vmatprep.subr.bf16.mxu0 0
      %737 = vmatpush1.bf16.msra.mxu0 %v679
      %738 = vmatprep.subr.bf16.mxu0 0
      %739 = vmatpush1.bf16.msra.mxu0 %v680
      %740 = vmatprep.subr.bf16.mxu0 0
      %741 = vmatpush1.bf16.msra.mxu0 %v681
      %742 = vmatprep.subr.bf16.mxu0 0
      %743 = vmatpush1.bf16.msra.mxu0 0
      %744 = vmatprep.subr.bf16.mxu0 0
      %745 = vmatpush1.bf16.msra.mxu0 0
      %746 = vmatprep.subr.bf16.mxu0 0
      %747 = vmatpush1.bf16.msra.mxu0 0
      %748 = vmatprep.subr.bf16.mxu0 0
      %749 = vmatpush1.bf16.msra.mxu0 0
      %750 = vmatprep.mubr.bf16.mxu0 %v695
      %751 = vmatmul.mubr.bf16.gmra.mrb[0].mxu0 %v598
      %v752 = vpop.f32.mrb[0].mxu0
      %v753 = vadd.f32 %v488, %v752
      %v754 = vpop.f32.mrb[0].mxu0
      %v755 = vpop.f32.mrb[0].mxu0
      %v756 = vadd.f32 %v491, %v755
      %v757 = vpop.f32.mrb[0].mxu0
      %758 = vmatprep.mubr.bf16.mxu0 %v698
      %759 = vmatmul.mubr.bf16.gmra.mrb[0].mxu0 %v600
      %v760 = vpop.f32.mrb[0].mxu0
      %v761 = vadd.f32 %v496, %v760
      %v762 = vpop.f32.mrb[0].mxu0
      %v763 = vpop.f32.mrb[0].mxu0
      %v764 = vadd.f32 %v499, %v763
      %v765 = vpop.f32.mrb[0].mxu0
      %766 = vmatprep.mubr.bf16.mxu0 %v701
      %767 = vmatmul.mubr.bf16.gmra.mrb[0].mxu0 %v602
      %v768 = vpop.f32.mrb[0].mxu0
      %v769 = vadd.f32 %v504, %v768
      %v770 = vpop.f32.mrb[0].mxu0
      %v771 = vpop.f32.mrb[0].mxu0
      %v772 = vadd.f32 %v507, %v771
      %v773 = vpop.f32.mrb[0].mxu0
      %774 = vmatprep.mubr.bf16.mxu0 %v704
      %775 = vmatmul.mubr.bf16.gmra.mrb[0].mxu0 %v604
      %v776 = vpop.f32.mrb[0].mxu0
      %v777 = vadd.f32 %v512, %v776
      %v778 = vpop.f32.mrb[0].mxu0
      %v779 = vpop.f32.mrb[0].mxu0
      %v780 = vadd.f32 %v515, %v779
      %v781 = vpop.f32.mrb[0].mxu0
      %782 = vmatprep.mubr.bf16.mxu0 %v707
      %783 = vmatmul.mubr.bf16.gmra.mrb[0].mxu0 %v606
      %v784 = vpop.f32.mrb[0].mxu0
      %v785 = vadd.f32 %v520, %v784
      %v786 = vpop.f32.mrb[0].mxu0
      %v787 = vpop.f32.mrb[0].mxu0
      %v788 = vadd.f32 %v523, %v787
      %v789 = vpop.f32.mrb[0].mxu0
      %790 = vmatprep.mubr.bf16.mxu0 %v710
      %791 = vmatmul.mubr.bf16.gmra.mrb[0].mxu0 %v608
      %v792 = vpop.f32.mrb[0].mxu0
      %v793 = vadd.f32 %v528, %v792
      %v794 = vpop.f32.mrb[0].mxu0
      %v795 = vpop.f32.mrb[0].mxu0
      %v796 = vadd.f32 %v531, %v795
      %v797 = vpop.f32.mrb[0].mxu0
      %798 = vmatprep.mubr.bf16.mxu0 %v713
      %799 = vmatmul.mubr.bf16.gmra.mrb[0].mxu0 %v610
      %v800 = vpop.f32.mrb[0].mxu0
      %v801 = vadd.f32 %v536, %v800
      %v802 = vpop.f32.mrb[0].mxu0
      %v803 = vpop.f32.mrb[0].mxu0
      %v804 = vadd.f32 %v539, %v803
      %v805 = vpop.f32.mrb[0].mxu0
      %806 = vmatprep.mubr.bf16.mxu0 %v716
      %807 = vmatmul.mubr.bf16.gmra.mrb[0].mxu0 %v612
      %v808 = vpop.f32.mrb[0].mxu0
      %v809 = vadd.f32 %v544, %v808
      %v810 = vpop.f32.mrb[0].mxu0
      %v811 = vpop.f32.mrb[0].mxu0
      %v812 = vadd.f32 %v547, %v811
      %v813 = vpop.f32.mrb[0].mxu0
      %814 = vdwg.mxu0
      %s815 = sadd.s32 %s195, 2
      %s816 = smul.u32 %s815, 4
      %s817 = smul.addr %s816, 4
      %s818 = scalar_lea.vmem %s183, %s817
      %v819 = vld [vmem:[%s818] sm:$0xff]
      %v820 = vld [vmem:[%s818 + $0x8] sm:$0xff]
      %v821 = vld [vmem:[%s818 + $0x10] sm:$0xff]
      %v822 = vld [vmem:[%s818 + $0x18] sm:$0xff]
      %v823 = vld [vmem:[%s818 + $0x20] sm:$0xff]
      %v824 = vld [vmem:[%s818 + $0x28] sm:$0xff]
      %v825 = vld [vmem:[%s818 + $0x30] sm:$0xff]
      %v826 = vld [vmem:[%s818 + $0x38] sm:$0xff]
      %v827 = vld [vmem:[%s818 + $0x40] sm:$0xff]
      %v828 = vld [vmem:[%s818 + $0x48] sm:$0xff]
      %v829 = vld [vmem:[%s818 + $0x50] sm:$0xff]
      %v830 = vld [vmem:[%s818 + $0x58] sm:$0xff]
      %v831 = vld [vmem:[%s818 + $0x60] sm:$0xff]
      %v832 = vld [vmem:[%s818 + $0x68] sm:$0xff]
      %v833 = vld [vmem:[%s818 + $0x70] sm:$0xff]
      %v834 = vld [vmem:[%s818 + $0x78] sm:$0xff]
      %s835 = scalar_lea.vmem %s1, 192
      %v836 = vld [vmem:[%s835] sm:$0xf]
      %v837 = vld [vmem:[%s835 + $0x4] sm:$0xf]
      %v838 = vld [vmem:[%s835 + $0x8] sm:$0xf]
      %v839 = vld [vmem:[%s835 + $0xc] sm:$0xf]
      %v840 = vld [vmem:[%s835 + $0x10] sm:$0xf]
      %v841 = vld [vmem:[%s835 + $0x14] sm:$0xf]
      %v842 = vld [vmem:[%s835 + $0x18] sm:$0xf]
      %v843 = vld [vmem:[%s835 + $0x1c] sm:$0xf]
      %v844 = vld [vmem:[%s835 + $0x20] sm:$0xf]
      %v845 = vld [vmem:[%s835 + $0x24] sm:$0xf]
      %v846 = vld [vmem:[%s835 + $0x28] sm:$0xf]
      %v847 = vld [vmem:[%s835 + $0x2c] sm:$0xf]
      %v848 = vld [vmem:[%s835 + $0x30] sm:$0xf]
      %v849 = vld [vmem:[%s835 + $0x34] sm:$0xf]
      %v850 = vld [vmem:[%s835 + $0x38] sm:$0xf]
      %v851 = vld [vmem:[%s835 + $0x3c] sm:$0xf]
      %v852 = vld [vmem:[%s835 + $0x40] sm:$0xf]
      %v853 = vld [vmem:[%s835 + $0x44] sm:$0xf]
      %v854 = vld [vmem:[%s835 + $0x48] sm:$0xf]
      %v855 = vld [vmem:[%s835 + $0x4c] sm:$0xf]
      %v856 = vld [vmem:[%s835 + $0x50] sm:$0xf]
      %v857 = vld [vmem:[%s835 + $0x54] sm:$0xf]
      %v858 = vld [vmem:[%s835 + $0x58] sm:$0xf]
      %v859 = vld [vmem:[%s835 + $0x5c] sm:$0xf]
      %v876 = vunpack.c.l.b16 %v819
      %v877 = vunpack.c.h.b16 %v819
      %v878 = vunpack.c.l.b16 %v820
      %v879 = vunpack.c.h.b16 %v820
      %v880 = vunpack.c.l.b16 %v821
      %v881 = vunpack.c.h.b16 %v821
      %v882 = vunpack.c.l.b16 %v822
      %v883 = vunpack.c.h.b16 %v822
      %v884 = vunpack.c.l.b16 %v823
      %v885 = vunpack.c.h.b16 %v823
      %v886 = vunpack.c.l.b16 %v824
      %v887 = vunpack.c.h.b16 %v824
      %v888 = vunpack.c.l.b16 %v825
      %v889 = vunpack.c.h.b16 %v825
      %v890 = vunpack.c.l.b16 %v826
      %v891 = vunpack.c.h.b16 %v826
      %v892 = vunpack.c.l.b16 %v827
      %v893 = vunpack.c.h.b16 %v827
      %v894 = vunpack.c.l.b16 %v828
      %v895 = vunpack.c.h.b16 %v828
      %v896 = vunpack.c.l.b16 %v829
      %v897 = vunpack.c.h.b16 %v829
      %v898 = vunpack.c.l.b16 %v830
      %v899 = vunpack.c.h.b16 %v830
      %v900 = vunpack.c.l.b16 %v831
      %v901 = vunpack.c.h.b16 %v831
      %v902 = vunpack.c.l.b16 %v832
      %v903 = vunpack.c.h.b16 %v832
      %v904 = vunpack.c.l.b16 %v833
      %v905 = vunpack.c.h.b16 %v833
      %v906 = vunpack.c.l.b16 %v834
      %v907 = vunpack.c.h.b16 %v834
      %v908 = vpack.c.b16 %v878, %v876
      %v909 = vpack.c.b16 %v879, %v877
      %v910 = vpack.c.b16 %v882, %v880
      %v911 = vpack.c.b16 %v883, %v881
      %v912 = vpack.c.b16 %v886, %v884
      %v913 = vpack.c.b16 %v887, %v885
      %v914 = vpack.c.b16 %v890, %v888
      %v915 = vpack.c.b16 %v891, %v889
      %v916 = vpack.c.b16 %v894, %v892
      %v917 = vpack.c.b16 %v895, %v893
      %v918 = vpack.c.b16 %v898, %v896
      %v919 = vpack.c.b16 %v899, %v897
      %v920 = vpack.c.b16 %v902, %v900
      %v921 = vpack.c.b16 %v903, %v901
      %v922 = vpack.c.b16 %v906, %v904
      %v923 = vpack.c.b16 %v907, %v905
      %v956 = vunpack.c.l.b16 %v836
      %v957 = vunpack.c.l.b16 %v837
      %v958 = vunpack.c.l.b16 %v838
      %v959 = vunpack.c.l.b16 %v839
      %v960 = vunpack.c.l.b16 %v840
      %v961 = vunpack.c.l.b16 %v841
      %v962 = vunpack.c.l.b16 %v842
      %v963 = vunpack.c.l.b16 %v843
      %v964 = vunpack.c.l.b16 %v844
      %v965 = vunpack.c.l.b16 %v845
      %v966 = vunpack.c.l.b16 %v846
      %v967 = vunpack.c.l.b16 %v847
      %v968 = vunpack.c.l.b16 %v848
      %v969 = vunpack.c.l.b16 %v849
      %v970 = vunpack.c.l.b16 %v850
      %v971 = vunpack.c.l.b16 %v851
      %v972 = vunpack.c.l.b16 %v852
      %v973 = vunpack.c.l.b16 %v853
      %v974 = vunpack.c.l.b16 %v854
      %v975 = vunpack.c.l.b16 %v855
      %v976 = vunpack.c.l.b16 %v856
      %v977 = vunpack.c.l.b16 %v857
      %v978 = vunpack.c.l.b16 %v858
      %v979 = vunpack.c.l.b16 %v859
      %v980 = vpack.c.b16 %v957, %v956
      %v981 = vpack.c.b16 %v959, %v958
      %v982 = vpack.c.b16 %v961, %v960
      %v983 = vpack.c.b16 %v963, %v962
      %v984 = vpack.c.b16 %v965, %v964
      %v985 = vpack.c.b16 %v967, %v966
      %v986 = vpack.c.b16 %v969, %v968
      %v987 = vpack.c.b16 %v971, %v970
      %v988 = vpack.c.b16 %v973, %v972
      %v989 = vpack.c.b16 %v975, %v974
      %v990 = vpack.c.b16 %v977, %v976
      %v991 = vpack.c.b16 %v979, %v978
      %v1005 = vsel %vm428, %v909, 0
      %v1008 = vsel %vm428, %v911, 0
      %v1011 = vsel %vm428, %v913, 0
      %v1014 = vsel %vm428, %v915, 0
      %v1017 = vsel %vm428, %v917, 0
      %v1020 = vsel %vm428, %v919, 0
      %v1023 = vsel %vm428, %v921, 0
      %v1026 = vsel %vm428, %v923, 0
      %1028 = vmatprep.subr.bf16.mxu0 0
      %1029 = vmatpush1.bf16.msra.mxu0 %v980
      %1030 = vmatprep.subr.bf16.mxu0 0
      %1031 = vmatpush1.bf16.msra.mxu0 %v981
      %1032 = vmatprep.subr.bf16.mxu0 0
      %1033 = vmatpush1.bf16.msra.mxu0 %v982
      %1034 = vmatprep.subr.bf16.mxu0 0
      %1035 = vmatpush1.bf16.msra.mxu0 %v983
      %1036 = vmatprep.subr.bf16.mxu0 0
      %1037 = vmatpush1.bf16.msra.mxu0 %v984
      %1038 = vmatprep.subr.bf16.mxu0 0
      %1039 = vmatpush1.bf16.msra.mxu0 %v985
      %1040 = vmatprep.subr.bf16.mxu0 0
      %1041 = vmatpush1.bf16.msra.mxu0 %v986
      %1042 = vmatprep.subr.bf16.mxu0 0
      %1043 = vmatpush1.bf16.msra.mxu0 %v987
      %1044 = vmatprep.subr.bf16.mxu0 0
      %1045 = vmatpush1.bf16.msra.mxu0 %v988
      %1046 = vmatprep.subr.bf16.mxu0 0
      %1047 = vmatpush1.bf16.msra.mxu0 %v989
      %1048 = vmatprep.subr.bf16.mxu0 0
      %1049 = vmatpush1.bf16.msra.mxu0 %v990
      %1050 = vmatprep.subr.bf16.mxu0 0
      %1051 = vmatpush1.bf16.msra.mxu0 %v991
      %1052 = vmatprep.subr.bf16.mxu0 0
      %1053 = vmatpush1.bf16.msra.mxu0 0
      %1054 = vmatprep.subr.bf16.mxu0 0
      %1055 = vmatpush1.bf16.msra.mxu0 0
      %1056 = vmatprep.subr.bf16.mxu0 0
      %1057 = vmatpush1.bf16.msra.mxu0 0
      %1058 = vmatprep.subr.bf16.mxu0 0
      %1059 = vmatpush1.bf16.msra.mxu0 0
      %1060 = vmatprep.mubr.bf16.mxu0 %v1005
      %1061 = vmatmul.mubr.bf16.gmra.mrb[0].mxu0 %v908
      %v1062 = vpop.f32.mrb[0].mxu0
      %v1063 = vadd.f32 0.0, %v1062
      %v1064 = vpop.f32.mrb[0].mxu0
      %v1065 = vpop.f32.mrb[0].mxu0
      %v1066 = vadd.f32 0.0, %v1065
      %v1067 = vpop.f32.mrb[0].mxu0
      %1068 = vmatprep.mubr.bf16.mxu0 %v1008
      %1069 = vmatmul.mubr.bf16.gmra.mrb[0].mxu0 %v910
      %v1070 = vpop.f32.mrb[0].mxu0
      %v1071 = vadd.f32 0.0, %v1070
      %v1072 = vpop.f32.mrb[0].mxu0
      %v1073 = vpop.f32.mrb[0].mxu0
      %v1074 = vadd.f32 0.0, %v1073
      %v1075 = vpop.f32.mrb[0].mxu0
      %1076 = vmatprep.mubr.bf16.mxu0 %v1011
      %1077 = vmatmul.mubr.bf16.gmra.mrb[0].mxu0 %v912
      %v1078 = vpop.f32.mrb[0].mxu0
      %v1079 = vadd.f32 0.0, %v1078
      %v1080 = vpop.f32.mrb[0].mxu0
      %v1081 = vpop.f32.mrb[0].mxu0
      %v1082 = vadd.f32 0.0, %v1081
      %v1083 = vpop.f32.mrb[0].mxu0
      %1084 = vmatprep.mubr.bf16.mxu0 %v1014
      %1085 = vmatmul.mubr.bf16.gmra.mrb[0].mxu0 %v914
      %v1086 = vpop.f32.mrb[0].mxu0
      %v1087 = vadd.f32 0.0, %v1086
      %v1088 = vpop.f32.mrb[0].mxu0
      %v1089 = vpop.f32.mrb[0].mxu0
      %v1090 = vadd.f32 0.0, %v1089
      %v1091 = vpop.f32.mrb[0].mxu0
      %1092 = vmatprep.mubr.bf16.mxu0 %v1017
      %1093 = vmatmul.mubr.bf16.gmra.mrb[0].mxu0 %v916
      %v1094 = vpop.f32.mrb[0].mxu0
      %v1095 = vadd.f32 0.0, %v1094
      %v1096 = vpop.f32.mrb[0].mxu0
      %v1097 = vpop.f32.mrb[0].mxu0
      %v1098 = vadd.f32 0.0, %v1097
      %v1099 = vpop.f32.mrb[0].mxu0
      %1100 = vmatprep.mubr.bf16.mxu0 %v1020
      %1101 = vmatmul.mubr.bf16.gmra.mrb[0].mxu0 %v918
      %v1102 = vpop.f32.mrb[0].mxu0
      %v1103 = vadd.f32 0.0, %v1102
      %v1104 = vpop.f32.mrb[0].mxu0
      %v1105 = vpop.f32.mrb[0].mxu0
      %v1106 = vadd.f32 0.0, %v1105
      %v1107 = vpop.f32.mrb[0].mxu0
      %1108 = vmatprep.mubr.bf16.mxu0 %v1023
      %1109 = vmatmul.mubr.bf16.gmra.mrb[0].mxu0 %v920
      %v1110 = vpop.f32.mrb[0].mxu0
      %v1111 = vadd.f32 0.0, %v1110
      %v1112 = vpop.f32.mrb[0].mxu0
      %v1113 = vpop.f32.mrb[0].mxu0
      %v1114 = vadd.f32 0.0, %v1113
      %v1115 = vpop.f32.mrb[0].mxu0
      %1116 = vmatprep.mubr.bf16.mxu0 %v1026
      %1117 = vmatmul.mubr.bf16.gmra.mrb[0].mxu0 %v922
      %v1118 = vpop.f32.mrb[0].mxu0
      %v1119 = vadd.f32 0.0, %v1118
      %v1120 = vpop.f32.mrb[0].mxu0
      %v1121 = vpop.f32.mrb[0].mxu0
      %v1122 = vadd.f32 0.0, %v1121
      %v1123 = vpop.f32.mrb[0].mxu0
      %1124 = vdwg.mxu0
      %v1125 = vadd.f32 %v753, %v1063
      %v1126 = vadd.f32 %v756, %v1066
      %v1127 = vadd.f32 %v761, %v1071
      %v1128 = vadd.f32 %v764, %v1074
      %v1129 = vadd.f32 %v769, %v1079
      %v1130 = vadd.f32 %v772, %v1082
      %v1131 = vadd.f32 %v777, %v1087
      %v1132 = vadd.f32 %v780, %v1090
      %v1133 = vadd.f32 %v785, %v1095
      %v1134 = vadd.f32 %v788, %v1098
      %v1135 = vadd.f32 %v793, %v1103
      %v1136 = vadd.f32 %v796, %v1106
      %v1137 = vadd.f32 %v801, %v1111
      %v1138 = vadd.f32 %v804, %v1114
      %v1139 = vadd.f32 %v809, %v1119
      %v1140 = vadd.f32 %v812, %v1122
      %v1141 = vld [vmem:[%s2] sm:$0x1]
      %v1143 = vlaneseq
      %v1144 = vshrl.u32 %v1143, 7
      %v1145 = vsub.s32 0, %v1144
      %v1146 = vrot.slane %v1141, %v1145
      %v1148 = vadd.f32 %v1125, %v1146
      %v1149 = vadd.f32 %v1126, %v1146
      %v1150 = vadd.f32 %v1127, %v1146
      %v1151 = vadd.f32 %v1128, %v1146
      %v1152 = vadd.f32 %v1129, %v1146
      %v1153 = vadd.f32 %v1130, %v1146
      %v1154 = vadd.f32 %v1131, %v1146
      %v1155 = vadd.f32 %v1132, %v1146
      %v1156 = vadd.f32 %v1133, %v1146
      %v1157 = vadd.f32 %v1134, %v1146
      %v1158 = vadd.f32 %v1135, %v1146
      %v1159 = vadd.f32 %v1136, %v1146
      %v1160 = vadd.f32 %v1137, %v1146
      %v1161 = vadd.f32 %v1138, %v1146
      %v1162 = vadd.f32 %v1139, %v1146
      %v1163 = vadd.f32 %v1140, %v1146
      %v1164 = vmax.f32 %v1148, 0.0
      %v1165 = vmax.f32 %v1149, 0.0
      %v1166 = vmax.f32 %v1150, 0.0
      %v1167 = vmax.f32 %v1151, 0.0
      %v1168 = vmax.f32 %v1152, 0.0
      %v1169 = vmax.f32 %v1153, 0.0
      %v1170 = vmax.f32 %v1154, 0.0
      %v1171 = vmax.f32 %v1155, 0.0
      %v1172 = vmax.f32 %v1156, 0.0
      %v1173 = vmax.f32 %v1157, 0.0
      %v1174 = vmax.f32 %v1158, 0.0
      %v1175 = vmax.f32 %v1159, 0.0
      %v1176 = vmax.f32 %v1160, 0.0
      %v1177 = vmax.f32 %v1161, 0.0
      %v1178 = vmax.f32 %v1162, 0.0
      %v1179 = vmax.f32 %v1163, 0.0
      %v1180 = vpack.c.bf16 %v1165, %v1164
      %v1181 = vpack.c.bf16 %v1167, %v1166
      %v1182 = vpack.c.bf16 %v1169, %v1168
      %v1183 = vpack.c.bf16 %v1171, %v1170
      %v1184 = vpack.c.bf16 %v1173, %v1172
      %v1185 = vpack.c.bf16 %v1175, %v1174
      %v1186 = vpack.c.bf16 %v1177, %v1176
      %v1187 = vpack.c.bf16 %v1179, %v1178
      %v1196 = vunpack.c.l.b16 %v1180
      %v1197 = vunpack.c.h.b16 %v1180
      %v1198 = vunpack.c.l.b16 %v1181
      %v1199 = vunpack.c.h.b16 %v1181
      %v1200 = vunpack.c.l.b16 %v1182
      %v1201 = vunpack.c.h.b16 %v1182
      %v1202 = vunpack.c.l.b16 %v1183
      %v1203 = vunpack.c.h.b16 %v1183
      %v1204 = vunpack.c.l.b16 %v1184
      %v1205 = vunpack.c.h.b16 %v1184
      %v1206 = vunpack.c.l.b16 %v1185
      %v1207 = vunpack.c.h.b16 %v1185
      %v1208 = vunpack.c.l.b16 %v1186
      %v1209 = vunpack.c.h.b16 %v1186
      %v1210 = vunpack.c.l.b16 %v1187
      %v1211 = vunpack.c.h.b16 %v1187
      %v1212 = vpack.c.b16 %v1196, %v1196
      %v1213 = vpack.c.b16 %v1197, %v1197
      %v1214 = vpack.c.b16 %v1198, %v1198
      %v1215 = vpack.c.b16 %v1199, %v1199
      %v1216 = vpack.c.b16 %v1200, %v1200
      %v1217 = vpack.c.b16 %v1201, %v1201
      %v1218 = vpack.c.b16 %v1202, %v1202
      %v1219 = vpack.c.b16 %v1203, %v1203
      %v1220 = vpack.c.b16 %v1204, %v1204
      %v1221 = vpack.c.b16 %v1205, %v1205
      %v1222 = vpack.c.b16 %v1206, %v1206
      %v1223 = vpack.c.b16 %v1207, %v1207
      %v1224 = vpack.c.b16 %v1208, %v1208
      %v1225 = vpack.c.b16 %v1209, %v1209
      %v1226 = vpack.c.b16 %v1210, %v1210
      %v1227 = vpack.c.b16 %v1211, %v1211
      %1244 = vst [vmem:[%s192] sm:$0xf] %v1212
      %1245 = vst [vmem:[%s192 + $0x4] sm:$0xf] %v1213
      %1246 = vst [vmem:[%s192 + $0x8] sm:$0xf] %v1214
      %1247 = vst [vmem:[%s192 + $0xc] sm:$0xf] %v1215
      %1248 = vst [vmem:[%s192 + $0x10] sm:$0xf] %v1216
      %1249 = vst [vmem:[%s192 + $0x14] sm:$0xf] %v1217
      %1250 = vst [vmem:[%s192 + $0x18] sm:$0xf] %v1218
      %1251 = vst [vmem:[%s192 + $0x1c] sm:$0xf] %v1219
      %1252 = vst [vmem:[%s192 + $0x20] sm:$0xf] %v1220
      %1253 = vst [vmem:[%s192 + $0x24] sm:$0xf] %v1221
      %1254 = vst [vmem:[%s192 + $0x28] sm:$0xf] %v1222
      %1255 = vst [vmem:[%s192 + $0x2c] sm:$0xf] %v1223
      %1256 = vst [vmem:[%s192 + $0x30] sm:$0xf] %v1224
      %1257 = vst [vmem:[%s192 + $0x34] sm:$0xf] %v1225
      %1258 = vst [vmem:[%s192 + $0x38] sm:$0xf] %v1226
      %1259 = vst [vmem:[%s192 + $0x3c] sm:$0xf] %v1227
      %s1260 = smul.u32 16, %s19
      %p1261 = scmp.lt.s32.totalorder %s18, 1
      %s1262 = scalar_select %p1261, %s18, 1
      %p1263 = scmp.lt.s32.totalorder %s1260, 31
      %s1264 = scalar_select %p1263, %s1260, 31
      %s1265 = smul.addr %s1262, 32
      %s1266 = sadd.s32 %s1264, %s1265
      %s1267 = smul.addr %s1266, 4
      %s1268 = scalar_lea.vmem %s3, %s1267
      // Predicated region
      $region33: #{apricot_cnn1_forward.9} parent=31 // pred_check
        %p1269 = pneg %p114
      $region34: #{apricot_cnn1_forward.9} parent=31 // pred_check_branch
        %1271 = sbr.rel (%p1269) target = $region36
      $region35: #{apricot_cnn1_forward.9} parent=31 // pred_region
        %s1272 = smul.u32 16, %s19
      $region36: #{apricot_cnn1_forward.9} parent=31 // pred_fallthru
        _
    $region32: #{apricot_cnn1_forward.9} parent=5 // pred_fallthru
      _
    %p1273 = scmp.le.s32.totalorder 2, %s9
    // Predicated region
    $region37: #{apricot_cnn1_forward.9} parent=5 // pred_check
      %p1274 = pneg %p1273
    $region38: #{apricot_cnn1_forward.9} parent=5 // pred_check_branch
      %1276 = sbr.rel (%p1274) target = $region40
    $region39: #{apricot_cnn1_forward.9} parent=5 // pred_region
      %s1277 = ssub.s32 %s9, 2
      // Predicated region
      $region41: #{apricot_cnn1_forward.9} parent=39 // pred_check
        %p1278 = pneg %p120
      $region42: #{apricot_cnn1_forward.9} parent=39 // pred_check_branch
        %1280 = sbr.rel (%p1278) target = $region44
      $region43: #{apricot_cnn1_forward.9} parent=39 // pred_region
        %s1281 = smul.u32 16, %s21
        %p1282 = scmp.lt.s32.totalorder %s20, 1
        %s1283 = scalar_select %p1282, %s20, 1
        %p1284 = scmp.lt.s32.totalorder %s1281, 31
        %s1285 = scalar_select %p1284, %s1281, 31
        %s1286 = smul.addr %s1283, 32
        %s1287 = sadd.s32 %s1285, %s1286
        %s1288 = smul.addr %s1287, 4
        %s1289 = scalar_lea.vmem %s3, %s1288
      $region44: #{apricot_cnn1_forward.9} parent=39 // pred_fallthru
        _
    $region40: #{apricot_cnn1_forward.9} parent=5 // pred_fallthru
      _
  $region6: #{apricot_cnn1_forward.9} parent=0 // loop_footer
    %s13 = sadd.s32 1, %s9
  $region7: #{apricot_cnn1_forward.9} parent=0 // loop_footer_branch
    %8 = sbr.rel target = $region3
  $region8: #{apricot_cnn1_forward.9} parent=0 // loop_exit
    _

// kernel: apricot_cnn1_forward.10
$region0: #{apricot_cnn1_forward.10}
  #allocation0 [shape = 'u32[]', space=smem, size = 0x4, offset = 0x4, fixed_abs, tag = 'smem constant byte address 0x4 - core index']
  #allocation1 [shape = 'u32[144,128]{1,0:T(1,128)}', space=vmem, size = 0x12000, scoped, tag = 'internal scratch']
  %s0 = inlined_call_operand.vmem [shape: bf16[2,18,2,8,384], index: 0, kind: input, shape index: {}]
  %s1 = inlined_call_operand.vmem [shape: bf16[3,384,128], index: 1, kind: input, shape index: {}]
  %s2 = inlined_call_operand.vmem [shape: f32[1,128], index: 2, kind: input, shape index: {}]
  %s3 = inlined_call_operand.vmem [shape: bf16[2,64,128], index: 3, kind: output, shape index: {}]
  %s4 = sld [smem:[#allocation0]]
  $region45: #{apricot_cnn1_forward.10} parent=0
    _
  %s6 = ssub.s32 1, %s4
  %s7 = scalar_select 0, %s6, %s4
  loop: start=0, step=1, limit=6
  $region2: #{apricot_cnn1_forward.10} parent=0 // loop_pre_header
    _
  $region3: #{apricot_cnn1_forward.10} parent=0 // loop_header
    %s9 = sphi 0, %s13
    %p10 = scmp.ge.s32.totalorder %s9, 6
    %s16 = sphi 0, %s28
    %s17 = sphi 0, %s24
    %s18 = sphi 0, %s16
    %s19 = sphi 0, %s17
    %s20 = sphi 0, %s18
    %s21 = sphi 0, %s19
    %s31 = sphi 0, %s33
    %s34 = sphi 0, %s31
    %s35 = sphi 0, %s34
    %s51 = sphi 0, %s35
    %s55 = sphi 0, %s55
    %s57 = sphi 0, %s55
    %s58 = sphi 0, %s57
    %s72 = sphi 0, %s58
    %s76 = sphi 0, %s76
    %s78 = sphi 0, %s76
    %s79 = sphi 0, %s78
    %s93 = sphi 0, %s79
    %s101 = sphi 0, %s103
    %s104 = sphi 0, %s101
    %s105 = sphi 0, %s104
    %s121 = sphi 0, %s105
  $region4: #{apricot_cnn1_forward.10} parent=0 // loop_header_branch
    %12 = sbr.rel (%p10) target = $region8
  $region5: #{apricot_cnn1_forward.10} parent=0 // loop_body
    %s14 = ssub.s32 %s9, 1
    %s15 = ssub.s32 %s9, 2
    %s22 = sadd.s32 1, %s17
    %p23 = scmp.ge.s32.totalorder %s22, 2
    %s24 = scalar_select %p23, 0, %s22
    %s25 = sadd.s32 1, %s16
    %s26 = scalar_select %p23, %s25, %s16
    %p27 = scmp.ge.s32.totalorder %s26, 2
    %s28 = scalar_select %p27, 0, %s26
    %s29 = ssub.s32 %s16, %s28
    %p30 = scmp.eq.s32.totalorder %s29, 0
    %s32 = sadd.s32 %s31, 1
    %s33 = scalar_select %p30, %s31, %s32
    %p36 = pneg %p30
    %p37 = scmp.eq.s32.totalorder %s9, 3
    %p38 = por %p36, %p37
    %p39 = scmp.ne.s32.totalorder %s31, %s34
    %p40 = scmp.eq.s32.totalorder %s9, 0
    %p41 = por %p39, %p40
    %p42 = scmp.ne.s32.totalorder %s31, %s34
    %p43 = scmp.eq.s32.totalorder %s14, 3
    %p44 = por %p42, %p43
    %p45 = scmp.ne.s32.totalorder %s34, %s35
    %p46 = scmp.eq.s32.totalorder %s14, 0
    %p47 = por %p45, %p46
    %p48 = scmp.ne.s32.totalorder %s34, %s35
    %p49 = scmp.eq.s32.totalorder %s15, 3
    %p50 = por %p48, %p49
    %p52 = scmp.ne.s32.totalorder %s35, %s51
    %p53 = scmp.eq.s32.totalorder %s15, 0
    %p54 = por %p52, %p53
    %s56 = sadd.s32 %s55, 1
    %p59 = scmp.eq.s32.totalorder %s9, 3
    %p60 = scmp.ne.s32.totalorder %s55, %s57
    %p61 = scmp.eq.s32.totalorder %s9, 0
    %p62 = por %p60, %p61
    %p63 = scmp.ne.s32.totalorder %s55, %s57
    %p64 = scmp.eq.s32.totalorder %s14, 3
    %p65 = por %p63, %p64
    %p66 = scmp.ne.s32.totalorder %s57, %s58
    %p67 = scmp.eq.s32.totalorder %s14, 0
    %p68 = por %p66, %p67
    %p69 = scmp.ne.s32.totalorder %s57, %s58
    %p70 = scmp.eq.s32.totalorder %s15, 3
    %p71 = por %p69, %p70
    %p73 = scmp.ne.s32.totalorder %s58, %s72
    %p74 = scmp.eq.s32.totalorder %s15, 0
    %p75 = por %p73, %p74
    %s77 = sadd.s32 %s76, 1
    %p80 = scmp.eq.s32.totalorder %s9, 3
    %p81 = scmp.ne.s32.totalorder %s76, %s78
    %p82 = scmp.eq.s32.totalorder %s9, 0
    %p83 = por %p81, %p82
    %p84 = scmp.ne.s32.totalorder %s76, %s78
    %p85 = scmp.eq.s32.totalorder %s14, 3
    %p86 = por %p84, %p85
    %p87 = scmp.ne.s32.totalorder %s78, %s79
    %p88 = scmp.eq.s32.totalorder %s14, 0
    %p89 = por %p87, %p88
    %p90 = scmp.ne.s32.totalorder %s78, %s79
    %p91 = scmp.eq.s32.totalorder %s15, 3
    %p92 = por %p90, %p91
    %p94 = scmp.ne.s32.totalorder %s79, %s93
    %p95 = scmp.eq.s32.totalorder %s15, 0
    %p96 = por %p94, %p95
    %s97 = ssub.s32 %s16, %s28
    %s98 = ssub.s32 %s17, %s24
    %s99 = sor.u32 %s97, %s98
    %p100 = scmp.eq.s32.totalorder %s99, 0
    %s102 = sadd.s32 %s101, 1
    %s103 = scalar_select %p100, %s101, %s102
    %p106 = pneg %p100
    %p107 = scmp.eq.s32.totalorder %s9, 3
    %p108 = por %p106, %p107
    %p109 = scmp.ne.s32.totalorder %s101, %s104
    %p110 = scmp.eq.s32.totalorder %s9, 0
    %p111 = por %p109, %p110
    %p112 = scmp.ne.s32.totalorder %s101, %s104
    %p113 = scmp.eq.s32.totalorder %s14, 3
    %p114 = por %p112, %p113
    %p115 = scmp.ne.s32.totalorder %s104, %s105
    %p116 = scmp.eq.s32.totalorder %s14, 0
    %p117 = por %p115, %p116
    %p118 = scmp.ne.s32.totalorder %s104, %s105
    %p119 = scmp.eq.s32.totalorder %s15, 3
    %p120 = por %p118, %p119
    %p122 = scmp.ne.s32.totalorder %s105, %s121
    %p123 = scmp.eq.s32.totalorder %s15, 0
    %p124 = por %p122, %p123
    %p125 = scmp.le.s32.totalorder 1, %s9
    %p126 = scmp.lt.s32.totalorder %s9, 5
    %p127 = pnand %p125, %p126
    %p128 = pneg %p127
    // Predicated region
    $region9: #{apricot_cnn1_forward.10} parent=5 // pred_check
      _
    $region10: #{apricot_cnn1_forward.10} parent=5 // pred_check_branch
      %130 = sbr.rel (%p127) target = $region12
    $region11: #{apricot_cnn1_forward.10} parent=5 // pred_region
      %s131 = ssub.s32 %s9, 1
      // Predicated region
      $region13: #{apricot_cnn1_forward.10} parent=11 // pred_check
        %p132 = pneg %p68
      $region14: #{apricot_cnn1_forward.10} parent=11 // pred_check_branch
        %134 = sbr.rel (%p132) target = $region16
      $region15: #{apricot_cnn1_forward.10} parent=11 // pred_region
        _
      $region16: #{apricot_cnn1_forward.10} parent=11 // pred_fallthru
        _
      // Predicated region
      $region17: #{apricot_cnn1_forward.10} parent=11 // pred_check
        %p135 = pneg %p89
      $region18: #{apricot_cnn1_forward.10} parent=11 // pred_check_branch
        %137 = sbr.rel (%p135) target = $region20
      $region19: #{apricot_cnn1_forward.10} parent=11 // pred_region
        _
      $region20: #{apricot_cnn1_forward.10} parent=11 // pred_fallthru
        _
    $region12: #{apricot_cnn1_forward.10} parent=5 // pred_fallthru
      _
    %p138 = scmp.lt.s32.totalorder %s9, 4
    // Predicated region
    $region21: #{apricot_cnn1_forward.10} parent=5 // pred_check
      %p139 = pneg %p138
    $region22: #{apricot_cnn1_forward.10} parent=5 // pred_check_branch
      %141 = sbr.rel (%p139) target = $region24
    $region23: #{apricot_cnn1_forward.10} parent=5 // pred_region
      // Predicated region
      $region25: #{apricot_cnn1_forward.10} parent=23 // pred_check
        %p142 = pneg %p41
      $region26: #{apricot_cnn1_forward.10} parent=23 // pred_check_branch
        %144 = sbr.rel (%p142) target = $region28
      $region27: #{apricot_cnn1_forward.10} parent=23 // pred_region
        %p145 = scmp.lt.s32.totalorder %s16, 1
        %s146 = scalar_select %p145, %s16, 1
        %s147 = smul.addr %s146, 108
        %s148 = smul.addr %s147, 4
        %s149 = scalar_lea.vmem %s0, %s148
      $region28: #{apricot_cnn1_forward.10} parent=23 // pred_fallthru
        _
    $region24: #{apricot_cnn1_forward.10} parent=5 // pred_fallthru
      _
    %p150 = scmp.le.s32.totalorder 1, %s9
    %p151 = scmp.lt.s32.totalorder %s9, 5
    %p152 = pnand %p150, %p151
    %p153 = pneg %p152
    // Predicated region
    $region29: #{apricot_cnn1_forward.10} parent=5 // pred_check
      _
    $region30: #{apricot_cnn1_forward.10} parent=5 // pred_check_branch
      %155 = sbr.rel (%p152) target = $region32
    $region31: #{apricot_cnn1_forward.10} parent=5 // pred_region
      %s156 = ssub.s32 %s9, 1
      %p157 = scmp.lt.s32.totalorder %s18, 1
      %s158 = scalar_select %p157, %s18, 1
      %s159 = smul.addr %s158, 108
      %s160 = smul.addr %s159, 4
      %s161 = scalar_lea.vmem %s0, %s160
      %p162 = pneg %p47
      %p163 = pneg %p44
      %p164 = pneg %p68
      %p165 = pneg %p65
      %p166 = pneg %p89
      %p167 = pneg %p86
      %p168 = pneg %p117
      %p169 = pneg %p114
      %s170 = smul.u32 4, %s19
      %p171 = scmp.lt.s32.totalorder %s18, 1
      %s172 = scalar_select %p171, %s18, 1
      %p173 = scmp.lt.s32.totalorder %s170, 7
      %s174 = scalar_select %p173, %s170, 7
      %s175 = smul.addr %s172, 8
      %s176 = sadd.s32 %s174, %s175
      %s177 = smul.addr %s176, 4
      %s178 = scalar_lea.vmem %s3, %s177
      %p179 = scmp.lt.s32.totalorder %s18, 1
      %s180 = scalar_select %p179, %s18, 1
      %s181 = smul.addr %s180, 108
      %s182 = smul.addr %s181, 4
      %s183 = scalar_lea.vmem %s0, %s182
      %s184 = smul.u32 4, %s19
      %p185 = scmp.lt.s32.totalorder %s18, 1
      %s186 = scalar_select %p185, %s18, 1
      %p187 = scmp.lt.s32.totalorder %s184, 7
      %s188 = scalar_select %p187, %s184, 7
      %s189 = smul.addr %s186, 8
      %s190 = sadd.s32 %s188, %s189
      %s191 = smul.addr %s190, 4
      %s192 = scalar_lea.vmem %s3, %s191
      %s193 = smul.u32 4, %s19
      %s195 = smul.u32 %s19, 8
      %s196 = smul.u32 %s195, 6
      %s197 = smul.addr %s196, 4
      %s198 = scalar_lea.vmem %s183, %s197
      %v199 = vld [vmem:[%s198] sm:$0xff]
      %v200 = vld [vmem:[%s198 + $0x8] sm:$0xf]
      %v201 = vld [vmem:[%s198 + $0x18] sm:$0xff]
      %v202 = vld [vmem:[%s198 + $0x20] sm:$0xf]
      %v203 = vld [vmem:[%s198 + $0x30] sm:$0xff]
      %v204 = vld [vmem:[%s198 + $0x38] sm:$0xf]
      %v205 = vld [vmem:[%s198 + $0x48] sm:$0xff]
      %v206 = vld [vmem:[%s198 + $0x50] sm:$0xf]
      %v207 = vld [vmem:[%s198 + $0x60] sm:$0xff]
      %v208 = vld [vmem:[%s198 + $0x68] sm:$0xf]
      %v209 = vld [vmem:[%s198 + $0x78] sm:$0xff]
      %v210 = vld [vmem:[%s198 + $0x80] sm:$0xf]
      %v211 = vld [vmem:[%s198 + $0x90] sm:$0xff]
      %v212 = vld [vmem:[%s198 + $0x98] sm:$0xf]
      %v213 = vld [vmem:[%s198 + $0xa8] sm:$0xff]
      %v214 = vld [vmem:[%s198 + $0xb0] sm:$0xf]
      %s215 = sadd.s32 3, %s196
      %s216 = smul.addr %s215, 4
      %s217 = scalar_lea.vmem %s183, %s216
      %v218 = vld [vmem:[%s217] sm:$0xff]
      %v219 = vld [vmem:[%s217 + $0x8] sm:$0xf]
      %v220 = vld [vmem:[%s217 + $0x18] sm:$0xff]
      %v221 = vld [vmem:[%s217 + $0x20] sm:$0xf]
      %v222 = vld [vmem:[%s217 + $0x30] sm:$0xff]
      %v223 = vld [vmem:[%s217 + $0x38] sm:$0xf]
      %v224 = vld [vmem:[%s217 + $0x48] sm:$0xff]
      %v225 = vld [vmem:[%s217 + $0x50] sm:$0xf]
      %v226 = vld [vmem:[%s217 + $0x60] sm:$0xff]
      %v227 = vld [vmem:[%s217 + $0x68] sm:$0xf]
      %v228 = vld [vmem:[%s217 + $0x78] sm:$0xff]
      %v229 = vld [vmem:[%s217 + $0x80] sm:$0xf]
      %v230 = vld [vmem:[%s217 + $0x90] sm:$0xff]
      %v231 = vld [vmem:[%s217 + $0x98] sm:$0xf]
      %v232 = vld [vmem:[%s217 + $0xa8] sm:$0xff]
      %v233 = vld [vmem:[%s217 + $0xb0] sm:$0xf]
      %v234 = vld [vmem:[%s1] sm:$0xf]
      %v235 = vld [vmem:[%s1 + $0x4] sm:$0xf]
      %v236 = vld [vmem:[%s1 + $0x8] sm:$0xf]
      %v237 = vld [vmem:[%s1 + $0xc] sm:$0xf]
      %v238 = vld [vmem:[%s1 + $0x10] sm:$0xf]
      %v239 = vld [vmem:[%s1 + $0x14] sm:$0xf]
      %v240 = vld [vmem:[%s1 + $0x18] sm:$0xf]
      %v241 = vld [vmem:[%s1 + $0x1c] sm:$0xf]
      %v242 = vld [vmem:[%s1 + $0x20] sm:$0xf]
      %v243 = vld [vmem:[%s1 + $0x24] sm:$0xf]
      %v244 = vld [vmem:[%s1 + $0x28] sm:$0xf]
      %v245 = vld [vmem:[%s1 + $0x2c] sm:$0xf]
      %v246 = vld [vmem:[%s1 + $0x30] sm:$0xf]
      %v247 = vld [vmem:[%s1 + $0x34] sm:$0xf]
      %v248 = vld [vmem:[%s1 + $0x38] sm:$0xf]
      %v249 = vld [vmem:[%s1 + $0x3c] sm:$0xf]
      %v250 = vld [vmem:[%s1 + $0x40] sm:$0xf]
      %v251 = vld [vmem:[%s1 + $0x44] sm:$0xf]
      %v252 = vld [vmem:[%s1 + $0x48] sm:$0xf]
      %v253 = vld [vmem:[%s1 + $0x4c] sm:$0xf]
      %v254 = vld [vmem:[%s1 + $0x50] sm:$0xf]
      %v255 = vld [vmem:[%s1 + $0x54] sm:$0xf]
      %v256 = vld [vmem:[%s1 + $0x58] sm:$0xf]
      %v257 = vld [vmem:[%s1 + $0x5c] sm:$0xf]
      %v258 = vld [vmem:[%s1 + $0x60] sm:$0xf]
      %v259 = vld [vmem:[%s1 + $0x64] sm:$0xf]
      %v260 = vld [vmem:[%s1 + $0x68] sm:$0xf]
      %v261 = vld [vmem:[%s1 + $0x6c] sm:$0xf]
      %v262 = vld [vmem:[%s1 + $0x70] sm:$0xf]
      %v263 = vld [vmem:[%s1 + $0x74] sm:$0xf]
      %v264 = vld [vmem:[%s1 + $0x78] sm:$0xf]
      %v265 = vld [vmem:[%s1 + $0x7c] sm:$0xf]
      %v266 = vld [vmem:[%s1 + $0x80] sm:$0xf]
      %v267 = vld [vmem:[%s1 + $0x84] sm:$0xf]
      %v268 = vld [vmem:[%s1 + $0x88] sm:$0xf]
      %v269 = vld [vmem:[%s1 + $0x8c] sm:$0xf]
      %v270 = vld [vmem:[%s1 + $0x90] sm:$0xf]
      %v271 = vld [vmem:[%s1 + $0x94] sm:$0xf]
      %v272 = vld [vmem:[%s1 + $0x98] sm:$0xf]
      %v273 = vld [vmem:[%s1 + $0x9c] sm:$0xf]
      %v274 = vld [vmem:[%s1 + $0xa0] sm:$0xf]
      %v275 = vld [vmem:[%s1 + $0xa4] sm:$0xf]
      %v276 = vld [vmem:[%s1 + $0xa8] sm:$0xf]
      %v277 = vld [vmem:[%s1 + $0xac] sm:$0xf]
      %v278 = vld [vmem:[%s1 + $0xb0] sm:$0xf]
      %v279 = vld [vmem:[%s1 + $0xb4] sm:$0xf]
      %v280 = vld [vmem:[%s1 + $0xb8] sm:$0xf]
      %v281 = vld [vmem:[%s1 + $0xbc] sm:$0xf]
      %s282 = sadd.s32 %s195, 1
      %s283 = smul.u32 %s282, 6
      %s284 = smul.addr %s283, 4
      %s285 = scalar_lea.vmem %s183, %s284
      %v286 = vld [vmem:[%s285] sm:$0xff]
      %v287 = vld [vmem:[%s285 + $0x8] sm:$0xf]
      %v288 = vld [vmem:[%s285 + $0x18] sm:$0xff]
      %v289 = vld [vmem:[%s285 + $0x20] sm:$0xf]
      %v290 = vld [vmem:[%s285 + $0x30] sm:$0xff]
      %v291 = vld [vmem:[%s285 + $0x38] sm:$0xf]
      %v292 = vld [vmem:[%s285 + $0x48] sm:$0xff]
      %v293 = vld [vmem:[%s285 + $0x50] sm:$0xf]
      %v294 = vld [vmem:[%s285 + $0x60] sm:$0xff]
      %v295 = vld [vmem:[%s285 + $0x68] sm:$0xf]
      %v296 = vld [vmem:[%s285 + $0x78] sm:$0xff]
      %v297 = vld [vmem:[%s285 + $0x80] sm:$0xf]
      %v298 = vld [vmem:[%s285 + $0x90] sm:$0xff]
      %v299 = vld [vmem:[%s285 + $0x98] sm:$0xf]
      %v300 = vld [vmem:[%s285 + $0xa8] sm:$0xff]
      %v301 = vld [vmem:[%s285 + $0xb0] sm:$0xf]
      %s302 = sadd.s32 3, %s283
      %s303 = smul.addr %s302, 4
      %s304 = scalar_lea.vmem %s183, %s303
      %v305 = vld [vmem:[%s304] sm:$0xff]
      %v306 = vld [vmem:[%s304 + $0x8] sm:$0xf]
      %v307 = vld [vmem:[%s304 + $0x18] sm:$0xff]
      %v308 = vld [vmem:[%s304 + $0x20] sm:$0xf]
      %v309 = vld [vmem:[%s304 + $0x30] sm:$0xff]
      %v310 = vld [vmem:[%s304 + $0x38] sm:$0xf]
      %v311 = vld [vmem:[%s304 + $0x48] sm:$0xff]
      %v312 = vld [vmem:[%s304 + $0x50] sm:$0xf]
      %v313 = vld [vmem:[%s304 + $0x60] sm:$0xff]
      %v314 = vld [vmem:[%s304 + $0x68] sm:$0xf]
      %v315 = vld [vmem:[%s304 + $0x78] sm:$0xff]
      %v316 = vld [vmem:[%s304 + $0x80] sm:$0xf]
      %v317 = vld [vmem:[%s304 + $0x90] sm:$0xff]
      %v318 = vld [vmem:[%s304 + $0x98] sm:$0xf]
      %v319 = vld [vmem:[%s304 + $0xa8] sm:$0xff]
      %v320 = vld [vmem:[%s304 + $0xb0] sm:$0xf]
      %s321 = scalar_lea.vmem %s1, 192
      %v322 = vld [vmem:[%s321] sm:$0xf]
      %v323 = vld [vmem:[%s321 + $0x4] sm:$0xf]
      %v324 = vld [vmem:[%s321 + $0x8] sm:$0xf]
      %v325 = vld [vmem:[%s321 + $0xc] sm:$0xf]
      %v326 = vld [vmem:[%s321 + $0x10] sm:$0xf]
      %v327 = vld [vmem:[%s321 + $0x14] sm:$0xf]
      %v328 = vld [vmem:[%s321 + $0x18] sm:$0xf]
      %v329 = vld [vmem:[%s321 + $0x1c] sm:$0xf]
      %v330 = vld [vmem:[%s321 + $0x20] sm:$0xf]
      %v331 = vld [vmem:[%s321 + $0x24] sm:$0xf]
      %v332 = vld [vmem:[%s321 + $0x28] sm:$0xf]
      %v333 = vld [vmem:[%s321 + $0x2c] sm:$0xf]
      %v334 = vld [vmem:[%s321 + $0x30] sm:$0xf]
      %v335 = vld [vmem:[%s321 + $0x34] sm:$0xf]
      %v336 = vld [vmem:[%s321 + $0x38] sm:$0xf]
      %v337 = vld [vmem:[%s321 + $0x3c] sm:$0xf]
      %v338 = vld [vmem:[%s321 + $0x40] sm:$0xf]
      %v339 = vld [vmem:[%s321 + $0x44] sm:$0xf]
      %v340 = vld [vmem:[%s321 + $0x48] sm:$0xf]
      %v341 = vld [vmem:[%s321 + $0x4c] sm:$0xf]
      %v342 = vld [vmem:[%s321 + $0x50] sm:$0xf]
      %v343 = vld [vmem:[%s321 + $0x54] sm:$0xf]
      %v344 = vld [vmem:[%s321 + $0x58] sm:$0xf]
      %v345 = vld [vmem:[%s321 + $0x5c] sm:$0xf]
      %v346 = vld [vmem:[%s321 + $0x60] sm:$0xf]
      %v347 = vld [vmem:[%s321 + $0x64] sm:$0xf]
      %v348 = vld [vmem:[%s321 + $0x68] sm:$0xf]
      %v349 = vld [vmem:[%s321 + $0x6c] sm:$0xf]
      %v350 = vld [vmem:[%s321 + $0x70] sm:$0xf]
      %v351 = vld [vmem:[%s321 + $0x74] sm:$0xf]
      %v352 = vld [vmem:[%s321 + $0x78] sm:$0xf]
      %v353 = vld [vmem:[%s321 + $0x7c] sm:$0xf]
      %v354 = vld [vmem:[%s321 + $0x80] sm:$0xf]
      %v355 = vld [vmem:[%s321 + $0x84] sm:$0xf]
      %v356 = vld [vmem:[%s321 + $0x88] sm:$0xf]
      %v357 = vld [vmem:[%s321 + $0x8c] sm:$0xf]
      %v358 = vld [vmem:[%s321 + $0x90] sm:$0xf]
      %v359 = vld [vmem:[%s321 + $0x94] sm:$0xf]
      %v360 = vld [vmem:[%s321 + $0x98] sm:$0xf]
      %v361 = vld [vmem:[%s321 + $0x9c] sm:$0xf]
      %v362 = vld [vmem:[%s321 + $0xa0] sm:$0xf]
      %v363 = vld [vmem:[%s321 + $0xa4] sm:$0xf]
      %v364 = vld [vmem:[%s321 + $0xa8] sm:$0xf]
      %v365 = vld [vmem:[%s321 + $0xac] sm:$0xf]
      %v366 = vld [vmem:[%s321 + $0xb0] sm:$0xf]
      %v367 = vld [vmem:[%s321 + $0xb4] sm:$0xf]
      %v368 = vld [vmem:[%s321 + $0xb8] sm:$0xf]
      %v369 = vld [vmem:[%s321 + $0xbc] sm:$0xf]
      %v386 = vunpack.c.l.b16 %v286
      %v387 = vunpack.c.h.b16 %v286
      %v388 = vunpack.c.l.b16 %v287
      %v389 = vunpack.c.l.b16 %v288
      %v390 = vunpack.c.h.b16 %v288
      %v391 = vunpack.c.l.b16 %v289
      %v392 = vunpack.c.l.b16 %v290
      %v393 = vunpack.c.h.b16 %v290
      %v394 = vunpack.c.l.b16 %v291
      %v395 = vunpack.c.l.b16 %v292
      %v396 = vunpack.c.h.b16 %v292
      %v397 = vunpack.c.l.b16 %v293
      %v398 = vunpack.c.l.b16 %v294
      %v399 = vunpack.c.h.b16 %v294
      %v400 = vunpack.c.l.b16 %v295
      %v401 = vunpack.c.l.b16 %v296
      %v402 = vunpack.c.h.b16 %v296
      %v403 = vunpack.c.l.b16 %v297
      %v404 = vunpack.c.l.b16 %v298
      %v405 = vunpack.c.h.b16 %v298
      %v406 = vunpack.c.l.b16 %v299
      %v407 = vunpack.c.l.b16 %v300
      %v408 = vunpack.c.h.b16 %v300
      %v409 = vunpack.c.l.b16 %v301
      %v410 = vpack.c.b16 %v389, %v386
      %v411 = vpack.c.b16 %v390, %v387
      %v412 = vpack.c.b16 %v391, %v388
      %v413 = vpack.c.b16 %v395, %v392
      %v414 = vpack.c.b16 %v396, %v393
      %v415 = vpack.c.b16 %v397, %v394
      %v416 = vpack.c.b16 %v401, %v398
      %v417 = vpack.c.b16 %v402, %v399
      %v418 = vpack.c.b16 %v403, %v400
      %v419 = vpack.c.b16 %v407, %v404
      %v420 = vpack.c.b16 %v408, %v405
      %v421 = vpack.c.b16 %v409, %v406
      %v482 = vunpack.c.l.b16 %v322
      %v483 = vunpack.c.l.b16 %v323
      %v484 = vunpack.c.l.b16 %v324
      %v485 = vunpack.c.l.b16 %v325
      %v486 = vunpack.c.l.b16 %v326
      %v487 = vunpack.c.l.b16 %v327
      %v488 = vunpack.c.l.b16 %v328
      %v489 = vunpack.c.l.b16 %v329
      %v490 = vunpack.c.l.b16 %v330
      %v491 = vunpack.c.l.b16 %v331
      %v492 = vunpack.c.l.b16 %v332
      %v493 = vunpack.c.l.b16 %v333
      %v494 = vunpack.c.l.b16 %v334
      %v495 = vunpack.c.l.b16 %v335
      %v496 = vunpack.c.l.b16 %v336
      %v497 = vunpack.c.l.b16 %v337
      %v498 = vunpack.c.l.b16 %v338
      %v499 = vunpack.c.l.b16 %v339
      %v500 = vunpack.c.l.b16 %v340
      %v501 = vunpack.c.l.b16 %v341
      %v502 = vunpack.c.l.b16 %v342
      %v503 = vunpack.c.l.b16 %v343
      %v504 = vunpack.c.l.b16 %v344
      %v505 = vunpack.c.l.b16 %v345
      %v506 = vunpack.c.l.b16 %v346
      %v507 = vunpack.c.l.b16 %v347
      %v508 = vunpack.c.l.b16 %v348
      %v509 = vunpack.c.l.b16 %v349
      %v510 = vunpack.c.l.b16 %v350
      %v511 = vunpack.c.l.b16 %v351
      %v512 = vunpack.c.l.b16 %v352
      %v513 = vunpack.c.l.b16 %v353
      %v514 = vunpack.c.l.b16 %v354
      %v515 = vunpack.c.l.b16 %v355
      %v516 = vunpack.c.l.b16 %v356
      %v517 = vunpack.c.l.b16 %v357
      %v518 = vunpack.c.l.b16 %v358
      %v519 = vunpack.c.l.b16 %v359
      %v520 = vunpack.c.l.b16 %v360
      %v521 = vunpack.c.l.b16 %v361
      %v522 = vunpack.c.l.b16 %v362
      %v523 = vunpack.c.l.b16 %v363
      %v524 = vunpack.c.l.b16 %v364
      %v525 = vunpack.c.l.b16 %v365
      %v526 = vunpack.c.l.b16 %v366
      %v527 = vunpack.c.l.b16 %v367
      %v528 = vunpack.c.l.b16 %v368
      %v529 = vunpack.c.l.b16 %v369
      %v530 = vpack.c.b16 %v483, %v482
      %v531 = vpack.c.b16 %v485, %v484
      %v532 = vpack.c.b16 %v487, %v486
      %v533 = vpack.c.b16 %v489, %v488
      %v534 = vpack.c.b16 %v491, %v490
      %v535 = vpack.c.b16 %v493, %v492
      %v536 = vpack.c.b16 %v495, %v494
      %v537 = vpack.c.b16 %v497, %v496
      %v538 = vpack.c.b16 %v499, %v498
      %v539 = vpack.c.b16 %v501, %v500
      %v540 = vpack.c.b16 %v503, %v502
      %v541 = vpack.c.b16 %v505, %v504
      %v542 = vpack.c.b16 %v507, %v506
      %v543 = vpack.c.b16 %v509, %v508
      %v544 = vpack.c.b16 %v511, %v510
      %v545 = vpack.c.b16 %v513, %v512
      %v546 = vpack.c.b16 %v515, %v514
      %v547 = vpack.c.b16 %v517, %v516
      %v548 = vpack.c.b16 %v519, %v518
      %v549 = vpack.c.b16 %v521, %v520
      %v550 = vpack.c.b16 %v523, %v522
      %v551 = vpack.c.b16 %v525, %v524
      %v552 = vpack.c.b16 %v527, %v526
      %v553 = vpack.c.b16 %v529, %v528
      %578 = vmatprep.subr.bf16.mxu0 0
      %579 = vmatpush1.bf16.msra.mxu0 %v530
      %580 = vmatprep.subr.bf16.mxu0 0
      %581 = vmatpush1.bf16.msra.mxu0 %v531
      %582 = vmatprep.subr.bf16.mxu0 0
      %583 = vmatpush1.bf16.msra.mxu0 %v532
      %584 = vmatprep.subr.bf16.mxu0 0
      %585 = vmatpush1.bf16.msra.mxu0 %v533
      %586 = vmatprep.subr.bf16.mxu0 0
      %587 = vmatpush1.bf16.msra.mxu0 %v534
      %588 = vmatprep.subr.bf16.mxu0 0
      %589 = vmatpush1.bf16.msra.mxu0 %v535
      %590 = vmatprep.subr.bf16.mxu0 0
      %591 = vmatpush1.bf16.msra.mxu0 %v536
      %592 = vmatprep.subr.bf16.mxu0 0
      %593 = vmatpush1.bf16.msra.mxu0 %v537
      %594 = vmatprep.subr.bf16.mxu0 0
      %595 = vmatpush1.bf16.msra.mxu0 %v538
      %596 = vmatprep.subr.bf16.mxu0 0
      %597 = vmatpush1.bf16.msra.mxu0 %v539
      %598 = vmatprep.subr.bf16.mxu0 0
      %599 = vmatpush1.bf16.msra.mxu0 %v540
      %600 = vmatprep.subr.bf16.mxu0 0
      %601 = vmatpush1.bf16.msra.mxu0 %v541
      %602 = vmatprep.subr.bf16.mxu0 0
      %603 = vmatpush1.bf16.msra.mxu0 %v542
      %604 = vmatprep.subr.bf16.mxu0 0
      %605 = vmatpush1.bf16.msra.mxu0 %v543
      %606 = vmatprep.subr.bf16.mxu0 0
      %607 = vmatpush1.bf16.msra.mxu0 %v544
      %608 = vmatprep.subr.bf16.mxu0 0
      %609 = vmatpush1.bf16.msra.mxu0 %v545
      %610 = vmatprep.mubr.bf16.mxu0 %v411
      %611 = vmatmul.mubr.bf16.gmra.mrb[0].mxu0 %v410
      %v612 = vpop.f32.mrb[0].mxu0
      %v613 = vadd.f32 0.0, %v612
      %v614 = vpop.f32.mrb[0].mxu0
      %v615 = vpop.f32.mrb[0].mxu0
      %v616 = vadd.f32 0.0, %v615
      %v617 = vpop.f32.mrb[0].mxu0
      %618 = vmatprep.mubr.bf16.mxu0 %v414
      %619 = vmatmul.mubr.bf16.gmra.mrb[0].mxu0 %v413
      %v620 = vpop.f32.mrb[0].mxu0
      %v621 = vadd.f32 0.0, %v620
      %v622 = vpop.f32.mrb[0].mxu0
      %v623 = vpop.f32.mrb[0].mxu0
      %v624 = vadd.f32 0.0, %v623
      %v625 = vpop.f32.mrb[0].mxu0
      %626 = vmatprep.mubr.bf16.mxu0 %v417
      %627 = vmatmul.mubr.bf16.gmra.mrb[0].mxu0 %v416
      %v628 = vpop.f32.mrb[0].mxu0
      %v629 = vadd.f32 0.0, %v628
      %v630 = vpop.f32.mrb[0].mxu0
      %v631 = vpop.f32.mrb[0].mxu0
      %v632 = vadd.f32 0.0, %v631
      %v633 = vpop.f32.mrb[0].mxu0
      %634 = vmatprep.mubr.bf16.mxu0 %v420
      %635 = vmatmul.mubr.bf16.gmra.mrb[0].mxu0 %v419
      %v636 = vpop.f32.mrb[0].mxu0
      %v637 = vadd.f32 0.0, %v636
      %v638 = vpop.f32.mrb[0].mxu0
      %v639 = vpop.f32.mrb[0].mxu0
      %v640 = vadd.f32 0.0, %v639
      %v641 = vpop.f32.mrb[0].mxu0
      %642 = vdwg.mxu0
      %643 = vmatprep.subr.bf16.mxu0 0
      %644 = vmatpush1.bf16.msra.mxu0 %v546
      %645 = vmatprep.subr.bf16.mxu0 0
      %646 = vmatpush1.bf16.msra.mxu0 %v547
      %647 = vmatprep.subr.bf16.mxu0 0
      %648 = vmatpush1.bf16.msra.mxu0 %v548
      %649 = vmatprep.subr.bf16.mxu0 0
      %650 = vmatpush1.bf16.msra.mxu0 %v549
      %651 = vmatprep.subr.bf16.mxu0 0
      %652 = vmatpush1.bf16.msra.mxu0 %v550
      %653 = vmatprep.subr.bf16.mxu0 0
      %654 = vmatpush1.bf16.msra.mxu0 %v551
      %655 = vmatprep.subr.bf16.mxu0 0
      %656 = vmatpush1.bf16.msra.mxu0 %v552
      %657 = vmatprep.subr.bf16.mxu0 0
      %658 = vmatpush1.bf16.msra.mxu0 %v553
      %659 = vmatprep.subr.bf16.mxu0 0
      %660 = vmatpush1.bf16.msra.mxu0 0
      %661 = vmatprep.subr.bf16.mxu0 0
      %662 = vmatpush1.bf16.msra.mxu0 0
      %663 = vmatprep.subr.bf16.mxu0 0
      %664 = vmatpush1.bf16.msra.mxu0 0
      %665 = vmatprep.subr.bf16.mxu0 0
      %666 = vmatpush1.bf16.msra.mxu0 0
      %667 = vmatprep.subr.bf16.mxu0 0
      %668 = vmatpush1.bf16.msra.mxu0 0
      %669 = vmatprep.subr.bf16.mxu0 0
      %670 = vmatpush1.bf16.msra.mxu0 0
      %671 = vmatprep.subr.bf16.mxu0 0
      %672 = vmatpush1.bf16.msra.mxu0 0
      %673 = vmatprep.subr.bf16.mxu0 0
      %674 = vmatpush1.bf16.msra.mxu0 0
      %675 = vmatprep.mubr.bf16.mxu0 0
      %676 = vmatmul.mubr.bf16.gmra.mrb[0].mxu0 %v412
      %v677 = vpop.f32.mrb[0].mxu0
      %v678 = vadd.f32 %v613, %v677
      %v679 = vpop.f32.mrb[0].mxu0
      %v680 = vpop.f32.mrb[0].mxu0
      %v681 = vadd.f32 %v616, %v680
      %v682 = vpop.f32.mrb[0].mxu0
      %683 = vmatprep.mubr.bf16.mxu0 0
      %684 = vmatmul.mubr.bf16.gmra.mrb[0].mxu0 %v415
      %v685 = vpop.f32.mrb[0].mxu0
      %v686 = vadd.f32 %v621, %v685
      %v687 = vpop.f32.mrb[0].mxu0
      %v688 = vpop.f32.mrb[0].mxu0
      %v689 = vadd.f32 %v624, %v688
      %v690 = vpop.f32.mrb[0].mxu0
      %691 = vmatprep.mubr.bf16.mxu0 0
      %692 = vmatmul.mubr.bf16.gmra.mrb[0].mxu0 %v418
      %v693 = vpop.f32.mrb[0].mxu0
      %v694 = vadd.f32 %v629, %v693
      %v695 = vpop.f32.mrb[0].mxu0
      %v696 = vpop.f32.mrb[0].mxu0
      %v697 = vadd.f32 %v632, %v696
      %v698 = vpop.f32.mrb[0].mxu0
      %699 = vmatprep.mubr.bf16.mxu0 0
      %700 = vmatmul.mubr.bf16.gmra.mrb[0].mxu0 %v421
      %v701 = vpop.f32.mrb[0].mxu0
      %v702 = vadd.f32 %v637, %v701
      %v703 = vpop.f32.mrb[0].mxu0
      %v704 = vpop.f32.mrb[0].mxu0
      %v705 = vadd.f32 %v640, %v704
      %v706 = vpop.f32.mrb[0].mxu0
      %707 = vdwg.mxu0
      %v724 = vunpack.c.l.b16 %v199
      %v725 = vunpack.c.h.b16 %v199
      %v726 = vunpack.c.l.b16 %v200
      %v727 = vunpack.c.l.b16 %v201
      %v728 = vunpack.c.h.b16 %v201
      %v729 = vunpack.c.l.b16 %v202
      %v730 = vunpack.c.l.b16 %v203
      %v731 = vunpack.c.h.b16 %v203
      %v732 = vunpack.c.l.b16 %v204
      %v733 = vunpack.c.l.b16 %v205
      %v734 = vunpack.c.h.b16 %v205
      %v735 = vunpack.c.l.b16 %v206
      %v736 = vunpack.c.l.b16 %v207
      %v737 = vunpack.c.h.b16 %v207
      %v738 = vunpack.c.l.b16 %v208
      %v739 = vunpack.c.l.b16 %v209
      %v740 = vunpack.c.h.b16 %v209
      %v741 = vunpack.c.l.b16 %v210
      %v742 = vunpack.c.l.b16 %v211
      %v743 = vunpack.c.h.b16 %v211
      %v744 = vunpack.c.l.b16 %v212
      %v745 = vunpack.c.l.b16 %v213
      %v746 = vunpack.c.h.b16 %v213
      %v747 = vunpack.c.l.b16 %v214
      %v748 = vpack.c.b16 %v727, %v724
      %v749 = vpack.c.b16 %v728, %v725
      %v750 = vpack.c.b16 %v729, %v726
      %v751 = vpack.c.b16 %v733, %v730
      %v752 = vpack.c.b16 %v734, %v731
      %v753 = vpack.c.b16 %v735, %v732
      %v754 = vpack.c.b16 %v739, %v736
      %v755 = vpack.c.b16 %v740, %v737
      %v756 = vpack.c.b16 %v741, %v738
      %v757 = vpack.c.b16 %v745, %v742
      %v758 = vpack.c.b16 %v746, %v743
      %v759 = vpack.c.b16 %v747, %v744
      %v820 = vunpack.c.l.b16 %v234
      %v821 = vunpack.c.l.b16 %v235
      %v822 = vunpack.c.l.b16 %v236
      %v823 = vunpack.c.l.b16 %v237
      %v824 = vunpack.c.l.b16 %v238
      %v825 = vunpack.c.l.b16 %v239
      %v826 = vunpack.c.l.b16 %v240
      %v827 = vunpack.c.l.b16 %v241
      %v828 = vunpack.c.l.b16 %v242
      %v829 = vunpack.c.l.b16 %v243
      %v830 = vunpack.c.l.b16 %v244
      %v831 = vunpack.c.l.b16 %v245
      %v832 = vunpack.c.l.b16 %v246
      %v833 = vunpack.c.l.b16 %v247
      %v834 = vunpack.c.l.b16 %v248
      %v835 = vunpack.c.l.b16 %v249
      %v836 = vunpack.c.l.b16 %v250
      %v837 = vunpack.c.l.b16 %v251
      %v838 = vunpack.c.l.b16 %v252
      %v839 = vunpack.c.l.b16 %v253
      %v840 = vunpack.c.l.b16 %v254
      %v841 = vunpack.c.l.b16 %v255
      %v842 = vunpack.c.l.b16 %v256
      %v843 = vunpack.c.l.b16 %v257
      %v844 = vunpack.c.l.b16 %v258
      %v845 = vunpack.c.l.b16 %v259
      %v846 = vunpack.c.l.b16 %v260
      %v847 = vunpack.c.l.b16 %v261
      %v848 = vunpack.c.l.b16 %v262
      %v849 = vunpack.c.l.b16 %v263
      %v850 = vunpack.c.l.b16 %v264
      %v851 = vunpack.c.l.b16 %v265
      %v852 = vunpack.c.l.b16 %v266
      %v853 = vunpack.c.l.b16 %v267
      %v854 = vunpack.c.l.b16 %v268
      %v855 = vunpack.c.l.b16 %v269
      %v856 = vunpack.c.l.b16 %v270
      %v857 = vunpack.c.l.b16 %v271
      %v858 = vunpack.c.l.b16 %v272
      %v859 = vunpack.c.l.b16 %v273
      %v860 = vunpack.c.l.b16 %v274
      %v861 = vunpack.c.l.b16 %v275
      %v862 = vunpack.c.l.b16 %v276
      %v863 = vunpack.c.l.b16 %v277
      %v864 = vunpack.c.l.b16 %v278
      %v865 = vunpack.c.l.b16 %v279
      %v866 = vunpack.c.l.b16 %v280
      %v867 = vunpack.c.l.b16 %v281
      %v868 = vpack.c.b16 %v821, %v820
      %v869 = vpack.c.b16 %v823, %v822
      %v870 = vpack.c.b16 %v825, %v824
      %v871 = vpack.c.b16 %v827, %v826
      %v872 = vpack.c.b16 %v829, %v828
      %v873 = vpack.c.b16 %v831, %v830
      %v874 = vpack.c.b16 %v833, %v832
      %v875 = vpack.c.b16 %v835, %v834
      %v876 = vpack.c.b16 %v837, %v836
      %v877 = vpack.c.b16 %v839, %v838
      %v878 = vpack.c.b16 %v841, %v840
      %v879 = vpack.c.b16 %v843, %v842
      %v880 = vpack.c.b16 %v845, %v844
      %v881 = vpack.c.b16 %v847, %v846
      %v882 = vpack.c.b16 %v849, %v848
      %v883 = vpack.c.b16 %v851, %v850
      %v884 = vpack.c.b16 %v853, %v852
      %v885 = vpack.c.b16 %v855, %v854
      %v886 = vpack.c.b16 %v857, %v856
      %v887 = vpack.c.b16 %v859, %v858
      %v888 = vpack.c.b16 %v861, %v860
      %v889 = vpack.c.b16 %v863, %v862
      %v890 = vpack.c.b16 %v865, %v864
      %v891 = vpack.c.b16 %v867, %v866
      %916 = vmatprep.subr.bf16.mxu0 0
      %917 = vmatpush1.bf16.msra.mxu0 %v868
      %918 = vmatprep.subr.bf16.mxu0 0
      %919 = vmatpush1.bf16.msra.mxu0 %v869
      %920 = vmatprep.subr.bf16.mxu0 0
      %921 = vmatpush1.bf16.msra.mxu0 %v870
      %922 = vmatprep.subr.bf16.mxu0 0
      %923 = vmatpush1.bf16.msra.mxu0 %v871
      %924 = vmatprep.subr.bf16.mxu0 0
      %925 = vmatpush1.bf16.msra.mxu0 %v872
      %926 = vmatprep.subr.bf16.mxu0 0
      %927 = vmatpush1.bf16.msra.mxu0 %v873
      %928 = vmatprep.subr.bf16.mxu0 0
      %929 = vmatpush1.bf16.msra.mxu0 %v874
      %930 = vmatprep.subr.bf16.mxu0 0
      %931 = vmatpush1.bf16.msra.mxu0 %v875
      %932 = vmatprep.subr.bf16.mxu0 0
      %933 = vmatpush1.bf16.msra.mxu0 %v876
      %934 = vmatprep.subr.bf16.mxu0 0
      %935 = vmatpush1.bf16.msra.mxu0 %v877
      %936 = vmatprep.subr.bf16.mxu0 0
      %937 = vmatpush1.bf16.msra.mxu0 %v878
      %938 = vmatprep.subr.bf16.mxu0 0
      %939 = vmatpush1.bf16.msra.mxu0 %v879
      %940 = vmatprep.subr.bf16.mxu0 0
      %941 = vmatpush1.bf16.msra.mxu0 %v880
      %942 = vmatprep.subr.bf16.mxu0 0
      %943 = vmatpush1.bf16.msra.mxu0 %v881
      %944 = vmatprep.subr.bf16.mxu0 0
      %945 = vmatpush1.bf16.msra.mxu0 %v882
      %946 = vmatprep.subr.bf16.mxu0 0
      %947 = vmatpush1.bf16.msra.mxu0 %v883
      %948 = vmatprep.mubr.bf16.mxu0 %v749
      %949 = vmatmul.mubr.bf16.gmra.mrb[0].mxu0 %v748
      %v950 = vpop.f32.mrb[0].mxu0
      %v951 = vadd.f32 %v678, %v950
      %v952 = vpop.f32.mrb[0].mxu0
      %v953 = vpop.f32.mrb[0].mxu0
      %v954 = vadd.f32 %v681, %v953
      %v955 = vpop.f32.mrb[0].mxu0
      %956 = vmatprep.mubr.bf16.mxu0 %v752
      %957 = vmatmul.mubr.bf16.gmra.mrb[0].mxu0 %v751
      %v958 = vpop.f32.mrb[0].mxu0
      %v959 = vadd.f32 %v686, %v958
      %v960 = vpop.f32.mrb[0].mxu0
      %v961 = vpop.f32.mrb[0].mxu0
      %v962 = vadd.f32 %v689, %v961
      %v963 = vpop.f32.mrb[0].mxu0
      %964 = vmatprep.mubr.bf16.mxu0 %v755
      %965 = vmatmul.mubr.bf16.gmra.mrb[0].mxu0 %v754
      %v966 = vpop.f32.mrb[0].mxu0
      %v967 = vadd.f32 %v694, %v966
      %v968 = vpop.f32.mrb[0].mxu0
      %v969 = vpop.f32.mrb[0].mxu0
      %v970 = vadd.f32 %v697, %v969
      %v971 = vpop.f32.mrb[0].mxu0
      %972 = vmatprep.mubr.bf16.mxu0 %v758
      %973 = vmatmul.mubr.bf16.gmra.mrb[0].mxu0 %v757
      %v974 = vpop.f32.mrb[0].mxu0
      %v975 = vadd.f32 %v702, %v974
      %v976 = vpop.f32.mrb[0].mxu0
      %v977 = vpop.f32.mrb[0].mxu0
      %v978 = vadd.f32 %v705, %v977
      %v979 = vpop.f32.mrb[0].mxu0
      %980 = vdwg.mxu0
      %981 = vmatprep.subr.bf16.mxu0 0
      %982 = vmatpush1.bf16.msra.mxu0 %v884
      %983 = vmatprep.subr.bf16.mxu0 0
      %984 = vmatpush1.bf16.msra.mxu0 %v885
      %985 = vmatprep.subr.bf16.mxu0 0
      %986 = vmatpush1.bf16.msra.mxu0 %v886
      %987 = vmatprep.subr.bf16.mxu0 0
      %988 = vmatpush1.bf16.msra.mxu0 %v887
      %989 = vmatprep.subr.bf16.mxu0 0
      %990 = vmatpush1.bf16.msra.mxu0 %v888
      %991 = vmatprep.subr.bf16.mxu0 0
      %992 = vmatpush1.bf16.msra.mxu0 %v889
      %993 = vmatprep.subr.bf16.mxu0 0
      %994 = vmatpush1.bf16.msra.mxu0 %v890
      %995 = vmatprep.subr.bf16.mxu0 0
      %996 = vmatpush1.bf16.msra.mxu0 %v891
      %997 = vmatprep.subr.bf16.mxu0 0
      %998 = vmatpush1.bf16.msra.mxu0 0
      %999 = vmatprep.subr.bf16.mxu0 0
      %1000 = vmatpush1.bf16.msra.mxu0 0
      %1001 = vmatprep.subr.bf16.mxu0 0
      %1002 = vmatpush1.bf16.msra.mxu0 0
      %1003 = vmatprep.subr.bf16.mxu0 0
      %1004 = vmatpush1.bf16.msra.mxu0 0
      %1005 = vmatprep.subr.bf16.mxu0 0
      %1006 = vmatpush1.bf16.msra.mxu0 0
      %1007 = vmatprep.subr.bf16.mxu0 0
      %1008 = vmatpush1.bf16.msra.mxu0 0
      %1009 = vmatprep.subr.bf16.mxu0 0
      %1010 = vmatpush1.bf16.msra.mxu0 0
      %1011 = vmatprep.subr.bf16.mxu0 0
      %1012 = vmatpush1.bf16.msra.mxu0 0
      %1013 = vmatprep.mubr.bf16.mxu0 0
      %1014 = vmatmul.mubr.bf16.gmra.mrb[0].mxu0 %v750
      %v1015 = vpop.f32.mrb[0].mxu0
      %v1016 = vadd.f32 %v951, %v1015
      %v1017 = vpop.f32.mrb[0].mxu0
      %v1018 = vpop.f32.mrb[0].mxu0
      %v1019 = vadd.f32 %v954, %v1018
      %v1020 = vpop.f32.mrb[0].mxu0
      %1021 = vmatprep.mubr.bf16.mxu0 0
      %1022 = vmatmul.mubr.bf16.gmra.mrb[0].mxu0 %v753
      %v1023 = vpop.f32.mrb[0].mxu0
      %v1024 = vadd.f32 %v959, %v1023
      %v1025 = vpop.f32.mrb[0].mxu0
      %v1026 = vpop.f32.mrb[0].mxu0
      %v1027 = vadd.f32 %v962, %v1026
      %v1028 = vpop.f32.mrb[0].mxu0
      %1029 = vmatprep.mubr.bf16.mxu0 0
      %1030 = vmatmul.mubr.bf16.gmra.mrb[0].mxu0 %v756
      %v1031 = vpop.f32.mrb[0].mxu0
      %v1032 = vadd.f32 %v967, %v1031
      %v1033 = vpop.f32.mrb[0].mxu0
      %v1034 = vpop.f32.mrb[0].mxu0
      %v1035 = vadd.f32 %v970, %v1034
      %v1036 = vpop.f32.mrb[0].mxu0
      %1037 = vmatprep.mubr.bf16.mxu0 0
      %1038 = vmatmul.mubr.bf16.gmra.mrb[0].mxu0 %v759
      %v1039 = vpop.f32.mrb[0].mxu0
      %v1040 = vadd.f32 %v975, %v1039
      %v1041 = vpop.f32.mrb[0].mxu0
      %v1042 = vpop.f32.mrb[0].mxu0
      %v1043 = vadd.f32 %v978, %v1042
      %v1044 = vpop.f32.mrb[0].mxu0
      %1045 = vdwg.mxu0
      %v1062 = vunpack.c.l.b16 %v305
      %v1063 = vunpack.c.h.b16 %v305
      %v1064 = vunpack.c.l.b16 %v306
      %v1065 = vunpack.c.l.b16 %v307
      %v1066 = vunpack.c.h.b16 %v307
      %v1067 = vunpack.c.l.b16 %v308
      %v1068 = vunpack.c.l.b16 %v309
      %v1069 = vunpack.c.h.b16 %v309
      %v1070 = vunpack.c.l.b16 %v310
      %v1071 = vunpack.c.l.b16 %v311
      %v1072 = vunpack.c.h.b16 %v311
      %v1073 = vunpack.c.l.b16 %v312
      %v1074 = vunpack.c.l.b16 %v313
      %v1075 = vunpack.c.h.b16 %v313
      %v1076 = vunpack.c.l.b16 %v314
      %v1077 = vunpack.c.l.b16 %v315
      %v1078 = vunpack.c.h.b16 %v315
      %v1079 = vunpack.c.l.b16 %v316
      %v1080 = vunpack.c.l.b16 %v317
      %v1081 = vunpack.c.h.b16 %v317
      %v1082 = vunpack.c.l.b16 %v318
      %v1083 = vunpack.c.l.b16 %v319
      %v1084 = vunpack.c.h.b16 %v319
      %v1085 = vunpack.c.l.b16 %v320
      %v1086 = vpack.c.b16 %v1065, %v1062
      %v1087 = vpack.c.b16 %v1066, %v1063
      %v1088 = vpack.c.b16 %v1067, %v1064
      %v1089 = vpack.c.b16 %v1071, %v1068
      %v1090 = vpack.c.b16 %v1072, %v1069
      %v1091 = vpack.c.b16 %v1073, %v1070
      %v1092 = vpack.c.b16 %v1077, %v1074
      %v1093 = vpack.c.b16 %v1078, %v1075
      %v1094 = vpack.c.b16 %v1079, %v1076
      %v1095 = vpack.c.b16 %v1083, %v1080
      %v1096 = vpack.c.b16 %v1084, %v1081
      %v1097 = vpack.c.b16 %v1085, %v1082
      %1110 = vmatprep.subr.bf16.mxu0 0
      %1111 = vmatpush1.bf16.msra.mxu0 %v530
      %1112 = vmatprep.subr.bf16.mxu0 0
      %1113 = vmatpush1.bf16.msra.mxu0 %v531
      %1114 = vmatprep.subr.bf16.mxu0 0
      %1115 = vmatpush1.bf16.msra.mxu0 %v532
      %1116 = vmatprep.subr.bf16.mxu0 0
      %1117 = vmatpush1.bf16.msra.mxu0 %v533
      %1118 = vmatprep.subr.bf16.mxu0 0
      %1119 = vmatpush1.bf16.msra.mxu0 %v534
      %1120 = vmatprep.subr.bf16.mxu0 0
      %1121 = vmatpush1.bf16.msra.mxu0 %v535
      %1122 = vmatprep.subr.bf16.mxu0 0
      %1123 = vmatpush1.bf16.msra.mxu0 %v536
      %1124 = vmatprep.subr.bf16.mxu0 0
      %1125 = vmatpush1.bf16.msra.mxu0 %v537
      %1126 = vmatprep.subr.bf16.mxu0 0
      %1127 = vmatpush1.bf16.msra.mxu0 %v538
      %1128 = vmatprep.subr.bf16.mxu0 0
      %1129 = vmatpush1.bf16.msra.mxu0 %v539
      %1130 = vmatprep.subr.bf16.mxu0 0
      %1131 = vmatpush1.bf16.msra.mxu0 %v540
      %1132 = vmatprep.subr.bf16.mxu0 0
      %1133 = vmatpush1.bf16.msra.mxu0 %v541
      %1134 = vmatprep.subr.bf16.mxu0 0
      %1135 = vmatpush1.bf16.msra.mxu0 %v542
      %1136 = vmatprep.subr.bf16.mxu0 0
      %1137 = vmatpush1.bf16.msra.mxu0 %v543
      %1138 = vmatprep.subr.bf16.mxu0 0
      %1139 = vmatpush1.bf16.msra.mxu0 %v544
      %1140 = vmatprep.subr.bf16.mxu0 0
      %1141 = vmatpush1.bf16.msra.mxu0 %v545
      %1142 = vmatprep.mubr.bf16.mxu0 %v1087
      %1143 = vmatmul.mubr.bf16.gmra.mrb[0].mxu0 %v1086
      %v1144 = vpop.f32.mrb[0].mxu0
      %v1145 = vadd.f32 0.0, %v1144
      %v1146 = vpop.f32.mrb[0].mxu0
      %v1147 = vpop.f32.mrb[0].mxu0
      %v1148 = vadd.f32 0.0, %v1147
      %v1149 = vpop.f32.mrb[0].mxu0
      %1150 = vmatprep.mubr.bf16.mxu0 %v1090
      %1151 = vmatmul.mubr.bf16.gmra.mrb[0].mxu0 %v1089
      %v1152 = vpop.f32.mrb[0].mxu0
      %v1153 = vadd.f32 0.0, %v1152
      %v1154 = vpop.f32.mrb[0].mxu0
      %v1155 = vpop.f32.mrb[0].mxu0
      %v1156 = vadd.f32 0.0, %v1155
      %v1157 = vpop.f32.mrb[0].mxu0
      %1158 = vmatprep.mubr.bf16.mxu0 %v1093
      %1159 = vmatmul.mubr.bf16.gmra.mrb[0].mxu0 %v1092
      %v1160 = vpop.f32.mrb[0].mxu0
      %v1161 = vadd.f32 0.0, %v1160
      %v1162 = vpop.f32.mrb[0].mxu0
      %v1163 = vpop.f32.mrb[0].mxu0
      %v1164 = vadd.f32 0.0, %v1163
      %v1165 = vpop.f32.mrb[0].mxu0
      %1166 = vmatprep.mubr.bf16.mxu0 %v1096
      %1167 = vmatmul.mubr.bf16.gmra.mrb[0].mxu0 %v1095
      %v1168 = vpop.f32.mrb[0].mxu0
      %v1169 = vadd.f32 0.0, %v1168
      %v1170 = vpop.f32.mrb[0].mxu0
      %v1171 = vpop.f32.mrb[0].mxu0
      %v1172 = vadd.f32 0.0, %v1171
      %v1173 = vpop.f32.mrb[0].mxu0
      %1174 = vdwg.mxu0
      %1175 = vmatprep.subr.bf16.mxu0 0
      %1176 = vmatpush1.bf16.msra.mxu0 %v546
      %1177 = vmatprep.subr.bf16.mxu0 0
      %1178 = vmatpush1.bf16.msra.mxu0 %v547
      %1179 = vmatprep.subr.bf16.mxu0 0
      %1180 = vmatpush1.bf16.msra.mxu0 %v548
      %1181 = vmatprep.subr.bf16.mxu0 0
      %1182 = vmatpush1.bf16.msra.mxu0 %v549
      %1183 = vmatprep.subr.bf16.mxu0 0
      %1184 = vmatpush1.bf16.msra.mxu0 %v550
      %1185 = vmatprep.subr.bf16.mxu0 0
      %1186 = vmatpush1.bf16.msra.mxu0 %v551
      %1187 = vmatprep.subr.bf16.mxu0 0
      %1188 = vmatpush1.bf16.msra.mxu0 %v552
      %1189 = vmatprep.subr.bf16.mxu0 0
      %1190 = vmatpush1.bf16.msra.mxu0 %v553
      %1191 = vmatprep.subr.bf16.mxu0 0
      %1192 = vmatpush1.bf16.msra.mxu0 0
      %1193 = vmatprep.subr.bf16.mxu0 0
      %1194 = vmatpush1.bf16.msra.mxu0 0
      %1195 = vmatprep.subr.bf16.mxu0 0
      %1196 = vmatpush1.bf16.msra.mxu0 0
      %1197 = vmatprep.subr.bf16.mxu0 0
      %1198 = vmatpush1.bf16.msra.mxu0 0
      %1199 = vmatprep.subr.bf16.mxu0 0
      %1200 = vmatpush1.bf16.msra.mxu0 0
      %1201 = vmatprep.subr.bf16.mxu0 0
      %1202 = vmatpush1.bf16.msra.mxu0 0
      %1203 = vmatprep.subr.bf16.mxu0 0
      %1204 = vmatpush1.bf16.msra.mxu0 0
      %1205 = vmatprep.subr.bf16.mxu0 0
      %1206 = vmatpush1.bf16.msra.mxu0 0
      %1207 = vmatprep.mubr.bf16.mxu0 0
      %1208 = vmatmul.mubr.bf16.gmra.mrb[0].mxu0 %v1088
      %v1209 = vpop.f32.mrb[0].mxu0
      %v1210 = vadd.f32 %v1145, %v1209
      %v1211 = vpop.f32.mrb[0].mxu0
      %v1212 = vpop.f32.mrb[0].mxu0
      %v1213 = vadd.f32 %v1148, %v1212
      %v1214 = vpop.f32.mrb[0].mxu0
      %1215 = vmatprep.mubr.bf16.mxu0 0
      %1216 = vmatmul.mubr.bf16.gmra.mrb[0].mxu0 %v1091
      %v1217 = vpop.f32.mrb[0].mxu0
      %v1218 = vadd.f32 %v1153, %v1217
      %v1219 = vpop.f32.mrb[0].mxu0
      %v1220 = vpop.f32.mrb[0].mxu0
      %v1221 = vadd.f32 %v1156, %v1220
      %v1222 = vpop.f32.mrb[0].mxu0
      %1223 = vmatprep.mubr.bf16.mxu0 0
      %1224 = vmatmul.mubr.bf16.gmra.mrb[0].mxu0 %v1094
      %v1225 = vpop.f32.mrb[0].mxu0
      %v1226 = vadd.f32 %v1161, %v1225
      %v1227 = vpop.f32.mrb[0].mxu0
      %v1228 = vpop.f32.mrb[0].mxu0
      %v1229 = vadd.f32 %v1164, %v1228
      %v1230 = vpop.f32.mrb[0].mxu0
      %1231 = vmatprep.mubr.bf16.mxu0 0
      %1232 = vmatmul.mubr.bf16.gmra.mrb[0].mxu0 %v1097
      %v1233 = vpop.f32.mrb[0].mxu0
      %v1234 = vadd.f32 %v1169, %v1233
      %v1235 = vpop.f32.mrb[0].mxu0
      %v1236 = vpop.f32.mrb[0].mxu0
      %v1237 = vadd.f32 %v1172, %v1236
      %v1238 = vpop.f32.mrb[0].mxu0
      %1239 = vdwg.mxu0
      %v1256 = vunpack.c.l.b16 %v218
      %v1257 = vunpack.c.h.b16 %v218
      %v1258 = vunpack.c.l.b16 %v219
      %v1259 = vunpack.c.l.b16 %v220
      %v1260 = vunpack.c.h.b16 %v220
      %v1261 = vunpack.c.l.b16 %v221
      %v1262 = vunpack.c.l.b16 %v222
      %v1263 = vunpack.c.h.b16 %v222
      %v1264 = vunpack.c.l.b16 %v223
      %v1265 = vunpack.c.l.b16 %v224
      %v1266 = vunpack.c.h.b16 %v224
      %v1267 = vunpack.c.l.b16 %v225
      %v1268 = vunpack.c.l.b16 %v226
      %v1269 = vunpack.c.h.b16 %v226
      %v1270 = vunpack.c.l.b16 %v227
      %v1271 = vunpack.c.l.b16 %v228
      %v1272 = vunpack.c.h.b16 %v228
      %v1273 = vunpack.c.l.b16 %v229
      %v1274 = vunpack.c.l.b16 %v230
      %v1275 = vunpack.c.h.b16 %v230
      %v1276 = vunpack.c.l.b16 %v231
      %v1277 = vunpack.c.l.b16 %v232
      %v1278 = vunpack.c.h.b16 %v232
      %v1279 = vunpack.c.l.b16 %v233
      %v1280 = vpack.c.b16 %v1259, %v1256
      %v1281 = vpack.c.b16 %v1260, %v1257
      %v1282 = vpack.c.b16 %v1261, %v1258
      %v1283 = vpack.c.b16 %v1265, %v1262
      %v1284 = vpack.c.b16 %v1266, %v1263
      %v1285 = vpack.c.b16 %v1267, %v1264
      %v1286 = vpack.c.b16 %v1271, %v1268
      %v1287 = vpack.c.b16 %v1272, %v1269
      %v1288 = vpack.c.b16 %v1273, %v1270
      %v1289 = vpack.c.b16 %v1277, %v1274
      %v1290 = vpack.c.b16 %v1278, %v1275
      %v1291 = vpack.c.b16 %v1279, %v1276
      %1304 = vmatprep.subr.bf16.mxu0 0
      %1305 = vmatpush1.bf16.msra.mxu0 %v868
      %1306 = vmatprep.subr.bf16.mxu0 0
      %1307 = vmatpush1.bf16.msra.mxu0 %v869
      %1308 = vmatprep.subr.bf16.mxu0 0
      %1309 = vmatpush1.bf16.msra.mxu0 %v870
      %1310 = vmatprep.subr.bf16.mxu0 0
      %1311 = vmatpush1.bf16.msra.mxu0 %v871
      %1312 = vmatprep.subr.bf16.mxu0 0
      %1313 = vmatpush1.bf16.msra.mxu0 %v872
      %1314 = vmatprep.subr.bf16.mxu0 0
      %1315 = vmatpush1.bf16.msra.mxu0 %v873
      %1316 = vmatprep.subr.bf16.mxu0 0
      %1317 = vmatpush1.bf16.msra.mxu0 %v874
      %1318 = vmatprep.subr.bf16.mxu0 0
      %1319 = vmatpush1.bf16.msra.mxu0 %v875
      %1320 = vmatprep.subr.bf16.mxu0 0
      %1321 = vmatpush1.bf16.msra.mxu0 %v876
      %1322 = vmatprep.subr.bf16.mxu0 0
      %1323 = vmatpush1.bf16.msra.mxu0 %v877
      %1324 = vmatprep.subr.bf16.mxu0 0
      %1325 = vmatpush1.bf16.msra.mxu0 %v878
      %1326 = vmatprep.subr.bf16.mxu0 0
      %1327 = vmatpush1.bf16.msra.mxu0 %v879
      %1328 = vmatprep.subr.bf16.mxu0 0
      %1329 = vmatpush1.bf16.msra.mxu0 %v880
      %1330 = vmatprep.subr.bf16.mxu0 0
      %1331 = vmatpush1.bf16.msra.mxu0 %v881
      %1332 = vmatprep.subr.bf16.mxu0 0
      %1333 = vmatpush1.bf16.msra.mxu0 %v882
      %1334 = vmatprep.subr.bf16.mxu0 0
      %1335 = vmatpush1.bf16.msra.mxu0 %v883
      %1336 = vmatprep.mubr.bf16.mxu0 %v1281
      %1337 = vmatmul.mubr.bf16.gmra.mrb[0].mxu0 %v1280
      %v1338 = vpop.f32.mrb[0].mxu0
      %v1339 = vadd.f32 %v1210, %v1338
      %v1340 = vpop.f32.mrb[0].mxu0
      %v1341 = vpop.f32.mrb[0].mxu0
      %v1342 = vadd.f32 %v1213, %v1341
      %v1343 = vpop.f32.mrb[0].mxu0
      %1344 = vmatprep.mubr.bf16.mxu0 %v1284
      %1345 = vmatmul.mubr.bf16.gmra.mrb[0].mxu0 %v1283
      %v1346 = vpop.f32.mrb[0].mxu0
      %v1347 = vadd.f32 %v1218, %v1346
      %v1348 = vpop.f32.mrb[0].mxu0
      %v1349 = vpop.f32.mrb[0].mxu0
      %v1350 = vadd.f32 %v1221, %v1349
      %v1351 = vpop.f32.mrb[0].mxu0
      %1352 = vmatprep.mubr.bf16.mxu0 %v1287
      %1353 = vmatmul.mubr.bf16.gmra.mrb[0].mxu0 %v1286
      %v1354 = vpop.f32.mrb[0].mxu0
      %v1355 = vadd.f32 %v1226, %v1354
      %v1356 = vpop.f32.mrb[0].mxu0
      %v1357 = vpop.f32.mrb[0].mxu0
      %v1358 = vadd.f32 %v1229, %v1357
      %v1359 = vpop.f32.mrb[0].mxu0
      %1360 = vmatprep.mubr.bf16.mxu0 %v1290
      %1361 = vmatmul.mubr.bf16.gmra.mrb[0].mxu0 %v1289
      %v1362 = vpop.f32.mrb[0].mxu0
      %v1363 = vadd.f32 %v1234, %v1362
      %v1364 = vpop.f32.mrb[0].mxu0
      %v1365 = vpop.f32.mrb[0].mxu0
      %v1366 = vadd.f32 %v1237, %v1365
      %v1367 = vpop.f32.mrb[0].mxu0
      %1368 = vdwg.mxu0
      %1369 = vmatprep.subr.bf16.mxu0 0
      %1370 = vmatpush1.bf16.msra.mxu0 %v884
      %1371 = vmatprep.subr.bf16.mxu0 0
      %1372 = vmatpush1.bf16.msra.mxu0 %v885
      %1373 = vmatprep.subr.bf16.mxu0 0
      %1374 = vmatpush1.bf16.msra.mxu0 %v886
      %1375 = vmatprep.subr.bf16.mxu0 0
      %1376 = vmatpush1.bf16.msra.mxu0 %v887
      %1377 = vmatprep.subr.bf16.mxu0 0
      %1378 = vmatpush1.bf16.msra.mxu0 %v888
      %1379 = vmatprep.subr.bf16.mxu0 0
      %1380 = vmatpush1.bf16.msra.mxu0 %v889
      %1381 = vmatprep.subr.bf16.mxu0 0
      %1382 = vmatpush1.bf16.msra.mxu0 %v890
      %1383 = vmatprep.subr.bf16.mxu0 0
      %1384 = vmatpush1.bf16.msra.mxu0 %v891
      %1385 = vmatprep.subr.bf16.mxu0 0
      %1386 = vmatpush1.bf16.msra.mxu0 0
      %1387 = vmatprep.subr.bf16.mxu0 0
      %1388 = vmatpush1.bf16.msra.mxu0 0
      %1389 = vmatprep.subr.bf16.mxu0 0
      %1390 = vmatpush1.bf16.msra.mxu0 0
      %1391 = vmatprep.subr.bf16.mxu0 0
      %1392 = vmatpush1.bf16.msra.mxu0 0
      %1393 = vmatprep.subr.bf16.mxu0 0
      %1394 = vmatpush1.bf16.msra.mxu0 0
      %1395 = vmatprep.subr.bf16.mxu0 0
      %1396 = vmatpush1.bf16.msra.mxu0 0
      %1397 = vmatprep.subr.bf16.mxu0 0
      %1398 = vmatpush1.bf16.msra.mxu0 0
      %1399 = vmatprep.subr.bf16.mxu0 0
      %1400 = vmatpush1.bf16.msra.mxu0 0
      %1401 = vmatprep.mubr.bf16.mxu0 0
      %1402 = vmatmul.mubr.bf16.gmra.mrb[0].mxu0 %v1282
      %v1403 = vpop.f32.mrb[0].mxu0
      %v1404 = vadd.f32 %v1339, %v1403
      %v1405 = vpop.f32.mrb[0].mxu0
      %v1406 = vpop.f32.mrb[0].mxu0
      %v1407 = vadd.f32 %v1342, %v1406
      %v1408 = vpop.f32.mrb[0].mxu0
      %1409 = vmatprep.mubr.bf16.mxu0 0
      %1410 = vmatmul.mubr.bf16.gmra.mrb[0].mxu0 %v1285
      %v1411 = vpop.f32.mrb[0].mxu0
      %v1412 = vadd.f32 %v1347, %v1411
      %v1413 = vpop.f32.mrb[0].mxu0
      %v1414 = vpop.f32.mrb[0].mxu0
      %v1415 = vadd.f32 %v1350, %v1414
      %v1416 = vpop.f32.mrb[0].mxu0
      %1417 = vmatprep.mubr.bf16.mxu0 0
      %1418 = vmatmul.mubr.bf16.gmra.mrb[0].mxu0 %v1288
      %v1419 = vpop.f32.mrb[0].mxu0
      %v1420 = vadd.f32 %v1355, %v1419
      %v1421 = vpop.f32.mrb[0].mxu0
      %v1422 = vpop.f32.mrb[0].mxu0
      %v1423 = vadd.f32 %v1358, %v1422
      %v1424 = vpop.f32.mrb[0].mxu0
      %1425 = vmatprep.mubr.bf16.mxu0 0
      %1426 = vmatmul.mubr.bf16.gmra.mrb[0].mxu0 %v1291
      %v1427 = vpop.f32.mrb[0].mxu0
      %v1428 = vadd.f32 %v1363, %v1427
      %v1429 = vpop.f32.mrb[0].mxu0
      %v1430 = vpop.f32.mrb[0].mxu0
      %v1431 = vadd.f32 %v1366, %v1430
      %v1432 = vpop.f32.mrb[0].mxu0
      %1433 = vdwg.mxu0
      %s1434 = sadd.s32 %s195, 2
      %s1435 = smul.u32 %s1434, 6
      %s1436 = smul.addr %s1435, 4
      %s1437 = scalar_lea.vmem %s183, %s1436
      %v1438 = vld [vmem:[%s1437] sm:$0xff]
      %v1439 = vld [vmem:[%s1437 + $0x8] sm:$0xf]
      %v1440 = vld [vmem:[%s1437 + $0x18] sm:$0xff]
      %v1441 = vld [vmem:[%s1437 + $0x20] sm:$0xf]
      %v1442 = vld [vmem:[%s1437 + $0x30] sm:$0xff]
      %v1443 = vld [vmem:[%s1437 + $0x38] sm:$0xf]
      %v1444 = vld [vmem:[%s1437 + $0x48] sm:$0xff]
      %v1445 = vld [vmem:[%s1437 + $0x50] sm:$0xf]
      %v1446 = vld [vmem:[%s1437 + $0x60] sm:$0xff]
      %v1447 = vld [vmem:[%s1437 + $0x68] sm:$0xf]
      %v1448 = vld [vmem:[%s1437 + $0x78] sm:$0xff]
      %v1449 = vld [vmem:[%s1437 + $0x80] sm:$0xf]
      %v1450 = vld [vmem:[%s1437 + $0x90] sm:$0xff]
      %v1451 = vld [vmem:[%s1437 + $0x98] sm:$0xf]
      %v1452 = vld [vmem:[%s1437 + $0xa8] sm:$0xff]
      %v1453 = vld [vmem:[%s1437 + $0xb0] sm:$0xf]
      %s1454 = sadd.s32 3, %s1435
      %s1455 = smul.addr %s1454, 4
      %s1456 = scalar_lea.vmem %s183, %s1455
      %v1457 = vld [vmem:[%s1456] sm:$0xff]
      %v1458 = vld [vmem:[%s1456 + $0x8] sm:$0xf]
      %v1459 = vld [vmem:[%s1456 + $0x18] sm:$0xff]
      %v1460 = vld [vmem:[%s1456 + $0x20] sm:$0xf]
      %v1461 = vld [vmem:[%s1456 + $0x30] sm:$0xff]
      %v1462 = vld [vmem:[%s1456 + $0x38] sm:$0xf]
      %v1463 = vld [vmem:[%s1456 + $0x48] sm:$0xff]
      %v1464 = vld [vmem:[%s1456 + $0x50] sm:$0xf]
      %v1465 = vld [vmem:[%s1456 + $0x60] sm:$0xff]
      %v1466 = vld [vmem:[%s1456 + $0x68] sm:$0xf]
      %v1467 = vld [vmem:[%s1456 + $0x78] sm:$0xff]
      %v1468 = vld [vmem:[%s1456 + $0x80] sm:$0xf]
      %v1469 = vld [vmem:[%s1456 + $0x90] sm:$0xff]
      %v1470 = vld [vmem:[%s1456 + $0x98] sm:$0xf]
      %v1471 = vld [vmem:[%s1456 + $0xa8] sm:$0xff]
      %v1472 = vld [vmem:[%s1456 + $0xb0] sm:$0xf]
      %s1473 = scalar_lea.vmem %s1, 384
      %v1474 = vld [vmem:[%s1473] sm:$0xf]
      %v1475 = vld [vmem:[%s1473 + $0x4] sm:$0xf]
      %v1476 = vld [vmem:[%s1473 + $0x8] sm:$0xf]
      %v1477 = vld [vmem:[%s1473 + $0xc] sm:$0xf]
      %v1478 = vld [vmem:[%s1473 + $0x10] sm:$0xf]
      %v1479 = vld [vmem:[%s1473 + $0x14] sm:$0xf]
      %v1480 = vld [vmem:[%s1473 + $0x18] sm:$0xf]
      %v1481 = vld [vmem:[%s1473 + $0x1c] sm:$0xf]
      %v1482 = vld [vmem:[%s1473 + $0x20] sm:$0xf]
      %v1483 = vld [vmem:[%s1473 + $0x24] sm:$0xf]
      %v1484 = vld [vmem:[%s1473 + $0x28] sm:$0xf]
      %v1485 = vld [vmem:[%s1473 + $0x2c] sm:$0xf]
      %v1486 = vld [vmem:[%s1473 + $0x30] sm:$0xf]
      %v1487 = vld [vmem:[%s1473 + $0x34] sm:$0xf]
      %v1488 = vld [vmem:[%s1473 + $0x38] sm:$0xf]
      %v1489 = vld [vmem:[%s1473 + $0x3c] sm:$0xf]
      %v1490 = vld [vmem:[%s1473 + $0x40] sm:$0xf]
      %v1491 = vld [vmem:[%s1473 + $0x44] sm:$0xf]
      %v1492 = vld [vmem:[%s1473 + $0x48] sm:$0xf]
      %v1493 = vld [vmem:[%s1473 + $0x4c] sm:$0xf]
      %v1494 = vld [vmem:[%s1473 + $0x50] sm:$0xf]
      %v1495 = vld [vmem:[%s1473 + $0x54] sm:$0xf]
      %v1496 = vld [vmem:[%s1473 + $0x58] sm:$0xf]
      %v1497 = vld [vmem:[%s1473 + $0x5c] sm:$0xf]
      %v1498 = vld [vmem:[%s1473 + $0x60] sm:$0xf]
      %v1499 = vld [vmem:[%s1473 + $0x64] sm:$0xf]
      %v1500 = vld [vmem:[%s1473 + $0x68] sm:$0xf]
      %v1501 = vld [vmem:[%s1473 + $0x6c] sm:$0xf]
      %v1502 = vld [vmem:[%s1473 + $0x70] sm:$0xf]
      %v1503 = vld [vmem:[%s1473 + $0x74] sm:$0xf]
      %v1504 = vld [vmem:[%s1473 + $0x78] sm:$0xf]
      %v1505 = vld [vmem:[%s1473 + $0x7c] sm:$0xf]
      %v1506 = vld [vmem:[%s1473 + $0x80] sm:$0xf]
      %v1507 = vld [vmem:[%s1473 + $0x84] sm:$0xf]
      %v1508 = vld [vmem:[%s1473 + $0x88] sm:$0xf]
      %v1509 = vld [vmem:[%s1473 + $0x8c] sm:$0xf]
      %v1510 = vld [vmem:[%s1473 + $0x90] sm:$0xf]
      %v1511 = vld [vmem:[%s1473 + $0x94] sm:$0xf]
      %v1512 = vld [vmem:[%s1473 + $0x98] sm:$0xf]
      %v1513 = vld [vmem:[%s1473 + $0x9c] sm:$0xf]
      %v1514 = vld [vmem:[%s1473 + $0xa0] sm:$0xf]
      %v1515 = vld [vmem:[%s1473 + $0xa4] sm:$0xf]
      %v1516 = vld [vmem:[%s1473 + $0xa8] sm:$0xf]
      %v1517 = vld [vmem:[%s1473 + $0xac] sm:$0xf]
      %v1518 = vld [vmem:[%s1473 + $0xb0] sm:$0xf]
      %v1519 = vld [vmem:[%s1473 + $0xb4] sm:$0xf]
      %v1520 = vld [vmem:[%s1473 + $0xb8] sm:$0xf]
      %v1521 = vld [vmem:[%s1473 + $0xbc] sm:$0xf]
      %v1538 = vunpack.c.l.b16 %v1438
      %v1539 = vunpack.c.h.b16 %v1438
      %v1540 = vunpack.c.l.b16 %v1439
      %v1541 = vunpack.c.l.b16 %v1440
      %v1542 = vunpack.c.h.b16 %v1440
      %v1543 = vunpack.c.l.b16 %v1441
      %v1544 = vunpack.c.l.b16 %v1442
      %v1545 = vunpack.c.h.b16 %v1442
      %v1546 = vunpack.c.l.b16 %v1443
      %v1547 = vunpack.c.l.b16 %v1444
      %v1548 = vunpack.c.h.b16 %v1444
      %v1549 = vunpack.c.l.b16 %v1445
      %v1550 = vunpack.c.l.b16 %v1446
      %v1551 = vunpack.c.h.b16 %v1446
      %v1552 = vunpack.c.l.b16 %v1447
      %v1553 = vunpack.c.l.b16 %v1448
      %v1554 = vunpack.c.h.b16 %v1448
      %v1555 = vunpack.c.l.b16 %v1449
      %v1556 = vunpack.c.l.b16 %v1450
      %v1557 = vunpack.c.h.b16 %v1450
      %v1558 = vunpack.c.l.b16 %v1451
      %v1559 = vunpack.c.l.b16 %v1452
      %v1560 = vunpack.c.h.b16 %v1452
      %v1561 = vunpack.c.l.b16 %v1453
      %v1562 = vpack.c.b16 %v1541, %v1538
      %v1563 = vpack.c.b16 %v1542, %v1539
      %v1564 = vpack.c.b16 %v1543, %v1540
      %v1565 = vpack.c.b16 %v1547, %v1544
      %v1566 = vpack.c.b16 %v1548, %v1545
      %v1567 = vpack.c.b16 %v1549, %v1546
      %v1568 = vpack.c.b16 %v1553, %v1550
      %v1569 = vpack.c.b16 %v1554, %v1551
      %v1570 = vpack.c.b16 %v1555, %v1552
      %v1571 = vpack.c.b16 %v1559, %v1556
      %v1572 = vpack.c.b16 %v1560, %v1557
      %v1573 = vpack.c.b16 %v1561, %v1558
      %v1634 = vunpack.c.l.b16 %v1474
      %v1635 = vunpack.c.l.b16 %v1475
      %v1636 = vunpack.c.l.b16 %v1476
      %v1637 = vunpack.c.l.b16 %v1477
      %v1638 = vunpack.c.l.b16 %v1478
      %v1639 = vunpack.c.l.b16 %v1479
      %v1640 = vunpack.c.l.b16 %v1480
      %v1641 = vunpack.c.l.b16 %v1481
      %v1642 = vunpack.c.l.b16 %v1482
      %v1643 = vunpack.c.l.b16 %v1483
      %v1644 = vunpack.c.l.b16 %v1484
      %v1645 = vunpack.c.l.b16 %v1485
      %v1646 = vunpack.c.l.b16 %v1486
      %v1647 = vunpack.c.l.b16 %v1487
      %v1648 = vunpack.c.l.b16 %v1488
      %v1649 = vunpack.c.l.b16 %v1489
      %v1650 = vunpack.c.l.b16 %v1490
      %v1651 = vunpack.c.l.b16 %v1491
      %v1652 = vunpack.c.l.b16 %v1492
      %v1653 = vunpack.c.l.b16 %v1493
      %v1654 = vunpack.c.l.b16 %v1494
      %v1655 = vunpack.c.l.b16 %v1495
      %v1656 = vunpack.c.l.b16 %v1496
      %v1657 = vunpack.c.l.b16 %v1497
      %v1658 = vunpack.c.l.b16 %v1498
      %v1659 = vunpack.c.l.b16 %v1499
      %v1660 = vunpack.c.l.b16 %v1500
      %v1661 = vunpack.c.l.b16 %v1501
      %v1662 = vunpack.c.l.b16 %v1502
      %v1663 = vunpack.c.l.b16 %v1503
      %v1664 = vunpack.c.l.b16 %v1504
      %v1665 = vunpack.c.l.b16 %v1505
      %v1666 = vunpack.c.l.b16 %v1506
      %v1667 = vunpack.c.l.b16 %v1507
      %v1668 = vunpack.c.l.b16 %v1508
      %v1669 = vunpack.c.l.b16 %v1509
      %v1670 = vunpack.c.l.b16 %v1510
      %v1671 = vunpack.c.l.b16 %v1511
      %v1672 = vunpack.c.l.b16 %v1512
      %v1673 = vunpack.c.l.b16 %v1513
      %v1674 = vunpack.c.l.b16 %v1514
      %v1675 = vunpack.c.l.b16 %v1515
      %v1676 = vunpack.c.l.b16 %v1516
      %v1677 = vunpack.c.l.b16 %v1517
      %v1678 = vunpack.c.l.b16 %v1518
      %v1679 = vunpack.c.l.b16 %v1519
      %v1680 = vunpack.c.l.b16 %v1520
      %v1681 = vunpack.c.l.b16 %v1521
      %v1682 = vpack.c.b16 %v1635, %v1634
      %v1683 = vpack.c.b16 %v1637, %v1636
      %v1684 = vpack.c.b16 %v1639, %v1638
      %v1685 = vpack.c.b16 %v1641, %v1640
      %v1686 = vpack.c.b16 %v1643, %v1642
      %v1687 = vpack.c.b16 %v1645, %v1644
      %v1688 = vpack.c.b16 %v1647, %v1646
      %v1689 = vpack.c.b16 %v1649, %v1648
      %v1690 = vpack.c.b16 %v1651, %v1650
      %v1691 = vpack.c.b16 %v1653, %v1652
      %v1692 = vpack.c.b16 %v1655, %v1654
      %v1693 = vpack.c.b16 %v1657, %v1656
      %v1694 = vpack.c.b16 %v1659, %v1658
      %v1695 = vpack.c.b16 %v1661, %v1660
      %v1696 = vpack.c.b16 %v1663, %v1662
      %v1697 = vpack.c.b16 %v1665, %v1664
      %v1698 = vpack.c.b16 %v1667, %v1666
      %v1699 = vpack.c.b16 %v1669, %v1668
      %v1700 = vpack.c.b16 %v1671, %v1670
      %v1701 = vpack.c.b16 %v1673, %v1672
      %v1702 = vpack.c.b16 %v1675, %v1674
      %v1703 = vpack.c.b16 %v1677, %v1676
      %v1704 = vpack.c.b16 %v1679, %v1678
      %v1705 = vpack.c.b16 %v1681, %v1680
      %1730 = vmatprep.subr.bf16.mxu0 0
      %1731 = vmatpush1.bf16.msra.mxu0 %v1682
      %1732 = vmatprep.subr.bf16.mxu0 0
      %1733 = vmatpush1.bf16.msra.mxu0 %v1683
      %1734 = vmatprep.subr.bf16.mxu0 0
      %1735 = vmatpush1.bf16.msra.mxu0 %v1684
      %1736 = vmatprep.subr.bf16.mxu0 0
      %1737 = vmatpush1.bf16.msra.mxu0 %v1685
      %1738 = vmatprep.subr.bf16.mxu0 0
      %1739 = vmatpush1.bf16.msra.mxu0 %v1686
      %1740 = vmatprep.subr.bf16.mxu0 0
      %1741 = vmatpush1.bf16.msra.mxu0 %v1687
      %1742 = vmatprep.subr.bf16.mxu0 0
      %1743 = vmatpush1.bf16.msra.mxu0 %v1688
      %1744 = vmatprep.subr.bf16.mxu0 0
      %1745 = vmatpush1.bf16.msra.mxu0 %v1689
      %1746 = vmatprep.subr.bf16.mxu0 0
      %1747 = vmatpush1.bf16.msra.mxu0 %v1690
      %1748 = vmatprep.subr.bf16.mxu0 0
      %1749 = vmatpush1.bf16.msra.mxu0 %v1691
      %1750 = vmatprep.subr.bf16.mxu0 0
      %1751 = vmatpush1.bf16.msra.mxu0 %v1692
      %1752 = vmatprep.subr.bf16.mxu0 0
      %1753 = vmatpush1.bf16.msra.mxu0 %v1693
      %1754 = vmatprep.subr.bf16.mxu0 0
      %1755 = vmatpush1.bf16.msra.mxu0 %v1694
      %1756 = vmatprep.subr.bf16.mxu0 0
      %1757 = vmatpush1.bf16.msra.mxu0 %v1695
      %1758 = vmatprep.subr.bf16.mxu0 0
      %1759 = vmatpush1.bf16.msra.mxu0 %v1696
      %1760 = vmatprep.subr.bf16.mxu0 0
      %1761 = vmatpush1.bf16.msra.mxu0 %v1697
      %1762 = vmatprep.mubr.bf16.mxu0 %v1563
      %1763 = vmatmul.mubr.bf16.gmra.mrb[0].mxu0 %v1562
      %v1764 = vpop.f32.mrb[0].mxu0
      %v1765 = vadd.f32 0.0, %v1764
      %v1766 = vpop.f32.mrb[0].mxu0
      %v1767 = vpop.f32.mrb[0].mxu0
      %v1768 = vadd.f32 0.0, %v1767
      %v1769 = vpop.f32.mrb[0].mxu0
      %1770 = vmatprep.mubr.bf16.mxu0 %v1566
      %1771 = vmatmul.mubr.bf16.gmra.mrb[0].mxu0 %v1565
      %v1772 = vpop.f32.mrb[0].mxu0
      %v1773 = vadd.f32 0.0, %v1772
      %v1774 = vpop.f32.mrb[0].mxu0
      %v1775 = vpop.f32.mrb[0].mxu0
      %v1776 = vadd.f32 0.0, %v1775
      %v1777 = vpop.f32.mrb[0].mxu0
      %1778 = vmatprep.mubr.bf16.mxu0 %v1569
      %1779 = vmatmul.mubr.bf16.gmra.mrb[0].mxu0 %v1568
      %v1780 = vpop.f32.mrb[0].mxu0
      %v1781 = vadd.f32 0.0, %v1780
      %v1782 = vpop.f32.mrb[0].mxu0
      %v1783 = vpop.f32.mrb[0].mxu0
      %v1784 = vadd.f32 0.0, %v1783
      %v1785 = vpop.f32.mrb[0].mxu0
      %1786 = vmatprep.mubr.bf16.mxu0 %v1572
      %1787 = vmatmul.mubr.bf16.gmra.mrb[0].mxu0 %v1571
      %v1788 = vpop.f32.mrb[0].mxu0
      %v1789 = vadd.f32 0.0, %v1788
      %v1790 = vpop.f32.mrb[0].mxu0
      %v1791 = vpop.f32.mrb[0].mxu0
      %v1792 = vadd.f32 0.0, %v1791
      %v1793 = vpop.f32.mrb[0].mxu0
      %1794 = vdwg.mxu0
      %1795 = vmatprep.subr.bf16.mxu0 0
      %1796 = vmatpush1.bf16.msra.mxu0 %v1698
      %1797 = vmatprep.subr.bf16.mxu0 0
      %1798 = vmatpush1.bf16.msra.mxu0 %v1699
      %1799 = vmatprep.subr.bf16.mxu0 0
      %1800 = vmatpush1.bf16.msra.mxu0 %v1700
      %1801 = vmatprep.subr.bf16.mxu0 0
      %1802 = vmatpush1.bf16.msra.mxu0 %v1701
      %1803 = vmatprep.subr.bf16.mxu0 0
      %1804 = vmatpush1.bf16.msra.mxu0 %v1702
      %1805 = vmatprep.subr.bf16.mxu0 0
      %1806 = vmatpush1.bf16.msra.mxu0 %v1703
      %1807 = vmatprep.subr.bf16.mxu0 0
      %1808 = vmatpush1.bf16.msra.mxu0 %v1704
      %1809 = vmatprep.subr.bf16.mxu0 0
      %1810 = vmatpush1.bf16.msra.mxu0 %v1705
      %1811 = vmatprep.subr.bf16.mxu0 0
      %1812 = vmatpush1.bf16.msra.mxu0 0
      %1813 = vmatprep.subr.bf16.mxu0 0
      %1814 = vmatpush1.bf16.msra.mxu0 0
      %1815 = vmatprep.subr.bf16.mxu0 0
      %1816 = vmatpush1.bf16.msra.mxu0 0
      %1817 = vmatprep.subr.bf16.mxu0 0
      %1818 = vmatpush1.bf16.msra.mxu0 0
      %1819 = vmatprep.subr.bf16.mxu0 0
      %1820 = vmatpush1.bf16.msra.mxu0 0
      %1821 = vmatprep.subr.bf16.mxu0 0
      %1822 = vmatpush1.bf16.msra.mxu0 0
      %1823 = vmatprep.subr.bf16.mxu0 0
      %1824 = vmatpush1.bf16.msra.mxu0 0
      %1825 = vmatprep.subr.bf16.mxu0 0
      %1826 = vmatpush1.bf16.msra.mxu0 0
      %1827 = vmatprep.mubr.bf16.mxu0 0
      %1828 = vmatmul.mubr.bf16.gmra.mrb[0].mxu0 %v1564
      %v1829 = vpop.f32.mrb[0].mxu0
      %v1830 = vadd.f32 %v1765, %v1829
      %v1831 = vpop.f32.mrb[0].mxu0
      %v1832 = vpop.f32.mrb[0].mxu0
      %v1833 = vadd.f32 %v1768, %v1832
      %v1834 = vpop.f32.mrb[0].mxu0
      %1835 = vmatprep.mubr.bf16.mxu0 0
      %1836 = vmatmul.mubr.bf16.gmra.mrb[0].mxu0 %v1567
      %v1837 = vpop.f32.mrb[0].mxu0
      %v1838 = vadd.f32 %v1773, %v1837
      %v1839 = vpop.f32.mrb[0].mxu0
      %v1840 = vpop.f32.mrb[0].mxu0
      %v1841 = vadd.f32 %v1776, %v1840
      %v1842 = vpop.f32.mrb[0].mxu0
      %1843 = vmatprep.mubr.bf16.mxu0 0
      %1844 = vmatmul.mubr.bf16.gmra.mrb[0].mxu0 %v1570
      %v1845 = vpop.f32.mrb[0].mxu0
      %v1846 = vadd.f32 %v1781, %v1845
      %v1847 = vpop.f32.mrb[0].mxu0
      %v1848 = vpop.f32.mrb[0].mxu0
      %v1849 = vadd.f32 %v1784, %v1848
      %v1850 = vpop.f32.mrb[0].mxu0
      %1851 = vmatprep.mubr.bf16.mxu0 0
      %1852 = vmatmul.mubr.bf16.gmra.mrb[0].mxu0 %v1573
      %v1853 = vpop.f32.mrb[0].mxu0
      %v1854 = vadd.f32 %v1789, %v1853
      %v1855 = vpop.f32.mrb[0].mxu0
      %v1856 = vpop.f32.mrb[0].mxu0
      %v1857 = vadd.f32 %v1792, %v1856
      %v1858 = vpop.f32.mrb[0].mxu0
      %1859 = vdwg.mxu0
      %v1860 = vadd.f32 %v1016, %v1830
      %v1861 = vadd.f32 %v1019, %v1833
      %v1862 = vadd.f32 %v1024, %v1838
      %v1863 = vadd.f32 %v1027, %v1841
      %v1864 = vadd.f32 %v1032, %v1846
      %v1865 = vadd.f32 %v1035, %v1849
      %v1866 = vadd.f32 %v1040, %v1854
      %v1867 = vadd.f32 %v1043, %v1857
      %v1884 = vunpack.c.l.b16 %v1457
      %v1885 = vunpack.c.h.b16 %v1457
      %v1886 = vunpack.c.l.b16 %v1458
      %v1887 = vunpack.c.l.b16 %v1459
      %v1888 = vunpack.c.h.b16 %v1459
      %v1889 = vunpack.c.l.b16 %v1460
      %v1890 = vunpack.c.l.b16 %v1461
      %v1891 = vunpack.c.h.b16 %v1461
      %v1892 = vunpack.c.l.b16 %v1462
      %v1893 = vunpack.c.l.b16 %v1463
      %v1894 = vunpack.c.h.b16 %v1463
      %v1895 = vunpack.c.l.b16 %v1464
      %v1896 = vunpack.c.l.b16 %v1465
      %v1897 = vunpack.c.h.b16 %v1465
      %v1898 = vunpack.c.l.b16 %v1466
      %v1899 = vunpack.c.l.b16 %v1467
      %v1900 = vunpack.c.h.b16 %v1467
      %v1901 = vunpack.c.l.b16 %v1468
      %v1902 = vunpack.c.l.b16 %v1469
      %v1903 = vunpack.c.h.b16 %v1469
      %v1904 = vunpack.c.l.b16 %v1470
      %v1905 = vunpack.c.l.b16 %v1471
      %v1906 = vunpack.c.h.b16 %v1471
      %v1907 = vunpack.c.l.b16 %v1472
      %v1908 = vpack.c.b16 %v1887, %v1884
      %v1909 = vpack.c.b16 %v1888, %v1885
      %v1910 = vpack.c.b16 %v1889, %v1886
      %v1911 = vpack.c.b16 %v1893, %v1890
      %v1912 = vpack.c.b16 %v1894, %v1891
      %v1913 = vpack.c.b16 %v1895, %v1892
      %v1914 = vpack.c.b16 %v1899, %v1896
      %v1915 = vpack.c.b16 %v1900, %v1897
      %v1916 = vpack.c.b16 %v1901, %v1898
      %v1917 = vpack.c.b16 %v1905, %v1902
      %v1918 = vpack.c.b16 %v1906, %v1903
      %v1919 = vpack.c.b16 %v1907, %v1904
      %1932 = vmatprep.subr.bf16.mxu0 0
      %1933 = vmatpush1.bf16.msra.mxu0 %v1682
      %1934 = vmatprep.subr.bf16.mxu0 0
      %1935 = vmatpush1.bf16.msra.mxu0 %v1683
      %1936 = vmatprep.subr.bf16.mxu0 0
      %1937 = vmatpush1.bf16.msra.mxu0 %v1684
      %1938 = vmatprep.subr.bf16.mxu0 0
      %1939 = vmatpush1.bf16.msra.mxu0 %v1685
      %1940 = vmatprep.subr.bf16.mxu0 0
      %1941 = vmatpush1.bf16.msra.mxu0 %v1686
      %1942 = vmatprep.subr.bf16.mxu0 0
      %1943 = vmatpush1.bf16.msra.mxu0 %v1687
      %1944 = vmatprep.subr.bf16.mxu0 0
      %1945 = vmatpush1.bf16.msra.mxu0 %v1688
      %1946 = vmatprep.subr.bf16.mxu0 0
      %1947 = vmatpush1.bf16.msra.mxu0 %v1689
      %1948 = vmatprep.subr.bf16.mxu0 0
      %1949 = vmatpush1.bf16.msra.mxu0 %v1690
      %1950 = vmatprep.subr.bf16.mxu0 0
      %1951 = vmatpush1.bf16.msra.mxu0 %v1691
      %1952 = vmatprep.subr.bf16.mxu0 0
      %1953 = vmatpush1.bf16.msra.mxu0 %v1692
      %1954 = vmatprep.subr.bf16.mxu0 0
      %1955 = vmatpush1.bf16.msra.mxu0 %v1693
      %1956 = vmatprep.subr.bf16.mxu0 0
      %1957 = vmatpush1.bf16.msra.mxu0 %v1694
      %1958 = vmatprep.subr.bf16.mxu0 0
      %1959 = vmatpush1.bf16.msra.mxu0 %v1695
      %1960 = vmatprep.subr.bf16.mxu0 0
      %1961 = vmatpush1.bf16.msra.mxu0 %v1696
      %1962 = vmatprep.subr.bf16.mxu0 0
      %1963 = vmatpush1.bf16.msra.mxu0 %v1697
      %1964 = vmatprep.mubr.bf16.mxu0 %v1909
      %1965 = vmatmul.mubr.bf16.gmra.mrb[0].mxu0 %v1908
      %v1966 = vpop.f32.mrb[0].mxu0
      %v1967 = vadd.f32 0.0, %v1966
      %v1968 = vpop.f32.mrb[0].mxu0
      %v1969 = vpop.f32.mrb[0].mxu0
      %v1970 = vadd.f32 0.0, %v1969
      %v1971 = vpop.f32.mrb[0].mxu0
      %1972 = vmatprep.mubr.bf16.mxu0 %v1912
      %1973 = vmatmul.mubr.bf16.gmra.mrb[0].mxu0 %v1911
      %v1974 = vpop.f32.mrb[0].mxu0
      %v1975 = vadd.f32 0.0, %v1974
      %v1976 = vpop.f32.mrb[0].mxu0
      %v1977 = vpop.f32.mrb[0].mxu0
      %v1978 = vadd.f32 0.0, %v1977
      %v1979 = vpop.f32.mrb[0].mxu0
      %1980 = vmatprep.mubr.bf16.mxu0 %v1915
      %1981 = vmatmul.mubr.bf16.gmra.mrb[0].mxu0 %v1914
      %v1982 = vpop.f32.mrb[0].mxu0
      %v1983 = vadd.f32 0.0, %v1982
      %v1984 = vpop.f32.mrb[0].mxu0
      %v1985 = vpop.f32.mrb[0].mxu0
      %v1986 = vadd.f32 0.0, %v1985
      %v1987 = vpop.f32.mrb[0].mxu0
      %1988 = vmatprep.mubr.bf16.mxu0 %v1918
      %1989 = vmatmul.mubr.bf16.gmra.mrb[0].mxu0 %v1917
      %v1990 = vpop.f32.mrb[0].mxu0
      %v1991 = vadd.f32 0.0, %v1990
      %v1992 = vpop.f32.mrb[0].mxu0
      %v1993 = vpop.f32.mrb[0].mxu0
      %v1994 = vadd.f32 0.0, %v1993
      %v1995 = vpop.f32.mrb[0].mxu0
      %1996 = vdwg.mxu0
      %1997 = vmatprep.subr.bf16.mxu0 0
      %1998 = vmatpush1.bf16.msra.mxu0 %v1698
      %1999 = vmatprep.subr.bf16.mxu0 0
      %2000 = vmatpush1.bf16.msra.mxu0 %v1699
      %2001 = vmatprep.subr.bf16.mxu0 0
      %2002 = vmatpush1.bf16.msra.mxu0 %v1700
      %2003 = vmatprep.subr.bf16.mxu0 0
      %2004 = vmatpush1.bf16.msra.mxu0 %v1701
      %2005 = vmatprep.subr.bf16.mxu0 0
      %2006 = vmatpush1.bf16.msra.mxu0 %v1702
      %2007 = vmatprep.subr.bf16.mxu0 0
      %2008 = vmatpush1.bf16.msra.mxu0 %v1703
      %2009 = vmatprep.subr.bf16.mxu0 0
      %2010 = vmatpush1.bf16.msra.mxu0 %v1704
      %2011 = vmatprep.subr.bf16.mxu0 0
      %2012 = vmatpush1.bf16.msra.mxu0 %v1705
      %2013 = vmatprep.subr.bf16.mxu0 0
      %2014 = vmatpush1.bf16.msra.mxu0 0
      %2015 = vmatprep.subr.bf16.mxu0 0
      %2016 = vmatpush1.bf16.msra.mxu0 0
      %2017 = vmatprep.subr.bf16.mxu0 0
      %2018 = vmatpush1.bf16.msra.mxu0 0
      %2019 = vmatprep.subr.bf16.mxu0 0
      %2020 = vmatpush1.bf16.msra.mxu0 0
      %2021 = vmatprep.subr.bf16.mxu0 0
      %2022 = vmatpush1.bf16.msra.mxu0 0
      %2023 = vmatprep.subr.bf16.mxu0 0
      %2024 = vmatpush1.bf16.msra.mxu0 0
      %2025 = vmatprep.subr.bf16.mxu0 0
      %2026 = vmatpush1.bf16.msra.mxu0 0
      %2027 = vmatprep.subr.bf16.mxu0 0
      %2028 = vmatpush1.bf16.msra.mxu0 0
      %2029 = vmatprep.mubr.bf16.mxu0 0
      %2030 = vmatmul.mubr.bf16.gmra.mrb[0].mxu0 %v1910
      %v2031 = vpop.f32.mrb[0].mxu0
      %v2032 = vadd.f32 %v1967, %v2031
      %v2033 = vpop.f32.mrb[0].mxu0
      %v2034 = vpop.f32.mrb[0].mxu0
      %v2035 = vadd.f32 %v1970, %v2034
      %v2036 = vpop.f32.mrb[0].mxu0
      %2037 = vmatprep.mubr.bf16.mxu0 0
      %2038 = vmatmul.mubr.bf16.gmra.mrb[0].mxu0 %v1913
      %v2039 = vpop.f32.mrb[0].mxu0
      %v2040 = vadd.f32 %v1975, %v2039
      %v2041 = vpop.f32.mrb[0].mxu0
      %v2042 = vpop.f32.mrb[0].mxu0
      %v2043 = vadd.f32 %v1978, %v2042
      %v2044 = vpop.f32.mrb[0].mxu0
      %2045 = vmatprep.mubr.bf16.mxu0 0
      %2046 = vmatmul.mubr.bf16.gmra.mrb[0].mxu0 %v1916
      %v2047 = vpop.f32.mrb[0].mxu0
      %v2048 = vadd.f32 %v1983, %v2047
      %v2049 = vpop.f32.mrb[0].mxu0
      %v2050 = vpop.f32.mrb[0].mxu0
      %v2051 = vadd.f32 %v1986, %v2050
      %v2052 = vpop.f32.mrb[0].mxu0
      %2053 = vmatprep.mubr.bf16.mxu0 0
      %2054 = vmatmul.mubr.bf16.gmra.mrb[0].mxu0 %v1919
      %v2055 = vpop.f32.mrb[0].mxu0
      %v2056 = vadd.f32 %v1991, %v2055
      %v2057 = vpop.f32.mrb[0].mxu0
      %v2058 = vpop.f32.mrb[0].mxu0
      %v2059 = vadd.f32 %v1994, %v2058
      %v2060 = vpop.f32.mrb[0].mxu0
      %2061 = vdwg.mxu0
      %v2062 = vadd.f32 %v1404, %v2032
      %v2063 = vadd.f32 %v1407, %v2035
      %v2064 = vadd.f32 %v1412, %v2040
      %v2065 = vadd.f32 %v1415, %v2043
      %v2066 = vadd.f32 %v1420, %v2048
      %v2067 = vadd.f32 %v1423, %v2051
      %v2068 = vadd.f32 %v1428, %v2056
      %v2069 = vadd.f32 %v1431, %v2059
      %v2070 = vld [vmem:[%s2] sm:$0x1]
      %v2072 = vlaneseq
      %v2073 = vshrl.u32 %v2072, 7
      %v2074 = vsub.s32 0, %v2073
      %v2075 = vrot.slane %v2070, %v2074
      %v2077 = vadd.f32 %v1860, %v2075
      %v2078 = vadd.f32 %v1861, %v2075
      %v2079 = vadd.f32 %v1862, %v2075
      %v2080 = vadd.f32 %v1863, %v2075
      %v2081 = vadd.f32 %v1864, %v2075
      %v2082 = vadd.f32 %v1865, %v2075
      %v2083 = vadd.f32 %v1866, %v2075
      %v2084 = vadd.f32 %v1867, %v2075
      %v2085 = vmax.f32 %v2077, 0.0
      %v2086 = vmax.f32 %v2078, 0.0
      %v2087 = vmax.f32 %v2079, 0.0
      %v2088 = vmax.f32 %v2080, 0.0
      %v2089 = vmax.f32 %v2081, 0.0
      %v2090 = vmax.f32 %v2082, 0.0
      %v2091 = vmax.f32 %v2083, 0.0
      %v2092 = vmax.f32 %v2084, 0.0
      %v2093 = vadd.f32 %v2062, %v2075
      %v2094 = vadd.f32 %v2063, %v2075
      %v2095 = vadd.f32 %v2064, %v2075
      %v2096 = vadd.f32 %v2065, %v2075
      %v2097 = vadd.f32 %v2066, %v2075
      %v2098 = vadd.f32 %v2067, %v2075
      %v2099 = vadd.f32 %v2068, %v2075
      %v2100 = vadd.f32 %v2069, %v2075
      %v2101 = vmax.f32 %v2093, 0.0
      %v2102 = vmax.f32 %v2094, 0.0
      %v2103 = vmax.f32 %v2095, 0.0
      %v2104 = vmax.f32 %v2096, 0.0
      %v2105 = vmax.f32 %v2097, 0.0
      %v2106 = vmax.f32 %v2098, 0.0
      %v2107 = vmax.f32 %v2099, 0.0
      %v2108 = vmax.f32 %v2100, 0.0
      %v2109 = vmax.f32 %v2085, %v2101
      %v2110 = vmax.f32 %v2086, %v2102
      %v2111 = vmax.f32 %v2087, %v2103
      %v2112 = vmax.f32 %v2088, %v2104
      %v2113 = vmax.f32 %v2089, %v2105
      %v2114 = vmax.f32 %v2090, %v2106
      %v2115 = vmax.f32 %v2091, %v2107
      %v2116 = vmax.f32 %v2092, %v2108
      %v2117 = vmax.f32 %v2109, %v2110
      %v2118 = vpack.c.bf16 %v2117, %v2117
      %2119 = vst [vmem:[%s192] sm:$0xf] %v2118
      %v2120 = vmax.f32 %v2111, %v2112
      %v2121 = vpack.c.bf16 %v2120, %v2120
      %2122 = vst [vmem:[%s192 + $0x4] sm:$0xf] %v2121
      %v2123 = vmax.f32 %v2113, %v2114
      %v2124 = vpack.c.bf16 %v2123, %v2123
      %2125 = vst [vmem:[%s192 + $0x8] sm:$0xf] %v2124
      %v2126 = vmax.f32 %v2115, %v2116
      %v2127 = vpack.c.bf16 %v2126, %v2126
      %2128 = vst [vmem:[%s192 + $0xc] sm:$0xf] %v2127
      %s2129 = smul.u32 4, %s19
      %p2130 = scmp.lt.s32.totalorder %s18, 1
      %s2131 = scalar_select %p2130, %s18, 1
      %p2132 = scmp.lt.s32.totalorder %s2129, 7
      %s2133 = scalar_select %p2132, %s2129, 7
      %s2134 = smul.addr %s2131, 8
      %s2135 = sadd.s32 %s2133, %s2134
      %s2136 = smul.addr %s2135, 4
      %s2137 = scalar_lea.vmem %s3, %s2136
      // Predicated region
      $region33: #{apricot_cnn1_forward.10} parent=31 // pred_check
        %p2138 = pneg %p114
      $region34: #{apricot_cnn1_forward.10} parent=31 // pred_check_branch
        %2140 = sbr.rel (%p2138) target = $region36
      $region35: #{apricot_cnn1_forward.10} parent=31 // pred_region
        %s2141 = smul.u32 4, %s19
      $region36: #{apricot_cnn1_forward.10} parent=31 // pred_fallthru
        _
    $region32: #{apricot_cnn1_forward.10} parent=5 // pred_fallthru
      _
    %p2142 = scmp.le.s32.totalorder 2, %s9
    // Predicated region
    $region37: #{apricot_cnn1_forward.10} parent=5 // pred_check
      %p2143 = pneg %p2142
    $region38: #{apricot_cnn1_forward.10} parent=5 // pred_check_branch
      %2145 = sbr.rel (%p2143) target = $region40
    $region39: #{apricot_cnn1_forward.10} parent=5 // pred_region
      %s2146 = ssub.s32 %s9, 2
      // Predicated region
      $region41: #{apricot_cnn1_forward.10} parent=39 // pred_check
        %p2147 = pneg %p120
      $region42: #{apricot_cnn1_forward.10} parent=39 // pred_check_branch
        %2149 = sbr.rel (%p2147) target = $region44
      $region43: #{apricot_cnn1_forward.10} parent=39 // pred_region
        %s2150 = smul.u32 4, %s21
        %p2151 = scmp.lt.s32.totalorder %s20, 1
        %s2152 = scalar_select %p2151, %s20, 1
        %p2153 = scmp.lt.s32.totalorder %s2150, 7
        %s2154 = scalar_select %p2153, %s2150, 7
        %s2155 = smul.addr %s2152, 8
        %s2156 = sadd.s32 %s2154, %s2155
        %s2157 = smul.addr %s2156, 4
        %s2158 = scalar_lea.vmem %s3, %s2157
      $region44: #{apricot_cnn1_forward.10} parent=39 // pred_fallthru
        _
    $region40: #{apricot_cnn1_forward.10} parent=5 // pred_fallthru
      _
  $region6: #{apricot_cnn1_forward.10} parent=0 // loop_footer
    %s13 = sadd.s32 1, %s9
  $region7: #{apricot_cnn1_forward.10} parent=0 // loop_footer_branch
    %8 = sbr.rel target = $region3
  $region8: #{apricot_cnn1_forward.10} parent=0 // loop_exit
    _

// kernel: apricot_cnn1_forward.11
$region0: #{apricot_cnn1_forward.11}
  #allocation0 [shape = 'u32[]', space=smem, size = 0x4, offset = 0x4, fixed_abs, tag = 'smem constant byte address 0x4 - core index']
  #allocation1 [shape = 'u32[144,128]{1,0:T(1,128)}', space=vmem, size = 0x12000, scoped, tag = 'internal scratch']
  #allocation2 [shape = 'f32[2,128]{1,0:T(2,128)}', space=vmem, size = 0x400, scoped, tag = 'scratch operand']
  %s0 = inlined_call_operand.vmem [shape: bf16[2,8192], index: 0, kind: input, shape index: {}]
  %s1 = inlined_call_operand.vmem [shape: bf16[8192,256], index: 1, kind: input, shape index: {}]
  %s2 = inlined_call_operand.vmem [shape: f32[1,256], index: 2, kind: input, shape index: {}]
  %s3 = inlined_call_operand.vmem [shape: bf16[2,256], index: 3, kind: output, shape index: {}]
  %s4 = sld [smem:[#allocation0]]
  $region94: #{apricot_cnn1_forward.11} parent=0
    _
  %s6 = ssub.s32 1, %s4
  %s7 = scalar_select 0, %s6, %s4
  $region1: #{apricot_cnn1_forward.11} parent=0
    #allocation3 [shape = 'u8[1048576]{0}', space=vmem, size = 0x100000, scoped, tag = 'input window, operand 1']
    loop: start=0, step=1, limit=10
    $region2: #{apricot_cnn1_forward.11} parent=1 // loop_pre_header
      _
    $region3: #{apricot_cnn1_forward.11} parent=1 // loop_header
      %s9 = sphi 0, %s13
      %p10 = scmp.ge.s32.totalorder %s9, 10
      %s16 = sphi 0, %s28
      %s17 = sphi 0, %s24
      %s18 = sphi 0, %s16
      %s19 = sphi 0, %s17
      %s20 = sphi 0, %s18
      %s21 = sphi 0, %s19
      %s31 = sphi 0, %s33
      %s34 = sphi 0, %s31
      %s35 = sphi 0, %s34
      %s51 = sphi 0, %s35
      %s59 = sphi 0, %s61
      %s62 = sphi 0, %s59
      %s63 = sphi 0, %s62
      %s79 = sphi 0, %s63
      %s85 = sphi 0, %s87
      %s88 = sphi 0, %s85
      %s89 = sphi 0, %s88
      %s105 = sphi 0, %s89
      %s111 = sphi 0, %s113
      %s114 = sphi 0, %s111
      %s115 = sphi 0, %s114
      %s131 = sphi 0, %s115
    $region4: #{apricot_cnn1_forward.11} parent=1 // loop_header_branch
      %12 = sbr.rel (%p10) target = $region8
    $region5: #{apricot_cnn1_forward.11} parent=1 // loop_body
      %s14 = ssub.s32 %s9, 1
      %s15 = ssub.s32 %s9, 2
      %s22 = sadd.s32 1, %s17
      %p23 = scmp.ge.s32.totalorder %s22, 4
      %s24 = scalar_select %p23, 0, %s22
      %s25 = sadd.s32 1, %s16
      %s26 = scalar_select %p23, %s25, %s16
      %p27 = scmp.ge.s32.totalorder %s26, 2
      %s28 = scalar_select %p27, 0, %s26
      %s29 = ssub.s32 %s17, %s24
      %p30 = scmp.eq.s32.totalorder %s29, 0
      %s32 = sadd.s32 %s31, 1
      %s33 = scalar_select %p30, %s31, %s32
      %p36 = pneg %p30
      %p37 = scmp.eq.s32.totalorder %s9, 7
      %p38 = por %p36, %p37
      %p39 = scmp.ne.s32.totalorder %s31, %s34
      %p40 = scmp.eq.s32.totalorder %s9, 0
      %p41 = por %p39, %p40
      %p42 = scmp.ne.s32.totalorder %s31, %s34
      %p43 = scmp.eq.s32.totalorder %s14, 7
      %p44 = por %p42, %p43
      %p45 = scmp.ne.s32.totalorder %s34, %s35
      %p46 = scmp.eq.s32.totalorder %s14, 0
      %p47 = por %p45, %p46
      %p48 = scmp.ne.s32.totalorder %s34, %s35
      %p49 = scmp.eq.s32.totalorder %s15, 7
      %p50 = por %p48, %p49
      %p52 = scmp.ne.s32.totalorder %s35, %s51
      %p53 = scmp.eq.s32.totalorder %s15, 0
      %p54 = por %p52, %p53
      %s55 = ssub.s32 %s17, %s24
      %s56 = ssub.s32 %s16, %s28
      %s57 = sor.u32 %s55, %s56
      %p58 = scmp.eq.s32.totalorder %s57, 0
      %s60 = sadd.s32 %s59, 1
      %s61 = scalar_select %p58, %s59, %s60
      %p64 = pneg %p58
      %p65 = scmp.eq.s32.totalorder %s9, 7
      %p66 = por %p64, %p65
      %p67 = scmp.ne.s32.totalorder %s59, %s62
      %p68 = scmp.eq.s32.totalorder %s9, 0
      %p69 = por %p67, %p68
      %p70 = scmp.ne.s32.totalorder %s59, %s62
      %p71 = scmp.eq.s32.totalorder %s14, 7
      %p72 = por %p70, %p71
      %p73 = scmp.ne.s32.totalorder %s62, %s63
      %p74 = scmp.eq.s32.totalorder %s14, 0
      %p75 = por %p73, %p74
      %p76 = scmp.ne.s32.totalorder %s62, %s63
      %p77 = scmp.eq.s32.totalorder %s15, 7
      %p78 = por %p76, %p77
      %p80 = scmp.ne.s32.totalorder %s63, %s79
      %p81 = scmp.eq.s32.totalorder %s15, 0
      %p82 = por %p80, %p81
      %s83 = ssub.s32 %s16, %s28
      %p84 = scmp.eq.s32.totalorder %s83, 0
      %s86 = sadd.s32 %s85, 1
      %s87 = scalar_select %p84, %s85, %s86
      %p90 = pneg %p84
      %p91 = scmp.eq.s32.totalorder %s9, 7
      %p92 = por %p90, %p91
      %p93 = scmp.ne.s32.totalorder %s85, %s88
      %p94 = scmp.eq.s32.totalorder %s9, 0
      %p95 = por %p93, %p94
      %p96 = scmp.ne.s32.totalorder %s85, %s88
      %p97 = scmp.eq.s32.totalorder %s14, 7
      %p98 = por %p96, %p97
      %p99 = scmp.ne.s32.totalorder %s88, %s89
      %p100 = scmp.eq.s32.totalorder %s14, 0
      %p101 = por %p99, %p100
      %p102 = scmp.ne.s32.totalorder %s88, %s89
      %p103 = scmp.eq.s32.totalorder %s15, 7
      %p104 = por %p102, %p103
      %p106 = scmp.ne.s32.totalorder %s89, %s105
      %p107 = scmp.eq.s32.totalorder %s15, 0
      %p108 = por %p106, %p107
      %s109 = ssub.s32 %s16, %s28
      %p110 = scmp.eq.s32.totalorder %s109, 0
      %s112 = sadd.s32 %s111, 1
      %s113 = scalar_select %p110, %s111, %s112
      %p116 = pneg %p110
      %p117 = scmp.eq.s32.totalorder %s9, 7
      %p118 = por %p116, %p117
      %p119 = scmp.ne.s32.totalorder %s111, %s114
      %p120 = scmp.eq.s32.totalorder %s9, 0
      %p121 = por %p119, %p120
      %p122 = scmp.ne.s32.totalorder %s111, %s114
      %p123 = scmp.eq.s32.totalorder %s14, 7
      %p124 = por %p122, %p123
      %p125 = scmp.ne.s32.totalorder %s114, %s115
      %p126 = scmp.eq.s32.totalorder %s14, 0
      %p127 = por %p125, %p126
      %p128 = scmp.ne.s32.totalorder %s114, %s115
      %p129 = scmp.eq.s32.totalorder %s15, 7
      %p130 = por %p128, %p129
      %p132 = scmp.ne.s32.totalorder %s115, %s131
      %p133 = scmp.eq.s32.totalorder %s15, 0
      %p134 = por %p132, %p133
      %p135 = scmp.le.s32.totalorder 1, %s9
      %p136 = scmp.lt.s32.totalorder %s9, 9
      %p137 = pnand %p135, %p136
      %p138 = pneg %p137
      // Predicated region
      $region9: #{apricot_cnn1_forward.11} parent=5 // pred_check
        _
      $region10: #{apricot_cnn1_forward.11} parent=5 // pred_check_branch
        %140 = sbr.rel (%p137) target = $region12
      $region11: #{apricot_cnn1_forward.11} parent=5 // pred_region
        %s141 = ssub.s32 %s9, 1
      $region12: #{apricot_cnn1_forward.11} parent=5 // pred_fallthru
        _
      %p142 = scmp.lt.s32.totalorder %s9, 8
      // Predicated region
      $region13: #{apricot_cnn1_forward.11} parent=5 // pred_check
        %p143 = pneg %p142
      $region14: #{apricot_cnn1_forward.11} parent=5 // pred_check_branch
        %145 = sbr.rel (%p143) target = $region16
      $region15: #{apricot_cnn1_forward.11} parent=5 // pred_region
        // Predicated region
        $region17: #{apricot_cnn1_forward.11} parent=15 // pred_check
          %p146 = pneg %p41
        $region18: #{apricot_cnn1_forward.11} parent=15 // pred_check_branch
          %148 = sbr.rel (%p146) target = $region20
        $region19: #{apricot_cnn1_forward.11} parent=15 // pred_region
          %s149 = smul.u32 16, %s17
          %p150 = scmp.lt.s32.totalorder %s149, 63
          %s151 = scalar_select %p150, %s149, 63
          %s152 = scalar_lea.vmem %s0, %s151
          %s153 = smul.u32 16, %s17
        $region20: #{apricot_cnn1_forward.11} parent=15 // pred_fallthru
          _
        // Predicated region
        $region21: #{apricot_cnn1_forward.11} parent=15 // pred_check
          %p154 = pneg %p69
        $region22: #{apricot_cnn1_forward.11} parent=15 // pred_check_branch
          %156 = sbr.rel (%p154) target = $region24
        $region23: #{apricot_cnn1_forward.11} parent=15 // pred_region
          %s157 = sand.u32 %s59, 1
          %s158 = sand.u32 %s59, 1
          %s159 = smul.addr %s158, 1024
          %s160 = scalar_lea.vmem [#allocation3], %s159
          %s161 = smul.u32 256, %s17
          %s162 = smul.addr %s161, 2
          %s163 = sadd.s32 %s16, %s162
          %s164 = smul.addr %s163, 4
          %s165 = scalar_lea.vmem %s1, %s164
          // Predicated region
          $region25: #{apricot_cnn1_forward.11} parent=23 // pred_check
            _
          $region26: #{apricot_cnn1_forward.11} parent=23 // pred_check_branch
            %167 = sbr.rel (0) target = $region28
          $region27: #{apricot_cnn1_forward.11} parent=23 // pred_region
            // Predicated region
            $region29: #{apricot_cnn1_forward.11} parent=27 // pred_check
              _
            $region30: #{apricot_cnn1_forward.11} parent=27 // pred_check_branch
              %169 = sbr.rel target = $region32
            $region31: #{apricot_cnn1_forward.11} parent=27 // pred_region
              // Predicated region
              $region44: #{apricot_cnn1_forward.11} parent=31 // pred_check
                _
              $region45: #{apricot_cnn1_forward.11} parent=31 // pred_check_branch
                %694 = sbr.rel (0) target = $region47
              $region46: #{apricot_cnn1_forward.11} parent=31 // pred_region
                loop: start=0, step=1, limit=1
                $region48: #{apricot_cnn1_forward.11} parent=46 // loop_pre_header
                  _
                $region49: #{apricot_cnn1_forward.11} parent=46 // loop_header
                  %s696 = sphi 0, %s700
                  %p697 = scmp.ge.s32.totalorder %s696, 1
                  %s701 = sphi %s165, %s165
                  %s702 = sphi %s160, %s160
                $region50: #{apricot_cnn1_forward.11} parent=46 // loop_header_branch
                  %699 = sbr.rel (%p697) target = $region54
                $region51: #{apricot_cnn1_forward.11} parent=46 // loop_body
                  _
                $region52: #{apricot_cnn1_forward.11} parent=46 // loop_footer
                  %s700 = sadd.s32 1, %s696
                $region53: #{apricot_cnn1_forward.11} parent=46 // loop_footer_branch
                  %695 = sbr.rel target = $region49
                $region54: #{apricot_cnn1_forward.11} parent=46 // loop_exit
                  _
                loop: start=0, step=1, limit=1
                $region55: #{apricot_cnn1_forward.11} parent=46 // loop_pre_header
                  _
                $region56: #{apricot_cnn1_forward.11} parent=46 // loop_header
                  %s705 = sphi 0, %s709
                  %p706 = scmp.ge.s32.totalorder %s705, 1
                  %s710 = sphi %s165, %s165
                  %s711 = sphi %s160, %s160
                $region57: #{apricot_cnn1_forward.11} parent=46 // loop_header_branch
                  %708 = sbr.rel (%p706) target = $region61
                $region58: #{apricot_cnn1_forward.11} parent=46 // loop_body
                  %v712 = vld [vmem:[%s710] sm:$0xf]
                  %713 = vst [vmem:[%s711] sm:$0xf] %v712
                  %v714 = vld [vmem:[%s710 + $0x8] sm:$0xf]
                  %715 = vst [vmem:[%s711 + $0x4] sm:$0xf] %v714
                  %v716 = vld [vmem:[%s710 + $0x10] sm:$0xf]
                  %717 = vst [vmem:[%s711 + $0x8] sm:$0xf] %v716
                  %v718 = vld [vmem:[%s710 + $0x18] sm:$0xf]
                  %719 = vst [vmem:[%s711 + $0xc] sm:$0xf] %v718
                  %v720 = vld [vmem:[%s710 + $0x20] sm:$0xf]
                  %721 = vst [vmem:[%s711 + $0x10] sm:$0xf] %v720
                  %v722 = vld [vmem:[%s710 + $0x28] sm:$0xf]
                  %723 = vst [vmem:[%s711 + $0x14] sm:$0xf] %v722
                  %v724 = vld [vmem:[%s710 + $0x30] sm:$0xf]
                  %725 = vst [vmem:[%s711 + $0x18] sm:$0xf] %v724
                  %v726 = vld [vmem:[%s710 + $0x38] sm:$0xf]
                  %727 = vst [vmem:[%s711 + $0x1c] sm:$0xf] %v726
                  %v728 = vld [vmem:[%s710 + $0x40] sm:$0xf]
                  %729 = vst [vmem:[%s711 + $0x20] sm:$0xf] %v728
                  %v730 = vld [vmem:[%s710 + $0x48] sm:$0xf]
                  %731 = vst [vmem:[%s711 + $0x24] sm:$0xf] %v730
                  %v732 = vld [vmem:[%s710 + $0x50] sm:$0xf]
                  %733 = vst [vmem:[%s711 + $0x28] sm:$0xf] %v732
                  %v734 = vld [vmem:[%s710 + $0x58] sm:$0xf]
                  %735 = vst [vmem:[%s711 + $0x2c] sm:$0xf] %v734
                  %v736 = vld [vmem:[%s710 + $0x60] sm:$0xf]
                  %737 = vst [vmem:[%s711 + $0x30] sm:$0xf] %v736
                  %v738 = vld [vmem:[%s710 + $0x68] sm:$0xf]
                  %739 = vst [vmem:[%s711 + $0x34] sm:$0xf] %v738
                  %v740 = vld [vmem:[%s710 + $0x70] sm:$0xf]
                  %741 = vst [vmem:[%s711 + $0x38] sm:$0xf] %v740
                  %v742 = vld [vmem:[%s710 + $0x78] sm:$0xf]
                  %743 = vst [vmem:[%s711 + $0x3c] sm:$0xf] %v742
                  %v744 = vld [vmem:[%s710 + $0x80] sm:$0xf]
                  %745 = vst [vmem:[%s711 + $0x40] sm:$0xf] %v744
                  %v746 = vld [vmem:[%s710 + $0x88] sm:$0xf]
                  %747 = vst [vmem:[%s711 + $0x44] sm:$0xf] %v746
                  %v748 = vld [vmem:[%s710 + $0x90] sm:$0xf]
                  %749 = vst [vmem:[%s711 + $0x48] sm:$0xf] %v748
                  %v750 = vld [vmem:[%s710 + $0x98] sm:$0xf]
                  %751 = vst [vmem:[%s711 + $0x4c] sm:$0xf] %v750
                  %v752 = vld [vmem:[%s710 + $0xa0] sm:$0xf]
                  %753 = vst [vmem:[%s711 + $0x50] sm:$0xf] %v752
                  %v754 = vld [vmem:[%s710 + $0xa8] sm:$0xf]
                  %755 = vst [vmem:[%s711 + $0x54] sm:$0xf] %v754
                  %v756 = vld [vmem:[%s710 + $0xb0] sm:$0xf]
                  %757 = vst [vmem:[%s711 + $0x58] sm:$0xf] %v756
                  %v758 = vld [vmem:[%s710 + $0xb8] sm:$0xf]
                  %759 = vst [vmem:[%s711 + $0x5c] sm:$0xf] %v758
                  %v760 = vld [vmem:[%s710 + $0xc0] sm:$0xf]
                  %761 = vst [vmem:[%s711 + $0x60] sm:$0xf] %v760
                  %v762 = vld [vmem:[%s710 + $0xc8] sm:$0xf]
                  %763 = vst [vmem:[%s711 + $0x64] sm:$0xf] %v762
                  %v764 = vld [vmem:[%s710 + $0xd0] sm:$0xf]
                  %765 = vst [vmem:[%s711 + $0x68] sm:$0xf] %v764
                  %v766 = vld [vmem:[%s710 + $0xd8] sm:$0xf]
                  %767 = vst [vmem:[%s711 + $0x6c] sm:$0xf] %v766
                  %v768 = vld [vmem:[%s710 + $0xe0] sm:$0xf]
                  %769 = vst [vmem:[%s711 + $0x70] sm:$0xf] %v768
                  %v770 = vld [vmem:[%s710 + $0xe8] sm:$0xf]
                  %771 = vst [vmem:[%s711 + $0x74] sm:$0xf] %v770
                  %v772 = vld [vmem:[%s710 + $0xf0] sm:$0xf]
                  %773 = vst [vmem:[%s711 + $0x78] sm:$0xf] %v772
                  %v774 = vld [vmem:[%s710 + $0xf8] sm:$0xf]
                  %775 = vst [vmem:[%s711 + $0x7c] sm:$0xf] %v774
                  %v776 = vld [vmem:[%s710 + $0x100] sm:$0xf]
                  %777 = vst [vmem:[%s711 + $0x80] sm:$0xf] %v776
                  %v778 = vld [vmem:[%s710 + $0x108] sm:$0xf]
                  %779 = vst [vmem:[%s711 + $0x84] sm:$0xf] %v778
                  %v780 = vld [vmem:[%s710 + $0x110] sm:$0xf]
                  %781 = vst [vmem:[%s711 + $0x88] sm:$0xf] %v780
                  %v782 = vld [vmem:[%s710 + $0x118] sm:$0xf]
                  %783 = vst [vmem:[%s711 + $0x8c] sm:$0xf] %v782
                  %v784 = vld [vmem:[%s710 + $0x120] sm:$0xf]
                  %785 = vst [vmem:[%s711 + $0x90] sm:$0xf] %v784
                  %v786 = vld [vmem:[%s710 + $0x128] sm:$0xf]
                  %787 = vst [vmem:[%s711 + $0x94] sm:$0xf] %v786
                  %v788 = vld [vmem:[%s710 + $0x130] sm:$0xf]
                  %789 = vst [vmem:[%s711 + $0x98] sm:$0xf] %v788
                  %v790 = vld [vmem:[%s710 + $0x138] sm:$0xf]
                  %791 = vst [vmem:[%s711 + $0x9c] sm:$0xf] %v790
                  %v792 = vld [vmem:[%s710 + $0x140] sm:$0xf]
                  %793 = vst [vmem:[%s711 + $0xa0] sm:$0xf] %v792
                  %v794 = vld [vmem:[%s710 + $0x148] sm:$0xf]
                  %795 = vst [vmem:[%s711 + $0xa4] sm:$0xf] %v794
                  %v796 = vld [vmem:[%s710 + $0x150] sm:$0xf]
                  %797 = vst [vmem:[%s711 + $0xa8] sm:$0xf] %v796
                  %v798 = vld [vmem:[%s710 + $0x158] sm:$0xf]
                  %799 = vst [vmem:[%s711 + $0xac] sm:$0xf] %v798
                  %v800 = vld [vmem:[%s710 + $0x160] sm:$0xf]
                  %801 = vst [vmem:[%s711 + $0xb0] sm:$0xf] %v800
                  %v802 = vld [vmem:[%s710 + $0x168] sm:$0xf]
                  %803 = vst [vmem:[%s711 + $0xb4] sm:$0xf] %v802
                  %v804 = vld [vmem:[%s710 + $0x170] sm:$0xf]
                  %805 = vst [vmem:[%s711 + $0xb8] sm:$0xf] %v804
                  %v806 = vld [vmem:[%s710 + $0x178] sm:$0xf]
                  %807 = vst [vmem:[%s711 + $0xbc] sm:$0xf] %v806
                  %v808 = vld [vmem:[%s710 + $0x180] sm:$0xf]
                  %809 = vst [vmem:[%s711 + $0xc0] sm:$0xf] %v808
                  %v810 = vld [vmem:[%s710 + $0x188] sm:$0xf]
                  %811 = vst [vmem:[%s711 + $0xc4] sm:$0xf] %v810
                  %v812 = vld [vmem:[%s710 + $0x190] sm:$0xf]
                  %813 = vst [vmem:[%s711 + $0xc8] sm:$0xf] %v812
                  %v814 = vld [vmem:[%s710 + $0x198] sm:$0xf]
                  %815 = vst [vmem:[%s711 + $0xcc] sm:$0xf] %v814
                  %v816 = vld [vmem:[%s710 + $0x1a0] sm:$0xf]
                  %817 = vst [vmem:[%s711 + $0xd0] sm:$0xf] %v816
                  %v818 = vld [vmem:[%s710 + $0x1a8] sm:$0xf]
                  %819 = vst [vmem:[%s711 + $0xd4] sm:$0xf] %v818
                  %v820 = vld [vmem:[%s710 + $0x1b0] sm:$0xf]
                  %821 = vst [vmem:[%s711 + $0xd8] sm:$0xf] %v820
                  %v822 = vld [vmem:[%s710 + $0x1b8] sm:$0xf]
                  %823 = vst [vmem:[%s711 + $0xdc] sm:$0xf] %v822
                  %v824 = vld [vmem:[%s710 + $0x1c0] sm:$0xf]
                  %825 = vst [vmem:[%s711 + $0xe0] sm:$0xf] %v824
                  %v826 = vld [vmem:[%s710 + $0x1c8] sm:$0xf]
                  %827 = vst [vmem:[%s711 + $0xe4] sm:$0xf] %v826
                  %v828 = vld [vmem:[%s710 + $0x1d0] sm:$0xf]
                  %829 = vst [vmem:[%s711 + $0xe8] sm:$0xf] %v828
                  %v830 = vld [vmem:[%s710 + $0x1d8] sm:$0xf]
                  %831 = vst [vmem:[%s711 + $0xec] sm:$0xf] %v830
                  %v832 = vld [vmem:[%s710 + $0x1e0] sm:$0xf]
                  %833 = vst [vmem:[%s711 + $0xf0] sm:$0xf] %v832
                  %v834 = vld [vmem:[%s710 + $0x1e8] sm:$0xf]
                  %835 = vst [vmem:[%s711 + $0xf4] sm:$0xf] %v834
                  %v836 = vld [vmem:[%s710 + $0x1f0] sm:$0xf]
                  %837 = vst [vmem:[%s711 + $0xf8] sm:$0xf] %v836
                  %v838 = vld [vmem:[%s710 + $0x1f8] sm:$0xf]
                  %839 = vst [vmem:[%s711 + $0xfc] sm:$0xf] %v838
                  %v840 = vld [vmem:[%s710 + $0x200] sm:$0xf]
                  %841 = vst [vmem:[%s711 + $0x100] sm:$0xf] %v840
                  %v842 = vld [vmem:[%s710 + $0x208] sm:$0xf]
                  %843 = vst [vmem:[%s711 + $0x104] sm:$0xf] %v842
                  %v844 = vld [vmem:[%s710 + $0x210] sm:$0xf]
                  %845 = vst [vmem:[%s711 + $0x108] sm:$0xf] %v844
                  %v846 = vld [vmem:[%s710 + $0x218] sm:$0xf]
                  %847 = vst [vmem:[%s711 + $0x10c] sm:$0xf] %v846
                  %v848 = vld [vmem:[%s710 + $0x220] sm:$0xf]
                  %849 = vst [vmem:[%s711 + $0x110] sm:$0xf] %v848
                  %v850 = vld [vmem:[%s710 + $0x228] sm:$0xf]
                  %851 = vst [vmem:[%s711 + $0x114] sm:$0xf] %v850
                  %v852 = vld [vmem:[%s710 + $0x230] sm:$0xf]
                  %853 = vst [vmem:[%s711 + $0x118] sm:$0xf] %v852
                  %v854 = vld [vmem:[%s710 + $0x238] sm:$0xf]
                  %855 = vst [vmem:[%s711 + $0x11c] sm:$0xf] %v854
                  %v856 = vld [vmem:[%s710 + $0x240] sm:$0xf]
                  %857 = vst [vmem:[%s711 + $0x120] sm:$0xf] %v856
                  %v858 = vld [vmem:[%s710 + $0x248] sm:$0xf]
                  %859 = vst [vmem:[%s711 + $0x124] sm:$0xf] %v858
                  %v860 = vld [vmem:[%s710 + $0x250] sm:$0xf]
                  %861 = vst [vmem:[%s711 + $0x128] sm:$0xf] %v860
                  %v862 = vld [vmem:[%s710 + $0x258] sm:$0xf]
                  %863 = vst [vmem:[%s711 + $0x12c] sm:$0xf] %v862
                  %v864 = vld [vmem:[%s710 + $0x260] sm:$0xf]
                  %865 = vst [vmem:[%s711 + $0x130] sm:$0xf] %v864
                  %v866 = vld [vmem:[%s710 + $0x268] sm:$0xf]
                  %867 = vst [vmem:[%s711 + $0x134] sm:$0xf] %v866
                  %v868 = vld [vmem:[%s710 + $0x270] sm:$0xf]
                  %869 = vst [vmem:[%s711 + $0x138] sm:$0xf] %v868
                  %v870 = vld [vmem:[%s710 + $0x278] sm:$0xf]
                  %871 = vst [vmem:[%s711 + $0x13c] sm:$0xf] %v870
                  %v872 = vld [vmem:[%s710 + $0x280] sm:$0xf]
                  %873 = vst [vmem:[%s711 + $0x140] sm:$0xf] %v872
                  %v874 = vld [vmem:[%s710 + $0x288] sm:$0xf]
                  %875 = vst [vmem:[%s711 + $0x144] sm:$0xf] %v874
                  %v876 = vld [vmem:[%s710 + $0x290] sm:$0xf]
                  %877 = vst [vmem:[%s711 + $0x148] sm:$0xf] %v876
                  %v878 = vld [vmem:[%s710 + $0x298] sm:$0xf]
                  %879 = vst [vmem:[%s711 + $0x14c] sm:$0xf] %v878
                  %v880 = vld [vmem:[%s710 + $0x2a0] sm:$0xf]
                  %881 = vst [vmem:[%s711 + $0x150] sm:$0xf] %v880
                  %v882 = vld [vmem:[%s710 + $0x2a8] sm:$0xf]
                  %883 = vst [vmem:[%s711 + $0x154] sm:$0xf] %v882
                  %v884 = vld [vmem:[%s710 + $0x2b0] sm:$0xf]
                  %885 = vst [vmem:[%s711 + $0x158] sm:$0xf] %v884
                  %v886 = vld [vmem:[%s710 + $0x2b8] sm:$0xf]
                  %887 = vst [vmem:[%s711 + $0x15c] sm:$0xf] %v886
                  %v888 = vld [vmem:[%s710 + $0x2c0] sm:$0xf]
                  %889 = vst [vmem:[%s711 + $0x160] sm:$0xf] %v888
                  %v890 = vld [vmem:[%s710 + $0x2c8] sm:$0xf]
                  %891 = vst [vmem:[%s711 + $0x164] sm:$0xf] %v890
                  %v892 = vld [vmem:[%s710 + $0x2d0] sm:$0xf]
                  %893 = vst [vmem:[%s711 + $0x168] sm:$0xf] %v892
                  %v894 = vld [vmem:[%s710 + $0x2d8] sm:$0xf]
                  %895 = vst [vmem:[%s711 + $0x16c] sm:$0xf] %v894
                  %v896 = vld [vmem:[%s710 + $0x2e0] sm:$0xf]
                  %897 = vst [vmem:[%s711 + $0x170] sm:$0xf] %v896
                  %v898 = vld [vmem:[%s710 + $0x2e8] sm:$0xf]
                  %899 = vst [vmem:[%s711 + $0x174] sm:$0xf] %v898
                  %v900 = vld [vmem:[%s710 + $0x2f0] sm:$0xf]
                  %901 = vst [vmem:[%s711 + $0x178] sm:$0xf] %v900
                  %v902 = vld [vmem:[%s710 + $0x2f8] sm:$0xf]
                  %903 = vst [vmem:[%s711 + $0x17c] sm:$0xf] %v902
                  %v904 = vld [vmem:[%s710 + $0x300] sm:$0xf]
                  %905 = vst [vmem:[%s711 + $0x180] sm:$0xf] %v904
                  %v906 = vld [vmem:[%s710 + $0x308] sm:$0xf]
                  %907 = vst [vmem:[%s711 + $0x184] sm:$0xf] %v906
                  %v908 = vld [vmem:[%s710 + $0x310] sm:$0xf]
                  %909 = vst [vmem:[%s711 + $0x188] sm:$0xf] %v908
                  %v910 = vld [vmem:[%s710 + $0x318] sm:$0xf]
                  %911 = vst [vmem:[%s711 + $0x18c] sm:$0xf] %v910
                  %v912 = vld [vmem:[%s710 + $0x320] sm:$0xf]
                  %913 = vst [vmem:[%s711 + $0x190] sm:$0xf] %v912
                  %v914 = vld [vmem:[%s710 + $0x328] sm:$0xf]
                  %915 = vst [vmem:[%s711 + $0x194] sm:$0xf] %v914
                  %v916 = vld [vmem:[%s710 + $0x330] sm:$0xf]
                  %917 = vst [vmem:[%s711 + $0x198] sm:$0xf] %v916
                  %v918 = vld [vmem:[%s710 + $0x338] sm:$0xf]
                  %919 = vst [vmem:[%s711 + $0x19c] sm:$0xf] %v918
                  %v920 = vld [vmem:[%s710 + $0x340] sm:$0xf]
                  %921 = vst [vmem:[%s711 + $0x1a0] sm:$0xf] %v920
                  %v922 = vld [vmem:[%s710 + $0x348] sm:$0xf]
                  %923 = vst [vmem:[%s711 + $0x1a4] sm:$0xf] %v922
                  %v924 = vld [vmem:[%s710 + $0x350] sm:$0xf]
                  %925 = vst [vmem:[%s711 + $0x1a8] sm:$0xf] %v924
                  %v926 = vld [vmem:[%s710 + $0x358] sm:$0xf]
                  %927 = vst [vmem:[%s711 + $0x1ac] sm:$0xf] %v926
                  %v928 = vld [vmem:[%s710 + $0x360] sm:$0xf]
                  %929 = vst [vmem:[%s711 + $0x1b0] sm:$0xf] %v928
                  %v930 = vld [vmem:[%s710 + $0x368] sm:$0xf]
                  %931 = vst [vmem:[%s711 + $0x1b4] sm:$0xf] %v930
                  %v932 = vld [vmem:[%s710 + $0x370] sm:$0xf]
                  %933 = vst [vmem:[%s711 + $0x1b8] sm:$0xf] %v932
                  %v934 = vld [vmem:[%s710 + $0x378] sm:$0xf]
                  %935 = vst [vmem:[%s711 + $0x1bc] sm:$0xf] %v934
                  %v936 = vld [vmem:[%s710 + $0x380] sm:$0xf]
                  %937 = vst [vmem:[%s711 + $0x1c0] sm:$0xf] %v936
                  %v938 = vld [vmem:[%s710 + $0x388] sm:$0xf]
                  %939 = vst [vmem:[%s711 + $0x1c4] sm:$0xf] %v938
                  %v940 = vld [vmem:[%s710 + $0x390] sm:$0xf]
                  %941 = vst [vmem:[%s711 + $0x1c8] sm:$0xf] %v940
                  %v942 = vld [vmem:[%s710 + $0x398] sm:$0xf]
                  %943 = vst [vmem:[%s711 + $0x1cc] sm:$0xf] %v942
                  %v944 = vld [vmem:[%s710 + $0x3a0] sm:$0xf]
                  %945 = vst [vmem:[%s711 + $0x1d0] sm:$0xf] %v944
                  %v946 = vld [vmem:[%s710 + $0x3a8] sm:$0xf]
                  %947 = vst [vmem:[%s711 + $0x1d4] sm:$0xf] %v946
                  %v948 = vld [vmem:[%s710 + $0x3b0] sm:$0xf]
                  %949 = vst [vmem:[%s711 + $0x1d8] sm:$0xf] %v948
                  %v950 = vld [vmem:[%s710 + $0x3b8] sm:$0xf]
                  %951 = vst [vmem:[%s711 + $0x1dc] sm:$0xf] %v950
                  %v952 = vld [vmem:[%s710 + $0x3c0] sm:$0xf]
                  %953 = vst [vmem:[%s711 + $0x1e0] sm:$0xf] %v952
                  %v954 = vld [vmem:[%s710 + $0x3c8] sm:$0xf]
                  %955 = vst [vmem:[%s711 + $0x1e4] sm:$0xf] %v954
                  %v956 = vld [vmem:[%s710 + $0x3d0] sm:$0xf]
                  %957 = vst [vmem:[%s711 + $0x1e8] sm:$0xf] %v956
                  %v958 = vld [vmem:[%s710 + $0x3d8] sm:$0xf]
                  %959 = vst [vmem:[%s711 + $0x1ec] sm:$0xf] %v958
                  %v960 = vld [vmem:[%s710 + $0x3e0] sm:$0xf]
                  %961 = vst [vmem:[%s711 + $0x1f0] sm:$0xf] %v960
                  %v962 = vld [vmem:[%s710 + $0x3e8] sm:$0xf]
                  %963 = vst [vmem:[%s711 + $0x1f4] sm:$0xf] %v962
                  %v964 = vld [vmem:[%s710 + $0x3f0] sm:$0xf]
                  %965 = vst [vmem:[%s711 + $0x1f8] sm:$0xf] %v964
                  %v966 = vld [vmem:[%s710 + $0x3f8] sm:$0xf]
                  %967 = vst [vmem:[%s711 + $0x1fc] sm:$0xf] %v966
                  %v968 = vld [vmem:[%s710 + $0x400] sm:$0xf]
                  %969 = vst [vmem:[%s711 + $0x200] sm:$0xf] %v968
                  %v970 = vld [vmem:[%s710 + $0x408] sm:$0xf]
                  %971 = vst [vmem:[%s711 + $0x204] sm:$0xf] %v970
                  %v972 = vld [vmem:[%s710 + $0x410] sm:$0xf]
                  %973 = vst [vmem:[%s711 + $0x208] sm:$0xf] %v972
                  %v974 = vld [vmem:[%s710 + $0x418] sm:$0xf]
                  %975 = vst [vmem:[%s711 + $0x20c] sm:$0xf] %v974
                  %v976 = vld [vmem:[%s710 + $0x420] sm:$0xf]
                  %977 = vst [vmem:[%s711 + $0x210] sm:$0xf] %v976
                  %v978 = vld [vmem:[%s710 + $0x428] sm:$0xf]
                  %979 = vst [vmem:[%s711 + $0x214] sm:$0xf] %v978
                  %v980 = vld [vmem:[%s710 + $0x430] sm:$0xf]
                  %981 = vst [vmem:[%s711 + $0x218] sm:$0xf] %v980
                  %v982 = vld [vmem:[%s710 + $0x438] sm:$0xf]
                  %983 = vst [vmem:[%s711 + $0x21c] sm:$0xf] %v982
                  %v984 = vld [vmem:[%s710 + $0x440] sm:$0xf]
                  %985 = vst [vmem:[%s711 + $0x220] sm:$0xf] %v984
                  %v986 = vld [vmem:[%s710 + $0x448] sm:$0xf]
                  %987 = vst [vmem:[%s711 + $0x224] sm:$0xf] %v986
                  %v988 = vld [vmem:[%s710 + $0x450] sm:$0xf]
                  %989 = vst [vmem:[%s711 + $0x228] sm:$0xf] %v988
                  %v990 = vld [vmem:[%s710 + $0x458] sm:$0xf]
                  %991 = vst [vmem:[%s711 + $0x22c] sm:$0xf] %v990
                  %v992 = vld [vmem:[%s710 + $0x460] sm:$0xf]
                  %993 = vst [vmem:[%s711 + $0x230] sm:$0xf] %v992
                  %v994 = vld [vmem:[%s710 + $0x468] sm:$0xf]
                  %995 = vst [vmem:[%s711 + $0x234] sm:$0xf] %v994
                  %v996 = vld [vmem:[%s710 + $0x470] sm:$0xf]
                  %997 = vst [vmem:[%s711 + $0x238] sm:$0xf] %v996
                  %v998 = vld [vmem:[%s710 + $0x478] sm:$0xf]
                  %999 = vst [vmem:[%s711 + $0x23c] sm:$0xf] %v998
                  %v1000 = vld [vmem:[%s710 + $0x480] sm:$0xf]
                  %1001 = vst [vmem:[%s711 + $0x240] sm:$0xf] %v1000
                  %v1002 = vld [vmem:[%s710 + $0x488] sm:$0xf]
                  %1003 = vst [vmem:[%s711 + $0x244] sm:$0xf] %v1002
                  %v1004 = vld [vmem:[%s710 + $0x490] sm:$0xf]
                  %1005 = vst [vmem:[%s711 + $0x248] sm:$0xf] %v1004
                  %v1006 = vld [vmem:[%s710 + $0x498] sm:$0xf]
                  %1007 = vst [vmem:[%s711 + $0x24c] sm:$0xf] %v1006
                  %v1008 = vld [vmem:[%s710 + $0x4a0] sm:$0xf]
                  %1009 = vst [vmem:[%s711 + $0x250] sm:$0xf] %v1008
                  %v1010 = vld [vmem:[%s710 + $0x4a8] sm:$0xf]
                  %1011 = vst [vmem:[%s711 + $0x254] sm:$0xf] %v1010
                  %v1012 = vld [vmem:[%s710 + $0x4b0] sm:$0xf]
                  %1013 = vst [vmem:[%s711 + $0x258] sm:$0xf] %v1012
                  %v1014 = vld [vmem:[%s710 + $0x4b8] sm:$0xf]
                  %1015 = vst [vmem:[%s711 + $0x25c] sm:$0xf] %v1014
                  %v1016 = vld [vmem:[%s710 + $0x4c0] sm:$0xf]
                  %1017 = vst [vmem:[%s711 + $0x260] sm:$0xf] %v1016
                  %v1018 = vld [vmem:[%s710 + $0x4c8] sm:$0xf]
                  %1019 = vst [vmem:[%s711 + $0x264] sm:$0xf] %v1018
                  %v1020 = vld [vmem:[%s710 + $0x4d0] sm:$0xf]
                  %1021 = vst [vmem:[%s711 + $0x268] sm:$0xf] %v1020
                  %v1022 = vld [vmem:[%s710 + $0x4d8] sm:$0xf]
                  %1023 = vst [vmem:[%s711 + $0x26c] sm:$0xf] %v1022
                  %v1024 = vld [vmem:[%s710 + $0x4e0] sm:$0xf]
                  %1025 = vst [vmem:[%s711 + $0x270] sm:$0xf] %v1024
                  %v1026 = vld [vmem:[%s710 + $0x4e8] sm:$0xf]
                  %1027 = vst [vmem:[%s711 + $0x274] sm:$0xf] %v1026
                  %v1028 = vld [vmem:[%s710 + $0x4f0] sm:$0xf]
                  %1029 = vst [vmem:[%s711 + $0x278] sm:$0xf] %v1028
                  %v1030 = vld [vmem:[%s710 + $0x4f8] sm:$0xf]
                  %1031 = vst [vmem:[%s711 + $0x27c] sm:$0xf] %v1030
                  %v1032 = vld [vmem:[%s710 + $0x500] sm:$0xf]
                  %1033 = vst [vmem:[%s711 + $0x280] sm:$0xf] %v1032
                  %v1034 = vld [vmem:[%s710 + $0x508] sm:$0xf]
                  %1035 = vst [vmem:[%s711 + $0x284] sm:$0xf] %v1034
                  %v1036 = vld [vmem:[%s710 + $0x510] sm:$0xf]
                  %1037 = vst [vmem:[%s711 + $0x288] sm:$0xf] %v1036
                  %v1038 = vld [vmem:[%s710 + $0x518] sm:$0xf]
                  %1039 = vst [vmem:[%s711 + $0x28c] sm:$0xf] %v1038
                  %v1040 = vld [vmem:[%s710 + $0x520] sm:$0xf]
                  %1041 = vst [vmem:[%s711 + $0x290] sm:$0xf] %v1040
                  %v1042 = vld [vmem:[%s710 + $0x528] sm:$0xf]
                  %1043 = vst [vmem:[%s711 + $0x294] sm:$0xf] %v1042
                  %v1044 = vld [vmem:[%s710 + $0x530] sm:$0xf]
                  %1045 = vst [vmem:[%s711 + $0x298] sm:$0xf] %v1044
                  %v1046 = vld [vmem:[%s710 + $0x538] sm:$0xf]
                  %1047 = vst [vmem:[%s711 + $0x29c] sm:$0xf] %v1046
                  %v1048 = vld [vmem:[%s710 + $0x540] sm:$0xf]
                  %1049 = vst [vmem:[%s711 + $0x2a0] sm:$0xf] %v1048
                  %v1050 = vld [vmem:[%s710 + $0x548] sm:$0xf]
                  %1051 = vst [vmem:[%s711 + $0x2a4] sm:$0xf] %v1050
                  %v1052 = vld [vmem:[%s710 + $0x550] sm:$0xf]
                  %1053 = vst [vmem:[%s711 + $0x2a8] sm:$0xf] %v1052
                  %v1054 = vld [vmem:[%s710 + $0x558] sm:$0xf]
                  %1055 = vst [vmem:[%s711 + $0x2ac] sm:$0xf] %v1054
                  %v1056 = vld [vmem:[%s710 + $0x560] sm:$0xf]
                  %1057 = vst [vmem:[%s711 + $0x2b0] sm:$0xf] %v1056
                  %v1058 = vld [vmem:[%s710 + $0x568] sm:$0xf]
                  %1059 = vst [vmem:[%s711 + $0x2b4] sm:$0xf] %v1058
                  %v1060 = vld [vmem:[%s710 + $0x570] sm:$0xf]
                  %1061 = vst [vmem:[%s711 + $0x2b8] sm:$0xf] %v1060
                  %v1062 = vld [vmem:[%s710 + $0x578] sm:$0xf]
                  %1063 = vst [vmem:[%s711 + $0x2bc] sm:$0xf] %v1062
                  %v1064 = vld [vmem:[%s710 + $0x580] sm:$0xf]
                  %1065 = vst [vmem:[%s711 + $0x2c0] sm:$0xf] %v1064
                  %v1066 = vld [vmem:[%s710 + $0x588] sm:$0xf]
                  %1067 = vst [vmem:[%s711 + $0x2c4] sm:$0xf] %v1066
                  %v1068 = vld [vmem:[%s710 + $0x590] sm:$0xf]
                  %1069 = vst [vmem:[%s711 + $0x2c8] sm:$0xf] %v1068
                  %v1070 = vld [vmem:[%s710 + $0x598] sm:$0xf]
                  %1071 = vst [vmem:[%s711 + $0x2cc] sm:$0xf] %v1070
                  %v1072 = vld [vmem:[%s710 + $0x5a0] sm:$0xf]
                  %1073 = vst [vmem:[%s711 + $0x2d0] sm:$0xf] %v1072
                  %v1074 = vld [vmem:[%s710 + $0x5a8] sm:$0xf]
                  %1075 = vst [vmem:[%s711 + $0x2d4] sm:$0xf] %v1074
                  %v1076 = vld [vmem:[%s710 + $0x5b0] sm:$0xf]
                  %1077 = vst [vmem:[%s711 + $0x2d8] sm:$0xf] %v1076
                  %v1078 = vld [vmem:[%s710 + $0x5b8] sm:$0xf]
                  %1079 = vst [vmem:[%s711 + $0x2dc] sm:$0xf] %v1078
                  %v1080 = vld [vmem:[%s710 + $0x5c0] sm:$0xf]
                  %1081 = vst [vmem:[%s711 + $0x2e0] sm:$0xf] %v1080
                  %v1082 = vld [vmem:[%s710 + $0x5c8] sm:$0xf]
                  %1083 = vst [vmem:[%s711 + $0x2e4] sm:$0xf] %v1082
                  %v1084 = vld [vmem:[%s710 + $0x5d0] sm:$0xf]
                  %1085 = vst [vmem:[%s711 + $0x2e8] sm:$0xf] %v1084
                  %v1086 = vld [vmem:[%s710 + $0x5d8] sm:$0xf]
                  %1087 = vst [vmem:[%s711 + $0x2ec] sm:$0xf] %v1086
                  %v1088 = vld [vmem:[%s710 + $0x5e0] sm:$0xf]
                  %1089 = vst [vmem:[%s711 + $0x2f0] sm:$0xf] %v1088
                  %v1090 = vld [vmem:[%s710 + $0x5e8] sm:$0xf]
                  %1091 = vst [vmem:[%s711 + $0x2f4] sm:$0xf] %v1090
                  %v1092 = vld [vmem:[%s710 + $0x5f0] sm:$0xf]
                  %1093 = vst [vmem:[%s711 + $0x2f8] sm:$0xf] %v1092
                  %v1094 = vld [vmem:[%s710 + $0x5f8] sm:$0xf]
                  %1095 = vst [vmem:[%s711 + $0x2fc] sm:$0xf] %v1094
                  %v1096 = vld [vmem:[%s710 + $0x600] sm:$0xf]
                  %1097 = vst [vmem:[%s711 + $0x300] sm:$0xf] %v1096
                  %v1098 = vld [vmem:[%s710 + $0x608] sm:$0xf]
                  %1099 = vst [vmem:[%s711 + $0x304] sm:$0xf] %v1098
                  %v1100 = vld [vmem:[%s710 + $0x610] sm:$0xf]
                  %1101 = vst [vmem:[%s711 + $0x308] sm:$0xf] %v1100
                  %v1102 = vld [vmem:[%s710 + $0x618] sm:$0xf]
                  %1103 = vst [vmem:[%s711 + $0x30c] sm:$0xf] %v1102
                  %v1104 = vld [vmem:[%s710 + $0x620] sm:$0xf]
                  %1105 = vst [vmem:[%s711 + $0x310] sm:$0xf] %v1104
                  %v1106 = vld [vmem:[%s710 + $0x628] sm:$0xf]
                  %1107 = vst [vmem:[%s711 + $0x314] sm:$0xf] %v1106
                  %v1108 = vld [vmem:[%s710 + $0x630] sm:$0xf]
                  %1109 = vst [vmem:[%s711 + $0x318] sm:$0xf] %v1108
                  %v1110 = vld [vmem:[%s710 + $0x638] sm:$0xf]
                  %1111 = vst [vmem:[%s711 + $0x31c] sm:$0xf] %v1110
                  %v1112 = vld [vmem:[%s710 + $0x640] sm:$0xf]
                  %1113 = vst [vmem:[%s711 + $0x320] sm:$0xf] %v1112
                  %v1114 = vld [vmem:[%s710 + $0x648] sm:$0xf]
                  %1115 = vst [vmem:[%s711 + $0x324] sm:$0xf] %v1114
                  %v1116 = vld [vmem:[%s710 + $0x650] sm:$0xf]
                  %1117 = vst [vmem:[%s711 + $0x328] sm:$0xf] %v1116
                  %v1118 = vld [vmem:[%s710 + $0x658] sm:$0xf]
                  %1119 = vst [vmem:[%s711 + $0x32c] sm:$0xf] %v1118
                  %v1120 = vld [vmem:[%s710 + $0x660] sm:$0xf]
                  %1121 = vst [vmem:[%s711 + $0x330] sm:$0xf] %v1120
                  %v1122 = vld [vmem:[%s710 + $0x668] sm:$0xf]
                  %1123 = vst [vmem:[%s711 + $0x334] sm:$0xf] %v1122
                  %v1124 = vld [vmem:[%s710 + $0x670] sm:$0xf]
                  %1125 = vst [vmem:[%s711 + $0x338] sm:$0xf] %v1124
                  %v1126 = vld [vmem:[%s710 + $0x678] sm:$0xf]
                  %1127 = vst [vmem:[%s711 + $0x33c] sm:$0xf] %v1126
                  %v1128 = vld [vmem:[%s710 + $0x680] sm:$0xf]
                  %1129 = vst [vmem:[%s711 + $0x340] sm:$0xf] %v1128
                  %v1130 = vld [vmem:[%s710 + $0x688] sm:$0xf]
                  %1131 = vst [vmem:[%s711 + $0x344] sm:$0xf] %v1130
                  %v1132 = vld [vmem:[%s710 + $0x690] sm:$0xf]
                  %1133 = vst [vmem:[%s711 + $0x348] sm:$0xf] %v1132
                  %v1134 = vld [vmem:[%s710 + $0x698] sm:$0xf]
                  %1135 = vst [vmem:[%s711 + $0x34c] sm:$0xf] %v1134
                  %v1136 = vld [vmem:[%s710 + $0x6a0] sm:$0xf]
                  %1137 = vst [vmem:[%s711 + $0x350] sm:$0xf] %v1136
                  %v1138 = vld [vmem:[%s710 + $0x6a8] sm:$0xf]
                  %1139 = vst [vmem:[%s711 + $0x354] sm:$0xf] %v1138
                  %v1140 = vld [vmem:[%s710 + $0x6b0] sm:$0xf]
                  %1141 = vst [vmem:[%s711 + $0x358] sm:$0xf] %v1140
                  %v1142 = vld [vmem:[%s710 + $0x6b8] sm:$0xf]
                  %1143 = vst [vmem:[%s711 + $0x35c] sm:$0xf] %v1142
                  %v1144 = vld [vmem:[%s710 + $0x6c0] sm:$0xf]
                  %1145 = vst [vmem:[%s711 + $0x360] sm:$0xf] %v1144
                  %v1146 = vld [vmem:[%s710 + $0x6c8] sm:$0xf]
                  %1147 = vst [vmem:[%s711 + $0x364] sm:$0xf] %v1146
                  %v1148 = vld [vmem:[%s710 + $0x6d0] sm:$0xf]
                  %1149 = vst [vmem:[%s711 + $0x368] sm:$0xf] %v1148
                  %v1150 = vld [vmem:[%s710 + $0x6d8] sm:$0xf]
                  %1151 = vst [vmem:[%s711 + $0x36c] sm:$0xf] %v1150
                  %v1152 = vld [vmem:[%s710 + $0x6e0] sm:$0xf]
                  %1153 = vst [vmem:[%s711 + $0x370] sm:$0xf] %v1152
                  %v1154 = vld [vmem:[%s710 + $0x6e8] sm:$0xf]
                  %1155 = vst [vmem:[%s711 + $0x374] sm:$0xf] %v1154
                  %v1156 = vld [vmem:[%s710 + $0x6f0] sm:$0xf]
                  %1157 = vst [vmem:[%s711 + $0x378] sm:$0xf] %v1156
                  %v1158 = vld [vmem:[%s710 + $0x6f8] sm:$0xf]
                  %1159 = vst [vmem:[%s711 + $0x37c] sm:$0xf] %v1158
                  %v1160 = vld [vmem:[%s710 + $0x700] sm:$0xf]
                  %1161 = vst [vmem:[%s711 + $0x380] sm:$0xf] %v1160
                  %v1162 = vld [vmem:[%s710 + $0x708] sm:$0xf]
                  %1163 = vst [vmem:[%s711 + $0x384] sm:$0xf] %v1162
                  %v1164 = vld [vmem:[%s710 + $0x710] sm:$0xf]
                  %1165 = vst [vmem:[%s711 + $0x388] sm:$0xf] %v1164
                  %v1166 = vld [vmem:[%s710 + $0x718] sm:$0xf]
                  %1167 = vst [vmem:[%s711 + $0x38c] sm:$0xf] %v1166
                  %v1168 = vld [vmem:[%s710 + $0x720] sm:$0xf]
                  %1169 = vst [vmem:[%s711 + $0x390] sm:$0xf] %v1168
                  %v1170 = vld [vmem:[%s710 + $0x728] sm:$0xf]
                  %1171 = vst [vmem:[%s711 + $0x394] sm:$0xf] %v1170
                  %v1172 = vld [vmem:[%s710 + $0x730] sm:$0xf]
                  %1173 = vst [vmem:[%s711 + $0x398] sm:$0xf] %v1172
                  %v1174 = vld [vmem:[%s710 + $0x738] sm:$0xf]
                  %1175 = vst [vmem:[%s711 + $0x39c] sm:$0xf] %v1174
                  %v1176 = vld [vmem:[%s710 + $0x740] sm:$0xf]
                  %1177 = vst [vmem:[%s711 + $0x3a0] sm:$0xf] %v1176
                  %v1178 = vld [vmem:[%s710 + $0x748] sm:$0xf]
                  %1179 = vst [vmem:[%s711 + $0x3a4] sm:$0xf] %v1178
                  %v1180 = vld [vmem:[%s710 + $0x750] sm:$0xf]
                  %1181 = vst [vmem:[%s711 + $0x3a8] sm:$0xf] %v1180
                  %v1182 = vld [vmem:[%s710 + $0x758] sm:$0xf]
                  %1183 = vst [vmem:[%s711 + $0x3ac] sm:$0xf] %v1182
                  %v1184 = vld [vmem:[%s710 + $0x760] sm:$0xf]
                  %1185 = vst [vmem:[%s711 + $0x3b0] sm:$0xf] %v1184
                  %v1186 = vld [vmem:[%s710 + $0x768] sm:$0xf]
                  %1187 = vst [vmem:[%s711 + $0x3b4] sm:$0xf] %v1186
                  %v1188 = vld [vmem:[%s710 + $0x770] sm:$0xf]
                  %1189 = vst [vmem:[%s711 + $0x3b8] sm:$0xf] %v1188
                  %v1190 = vld [vmem:[%s710 + $0x778] sm:$0xf]
                  %1191 = vst [vmem:[%s711 + $0x3bc] sm:$0xf] %v1190
                  %v1192 = vld [vmem:[%s710 + $0x780] sm:$0xf]
                  %1193 = vst [vmem:[%s711 + $0x3c0] sm:$0xf] %v1192
                  %v1194 = vld [vmem:[%s710 + $0x788] sm:$0xf]
                  %1195 = vst [vmem:[%s711 + $0x3c4] sm:$0xf] %v1194
                  %v1196 = vld [vmem:[%s710 + $0x790] sm:$0xf]
                  %1197 = vst [vmem:[%s711 + $0x3c8] sm:$0xf] %v1196
                  %v1198 = vld [vmem:[%s710 + $0x798] sm:$0xf]
                  %1199 = vst [vmem:[%s711 + $0x3cc] sm:$0xf] %v1198
                  %v1200 = vld [vmem:[%s710 + $0x7a0] sm:$0xf]
                  %1201 = vst [vmem:[%s711 + $0x3d0] sm:$0xf] %v1200
                  %v1202 = vld [vmem:[%s710 + $0x7a8] sm:$0xf]
                  %1203 = vst [vmem:[%s711 + $0x3d4] sm:$0xf] %v1202
                  %v1204 = vld [vmem:[%s710 + $0x7b0] sm:$0xf]
                  %1205 = vst [vmem:[%s711 + $0x3d8] sm:$0xf] %v1204
                  %v1206 = vld [vmem:[%s710 + $0x7b8] sm:$0xf]
                  %1207 = vst [vmem:[%s711 + $0x3dc] sm:$0xf] %v1206
                  %v1208 = vld [vmem:[%s710 + $0x7c0] sm:$0xf]
                  %1209 = vst [vmem:[%s711 + $0x3e0] sm:$0xf] %v1208
                  %v1210 = vld [vmem:[%s710 + $0x7c8] sm:$0xf]
                  %1211 = vst [vmem:[%s711 + $0x3e4] sm:$0xf] %v1210
                  %v1212 = vld [vmem:[%s710 + $0x7d0] sm:$0xf]
                  %1213 = vst [vmem:[%s711 + $0x3e8] sm:$0xf] %v1212
                  %v1214 = vld [vmem:[%s710 + $0x7d8] sm:$0xf]
                  %1215 = vst [vmem:[%s711 + $0x3ec] sm:$0xf] %v1214
                  %v1216 = vld [vmem:[%s710 + $0x7e0] sm:$0xf]
                  %1217 = vst [vmem:[%s711 + $0x3f0] sm:$0xf] %v1216
                  %v1218 = vld [vmem:[%s710 + $0x7e8] sm:$0xf]
                  %1219 = vst [vmem:[%s711 + $0x3f4] sm:$0xf] %v1218
                  %v1220 = vld [vmem:[%s710 + $0x7f0] sm:$0xf]
                  %1221 = vst [vmem:[%s711 + $0x3f8] sm:$0xf] %v1220
                  %v1222 = vld [vmem:[%s710 + $0x7f8] sm:$0xf]
                  %1223 = vst [vmem:[%s711 + $0x3fc] sm:$0xf] %v1222
                $region59: #{apricot_cnn1_forward.11} parent=46 // loop_footer
                  %s709 = sadd.s32 1, %s705
                $region60: #{apricot_cnn1_forward.11} parent=46 // loop_footer_branch
                  %704 = sbr.rel target = $region56
                $region61: #{apricot_cnn1_forward.11} parent=46 // loop_exit
                  _
              $region47: #{apricot_cnn1_forward.11} parent=31 // pred_fallthru
                _
            $region32: #{apricot_cnn1_forward.11} parent=27 // pred_fallthru
              _
            // Predicated region
            $region33: #{apricot_cnn1_forward.11} parent=27 // pred_check
              _
            $region34: #{apricot_cnn1_forward.11} parent=27 // pred_check_branch
              %171 = sbr.rel (0) target = $region36
            $region35: #{apricot_cnn1_forward.11} parent=27 // pred_region
              loop: start=0, step=1, limit=1
              $region37: #{apricot_cnn1_forward.11} parent=35 // loop_pre_header
                _
              $region38: #{apricot_cnn1_forward.11} parent=35 // loop_header
                %s174 = sphi 0, %s178
                %p175 = scmp.ge.s32.totalorder %s174, 1
                %s179 = sphi %s165, %s165
                %s180 = sphi %s160, %s160
              $region39: #{apricot_cnn1_forward.11} parent=35 // loop_header_branch
                %177 = sbr.rel (%p175) target = $region43
              $region40: #{apricot_cnn1_forward.11} parent=35 // loop_body
                %v181 = vld [vmem:[%s179] sm:$0xf]
                %182 = vst [vmem:[%s180] sm:$0xf] %v181
                %v183 = vld [vmem:[%s179 + $0x8] sm:$0xf]
                %184 = vst [vmem:[%s180 + $0x4] sm:$0xf] %v183
                %v185 = vld [vmem:[%s179 + $0x10] sm:$0xf]
                %186 = vst [vmem:[%s180 + $0x8] sm:$0xf] %v185
                %v187 = vld [vmem:[%s179 + $0x18] sm:$0xf]
                %188 = vst [vmem:[%s180 + $0xc] sm:$0xf] %v187
                %v189 = vld [vmem:[%s179 + $0x20] sm:$0xf]
                %190 = vst [vmem:[%s180 + $0x10] sm:$0xf] %v189
                %v191 = vld [vmem:[%s179 + $0x28] sm:$0xf]
                %192 = vst [vmem:[%s180 + $0x14] sm:$0xf] %v191
                %v193 = vld [vmem:[%s179 + $0x30] sm:$0xf]
                %194 = vst [vmem:[%s180 + $0x18] sm:$0xf] %v193
                %v195 = vld [vmem:[%s179 + $0x38] sm:$0xf]
                %196 = vst [vmem:[%s180 + $0x1c] sm:$0xf] %v195
                %v197 = vld [vmem:[%s179 + $0x40] sm:$0xf]
                %198 = vst [vmem:[%s180 + $0x20] sm:$0xf] %v197
                %v199 = vld [vmem:[%s179 + $0x48] sm:$0xf]
                %200 = vst [vmem:[%s180 + $0x24] sm:$0xf] %v199
                %v201 = vld [vmem:[%s179 + $0x50] sm:$0xf]
                %202 = vst [vmem:[%s180 + $0x28] sm:$0xf] %v201
                %v203 = vld [vmem:[%s179 + $0x58] sm:$0xf]
                %204 = vst [vmem:[%s180 + $0x2c] sm:$0xf] %v203
                %v205 = vld [vmem:[%s179 + $0x60] sm:$0xf]
                %206 = vst [vmem:[%s180 + $0x30] sm:$0xf] %v205
                %v207 = vld [vmem:[%s179 + $0x68] sm:$0xf]
                %208 = vst [vmem:[%s180 + $0x34] sm:$0xf] %v207
                %v209 = vld [vmem:[%s179 + $0x70] sm:$0xf]
                %210 = vst [vmem:[%s180 + $0x38] sm:$0xf] %v209
                %v211 = vld [vmem:[%s179 + $0x78] sm:$0xf]
                %212 = vst [vmem:[%s180 + $0x3c] sm:$0xf] %v211
                %v213 = vld [vmem:[%s179 + $0x80] sm:$0xf]
                %214 = vst [vmem:[%s180 + $0x40] sm:$0xf] %v213
                %v215 = vld [vmem:[%s179 + $0x88] sm:$0xf]
                %216 = vst [vmem:[%s180 + $0x44] sm:$0xf] %v215
                %v217 = vld [vmem:[%s179 + $0x90] sm:$0xf]
                %218 = vst [vmem:[%s180 + $0x48] sm:$0xf] %v217
                %v219 = vld [vmem:[%s179 + $0x98] sm:$0xf]
                %220 = vst [vmem:[%s180 + $0x4c] sm:$0xf] %v219
                %v221 = vld [vmem:[%s179 + $0xa0] sm:$0xf]
                %222 = vst [vmem:[%s180 + $0x50] sm:$0xf] %v221
                %v223 = vld [vmem:[%s179 + $0xa8] sm:$0xf]
                %224 = vst [vmem:[%s180 + $0x54] sm:$0xf] %v223
                %v225 = vld [vmem:[%s179 + $0xb0] sm:$0xf]
                %226 = vst [vmem:[%s180 + $0x58] sm:$0xf] %v225
                %v227 = vld [vmem:[%s179 + $0xb8] sm:$0xf]
                %228 = vst [vmem:[%s180 + $0x5c] sm:$0xf] %v227
                %v229 = vld [vmem:[%s179 + $0xc0] sm:$0xf]
                %230 = vst [vmem:[%s180 + $0x60] sm:$0xf] %v229
                %v231 = vld [vmem:[%s179 + $0xc8] sm:$0xf]
                %232 = vst [vmem:[%s180 + $0x64] sm:$0xf] %v231
                %v233 = vld [vmem:[%s179 + $0xd0] sm:$0xf]
                %234 = vst [vmem:[%s180 + $0x68] sm:$0xf] %v233
                %v235 = vld [vmem:[%s179 + $0xd8] sm:$0xf]
                %236 = vst [vmem:[%s180 + $0x6c] sm:$0xf] %v235
                %v237 = vld [vmem:[%s179 + $0xe0] sm:$0xf]
                %238 = vst [vmem:[%s180 + $0x70] sm:$0xf] %v237
                %v239 = vld [vmem:[%s179 + $0xe8] sm:$0xf]
                %240 = vst [vmem:[%s180 + $0x74] sm:$0xf] %v239
                %v241 = vld [vmem:[%s179 + $0xf0] sm:$0xf]
                %242 = vst [vmem:[%s180 + $0x78] sm:$0xf] %v241
                %v243 = vld [vmem:[%s179 + $0xf8] sm:$0xf]
                %244 = vst [vmem:[%s180 + $0x7c] sm:$0xf] %v243
                %v245 = vld [vmem:[%s179 + $0x100] sm:$0xf]
                %246 = vst [vmem:[%s180 + $0x80] sm:$0xf] %v245
                %v247 = vld [vmem:[%s179 + $0x108] sm:$0xf]
                %248 = vst [vmem:[%s180 + $0x84] sm:$0xf] %v247
                %v249 = vld [vmem:[%s179 + $0x110] sm:$0xf]
                %250 = vst [vmem:[%s180 + $0x88] sm:$0xf] %v249
                %v251 = vld [vmem:[%s179 + $0x118] sm:$0xf]
                %252 = vst [vmem:[%s180 + $0x8c] sm:$0xf] %v251
                %v253 = vld [vmem:[%s179 + $0x120] sm:$0xf]
                %254 = vst [vmem:[%s180 + $0x90] sm:$0xf] %v253
                %v255 = vld [vmem:[%s179 + $0x128] sm:$0xf]
                %256 = vst [vmem:[%s180 + $0x94] sm:$0xf] %v255
                %v257 = vld [vmem:[%s179 + $0x130] sm:$0xf]
                %258 = vst [vmem:[%s180 + $0x98] sm:$0xf] %v257
                %v259 = vld [vmem:[%s179 + $0x138] sm:$0xf]
                %260 = vst [vmem:[%s180 + $0x9c] sm:$0xf] %v259
                %v261 = vld [vmem:[%s179 + $0x140] sm:$0xf]
                %262 = vst [vmem:[%s180 + $0xa0] sm:$0xf] %v261
                %v263 = vld [vmem:[%s179 + $0x148] sm:$0xf]
                %264 = vst [vmem:[%s180 + $0xa4] sm:$0xf] %v263
                %v265 = vld [vmem:[%s179 + $0x150] sm:$0xf]
                %266 = vst [vmem:[%s180 + $0xa8] sm:$0xf] %v265
                %v267 = vld [vmem:[%s179 + $0x158] sm:$0xf]
                %268 = vst [vmem:[%s180 + $0xac] sm:$0xf] %v267
                %v269 = vld [vmem:[%s179 + $0x160] sm:$0xf]
                %270 = vst [vmem:[%s180 + $0xb0] sm:$0xf] %v269
                %v271 = vld [vmem:[%s179 + $0x168] sm:$0xf]
                %272 = vst [vmem:[%s180 + $0xb4] sm:$0xf] %v271
                %v273 = vld [vmem:[%s179 + $0x170] sm:$0xf]
                %274 = vst [vmem:[%s180 + $0xb8] sm:$0xf] %v273
                %v275 = vld [vmem:[%s179 + $0x178] sm:$0xf]
                %276 = vst [vmem:[%s180 + $0xbc] sm:$0xf] %v275
                %v277 = vld [vmem:[%s179 + $0x180] sm:$0xf]
                %278 = vst [vmem:[%s180 + $0xc0] sm:$0xf] %v277
                %v279 = vld [vmem:[%s179 + $0x188] sm:$0xf]
                %280 = vst [vmem:[%s180 + $0xc4] sm:$0xf] %v279
                %v281 = vld [vmem:[%s179 + $0x190] sm:$0xf]
                %282 = vst [vmem:[%s180 + $0xc8] sm:$0xf] %v281
                %v283 = vld [vmem:[%s179 + $0x198] sm:$0xf]
                %284 = vst [vmem:[%s180 + $0xcc] sm:$0xf] %v283
                %v285 = vld [vmem:[%s179 + $0x1a0] sm:$0xf]
                %286 = vst [vmem:[%s180 + $0xd0] sm:$0xf] %v285
                %v287 = vld [vmem:[%s179 + $0x1a8] sm:$0xf]
                %288 = vst [vmem:[%s180 + $0xd4] sm:$0xf] %v287
                %v289 = vld [vmem:[%s179 + $0x1b0] sm:$0xf]
                %290 = vst [vmem:[%s180 + $0xd8] sm:$0xf] %v289
                %v291 = vld [vmem:[%s179 + $0x1b8] sm:$0xf]
                %292 = vst [vmem:[%s180 + $0xdc] sm:$0xf] %v291
                %v293 = vld [vmem:[%s179 + $0x1c0] sm:$0xf]
                %294 = vst [vmem:[%s180 + $0xe0] sm:$0xf] %v293
                %v295 = vld [vmem:[%s179 + $0x1c8] sm:$0xf]
                %296 = vst [vmem:[%s180 + $0xe4] sm:$0xf] %v295
                %v297 = vld [vmem:[%s179 + $0x1d0] sm:$0xf]
                %298 = vst [vmem:[%s180 + $0xe8] sm:$0xf] %v297
                %v299 = vld [vmem:[%s179 + $0x1d8] sm:$0xf]
                %300 = vst [vmem:[%s180 + $0xec] sm:$0xf] %v299
                %v301 = vld [vmem:[%s179 + $0x1e0] sm:$0xf]
                %302 = vst [vmem:[%s180 + $0xf0] sm:$0xf] %v301
                %v303 = vld [vmem:[%s179 + $0x1e8] sm:$0xf]
                %304 = vst [vmem:[%s180 + $0xf4] sm:$0xf] %v303
                %v305 = vld [vmem:[%s179 + $0x1f0] sm:$0xf]
                %306 = vst [vmem:[%s180 + $0xf8] sm:$0xf] %v305
                %v307 = vld [vmem:[%s179 + $0x1f8] sm:$0xf]
                %308 = vst [vmem:[%s180 + $0xfc] sm:$0xf] %v307
                %v309 = vld [vmem:[%s179 + $0x200] sm:$0xf]
                %310 = vst [vmem:[%s180 + $0x100] sm:$0xf] %v309
                %v311 = vld [vmem:[%s179 + $0x208] sm:$0xf]
                %312 = vst [vmem:[%s180 + $0x104] sm:$0xf] %v311
                %v313 = vld [vmem:[%s179 + $0x210] sm:$0xf]
                %314 = vst [vmem:[%s180 + $0x108] sm:$0xf] %v313
                %v315 = vld [vmem:[%s179 + $0x218] sm:$0xf]
                %316 = vst [vmem:[%s180 + $0x10c] sm:$0xf] %v315
                %v317 = vld [vmem:[%s179 + $0x220] sm:$0xf]
                %318 = vst [vmem:[%s180 + $0x110] sm:$0xf] %v317
                %v319 = vld [vmem:[%s179 + $0x228] sm:$0xf]
                %320 = vst [vmem:[%s180 + $0x114] sm:$0xf] %v319
                %v321 = vld [vmem:[%s179 + $0x230] sm:$0xf]
                %322 = vst [vmem:[%s180 + $0x118] sm:$0xf] %v321
                %v323 = vld [vmem:[%s179 + $0x238] sm:$0xf]
                %324 = vst [vmem:[%s180 + $0x11c] sm:$0xf] %v323
                %v325 = vld [vmem:[%s179 + $0x240] sm:$0xf]
                %326 = vst [vmem:[%s180 + $0x120] sm:$0xf] %v325
                %v327 = vld [vmem:[%s179 + $0x248] sm:$0xf]
                %328 = vst [vmem:[%s180 + $0x124] sm:$0xf] %v327
                %v329 = vld [vmem:[%s179 + $0x250] sm:$0xf]
                %330 = vst [vmem:[%s180 + $0x128] sm:$0xf] %v329
                %v331 = vld [vmem:[%s179 + $0x258] sm:$0xf]
                %332 = vst [vmem:[%s180 + $0x12c] sm:$0xf] %v331
                %v333 = vld [vmem:[%s179 + $0x260] sm:$0xf]
                %334 = vst [vmem:[%s180 + $0x130] sm:$0xf] %v333
                %v335 = vld [vmem:[%s179 + $0x268] sm:$0xf]
                %336 = vst [vmem:[%s180 + $0x134] sm:$0xf] %v335
                %v337 = vld [vmem:[%s179 + $0x270] sm:$0xf]
                %338 = vst [vmem:[%s180 + $0x138] sm:$0xf] %v337
                %v339 = vld [vmem:[%s179 + $0x278] sm:$0xf]
                %340 = vst [vmem:[%s180 + $0x13c] sm:$0xf] %v339
                %v341 = vld [vmem:[%s179 + $0x280] sm:$0xf]
                %342 = vst [vmem:[%s180 + $0x140] sm:$0xf] %v341
                %v343 = vld [vmem:[%s179 + $0x288] sm:$0xf]
                %344 = vst [vmem:[%s180 + $0x144] sm:$0xf] %v343
                %v345 = vld [vmem:[%s179 + $0x290] sm:$0xf]
                %346 = vst [vmem:[%s180 + $0x148] sm:$0xf] %v345
                %v347 = vld [vmem:[%s179 + $0x298] sm:$0xf]
                %348 = vst [vmem:[%s180 + $0x14c] sm:$0xf] %v347
                %v349 = vld [vmem:[%s179 + $0x2a0] sm:$0xf]
                %350 = vst [vmem:[%s180 + $0x150] sm:$0xf] %v349
                %v351 = vld [vmem:[%s179 + $0x2a8] sm:$0xf]
                %352 = vst [vmem:[%s180 + $0x154] sm:$0xf] %v351
                %v353 = vld [vmem:[%s179 + $0x2b0] sm:$0xf]
                %354 = vst [vmem:[%s180 + $0x158] sm:$0xf] %v353
                %v355 = vld [vmem:[%s179 + $0x2b8] sm:$0xf]
                %356 = vst [vmem:[%s180 + $0x15c] sm:$0xf] %v355
                %v357 = vld [vmem:[%s179 + $0x2c0] sm:$0xf]
                %358 = vst [vmem:[%s180 + $0x160] sm:$0xf] %v357
                %v359 = vld [vmem:[%s179 + $0x2c8] sm:$0xf]
                %360 = vst [vmem:[%s180 + $0x164] sm:$0xf] %v359
                %v361 = vld [vmem:[%s179 + $0x2d0] sm:$0xf]
                %362 = vst [vmem:[%s180 + $0x168] sm:$0xf] %v361
                %v363 = vld [vmem:[%s179 + $0x2d8] sm:$0xf]
                %364 = vst [vmem:[%s180 + $0x16c] sm:$0xf] %v363
                %v365 = vld [vmem:[%s179 + $0x2e0] sm:$0xf]
                %366 = vst [vmem:[%s180 + $0x170] sm:$0xf] %v365
                %v367 = vld [vmem:[%s179 + $0x2e8] sm:$0xf]
                %368 = vst [vmem:[%s180 + $0x174] sm:$0xf] %v367
                %v369 = vld [vmem:[%s179 + $0x2f0] sm:$0xf]
                %370 = vst [vmem:[%s180 + $0x178] sm:$0xf] %v369
                %v371 = vld [vmem:[%s179 + $0x2f8] sm:$0xf]
                %372 = vst [vmem:[%s180 + $0x17c] sm:$0xf] %v371
                %v373 = vld [vmem:[%s179 + $0x300] sm:$0xf]
                %374 = vst [vmem:[%s180 + $0x180] sm:$0xf] %v373
                %v375 = vld [vmem:[%s179 + $0x308] sm:$0xf]
                %376 = vst [vmem:[%s180 + $0x184] sm:$0xf] %v375
                %v377 = vld [vmem:[%s179 + $0x310] sm:$0xf]
                %378 = vst [vmem:[%s180 + $0x188] sm:$0xf] %v377
                %v379 = vld [vmem:[%s179 + $0x318] sm:$0xf]
                %380 = vst [vmem:[%s180 + $0x18c] sm:$0xf] %v379
                %v381 = vld [vmem:[%s179 + $0x320] sm:$0xf]
                %382 = vst [vmem:[%s180 + $0x190] sm:$0xf] %v381
                %v383 = vld [vmem:[%s179 + $0x328] sm:$0xf]
                %384 = vst [vmem:[%s180 + $0x194] sm:$0xf] %v383
                %v385 = vld [vmem:[%s179 + $0x330] sm:$0xf]
                %386 = vst [vmem:[%s180 + $0x198] sm:$0xf] %v385
                %v387 = vld [vmem:[%s179 + $0x338] sm:$0xf]
                %388 = vst [vmem:[%s180 + $0x19c] sm:$0xf] %v387
                %v389 = vld [vmem:[%s179 + $0x340] sm:$0xf]
                %390 = vst [vmem:[%s180 + $0x1a0] sm:$0xf] %v389
                %v391 = vld [vmem:[%s179 + $0x348] sm:$0xf]
                %392 = vst [vmem:[%s180 + $0x1a4] sm:$0xf] %v391
                %v393 = vld [vmem:[%s179 + $0x350] sm:$0xf]
                %394 = vst [vmem:[%s180 + $0x1a8] sm:$0xf] %v393
                %v395 = vld [vmem:[%s179 + $0x358] sm:$0xf]
                %396 = vst [vmem:[%s180 + $0x1ac] sm:$0xf] %v395
                %v397 = vld [vmem:[%s179 + $0x360] sm:$0xf]
                %398 = vst [vmem:[%s180 + $0x1b0] sm:$0xf] %v397
                %v399 = vld [vmem:[%s179 + $0x368] sm:$0xf]
                %400 = vst [vmem:[%s180 + $0x1b4] sm:$0xf] %v399
                %v401 = vld [vmem:[%s179 + $0x370] sm:$0xf]
                %402 = vst [vmem:[%s180 + $0x1b8] sm:$0xf] %v401
                %v403 = vld [vmem:[%s179 + $0x378] sm:$0xf]
                %404 = vst [vmem:[%s180 + $0x1bc] sm:$0xf] %v403
                %v405 = vld [vmem:[%s179 + $0x380] sm:$0xf]
                %406 = vst [vmem:[%s180 + $0x1c0] sm:$0xf] %v405
                %v407 = vld [vmem:[%s179 + $0x388] sm:$0xf]
                %408 = vst [vmem:[%s180 + $0x1c4] sm:$0xf] %v407
                %v409 = vld [vmem:[%s179 + $0x390] sm:$0xf]
                %410 = vst [vmem:[%s180 + $0x1c8] sm:$0xf] %v409
                %v411 = vld [vmem:[%s179 + $0x398] sm:$0xf]
                %412 = vst [vmem:[%s180 + $0x1cc] sm:$0xf] %v411
                %v413 = vld [vmem:[%s179 + $0x3a0] sm:$0xf]
                %414 = vst [vmem:[%s180 + $0x1d0] sm:$0xf] %v413
                %v415 = vld [vmem:[%s179 + $0x3a8] sm:$0xf]
                %416 = vst [vmem:[%s180 + $0x1d4] sm:$0xf] %v415
                %v417 = vld [vmem:[%s179 + $0x3b0] sm:$0xf]
                %418 = vst [vmem:[%s180 + $0x1d8] sm:$0xf] %v417
                %v419 = vld [vmem:[%s179 + $0x3b8] sm:$0xf]
                %420 = vst [vmem:[%s180 + $0x1dc] sm:$0xf] %v419
                %v421 = vld [vmem:[%s179 + $0x3c0] sm:$0xf]
                %422 = vst [vmem:[%s180 + $0x1e0] sm:$0xf] %v421
                %v423 = vld [vmem:[%s179 + $0x3c8] sm:$0xf]
                %424 = vst [vmem:[%s180 + $0x1e4] sm:$0xf] %v423
                %v425 = vld [vmem:[%s179 + $0x3d0] sm:$0xf]
                %426 = vst [vmem:[%s180 + $0x1e8] sm:$0xf] %v425
                %v427 = vld [vmem:[%s179 + $0x3d8] sm:$0xf]
                %428 = vst [vmem:[%s180 + $0x1ec] sm:$0xf] %v427
                %v429 = vld [vmem:[%s179 + $0x3e0] sm:$0xf]
                %430 = vst [vmem:[%s180 + $0x1f0] sm:$0xf] %v429
                %v431 = vld [vmem:[%s179 + $0x3e8] sm:$0xf]
                %432 = vst [vmem:[%s180 + $0x1f4] sm:$0xf] %v431
                %v433 = vld [vmem:[%s179 + $0x3f0] sm:$0xf]
                %434 = vst [vmem:[%s180 + $0x1f8] sm:$0xf] %v433
                %v435 = vld [vmem:[%s179 + $0x3f8] sm:$0xf]
                %436 = vst [vmem:[%s180 + $0x1fc] sm:$0xf] %v435
                %v437 = vld [vmem:[%s179 + $0x400] sm:$0xf]
                %438 = vst [vmem:[%s180 + $0x200] sm:$0xf] %v437
                %v439 = vld [vmem:[%s179 + $0x408] sm:$0xf]
                %440 = vst [vmem:[%s180 + $0x204] sm:$0xf] %v439
                %v441 = vld [vmem:[%s179 + $0x410] sm:$0xf]
                %442 = vst [vmem:[%s180 + $0x208] sm:$0xf] %v441
                %v443 = vld [vmem:[%s179 + $0x418] sm:$0xf]
                %444 = vst [vmem:[%s180 + $0x20c] sm:$0xf] %v443
                %v445 = vld [vmem:[%s179 + $0x420] sm:$0xf]
                %446 = vst [vmem:[%s180 + $0x210] sm:$0xf] %v445
                %v447 = vld [vmem:[%s179 + $0x428] sm:$0xf]
                %448 = vst [vmem:[%s180 + $0x214] sm:$0xf] %v447
                %v449 = vld [vmem:[%s179 + $0x430] sm:$0xf]
                %450 = vst [vmem:[%s180 + $0x218] sm:$0xf] %v449
                %v451 = vld [vmem:[%s179 + $0x438] sm:$0xf]
                %452 = vst [vmem:[%s180 + $0x21c] sm:$0xf] %v451
                %v453 = vld [vmem:[%s179 + $0x440] sm:$0xf]
                %454 = vst [vmem:[%s180 + $0x220] sm:$0xf] %v453
                %v455 = vld [vmem:[%s179 + $0x448] sm:$0xf]
                %456 = vst [vmem:[%s180 + $0x224] sm:$0xf] %v455
                %v457 = vld [vmem:[%s179 + $0x450] sm:$0xf]
                %458 = vst [vmem:[%s180 + $0x228] sm:$0xf] %v457
                %v459 = vld [vmem:[%s179 + $0x458] sm:$0xf]
                %460 = vst [vmem:[%s180 + $0x22c] sm:$0xf] %v459
                %v461 = vld [vmem:[%s179 + $0x460] sm:$0xf]
                %462 = vst [vmem:[%s180 + $0x230] sm:$0xf] %v461
                %v463 = vld [vmem:[%s179 + $0x468] sm:$0xf]
                %464 = vst [vmem:[%s180 + $0x234] sm:$0xf] %v463
                %v465 = vld [vmem:[%s179 + $0x470] sm:$0xf]
                %466 = vst [vmem:[%s180 + $0x238] sm:$0xf] %v465
                %v467 = vld [vmem:[%s179 + $0x478] sm:$0xf]
                %468 = vst [vmem:[%s180 + $0x23c] sm:$0xf] %v467
                %v469 = vld [vmem:[%s179 + $0x480] sm:$0xf]
                %470 = vst [vmem:[%s180 + $0x240] sm:$0xf] %v469
                %v471 = vld [vmem:[%s179 + $0x488] sm:$0xf]
                %472 = vst [vmem:[%s180 + $0x244] sm:$0xf] %v471
                %v473 = vld [vmem:[%s179 + $0x490] sm:$0xf]
                %474 = vst [vmem:[%s180 + $0x248] sm:$0xf] %v473
                %v475 = vld [vmem:[%s179 + $0x498] sm:$0xf]
                %476 = vst [vmem:[%s180 + $0x24c] sm:$0xf] %v475
                %v477 = vld [vmem:[%s179 + $0x4a0] sm:$0xf]
                %478 = vst [vmem:[%s180 + $0x250] sm:$0xf] %v477
                %v479 = vld [vmem:[%s179 + $0x4a8] sm:$0xf]
                %480 = vst [vmem:[%s180 + $0x254] sm:$0xf] %v479
                %v481 = vld [vmem:[%s179 + $0x4b0] sm:$0xf]
                %482 = vst [vmem:[%s180 + $0x258] sm:$0xf] %v481
                %v483 = vld [vmem:[%s179 + $0x4b8] sm:$0xf]
                %484 = vst [vmem:[%s180 + $0x25c] sm:$0xf] %v483
                %v485 = vld [vmem:[%s179 + $0x4c0] sm:$0xf]
                %486 = vst [vmem:[%s180 + $0x260] sm:$0xf] %v485
                %v487 = vld [vmem:[%s179 + $0x4c8] sm:$0xf]
                %488 = vst [vmem:[%s180 + $0x264] sm:$0xf] %v487
                %v489 = vld [vmem:[%s179 + $0x4d0] sm:$0xf]
                %490 = vst [vmem:[%s180 + $0x268] sm:$0xf] %v489
                %v491 = vld [vmem:[%s179 + $0x4d8] sm:$0xf]
                %492 = vst [vmem:[%s180 + $0x26c] sm:$0xf] %v491
                %v493 = vld [vmem:[%s179 + $0x4e0] sm:$0xf]
                %494 = vst [vmem:[%s180 + $0x270] sm:$0xf] %v493
                %v495 = vld [vmem:[%s179 + $0x4e8] sm:$0xf]
                %496 = vst [vmem:[%s180 + $0x274] sm:$0xf] %v495
                %v497 = vld [vmem:[%s179 + $0x4f0] sm:$0xf]
                %498 = vst [vmem:[%s180 + $0x278] sm:$0xf] %v497
                %v499 = vld [vmem:[%s179 + $0x4f8] sm:$0xf]
                %500 = vst [vmem:[%s180 + $0x27c] sm:$0xf] %v499
                %v501 = vld [vmem:[%s179 + $0x500] sm:$0xf]
                %502 = vst [vmem:[%s180 + $0x280] sm:$0xf] %v501
                %v503 = vld [vmem:[%s179 + $0x508] sm:$0xf]
                %504 = vst [vmem:[%s180 + $0x284] sm:$0xf] %v503
                %v505 = vld [vmem:[%s179 + $0x510] sm:$0xf]
                %506 = vst [vmem:[%s180 + $0x288] sm:$0xf] %v505
                %v507 = vld [vmem:[%s179 + $0x518] sm:$0xf]
                %508 = vst [vmem:[%s180 + $0x28c] sm:$0xf] %v507
                %v509 = vld [vmem:[%s179 + $0x520] sm:$0xf]
                %510 = vst [vmem:[%s180 + $0x290] sm:$0xf] %v509
                %v511 = vld [vmem:[%s179 + $0x528] sm:$0xf]
                %512 = vst [vmem:[%s180 + $0x294] sm:$0xf] %v511
                %v513 = vld [vmem:[%s179 + $0x530] sm:$0xf]
                %514 = vst [vmem:[%s180 + $0x298] sm:$0xf] %v513
                %v515 = vld [vmem:[%s179 + $0x538] sm:$0xf]
                %516 = vst [vmem:[%s180 + $0x29c] sm:$0xf] %v515
                %v517 = vld [vmem:[%s179 + $0x540] sm:$0xf]
                %518 = vst [vmem:[%s180 + $0x2a0] sm:$0xf] %v517
                %v519 = vld [vmem:[%s179 + $0x548] sm:$0xf]
                %520 = vst [vmem:[%s180 + $0x2a4] sm:$0xf] %v519
                %v521 = vld [vmem:[%s179 + $0x550] sm:$0xf]
                %522 = vst [vmem:[%s180 + $0x2a8] sm:$0xf] %v521
                %v523 = vld [vmem:[%s179 + $0x558] sm:$0xf]
                %524 = vst [vmem:[%s180 + $0x2ac] sm:$0xf] %v523
                %v525 = vld [vmem:[%s179 + $0x560] sm:$0xf]
                %526 = vst [vmem:[%s180 + $0x2b0] sm:$0xf] %v525
                %v527 = vld [vmem:[%s179 + $0x568] sm:$0xf]
                %528 = vst [vmem:[%s180 + $0x2b4] sm:$0xf] %v527
                %v529 = vld [vmem:[%s179 + $0x570] sm:$0xf]
                %530 = vst [vmem:[%s180 + $0x2b8] sm:$0xf] %v529
                %v531 = vld [vmem:[%s179 + $0x578] sm:$0xf]
                %532 = vst [vmem:[%s180 + $0x2bc] sm:$0xf] %v531
                %v533 = vld [vmem:[%s179 + $0x580] sm:$0xf]
                %534 = vst [vmem:[%s180 + $0x2c0] sm:$0xf] %v533
                %v535 = vld [vmem:[%s179 + $0x588] sm:$0xf]
                %536 = vst [vmem:[%s180 + $0x2c4] sm:$0xf] %v535
                %v537 = vld [vmem:[%s179 + $0x590] sm:$0xf]
                %538 = vst [vmem:[%s180 + $0x2c8] sm:$0xf] %v537
                %v539 = vld [vmem:[%s179 + $0x598] sm:$0xf]
                %540 = vst [vmem:[%s180 + $0x2cc] sm:$0xf] %v539
                %v541 = vld [vmem:[%s179 + $0x5a0] sm:$0xf]
                %542 = vst [vmem:[%s180 + $0x2d0] sm:$0xf] %v541
                %v543 = vld [vmem:[%s179 + $0x5a8] sm:$0xf]
                %544 = vst [vmem:[%s180 + $0x2d4] sm:$0xf] %v543
                %v545 = vld [vmem:[%s179 + $0x5b0] sm:$0xf]
                %546 = vst [vmem:[%s180 + $0x2d8] sm:$0xf] %v545
                %v547 = vld [vmem:[%s179 + $0x5b8] sm:$0xf]
                %548 = vst [vmem:[%s180 + $0x2dc] sm:$0xf] %v547
                %v549 = vld [vmem:[%s179 + $0x5c0] sm:$0xf]
                %550 = vst [vmem:[%s180 + $0x2e0] sm:$0xf] %v549
                %v551 = vld [vmem:[%s179 + $0x5c8] sm:$0xf]
                %552 = vst [vmem:[%s180 + $0x2e4] sm:$0xf] %v551
                %v553 = vld [vmem:[%s179 + $0x5d0] sm:$0xf]
                %554 = vst [vmem:[%s180 + $0x2e8] sm:$0xf] %v553
                %v555 = vld [vmem:[%s179 + $0x5d8] sm:$0xf]
                %556 = vst [vmem:[%s180 + $0x2ec] sm:$0xf] %v555
                %v557 = vld [vmem:[%s179 + $0x5e0] sm:$0xf]
                %558 = vst [vmem:[%s180 + $0x2f0] sm:$0xf] %v557
                %v559 = vld [vmem:[%s179 + $0x5e8] sm:$0xf]
                %560 = vst [vmem:[%s180 + $0x2f4] sm:$0xf] %v559
                %v561 = vld [vmem:[%s179 + $0x5f0] sm:$0xf]
                %562 = vst [vmem:[%s180 + $0x2f8] sm:$0xf] %v561
                %v563 = vld [vmem:[%s179 + $0x5f8] sm:$0xf]
                %564 = vst [vmem:[%s180 + $0x2fc] sm:$0xf] %v563
                %v565 = vld [vmem:[%s179 + $0x600] sm:$0xf]
                %566 = vst [vmem:[%s180 + $0x300] sm:$0xf] %v565
                %v567 = vld [vmem:[%s179 + $0x608] sm:$0xf]
                %568 = vst [vmem:[%s180 + $0x304] sm:$0xf] %v567
                %v569 = vld [vmem:[%s179 + $0x610] sm:$0xf]
                %570 = vst [vmem:[%s180 + $0x308] sm:$0xf] %v569
                %v571 = vld [vmem:[%s179 + $0x618] sm:$0xf]
                %572 = vst [vmem:[%s180 + $0x30c] sm:$0xf] %v571
                %v573 = vld [vmem:[%s179 + $0x620] sm:$0xf]
                %574 = vst [vmem:[%s180 + $0x310] sm:$0xf] %v573
                %v575 = vld [vmem:[%s179 + $0x628] sm:$0xf]
                %576 = vst [vmem:[%s180 + $0x314] sm:$0xf] %v575
                %v577 = vld [vmem:[%s179 + $0x630] sm:$0xf]
                %578 = vst [vmem:[%s180 + $0x318] sm:$0xf] %v577
                %v579 = vld [vmem:[%s179 + $0x638] sm:$0xf]
                %580 = vst [vmem:[%s180 + $0x31c] sm:$0xf] %v579
                %v581 = vld [vmem:[%s179 + $0x640] sm:$0xf]
                %582 = vst [vmem:[%s180 + $0x320] sm:$0xf] %v581
                %v583 = vld [vmem:[%s179 + $0x648] sm:$0xf]
                %584 = vst [vmem:[%s180 + $0x324] sm:$0xf] %v583
                %v585 = vld [vmem:[%s179 + $0x650] sm:$0xf]
                %586 = vst [vmem:[%s180 + $0x328] sm:$0xf] %v585
                %v587 = vld [vmem:[%s179 + $0x658] sm:$0xf]
                %588 = vst [vmem:[%s180 + $0x32c] sm:$0xf] %v587
                %v589 = vld [vmem:[%s179 + $0x660] sm:$0xf]
                %590 = vst [vmem:[%s180 + $0x330] sm:$0xf] %v589
                %v591 = vld [vmem:[%s179 + $0x668] sm:$0xf]
                %592 = vst [vmem:[%s180 + $0x334] sm:$0xf] %v591
                %v593 = vld [vmem:[%s179 + $0x670] sm:$0xf]
                %594 = vst [vmem:[%s180 + $0x338] sm:$0xf] %v593
                %v595 = vld [vmem:[%s179 + $0x678] sm:$0xf]
                %596 = vst [vmem:[%s180 + $0x33c] sm:$0xf] %v595
                %v597 = vld [vmem:[%s179 + $0x680] sm:$0xf]
                %598 = vst [vmem:[%s180 + $0x340] sm:$0xf] %v597
                %v599 = vld [vmem:[%s179 + $0x688] sm:$0xf]
                %600 = vst [vmem:[%s180 + $0x344] sm:$0xf] %v599
                %v601 = vld [vmem:[%s179 + $0x690] sm:$0xf]
                %602 = vst [vmem:[%s180 + $0x348] sm:$0xf] %v601
                %v603 = vld [vmem:[%s179 + $0x698] sm:$0xf]
                %604 = vst [vmem:[%s180 + $0x34c] sm:$0xf] %v603
                %v605 = vld [vmem:[%s179 + $0x6a0] sm:$0xf]
                %606 = vst [vmem:[%s180 + $0x350] sm:$0xf] %v605
                %v607 = vld [vmem:[%s179 + $0x6a8] sm:$0xf]
                %608 = vst [vmem:[%s180 + $0x354] sm:$0xf] %v607
                %v609 = vld [vmem:[%s179 + $0x6b0] sm:$0xf]
                %610 = vst [vmem:[%s180 + $0x358] sm:$0xf] %v609
                %v611 = vld [vmem:[%s179 + $0x6b8] sm:$0xf]
                %612 = vst [vmem:[%s180 + $0x35c] sm:$0xf] %v611
                %v613 = vld [vmem:[%s179 + $0x6c0] sm:$0xf]
                %614 = vst [vmem:[%s180 + $0x360] sm:$0xf] %v613
                %v615 = vld [vmem:[%s179 + $0x6c8] sm:$0xf]
                %616 = vst [vmem:[%s180 + $0x364] sm:$0xf] %v615
                %v617 = vld [vmem:[%s179 + $0x6d0] sm:$0xf]
                %618 = vst [vmem:[%s180 + $0x368] sm:$0xf] %v617
                %v619 = vld [vmem:[%s179 + $0x6d8] sm:$0xf]
                %620 = vst [vmem:[%s180 + $0x36c] sm:$0xf] %v619
                %v621 = vld [vmem:[%s179 + $0x6e0] sm:$0xf]
                %622 = vst [vmem:[%s180 + $0x370] sm:$0xf] %v621
                %v623 = vld [vmem:[%s179 + $0x6e8] sm:$0xf]
                %624 = vst [vmem:[%s180 + $0x374] sm:$0xf] %v623
                %v625 = vld [vmem:[%s179 + $0x6f0] sm:$0xf]
                %626 = vst [vmem:[%s180 + $0x378] sm:$0xf] %v625
                %v627 = vld [vmem:[%s179 + $0x6f8] sm:$0xf]
                %628 = vst [vmem:[%s180 + $0x37c] sm:$0xf] %v627
                %v629 = vld [vmem:[%s179 + $0x700] sm:$0xf]
                %630 = vst [vmem:[%s180 + $0x380] sm:$0xf] %v629
                %v631 = vld [vmem:[%s179 + $0x708] sm:$0xf]
                %632 = vst [vmem:[%s180 + $0x384] sm:$0xf] %v631
                %v633 = vld [vmem:[%s179 + $0x710] sm:$0xf]
                %634 = vst [vmem:[%s180 + $0x388] sm:$0xf] %v633
                %v635 = vld [vmem:[%s179 + $0x718] sm:$0xf]
                %636 = vst [vmem:[%s180 + $0x38c] sm:$0xf] %v635
                %v637 = vld [vmem:[%s179 + $0x720] sm:$0xf]
                %638 = vst [vmem:[%s180 + $0x390] sm:$0xf] %v637
                %v639 = vld [vmem:[%s179 + $0x728] sm:$0xf]
                %640 = vst [vmem:[%s180 + $0x394] sm:$0xf] %v639
                %v641 = vld [vmem:[%s179 + $0x730] sm:$0xf]
                %642 = vst [vmem:[%s180 + $0x398] sm:$0xf] %v641
                %v643 = vld [vmem:[%s179 + $0x738] sm:$0xf]
                %644 = vst [vmem:[%s180 + $0x39c] sm:$0xf] %v643
                %v645 = vld [vmem:[%s179 + $0x740] sm:$0xf]
                %646 = vst [vmem:[%s180 + $0x3a0] sm:$0xf] %v645
                %v647 = vld [vmem:[%s179 + $0x748] sm:$0xf]
                %648 = vst [vmem:[%s180 + $0x3a4] sm:$0xf] %v647
                %v649 = vld [vmem:[%s179 + $0x750] sm:$0xf]
                %650 = vst [vmem:[%s180 + $0x3a8] sm:$0xf] %v649
                %v651 = vld [vmem:[%s179 + $0x758] sm:$0xf]
                %652 = vst [vmem:[%s180 + $0x3ac] sm:$0xf] %v651
                %v653 = vld [vmem:[%s179 + $0x760] sm:$0xf]
                %654 = vst [vmem:[%s180 + $0x3b0] sm:$0xf] %v653
                %v655 = vld [vmem:[%s179 + $0x768] sm:$0xf]
                %656 = vst [vmem:[%s180 + $0x3b4] sm:$0xf] %v655
                %v657 = vld [vmem:[%s179 + $0x770] sm:$0xf]
                %658 = vst [vmem:[%s180 + $0x3b8] sm:$0xf] %v657
                %v659 = vld [vmem:[%s179 + $0x778] sm:$0xf]
                %660 = vst [vmem:[%s180 + $0x3bc] sm:$0xf] %v659
                %v661 = vld [vmem:[%s179 + $0x780] sm:$0xf]
                %662 = vst [vmem:[%s180 + $0x3c0] sm:$0xf] %v661
                %v663 = vld [vmem:[%s179 + $0x788] sm:$0xf]
                %664 = vst [vmem:[%s180 + $0x3c4] sm:$0xf] %v663
                %v665 = vld [vmem:[%s179 + $0x790] sm:$0xf]
                %666 = vst [vmem:[%s180 + $0x3c8] sm:$0xf] %v665
                %v667 = vld [vmem:[%s179 + $0x798] sm:$0xf]
                %668 = vst [vmem:[%s180 + $0x3cc] sm:$0xf] %v667
                %v669 = vld [vmem:[%s179 + $0x7a0] sm:$0xf]
                %670 = vst [vmem:[%s180 + $0x3d0] sm:$0xf] %v669
                %v671 = vld [vmem:[%s179 + $0x7a8] sm:$0xf]
                %672 = vst [vmem:[%s180 + $0x3d4] sm:$0xf] %v671
                %v673 = vld [vmem:[%s179 + $0x7b0] sm:$0xf]
                %674 = vst [vmem:[%s180 + $0x3d8] sm:$0xf] %v673
                %v675 = vld [vmem:[%s179 + $0x7b8] sm:$0xf]
                %676 = vst [vmem:[%s180 + $0x3dc] sm:$0xf] %v675
                %v677 = vld [vmem:[%s179 + $0x7c0] sm:$0xf]
                %678 = vst [vmem:[%s180 + $0x3e0] sm:$0xf] %v677
                %v679 = vld [vmem:[%s179 + $0x7c8] sm:$0xf]
                %680 = vst [vmem:[%s180 + $0x3e4] sm:$0xf] %v679
                %v681 = vld [vmem:[%s179 + $0x7d0] sm:$0xf]
                %682 = vst [vmem:[%s180 + $0x3e8] sm:$0xf] %v681
                %v683 = vld [vmem:[%s179 + $0x7d8] sm:$0xf]
                %684 = vst [vmem:[%s180 + $0x3ec] sm:$0xf] %v683
                %v685 = vld [vmem:[%s179 + $0x7e0] sm:$0xf]
                %686 = vst [vmem:[%s180 + $0x3f0] sm:$0xf] %v685
                %v687 = vld [vmem:[%s179 + $0x7e8] sm:$0xf]
                %688 = vst [vmem:[%s180 + $0x3f4] sm:$0xf] %v687
                %v689 = vld [vmem:[%s179 + $0x7f0] sm:$0xf]
                %690 = vst [vmem:[%s180 + $0x3f8] sm:$0xf] %v689
                %v691 = vld [vmem:[%s179 + $0x7f8] sm:$0xf]
                %692 = vst [vmem:[%s180 + $0x3fc] sm:$0xf] %v691
              $region41: #{apricot_cnn1_forward.11} parent=35 // loop_footer
                %s178 = sadd.s32 1, %s174
              $region42: #{apricot_cnn1_forward.11} parent=35 // loop_footer_branch
                %173 = sbr.rel target = $region38
              $region43: #{apricot_cnn1_forward.11} parent=35 // loop_exit
                _
            $region36: #{apricot_cnn1_forward.11} parent=27 // pred_fallthru
              _
          $region28: #{apricot_cnn1_forward.11} parent=23 // pred_fallthru
            _
          %1224 = vnop
        $region24: #{apricot_cnn1_forward.11} parent=15 // pred_fallthru
          _
        // Predicated region
        $region62: #{apricot_cnn1_forward.11} parent=15 // pred_check
          %p1225 = pneg %p95
        $region63: #{apricot_cnn1_forward.11} parent=15 // pred_check_branch
          %1227 = sbr.rel (%p1225) target = $region65
        $region64: #{apricot_cnn1_forward.11} parent=15 // pred_region
          %p1228 = scmp.lt.s32.totalorder %s16, 1
          %s1229 = scalar_select %p1228, %s16, 1
          %s1230 = scalar_lea.vmem %s2, %s1229
        $region65: #{apricot_cnn1_forward.11} parent=15 // pred_fallthru
          _
      $region16: #{apricot_cnn1_forward.11} parent=5 // pred_fallthru
        _
      %p1231 = scmp.le.s32.totalorder 1, %s9
      %p1232 = scmp.lt.s32.totalorder %s9, 9
      %p1233 = pnand %p1231, %p1232
      %p1234 = pneg %p1233
      // Predicated region
      $region66: #{apricot_cnn1_forward.11} parent=5 // pred_check
        _
      $region67: #{apricot_cnn1_forward.11} parent=5 // pred_check_branch
        %1236 = sbr.rel (%p1233) target = $region69
      $region68: #{apricot_cnn1_forward.11} parent=5 // pred_region
        %s1237 = ssub.s32 %s9, 1
        %s1238 = sand.u32 %s62, 1
        %s1239 = sand.u32 %s62, 1
        %s1240 = smul.addr %s1239, 1024
        %s1241 = scalar_lea.vmem [#allocation3], %s1240
        // Predicated region
        $region70: #{apricot_cnn1_forward.11} parent=68 // pred_check
          %p1242 = pneg %p75
        $region71: #{apricot_cnn1_forward.11} parent=68 // pred_check_branch
          %1244 = sbr.rel (%p1242) target = $region73
        $region72: #{apricot_cnn1_forward.11} parent=68 // pred_region
          _
        $region73: #{apricot_cnn1_forward.11} parent=68 // pred_fallthru
          _
        %s1245 = smul.u32 16, %s19
        %p1246 = scmp.lt.s32.totalorder %s1245, 63
        %s1247 = scalar_select %p1246, %s1245, 63
        %s1248 = scalar_lea.vmem %s0, %s1247
        %p1249 = pneg %p47
        %p1250 = pneg %p44
        %s1251 = sand.u32 %s62, 1
        %s1252 = sand.u32 %s62, 1
        %s1253 = smul.addr %s1252, 1024
        %s1254 = scalar_lea.vmem [#allocation3], %s1253
        %p1255 = pneg %p75
        %p1256 = pneg %p72
        %p1257 = scmp.lt.s32.totalorder %s18, 1
        %s1258 = scalar_select %p1257, %s18, 1
        %s1259 = scalar_lea.vmem %s2, %s1258
        %p1260 = pneg %p101
        %p1261 = pneg %p98
        %p1262 = pneg %p127
        %p1263 = pneg %p124
        %p1264 = scmp.lt.s32.totalorder %s18, 1
        %s1265 = scalar_select %p1264, %s18, 1
        %s1266 = scalar_lea.vmem %s3, %s1265
        %s1267 = smul.u32 16, %s19
        %p1268 = scmp.lt.s32.totalorder %s1267, 63
        %s1269 = scalar_select %p1268, %s1267, 63
        %s1270 = scalar_lea.vmem %s0, %s1269
        %s1271 = smul.u32 16, %s19
        %s1272 = smul.u32 256, %s19
        %p1273 = scmp.lt.s32.totalorder %s18, 1
        %s1274 = scalar_select %p1273, %s18, 1
        %s1275 = scalar_lea.vmem %s2, %s1274
        %p1276 = scmp.lt.s32.totalorder %s18, 1
        %s1277 = scalar_select %p1276, %s18, 1
        %s1278 = scalar_lea.vmem %s3, %s1277
        %p1280 = scmp.eq.s32.totalorder %s19, 0
        // Predicated region
        $region74: #{apricot_cnn1_forward.11} parent=68 // pred_check
          %p1281 = pneg %p1280
        $region75: #{apricot_cnn1_forward.11} parent=68 // pred_check_branch
          %1283 = sbr.rel (%p1281) target = $region77
        $region76: #{apricot_cnn1_forward.11} parent=68 // pred_region
          %1284 = vst [vmem:[#allocation2] sm:$0x3] 0.0
        $region77: #{apricot_cnn1_forward.11} parent=68 // pred_fallthru
          _
        %v1285 = vld [vmem:[#allocation2] sm:$0x3]
        %v1286 = vld [vmem:[%s1270] sm:$0xff]
        %v1287 = vld [vmem:[%s1270 + $0x8] sm:$0xff]
        %v1288 = vld [vmem:[%s1241] sm:$0xf]
        %v1289 = vld [vmem:[%s1241 + $0x4] sm:$0xf]
        %v1290 = vld [vmem:[%s1241 + $0x8] sm:$0xf]
        %v1291 = vld [vmem:[%s1241 + $0xc] sm:$0xf]
        %v1292 = vld [vmem:[%s1241 + $0x10] sm:$0xf]
        %v1293 = vld [vmem:[%s1241 + $0x14] sm:$0xf]
        %v1294 = vld [vmem:[%s1241 + $0x18] sm:$0xf]
        %v1295 = vld [vmem:[%s1241 + $0x1c] sm:$0xf]
        %v1296 = vld [vmem:[%s1241 + $0x20] sm:$0xf]
        %v1297 = vld [vmem:[%s1241 + $0x24] sm:$0xf]
        %v1298 = vld [vmem:[%s1241 + $0x28] sm:$0xf]
        %v1299 = vld [vmem:[%s1241 + $0x2c] sm:$0xf]
        %v1300 = vld [vmem:[%s1241 + $0x30] sm:$0xf]
        %v1301 = vld [vmem:[%s1241 + $0x34] sm:$0xf]
        %v1302 = vld [vmem:[%s1241 + $0x38] sm:$0xf]
        %v1303 = vld [vmem:[%s1241 + $0x3c] sm:$0xf]
        %v1304 = vld [vmem:[%s1241 + $0x40] sm:$0xf]
        %v1305 = vld [vmem:[%s1241 + $0x44] sm:$0xf]
        %v1306 = vld [vmem:[%s1241 + $0x48] sm:$0xf]
        %v1307 = vld [vmem:[%s1241 + $0x4c] sm:$0xf]
        %v1308 = vld [vmem:[%s1241 + $0x50] sm:$0xf]
        %v1309 = vld [vmem:[%s1241 + $0x54] sm:$0xf]
        %v1310 = vld [vmem:[%s1241 + $0x58] sm:$0xf]
        %v1311 = vld [vmem:[%s1241 + $0x5c] sm:$0xf]
        %v1312 = vld [vmem:[%s1241 + $0x60] sm:$0xf]
        %v1313 = vld [vmem:[%s1241 + $0x64] sm:$0xf]
        %v1314 = vld [vmem:[%s1241 + $0x68] sm:$0xf]
        %v1315 = vld [vmem:[%s1241 + $0x6c] sm:$0xf]
        %v1316 = vld [vmem:[%s1241 + $0x70] sm:$0xf]
        %v1317 = vld [vmem:[%s1241 + $0x74] sm:$0xf]
        %v1318 = vld [vmem:[%s1241 + $0x78] sm:$0xf]
        %v1319 = vld [vmem:[%s1241 + $0x7c] sm:$0xf]
        %v1320 = vld [vmem:[%s1241 + $0x80] sm:$0xf]
        %v1321 = vld [vmem:[%s1241 + $0x84] sm:$0xf]
        %v1322 = vld [vmem:[%s1241 + $0x88] sm:$0xf]
        %v1323 = vld [vmem:[%s1241 + $0x8c] sm:$0xf]
        %v1324 = vld [vmem:[%s1241 + $0x90] sm:$0xf]
        %v1325 = vld [vmem:[%s1241 + $0x94] sm:$0xf]
        %v1326 = vld [vmem:[%s1241 + $0x98] sm:$0xf]
        %v1327 = vld [vmem:[%s1241 + $0x9c] sm:$0xf]
        %v1328 = vld [vmem:[%s1241 + $0xa0] sm:$0xf]
        %v1329 = vld [vmem:[%s1241 + $0xa4] sm:$0xf]
        %v1330 = vld [vmem:[%s1241 + $0xa8] sm:$0xf]
        %v1331 = vld [vmem:[%s1241 + $0xac] sm:$0xf]
        %v1332 = vld [vmem:[%s1241 + $0xb0] sm:$0xf]
        %v1333 = vld [vmem:[%s1241 + $0xb4] sm:$0xf]
        %v1334 = vld [vmem:[%s1241 + $0xb8] sm:$0xf]
        %v1335 = vld [vmem:[%s1241 + $0xbc] sm:$0xf]
        %v1336 = vld [vmem:[%s1241 + $0xc0] sm:$0xf]
        %v1337 = vld [vmem:[%s1241 + $0xc4] sm:$0xf]
        %v1338 = vld [vmem:[%s1241 + $0xc8] sm:$0xf]
        %v1339 = vld [vmem:[%s1241 + $0xcc] sm:$0xf]
        %v1340 = vld [vmem:[%s1241 + $0xd0] sm:$0xf]
        %v1341 = vld [vmem:[%s1241 + $0xd4] sm:$0xf]
        %v1342 = vld [vmem:[%s1241 + $0xd8] sm:$0xf]
        %v1343 = vld [vmem:[%s1241 + $0xdc] sm:$0xf]
        %v1344 = vld [vmem:[%s1241 + $0xe0] sm:$0xf]
        %v1345 = vld [vmem:[%s1241 + $0xe4] sm:$0xf]
        %v1346 = vld [vmem:[%s1241 + $0xe8] sm:$0xf]
        %v1347 = vld [vmem:[%s1241 + $0xec] sm:$0xf]
        %v1348 = vld [vmem:[%s1241 + $0xf0] sm:$0xf]
        %v1349 = vld [vmem:[%s1241 + $0xf4] sm:$0xf]
        %v1350 = vld [vmem:[%s1241 + $0xf8] sm:$0xf]
        %v1351 = vld [vmem:[%s1241 + $0xfc] sm:$0xf]
        %v1352 = vld [vmem:[%s1241 + $0x100] sm:$0xf]
        %v1353 = vld [vmem:[%s1241 + $0x104] sm:$0xf]
        %v1354 = vld [vmem:[%s1241 + $0x108] sm:$0xf]
        %v1355 = vld [vmem:[%s1241 + $0x10c] sm:$0xf]
        %v1356 = vld [vmem:[%s1241 + $0x110] sm:$0xf]
        %v1357 = vld [vmem:[%s1241 + $0x114] sm:$0xf]
        %v1358 = vld [vmem:[%s1241 + $0x118] sm:$0xf]
        %v1359 = vld [vmem:[%s1241 + $0x11c] sm:$0xf]
        %v1360 = vld [vmem:[%s1241 + $0x120] sm:$0xf]
        %v1361 = vld [vmem:[%s1241 + $0x124] sm:$0xf]
        %v1362 = vld [vmem:[%s1241 + $0x128] sm:$0xf]
        %v1363 = vld [vmem:[%s1241 + $0x12c] sm:$0xf]
        %v1364 = vld [vmem:[%s1241 + $0x130] sm:$0xf]
        %v1365 = vld [vmem:[%s1241 + $0x134] sm:$0xf]
        %v1366 = vld [vmem:[%s1241 + $0x138] sm:$0xf]
        %v1367 = vld [vmem:[%s1241 + $0x13c] sm:$0xf]
        %v1368 = vld [vmem:[%s1241 + $0x140] sm:$0xf]
        %v1369 = vld [vmem:[%s1241 + $0x144] sm:$0xf]
        %v1370 = vld [vmem:[%s1241 + $0x148] sm:$0xf]
        %v1371 = vld [vmem:[%s1241 + $0x14c] sm:$0xf]
        %v1372 = vld [vmem:[%s1241 + $0x150] sm:$0xf]
        %v1373 = vld [vmem:[%s1241 + $0x154] sm:$0xf]
        %v1374 = vld [vmem:[%s1241 + $0x158] sm:$0xf]
        %v1375 = vld [vmem:[%s1241 + $0x15c] sm:$0xf]
        %v1376 = vld [vmem:[%s1241 + $0x160] sm:$0xf]
        %v1377 = vld [vmem:[%s1241 + $0x164] sm:$0xf]
        %v1378 = vld [vmem:[%s1241 + $0x168] sm:$0xf]
        %v1379 = vld [vmem:[%s1241 + $0x16c] sm:$0xf]
        %v1380 = vld [vmem:[%s1241 + $0x170] sm:$0xf]
        %v1381 = vld [vmem:[%s1241 + $0x174] sm:$0xf]
        %v1382 = vld [vmem:[%s1241 + $0x178] sm:$0xf]
        %v1383 = vld [vmem:[%s1241 + $0x17c] sm:$0xf]
        %v1384 = vld [vmem:[%s1241 + $0x180] sm:$0xf]
        %v1385 = vld [vmem:[%s1241 + $0x184] sm:$0xf]
        %v1386 = vld [vmem:[%s1241 + $0x188] sm:$0xf]
        %v1387 = vld [vmem:[%s1241 + $0x18c] sm:$0xf]
        %v1388 = vld [vmem:[%s1241 + $0x190] sm:$0xf]
        %v1389 = vld [vmem:[%s1241 + $0x194] sm:$0xf]
        %v1390 = vld [vmem:[%s1241 + $0x198] sm:$0xf]
        %v1391 = vld [vmem:[%s1241 + $0x19c] sm:$0xf]
        %v1392 = vld [vmem:[%s1241 + $0x1a0] sm:$0xf]
        %v1393 = vld [vmem:[%s1241 + $0x1a4] sm:$0xf]
        %v1394 = vld [vmem:[%s1241 + $0x1a8] sm:$0xf]
        %v1395 = vld [vmem:[%s1241 + $0x1ac] sm:$0xf]
        %v1396 = vld [vmem:[%s1241 + $0x1b0] sm:$0xf]
        %v1397 = vld [vmem:[%s1241 + $0x1b4] sm:$0xf]
        %v1398 = vld [vmem:[%s1241 + $0x1b8] sm:$0xf]
        %v1399 = vld [vmem:[%s1241 + $0x1bc] sm:$0xf]
        %v1400 = vld [vmem:[%s1241 + $0x1c0] sm:$0xf]
        %v1401 = vld [vmem:[%s1241 + $0x1c4] sm:$0xf]
        %v1402 = vld [vmem:[%s1241 + $0x1c8] sm:$0xf]
        %v1403 = vld [vmem:[%s1241 + $0x1cc] sm:$0xf]
        %v1404 = vld [vmem:[%s1241 + $0x1d0] sm:$0xf]
        %v1405 = vld [vmem:[%s1241 + $0x1d4] sm:$0xf]
        %v1406 = vld [vmem:[%s1241 + $0x1d8] sm:$0xf]
        %v1407 = vld [vmem:[%s1241 + $0x1dc] sm:$0xf]
        %v1408 = vld [vmem:[%s1241 + $0x1e0] sm:$0xf]
        %v1409 = vld [vmem:[%s1241 + $0x1e4] sm:$0xf]
        %v1410 = vld [vmem:[%s1241 + $0x1e8] sm:$0xf]
        %v1411 = vld [vmem:[%s1241 + $0x1ec] sm:$0xf]
        %v1412 = vld [vmem:[%s1241 + $0x1f0] sm:$0xf]
        %v1413 = vld [vmem:[%s1241 + $0x1f4] sm:$0xf]
        %v1414 = vld [vmem:[%s1241 + $0x1f8] sm:$0xf]
        %v1415 = vld [vmem:[%s1241 + $0x1fc] sm:$0xf]
        %v1416 = vld [vmem:[%s1241 + $0x200] sm:$0xf]
        %v1417 = vld [vmem:[%s1241 + $0x204] sm:$0xf]
        %v1418 = vld [vmem:[%s1241 + $0x208] sm:$0xf]
        %v1419 = vld [vmem:[%s1241 + $0x20c] sm:$0xf]
        %v1420 = vld [vmem:[%s1241 + $0x210] sm:$0xf]
        %v1421 = vld [vmem:[%s1241 + $0x214] sm:$0xf]
        %v1422 = vld [vmem:[%s1241 + $0x218] sm:$0xf]
        %v1423 = vld [vmem:[%s1241 + $0x21c] sm:$0xf]
        %v1424 = vld [vmem:[%s1241 + $0x220] sm:$0xf]
        %v1425 = vld [vmem:[%s1241 + $0x224] sm:$0xf]
        %v1426 = vld [vmem:[%s1241 + $0x228] sm:$0xf]
        %v1427 = vld [vmem:[%s1241 + $0x22c] sm:$0xf]
        %v1428 = vld [vmem:[%s1241 + $0x230] sm:$0xf]
        %v1429 = vld [vmem:[%s1241 + $0x234] sm:$0xf]
        %v1430 = vld [vmem:[%s1241 + $0x238] sm:$0xf]
        %v1431 = vld [vmem:[%s1241 + $0x23c] sm:$0xf]
        %v1432 = vld [vmem:[%s1241 + $0x240] sm:$0xf]
        %v1433 = vld [vmem:[%s1241 + $0x244] sm:$0xf]
        %v1434 = vld [vmem:[%s1241 + $0x248] sm:$0xf]
        %v1435 = vld [vmem:[%s1241 + $0x24c] sm:$0xf]
        %v1436 = vld [vmem:[%s1241 + $0x250] sm:$0xf]
        %v1437 = vld [vmem:[%s1241 + $0x254] sm:$0xf]
        %v1438 = vld [vmem:[%s1241 + $0x258] sm:$0xf]
        %v1439 = vld [vmem:[%s1241 + $0x25c] sm:$0xf]
        %v1440 = vld [vmem:[%s1241 + $0x260] sm:$0xf]
        %v1441 = vld [vmem:[%s1241 + $0x264] sm:$0xf]
        %v1442 = vld [vmem:[%s1241 + $0x268] sm:$0xf]
        %v1443 = vld [vmem:[%s1241 + $0x26c] sm:$0xf]
        %v1444 = vld [vmem:[%s1241 + $0x270] sm:$0xf]
        %v1445 = vld [vmem:[%s1241 + $0x274] sm:$0xf]
        %v1446 = vld [vmem:[%s1241 + $0x278] sm:$0xf]
        %v1447 = vld [vmem:[%s1241 + $0x27c] sm:$0xf]
        %v1448 = vld [vmem:[%s1241 + $0x280] sm:$0xf]
        %v1449 = vld [vmem:[%s1241 + $0x284] sm:$0xf]
        %v1450 = vld [vmem:[%s1241 + $0x288] sm:$0xf]
        %v1451 = vld [vmem:[%s1241 + $0x28c] sm:$0xf]
        %v1452 = vld [vmem:[%s1241 + $0x290] sm:$0xf]
        %v1453 = vld [vmem:[%s1241 + $0x294] sm:$0xf]
        %v1454 = vld [vmem:[%s1241 + $0x298] sm:$0xf]
        %v1455 = vld [vmem:[%s1241 + $0x29c] sm:$0xf]
        %v1456 = vld [vmem:[%s1241 + $0x2a0] sm:$0xf]
        %v1457 = vld [vmem:[%s1241 + $0x2a4] sm:$0xf]
        %v1458 = vld [vmem:[%s1241 + $0x2a8] sm:$0xf]
        %v1459 = vld [vmem:[%s1241 + $0x2ac] sm:$0xf]
        %v1460 = vld [vmem:[%s1241 + $0x2b0] sm:$0xf]
        %v1461 = vld [vmem:[%s1241 + $0x2b4] sm:$0xf]
        %v1462 = vld [vmem:[%s1241 + $0x2b8] sm:$0xf]
        %v1463 = vld [vmem:[%s1241 + $0x2bc] sm:$0xf]
        %v1464 = vld [vmem:[%s1241 + $0x2c0] sm:$0xf]
        %v1465 = vld [vmem:[%s1241 + $0x2c4] sm:$0xf]
        %v1466 = vld [vmem:[%s1241 + $0x2c8] sm:$0xf]
        %v1467 = vld [vmem:[%s1241 + $0x2cc] sm:$0xf]
        %v1468 = vld [vmem:[%s1241 + $0x2d0] sm:$0xf]
        %v1469 = vld [vmem:[%s1241 + $0x2d4] sm:$0xf]
        %v1470 = vld [vmem:[%s1241 + $0x2d8] sm:$0xf]
        %v1471 = vld [vmem:[%s1241 + $0x2dc] sm:$0xf]
        %v1472 = vld [vmem:[%s1241 + $0x2e0] sm:$0xf]
        %v1473 = vld [vmem:[%s1241 + $0x2e4] sm:$0xf]
        %v1474 = vld [vmem:[%s1241 + $0x2e8] sm:$0xf]
        %v1475 = vld [vmem:[%s1241 + $0x2ec] sm:$0xf]
        %v1476 = vld [vmem:[%s1241 + $0x2f0] sm:$0xf]
        %v1477 = vld [vmem:[%s1241 + $0x2f4] sm:$0xf]
        %v1478 = vld [vmem:[%s1241 + $0x2f8] sm:$0xf]
        %v1479 = vld [vmem:[%s1241 + $0x2fc] sm:$0xf]
        %v1480 = vld [vmem:[%s1241 + $0x300] sm:$0xf]
        %v1481 = vld [vmem:[%s1241 + $0x304] sm:$0xf]
        %v1482 = vld [vmem:[%s1241 + $0x308] sm:$0xf]
        %v1483 = vld [vmem:[%s1241 + $0x30c] sm:$0xf]
        %v1484 = vld [vmem:[%s1241 + $0x310] sm:$0xf]
        %v1485 = vld [vmem:[%s1241 + $0x314] sm:$0xf]
        %v1486 = vld [vmem:[%s1241 + $0x318] sm:$0xf]
        %v1487 = vld [vmem:[%s1241 + $0x31c] sm:$0xf]
        %v1488 = vld [vmem:[%s1241 + $0x320] sm:$0xf]
        %v1489 = vld [vmem:[%s1241 + $0x324] sm:$0xf]
        %v1490 = vld [vmem:[%s1241 + $0x328] sm:$0xf]
        %v1491 = vld [vmem:[%s1241 + $0x32c] sm:$0xf]
        %v1492 = vld [vmem:[%s1241 + $0x330] sm:$0xf]
        %v1493 = vld [vmem:[%s1241 + $0x334] sm:$0xf]
        %v1494 = vld [vmem:[%s1241 + $0x338] sm:$0xf]
        %v1495 = vld [vmem:[%s1241 + $0x33c] sm:$0xf]
        %v1496 = vld [vmem:[%s1241 + $0x340] sm:$0xf]
        %v1497 = vld [vmem:[%s1241 + $0x344] sm:$0xf]
        %v1498 = vld [vmem:[%s1241 + $0x348] sm:$0xf]
        %v1499 = vld [vmem:[%s1241 + $0x34c] sm:$0xf]
        %v1500 = vld [vmem:[%s1241 + $0x350] sm:$0xf]
        %v1501 = vld [vmem:[%s1241 + $0x354] sm:$0xf]
        %v1502 = vld [vmem:[%s1241 + $0x358] sm:$0xf]
        %v1503 = vld [vmem:[%s1241 + $0x35c] sm:$0xf]
        %v1504 = vld [vmem:[%s1241 + $0x360] sm:$0xf]
        %v1505 = vld [vmem:[%s1241 + $0x364] sm:$0xf]
        %v1506 = vld [vmem:[%s1241 + $0x368] sm:$0xf]
        %v1507 = vld [vmem:[%s1241 + $0x36c] sm:$0xf]
        %v1508 = vld [vmem:[%s1241 + $0x370] sm:$0xf]
        %v1509 = vld [vmem:[%s1241 + $0x374] sm:$0xf]
        %v1510 = vld [vmem:[%s1241 + $0x378] sm:$0xf]
        %v1511 = vld [vmem:[%s1241 + $0x37c] sm:$0xf]
        %v1512 = vld [vmem:[%s1241 + $0x380] sm:$0xf]
        %v1513 = vld [vmem:[%s1241 + $0x384] sm:$0xf]
        %v1514 = vld [vmem:[%s1241 + $0x388] sm:$0xf]
        %v1515 = vld [vmem:[%s1241 + $0x38c] sm:$0xf]
        %v1516 = vld [vmem:[%s1241 + $0x390] sm:$0xf]
        %v1517 = vld [vmem:[%s1241 + $0x394] sm:$0xf]
        %v1518 = vld [vmem:[%s1241 + $0x398] sm:$0xf]
        %v1519 = vld [vmem:[%s1241 + $0x39c] sm:$0xf]
        %v1520 = vld [vmem:[%s1241 + $0x3a0] sm:$0xf]
        %v1521 = vld [vmem:[%s1241 + $0x3a4] sm:$0xf]
        %v1522 = vld [vmem:[%s1241 + $0x3a8] sm:$0xf]
        %v1523 = vld [vmem:[%s1241 + $0x3ac] sm:$0xf]
        %v1524 = vld [vmem:[%s1241 + $0x3b0] sm:$0xf]
        %v1525 = vld [vmem:[%s1241 + $0x3b4] sm:$0xf]
        %v1526 = vld [vmem:[%s1241 + $0x3b8] sm:$0xf]
        %v1527 = vld [vmem:[%s1241 + $0x3bc] sm:$0xf]
        %v1528 = vld [vmem:[%s1241 + $0x3c0] sm:$0xf]
        %v1529 = vld [vmem:[%s1241 + $0x3c4] sm:$0xf]
        %v1530 = vld [vmem:[%s1241 + $0x3c8] sm:$0xf]
        %v1531 = vld [vmem:[%s1241 + $0x3cc] sm:$0xf]
        %v1532 = vld [vmem:[%s1241 + $0x3d0] sm:$0xf]
        %v1533 = vld [vmem:[%s1241 + $0x3d4] sm:$0xf]
        %v1534 = vld [vmem:[%s1241 + $0x3d8] sm:$0xf]
        %v1535 = vld [vmem:[%s1241 + $0x3dc] sm:$0xf]
        %v1536 = vld [vmem:[%s1241 + $0x3e0] sm:$0xf]
        %v1537 = vld [vmem:[%s1241 + $0x3e4] sm:$0xf]
        %v1538 = vld [vmem:[%s1241 + $0x3e8] sm:$0xf]
        %v1539 = vld [vmem:[%s1241 + $0x3ec] sm:$0xf]
        %v1540 = vld [vmem:[%s1241 + $0x3f0] sm:$0xf]
        %v1541 = vld [vmem:[%s1241 + $0x3f4] sm:$0xf]
        %v1542 = vld [vmem:[%s1241 + $0x3f8] sm:$0xf]
        %v1543 = vld [vmem:[%s1241 + $0x3fc] sm:$0xf]
        %v1546 = vcombine.high %v1286, %v1286
        %v1548 = vunpack.c.l.s4 1966171168
        %v1549 = vunpack.c.0.s8 %v1548
        %v1550 = vlaneseq
        %v1551 = vshrl.u32 %v1550, 7
        %v1552 = vsub.s32 %v1549, %v1551
        %v1553 = vrot.slane %v1286, %v1552
        %v1555 = vunpack.c.l.s4 1966171168
        %v1556 = vunpack.c.0.s8 %v1555
        %v1557 = vlaneseq
        %v1558 = vshrl.u32 %v1557, 7
        %v1559 = vsub.s32 %v1556, %v1558
        %v1560 = vrot.slane %v1546, %v1559
        %v1561 = vcombine.high %v1553, %v1553
        %v1562 = vcombine.high %v1560, %v1560
        %v1564 = vunpack.c.l.s4 1966171168
        %v1565 = vunpack.c.0.s8 %v1564
        %v1566 = vlaneseq
        %v1567 = vshrl.u32 %v1566, 7
        %v1568 = vsub.s32 %v1565, %v1567
        %v1569 = vrot.slane %v1553, %v1568
        %v1571 = vunpack.c.l.s4 1966171168
        %v1572 = vunpack.c.0.s8 %v1571
        %v1573 = vlaneseq
        %v1574 = vshrl.u32 %v1573, 7
        %v1575 = vsub.s32 %v1572, %v1574
        %v1576 = vrot.slane %v1560, %v1575
        %v1578 = vunpack.c.l.s4 1966171168
        %v1579 = vunpack.c.0.s8 %v1578
        %v1580 = vlaneseq
        %v1581 = vshrl.u32 %v1580, 7
        %v1582 = vsub.s32 %v1579, %v1581
        %v1583 = vrot.slane %v1561, %v1582
        %v1585 = vunpack.c.l.s4 1966171168
        %v1586 = vunpack.c.0.s8 %v1585
        %v1587 = vlaneseq
        %v1588 = vshrl.u32 %v1587, 7
        %v1589 = vsub.s32 %v1586, %v1588
        %v1590 = vrot.slane %v1562, %v1589
        %v1591 = vcombine.high %v1569, %v1569
        %v1592 = vcombine.high %v1576, %v1576
        %v1593 = vcombine.high %v1583, %v1583
        %v1594 = vcombine.high %v1590, %v1590
        %v1595 = vcombine.high %v1287, %v1287
        %v1597 = vunpack.c.l.s4 1966171168
        %v1598 = vunpack.c.0.s8 %v1597
        %v1599 = vlaneseq
        %v1600 = vshrl.u32 %v1599, 7
        %v1601 = vsub.s32 %v1598, %v1600
        %v1602 = vrot.slane %v1287, %v1601
        %v1604 = vunpack.c.l.s4 1966171168
        %v1605 = vunpack.c.0.s8 %v1604
        %v1606 = vlaneseq
        %v1607 = vshrl.u32 %v1606, 7
        %v1608 = vsub.s32 %v1605, %v1607
        %v1609 = vrot.slane %v1595, %v1608
        %v1610 = vcombine.high %v1602, %v1602
        %v1611 = vcombine.high %v1609, %v1609
        %v1613 = vunpack.c.l.s4 1966171168
        %v1614 = vunpack.c.0.s8 %v1613
        %v1615 = vlaneseq
        %v1616 = vshrl.u32 %v1615, 7
        %v1617 = vsub.s32 %v1614, %v1616
        %v1618 = vrot.slane %v1602, %v1617
        %v1620 = vunpack.c.l.s4 1966171168
        %v1621 = vunpack.c.0.s8 %v1620
        %v1622 = vlaneseq
        %v1623 = vshrl.u32 %v1622, 7
        %v1624 = vsub.s32 %v1621, %v1623
        %v1625 = vrot.slane %v1609, %v1624
        %v1627 = vunpack.c.l.s4 1966171168
        %v1628 = vunpack.c.0.s8 %v1627
        %v1629 = vlaneseq
        %v1630 = vshrl.u32 %v1629, 7
        %v1631 = vsub.s32 %v1628, %v1630
        %v1632 = vrot.slane %v1610, %v1631
        %v1634 = vunpack.c.l.s4 1966171168
        %v1635 = vunpack.c.0.s8 %v1634
        %v1636 = vlaneseq
        %v1637 = vshrl.u32 %v1636, 7
        %v1638 = vsub.s32 %v1635, %v1637
        %v1639 = vrot.slane %v1611, %v1638
        %v1640 = vcombine.high %v1618, %v1618
        %v1641 = vcombine.high %v1625, %v1625
        %v1642 = vcombine.high %v1632, %v1632
        %v1643 = vcombine.high %v1639, %v1639
        %v1916 = vunpack.c.l.b16 %v1288
        %v1917 = vunpack.c.l.b16 %v1289
        %v1918 = vunpack.c.l.b16 %v1290
        %v1919 = vunpack.c.l.b16 %v1291
        %v1920 = vunpack.c.l.b16 %v1292
        %v1921 = vunpack.c.l.b16 %v1293
        %v1922 = vunpack.c.l.b16 %v1294
        %v1923 = vunpack.c.l.b16 %v1295
        %v1924 = vunpack.c.l.b16 %v1296
        %v1925 = vunpack.c.l.b16 %v1297
        %v1926 = vunpack.c.l.b16 %v1298
        %v1927 = vunpack.c.l.b16 %v1299
        %v1928 = vunpack.c.l.b16 %v1300
        %v1929 = vunpack.c.l.b16 %v1301
        %v1930 = vunpack.c.l.b16 %v1302
        %v1931 = vunpack.c.l.b16 %v1303
        %v1932 = vunpack.c.l.b16 %v1304
        %v1933 = vunpack.c.l.b16 %v1305
        %v1934 = vunpack.c.l.b16 %v1306
        %v1935 = vunpack.c.l.b16 %v1307
        %v1936 = vunpack.c.l.b16 %v1308
        %v1937 = vunpack.c.l.b16 %v1309
        %v1938 = vunpack.c.l.b16 %v1310
        %v1939 = vunpack.c.l.b16 %v1311
        %v1940 = vunpack.c.l.b16 %v1312
        %v1941 = vunpack.c.l.b16 %v1313
        %v1942 = vunpack.c.l.b16 %v1314
        %v1943 = vunpack.c.l.b16 %v1315
        %v1944 = vunpack.c.l.b16 %v1316
        %v1945 = vunpack.c.l.b16 %v1317
        %v1946 = vunpack.c.l.b16 %v1318
        %v1947 = vunpack.c.l.b16 %v1319
        %v1948 = vunpack.c.l.b16 %v1320
        %v1949 = vunpack.c.l.b16 %v1321
        %v1950 = vunpack.c.l.b16 %v1322
        %v1951 = vunpack.c.l.b16 %v1323
        %v1952 = vunpack.c.l.b16 %v1324
        %v1953 = vunpack.c.l.b16 %v1325
        %v1954 = vunpack.c.l.b16 %v1326
        %v1955 = vunpack.c.l.b16 %v1327
        %v1956 = vunpack.c.l.b16 %v1328
        %v1957 = vunpack.c.l.b16 %v1329
        %v1958 = vunpack.c.l.b16 %v1330
        %v1959 = vunpack.c.l.b16 %v1331
        %v1960 = vunpack.c.l.b16 %v1332
        %v1961 = vunpack.c.l.b16 %v1333
        %v1962 = vunpack.c.l.b16 %v1334
        %v1963 = vunpack.c.l.b16 %v1335
        %v1964 = vunpack.c.l.b16 %v1336
        %v1965 = vunpack.c.l.b16 %v1337
        %v1966 = vunpack.c.l.b16 %v1338
        %v1967 = vunpack.c.l.b16 %v1339
        %v1968 = vunpack.c.l.b16 %v1340
        %v1969 = vunpack.c.l.b16 %v1341
        %v1970 = vunpack.c.l.b16 %v1342
        %v1971 = vunpack.c.l.b16 %v1343
        %v1972 = vunpack.c.l.b16 %v1344
        %v1973 = vunpack.c.l.b16 %v1345
        %v1974 = vunpack.c.l.b16 %v1346
        %v1975 = vunpack.c.l.b16 %v1347
        %v1976 = vunpack.c.l.b16 %v1348
        %v1977 = vunpack.c.l.b16 %v1349
        %v1978 = vunpack.c.l.b16 %v1350
        %v1979 = vunpack.c.l.b16 %v1351
        %v1980 = vunpack.c.l.b16 %v1352
        %v1981 = vunpack.c.l.b16 %v1353
        %v1982 = vunpack.c.l.b16 %v1354
        %v1983 = vunpack.c.l.b16 %v1355
        %v1984 = vunpack.c.l.b16 %v1356
        %v1985 = vunpack.c.l.b16 %v1357
        %v1986 = vunpack.c.l.b16 %v1358
        %v1987 = vunpack.c.l.b16 %v1359
        %v1988 = vunpack.c.l.b16 %v1360
        %v1989 = vunpack.c.l.b16 %v1361
        %v1990 = vunpack.c.l.b16 %v1362
        %v1991 = vunpack.c.l.b16 %v1363
        %v1992 = vunpack.c.l.b16 %v1364
        %v1993 = vunpack.c.l.b16 %v1365
        %v1994 = vunpack.c.l.b16 %v1366
        %v1995 = vunpack.c.l.b16 %v1367
        %v1996 = vunpack.c.l.b16 %v1368
        %v1997 = vunpack.c.l.b16 %v1369
        %v1998 = vunpack.c.l.b16 %v1370
        %v1999 = vunpack.c.l.b16 %v1371
        %v2000 = vunpack.c.l.b16 %v1372
        %v2001 = vunpack.c.l.b16 %v1373
        %v2002 = vunpack.c.l.b16 %v1374
        %v2003 = vunpack.c.l.b16 %v1375
        %v2004 = vunpack.c.l.b16 %v1376
        %v2005 = vunpack.c.l.b16 %v1377
        %v2006 = vunpack.c.l.b16 %v1378
        %v2007 = vunpack.c.l.b16 %v1379
        %v2008 = vunpack.c.l.b16 %v1380
        %v2009 = vunpack.c.l.b16 %v1381
        %v2010 = vunpack.c.l.b16 %v1382
        %v2011 = vunpack.c.l.b16 %v1383
        %v2012 = vunpack.c.l.b16 %v1384
        %v2013 = vunpack.c.l.b16 %v1385
        %v2014 = vunpack.c.l.b16 %v1386
        %v2015 = vunpack.c.l.b16 %v1387
        %v2016 = vunpack.c.l.b16 %v1388
        %v2017 = vunpack.c.l.b16 %v1389
        %v2018 = vunpack.c.l.b16 %v1390
        %v2019 = vunpack.c.l.b16 %v1391
        %v2020 = vunpack.c.l.b16 %v1392
        %v2021 = vunpack.c.l.b16 %v1393
        %v2022 = vunpack.c.l.b16 %v1394
        %v2023 = vunpack.c.l.b16 %v1395
        %v2024 = vunpack.c.l.b16 %v1396
        %v2025 = vunpack.c.l.b16 %v1397
        %v2026 = vunpack.c.l.b16 %v1398
        %v2027 = vunpack.c.l.b16 %v1399
        %v2028 = vunpack.c.l.b16 %v1400
        %v2029 = vunpack.c.l.b16 %v1401
        %v2030 = vunpack.c.l.b16 %v1402
        %v2031 = vunpack.c.l.b16 %v1403
        %v2032 = vunpack.c.l.b16 %v1404
        %v2033 = vunpack.c.l.b16 %v1405
        %v2034 = vunpack.c.l.b16 %v1406
        %v2035 = vunpack.c.l.b16 %v1407
        %v2036 = vunpack.c.l.b16 %v1408
        %v2037 = vunpack.c.l.b16 %v1409
        %v2038 = vunpack.c.l.b16 %v1410
        %v2039 = vunpack.c.l.b16 %v1411
        %v2040 = vunpack.c.l.b16 %v1412
        %v2041 = vunpack.c.l.b16 %v1413
        %v2042 = vunpack.c.l.b16 %v1414
        %v2043 = vunpack.c.l.b16 %v1415
        %v2044 = vunpack.c.l.b16 %v1416
        %v2045 = vunpack.c.l.b16 %v1417
        %v2046 = vunpack.c.l.b16 %v1418
        %v2047 = vunpack.c.l.b16 %v1419
        %v2048 = vunpack.c.l.b16 %v1420
        %v2049 = vunpack.c.l.b16 %v1421
        %v2050 = vunpack.c.l.b16 %v1422
        %v2051 = vunpack.c.l.b16 %v1423
        %v2052 = vunpack.c.l.b16 %v1424
        %v2053 = vunpack.c.l.b16 %v1425
        %v2054 = vunpack.c.l.b16 %v1426
        %v2055 = vunpack.c.l.b16 %v1427
        %v2056 = vunpack.c.l.b16 %v1428
        %v2057 = vunpack.c.l.b16 %v1429
        %v2058 = vunpack.c.l.b16 %v1430
        %v2059 = vunpack.c.l.b16 %v1431
        %v2060 = vunpack.c.l.b16 %v1432
        %v2061 = vunpack.c.l.b16 %v1433
        %v2062 = vunpack.c.l.b16 %v1434
        %v2063 = vunpack.c.l.b16 %v1435
        %v2064 = vunpack.c.l.b16 %v1436
        %v2065 = vunpack.c.l.b16 %v1437
        %v2066 = vunpack.c.l.b16 %v1438
        %v2067 = vunpack.c.l.b16 %v1439
        %v2068 = vunpack.c.l.b16 %v1440
        %v2069 = vunpack.c.l.b16 %v1441
        %v2070 = vunpack.c.l.b16 %v1442
        %v2071 = vunpack.c.l.b16 %v1443
        %v2072 = vunpack.c.l.b16 %v1444
        %v2073 = vunpack.c.l.b16 %v1445
        %v2074 = vunpack.c.l.b16 %v1446
        %v2075 = vunpack.c.l.b16 %v1447
        %v2076 = vunpack.c.l.b16 %v1448
        %v2077 = vunpack.c.l.b16 %v1449
        %v2078 = vunpack.c.l.b16 %v1450
        %v2079 = vunpack.c.l.b16 %v1451
        %v2080 = vunpack.c.l.b16 %v1452
        %v2081 = vunpack.c.l.b16 %v1453
        %v2082 = vunpack.c.l.b16 %v1454
        %v2083 = vunpack.c.l.b16 %v1455
        %v2084 = vunpack.c.l.b16 %v1456
        %v2085 = vunpack.c.l.b16 %v1457
        %v2086 = vunpack.c.l.b16 %v1458
        %v2087 = vunpack.c.l.b16 %v1459
        %v2088 = vunpack.c.l.b16 %v1460
        %v2089 = vunpack.c.l.b16 %v1461
        %v2090 = vunpack.c.l.b16 %v1462
        %v2091 = vunpack.c.l.b16 %v1463
        %v2092 = vunpack.c.l.b16 %v1464
        %v2093 = vunpack.c.l.b16 %v1465
        %v2094 = vunpack.c.l.b16 %v1466
        %v2095 = vunpack.c.l.b16 %v1467
        %v2096 = vunpack.c.l.b16 %v1468
        %v2097 = vunpack.c.l.b16 %v1469
        %v2098 = vunpack.c.l.b16 %v1470
        %v2099 = vunpack.c.l.b16 %v1471
        %v2100 = vunpack.c.l.b16 %v1472
        %v2101 = vunpack.c.l.b16 %v1473
        %v2102 = vunpack.c.l.b16 %v1474
        %v2103 = vunpack.c.l.b16 %v1475
        %v2104 = vunpack.c.l.b16 %v1476
        %v2105 = vunpack.c.l.b16 %v1477
        %v2106 = vunpack.c.l.b16 %v1478
        %v2107 = vunpack.c.l.b16 %v1479
        %v2108 = vunpack.c.l.b16 %v1480
        %v2109 = vunpack.c.l.b16 %v1481
        %v2110 = vunpack.c.l.b16 %v1482
        %v2111 = vunpack.c.l.b16 %v1483
        %v2112 = vunpack.c.l.b16 %v1484
        %v2113 = vunpack.c.l.b16 %v1485
        %v2114 = vunpack.c.l.b16 %v1486
        %v2115 = vunpack.c.l.b16 %v1487
        %v2116 = vunpack.c.l.b16 %v1488
        %v2117 = vunpack.c.l.b16 %v1489
        %v2118 = vunpack.c.l.b16 %v1490
        %v2119 = vunpack.c.l.b16 %v1491
        %v2120 = vunpack.c.l.b16 %v1492
        %v2121 = vunpack.c.l.b16 %v1493
        %v2122 = vunpack.c.l.b16 %v1494
        %v2123 = vunpack.c.l.b16 %v1495
        %v2124 = vunpack.c.l.b16 %v1496
        %v2125 = vunpack.c.l.b16 %v1497
        %v2126 = vunpack.c.l.b16 %v1498
        %v2127 = vunpack.c.l.b16 %v1499
        %v2128 = vunpack.c.l.b16 %v1500
        %v2129 = vunpack.c.l.b16 %v1501
        %v2130 = vunpack.c.l.b16 %v1502
        %v2131 = vunpack.c.l.b16 %v1503
        %v2132 = vunpack.c.l.b16 %v1504
        %v2133 = vunpack.c.l.b16 %v1505
        %v2134 = vunpack.c.l.b16 %v1506
        %v2135 = vunpack.c.l.b16 %v1507
        %v2136 = vunpack.c.l.b16 %v1508
        %v2137 = vunpack.c.l.b16 %v1509
        %v2138 = vunpack.c.l.b16 %v1510
        %v2139 = vunpack.c.l.b16 %v1511
        %v2140 = vunpack.c.l.b16 %v1512
        %v2141 = vunpack.c.l.b16 %v1513
        %v2142 = vunpack.c.l.b16 %v1514
        %v2143 = vunpack.c.l.b16 %v1515
        %v2144 = vunpack.c.l.b16 %v1516
        %v2145 = vunpack.c.l.b16 %v1517
        %v2146 = vunpack.c.l.b16 %v1518
        %v2147 = vunpack.c.l.b16 %v1519
        %v2148 = vunpack.c.l.b16 %v1520
        %v2149 = vunpack.c.l.b16 %v1521
        %v2150 = vunpack.c.l.b16 %v1522
        %v2151 = vunpack.c.l.b16 %v1523
        %v2152 = vunpack.c.l.b16 %v1524
        %v2153 = vunpack.c.l.b16 %v1525
        %v2154 = vunpack.c.l.b16 %v1526
        %v2155 = vunpack.c.l.b16 %v1527
        %v2156 = vunpack.c.l.b16 %v1528
        %v2157 = vunpack.c.l.b16 %v1529
        %v2158 = vunpack.c.l.b16 %v1530
        %v2159 = vunpack.c.l.b16 %v1531
        %v2160 = vunpack.c.l.b16 %v1532
        %v2161 = vunpack.c.l.b16 %v1533
        %v2162 = vunpack.c.l.b16 %v1534
        %v2163 = vunpack.c.l.b16 %v1535
        %v2164 = vunpack.c.l.b16 %v1536
        %v2165 = vunpack.c.l.b16 %v1537
        %v2166 = vunpack.c.l.b16 %v1538
        %v2167 = vunpack.c.l.b16 %v1539
        %v2168 = vunpack.c.l.b16 %v1540
        %v2169 = vunpack.c.l.b16 %v1541
        %v2170 = vunpack.c.l.b16 %v1542
        %v2171 = vunpack.c.l.b16 %v1543
        %v2172 = vpack.c.b16 %v1917, %v1916
        %v2173 = vpack.c.b16 %v1919, %v1918
        %v2174 = vpack.c.b16 %v1921, %v1920
        %v2175 = vpack.c.b16 %v1923, %v1922
        %v2176 = vpack.c.b16 %v1925, %v1924
        %v2177 = vpack.c.b16 %v1927, %v1926
        %v2178 = vpack.c.b16 %v1929, %v1928
        %v2179 = vpack.c.b16 %v1931, %v1930
        %v2180 = vpack.c.b16 %v1933, %v1932
        %v2181 = vpack.c.b16 %v1935, %v1934
        %v2182 = vpack.c.b16 %v1937, %v1936
        %v2183 = vpack.c.b16 %v1939, %v1938
        %v2184 = vpack.c.b16 %v1941, %v1940
        %v2185 = vpack.c.b16 %v1943, %v1942
        %v2186 = vpack.c.b16 %v1945, %v1944
        %v2187 = vpack.c.b16 %v1947, %v1946
        %v2188 = vpack.c.b16 %v1949, %v1948
        %v2189 = vpack.c.b16 %v1951, %v1950
        %v2190 = vpack.c.b16 %v1953, %v1952
        %v2191 = vpack.c.b16 %v1955, %v1954
        %v2192 = vpack.c.b16 %v1957, %v1956
        %v2193 = vpack.c.b16 %v1959, %v1958
        %v2194 = vpack.c.b16 %v1961, %v1960
        %v2195 = vpack.c.b16 %v1963, %v1962
        %v2196 = vpack.c.b16 %v1965, %v1964
        %v2197 = vpack.c.b16 %v1967, %v1966
        %v2198 = vpack.c.b16 %v1969, %v1968
        %v2199 = vpack.c.b16 %v1971, %v1970
        %v2200 = vpack.c.b16 %v1973, %v1972
        %v2201 = vpack.c.b16 %v1975, %v1974
        %v2202 = vpack.c.b16 %v1977, %v1976
        %v2203 = vpack.c.b16 %v1979, %v1978
        %v2204 = vpack.c.b16 %v1981, %v1980
        %v2205 = vpack.c.b16 %v1983, %v1982
        %v2206 = vpack.c.b16 %v1985, %v1984
        %v2207 = vpack.c.b16 %v1987, %v1986
        %v2208 = vpack.c.b16 %v1989, %v1988
        %v2209 = vpack.c.b16 %v1991, %v1990
        %v2210 = vpack.c.b16 %v1993, %v1992
        %v2211 = vpack.c.b16 %v1995, %v1994
        %v2212 = vpack.c.b16 %v1997, %v1996
        %v2213 = vpack.c.b16 %v1999, %v1998
        %v2214 = vpack.c.b16 %v2001, %v2000
        %v2215 = vpack.c.b16 %v2003, %v2002
        %v2216 = vpack.c.b16 %v2005, %v2004
        %v2217 = vpack.c.b16 %v2007, %v2006
        %v2218 = vpack.c.b16 %v2009, %v2008
        %v2219 = vpack.c.b16 %v2011, %v2010
        %v2220 = vpack.c.b16 %v2013, %v2012
        %v2221 = vpack.c.b16 %v2015, %v2014
        %v2222 = vpack.c.b16 %v2017, %v2016
        %v2223 = vpack.c.b16 %v2019, %v2018
        %v2224 = vpack.c.b16 %v2021, %v2020
        %v2225 = vpack.c.b16 %v2023, %v2022
        %v2226 = vpack.c.b16 %v2025, %v2024
        %v2227 = vpack.c.b16 %v2027, %v2026
        %v2228 = vpack.c.b16 %v2029, %v2028
        %v2229 = vpack.c.b16 %v2031, %v2030
        %v2230 = vpack.c.b16 %v2033, %v2032
        %v2231 = vpack.c.b16 %v2035, %v2034
        %v2232 = vpack.c.b16 %v2037, %v2036
        %v2233 = vpack.c.b16 %v2039, %v2038
        %v2234 = vpack.c.b16 %v2041, %v2040
        %v2235 = vpack.c.b16 %v2043, %v2042
        %v2236 = vpack.c.b16 %v2045, %v2044
        %v2237 = vpack.c.b16 %v2047, %v2046
        %v2238 = vpack.c.b16 %v2049, %v2048
        %v2239 = vpack.c.b16 %v2051, %v2050
        %v2240 = vpack.c.b16 %v2053, %v2052
        %v2241 = vpack.c.b16 %v2055, %v2054
        %v2242 = vpack.c.b16 %v2057, %v2056
        %v2243 = vpack.c.b16 %v2059, %v2058
        %v2244 = vpack.c.b16 %v2061, %v2060
        %v2245 = vpack.c.b16 %v2063, %v2062
        %v2246 = vpack.c.b16 %v2065, %v2064
        %v2247 = vpack.c.b16 %v2067, %v2066
        %v2248 = vpack.c.b16 %v2069, %v2068
        %v2249 = vpack.c.b16 %v2071, %v2070
        %v2250 = vpack.c.b16 %v2073, %v2072
        %v2251 = vpack.c.b16 %v2075, %v2074
        %v2252 = vpack.c.b16 %v2077, %v2076
        %v2253 = vpack.c.b16 %v2079, %v2078
        %v2254 = vpack.c.b16 %v2081, %v2080
        %v2255 = vpack.c.b16 %v2083, %v2082
        %v2256 = vpack.c.b16 %v2085, %v2084
        %v2257 = vpack.c.b16 %v2087, %v2086
        %v2258 = vpack.c.b16 %v2089, %v2088
        %v2259 = vpack.c.b16 %v2091, %v2090
        %v2260 = vpack.c.b16 %v2093, %v2092
        %v2261 = vpack.c.b16 %v2095, %v2094
        %v2262 = vpack.c.b16 %v2097, %v2096
        %v2263 = vpack.c.b16 %v2099, %v2098
        %v2264 = vpack.c.b16 %v2101, %v2100
        %v2265 = vpack.c.b16 %v2103, %v2102
        %v2266 = vpack.c.b16 %v2105, %v2104
        %v2267 = vpack.c.b16 %v2107, %v2106
        %v2268 = vpack.c.b16 %v2109, %v2108
        %v2269 = vpack.c.b16 %v2111, %v2110
        %v2270 = vpack.c.b16 %v2113, %v2112
        %v2271 = vpack.c.b16 %v2115, %v2114
        %v2272 = vpack.c.b16 %v2117, %v2116
        %v2273 = vpack.c.b16 %v2119, %v2118
        %v2274 = vpack.c.b16 %v2121, %v2120
        %v2275 = vpack.c.b16 %v2123, %v2122
        %v2276 = vpack.c.b16 %v2125, %v2124
        %v2277 = vpack.c.b16 %v2127, %v2126
        %v2278 = vpack.c.b16 %v2129, %v2128
        %v2279 = vpack.c.b16 %v2131, %v2130
        %v2280 = vpack.c.b16 %v2133, %v2132
        %v2281 = vpack.c.b16 %v2135, %v2134
        %v2282 = vpack.c.b16 %v2137, %v2136
        %v2283 = vpack.c.b16 %v2139, %v2138
        %v2284 = vpack.c.b16 %v2141, %v2140
        %v2285 = vpack.c.b16 %v2143, %v2142
        %v2286 = vpack.c.b16 %v2145, %v2144
        %v2287 = vpack.c.b16 %v2147, %v2146
        %v2288 = vpack.c.b16 %v2149, %v2148
        %v2289 = vpack.c.b16 %v2151, %v2150
        %v2290 = vpack.c.b16 %v2153, %v2152
        %v2291 = vpack.c.b16 %v2155, %v2154
        %v2292 = vpack.c.b16 %v2157, %v2156
        %v2293 = vpack.c.b16 %v2159, %v2158
        %v2294 = vpack.c.b16 %v2161, %v2160
        %v2295 = vpack.c.b16 %v2163, %v2162
        %v2296 = vpack.c.b16 %v2165, %v2164
        %v2297 = vpack.c.b16 %v2167, %v2166
        %v2298 = vpack.c.b16 %v2169, %v2168
        %v2299 = vpack.c.b16 %v2171, %v2170
        %2428 = vmatprep.subr.bf16.mxu0 0
        %2429 = vmatpush1.bf16.msra.mxu0 %v2172
        %2430 = vmatprep.subr.bf16.mxu0 0
        %2431 = vmatpush1.bf16.msra.mxu0 %v2173
        %2432 = vmatprep.subr.bf16.mxu0 0
        %2433 = vmatpush1.bf16.msra.mxu0 %v2174
        %2434 = vmatprep.subr.bf16.mxu0 0
        %2435 = vmatpush1.bf16.msra.mxu0 %v2175
        %2436 = vmatprep.subr.bf16.mxu0 0
        %2437 = vmatpush1.bf16.msra.mxu0 %v2176
        %2438 = vmatprep.subr.bf16.mxu0 0
        %2439 = vmatpush1.bf16.msra.mxu0 %v2177
        %2440 = vmatprep.subr.bf16.mxu0 0
        %2441 = vmatpush1.bf16.msra.mxu0 %v2178
        %2442 = vmatprep.subr.bf16.mxu0 0
        %2443 = vmatpush1.bf16.msra.mxu0 %v2179
        %2444 = vmatprep.subr.bf16.mxu0 0
        %2445 = vmatpush1.bf16.msra.mxu0 %v2180
        %2446 = vmatprep.subr.bf16.mxu0 0
        %2447 = vmatpush1.bf16.msra.mxu0 %v2181
        %2448 = vmatprep.subr.bf16.mxu0 0
        %2449 = vmatpush1.bf16.msra.mxu0 %v2182
        %2450 = vmatprep.subr.bf16.mxu0 0
        %2451 = vmatpush1.bf16.msra.mxu0 %v2183
        %2452 = vmatprep.subr.bf16.mxu0 0
        %2453 = vmatpush1.bf16.msra.mxu0 %v2184
        %2454 = vmatprep.subr.bf16.mxu0 0
        %2455 = vmatpush1.bf16.msra.mxu0 %v2185
        %2456 = vmatprep.subr.bf16.mxu0 0
        %2457 = vmatpush1.bf16.msra.mxu0 %v2186
        %2458 = vmatprep.subr.bf16.mxu0 0
        %2459 = vmatpush1.bf16.msra.mxu0 %v2187
        %2460 = vmatprep.mubr.bf16.mxu0 %v1583
        %2461 = vmatmul.mubr.bf16.gmra.mrb[0].mxu0 %v1569
        %v2462 = vpop.f32.mrb[0].mxu0
        %v2463 = vadd.f32 0.0, %v2462
        %v2464 = vpop.f32.mrb[0].mxu0
        %v2465 = vpop.f32.mrb[0].mxu0
        %v2466 = vpop.f32.mrb[0].mxu0
        %2467 = vdwg.mxu0
        %2468 = vmatprep.subr.bf16.mxu0 0
        %2469 = vmatpush1.bf16.msra.mxu0 %v2188
        %2470 = vmatprep.subr.bf16.mxu0 0
        %2471 = vmatpush1.bf16.msra.mxu0 %v2189
        %2472 = vmatprep.subr.bf16.mxu0 0
        %2473 = vmatpush1.bf16.msra.mxu0 %v2190
        %2474 = vmatprep.subr.bf16.mxu0 0
        %2475 = vmatpush1.bf16.msra.mxu0 %v2191
        %2476 = vmatprep.subr.bf16.mxu0 0
        %2477 = vmatpush1.bf16.msra.mxu0 %v2192
        %2478 = vmatprep.subr.bf16.mxu0 0
        %2479 = vmatpush1.bf16.msra.mxu0 %v2193
        %2480 = vmatprep.subr.bf16.mxu0 0
        %2481 = vmatpush1.bf16.msra.mxu0 %v2194
        %2482 = vmatprep.subr.bf16.mxu0 0
        %2483 = vmatpush1.bf16.msra.mxu0 %v2195
        %2484 = vmatprep.subr.bf16.mxu0 0
        %2485 = vmatpush1.bf16.msra.mxu0 %v2196
        %2486 = vmatprep.subr.bf16.mxu0 0
        %2487 = vmatpush1.bf16.msra.mxu0 %v2197
        %2488 = vmatprep.subr.bf16.mxu0 0
        %2489 = vmatpush1.bf16.msra.mxu0 %v2198
        %2490 = vmatprep.subr.bf16.mxu0 0
        %2491 = vmatpush1.bf16.msra.mxu0 %v2199
        %2492 = vmatprep.subr.bf16.mxu0 0
        %2493 = vmatpush1.bf16.msra.mxu0 %v2200
        %2494 = vmatprep.subr.bf16.mxu0 0
        %2495 = vmatpush1.bf16.msra.mxu0 %v2201
        %2496 = vmatprep.subr.bf16.mxu0 0
        %2497 = vmatpush1.bf16.msra.mxu0 %v2202
        %2498 = vmatprep.subr.bf16.mxu0 0
        %2499 = vmatpush1.bf16.msra.mxu0 %v2203
        %2500 = vmatprep.mubr.bf16.mxu0 %v1593
        %2501 = vmatmul.mubr.bf16.gmra.mrb[0].mxu0 %v1591
        %v2502 = vpop.f32.mrb[0].mxu0
        %v2503 = vadd.f32 %v2463, %v2502
        %v2504 = vpop.f32.mrb[0].mxu0
        %v2505 = vpop.f32.mrb[0].mxu0
        %v2506 = vpop.f32.mrb[0].mxu0
        %2507 = vdwg.mxu0
        %2508 = vmatprep.subr.bf16.mxu0 0
        %2509 = vmatpush1.bf16.msra.mxu0 %v2204
        %2510 = vmatprep.subr.bf16.mxu0 0
        %2511 = vmatpush1.bf16.msra.mxu0 %v2205
        %2512 = vmatprep.subr.bf16.mxu0 0
        %2513 = vmatpush1.bf16.msra.mxu0 %v2206
        %2514 = vmatprep.subr.bf16.mxu0 0
        %2515 = vmatpush1.bf16.msra.mxu0 %v2207
        %2516 = vmatprep.subr.bf16.mxu0 0
        %2517 = vmatpush1.bf16.msra.mxu0 %v2208
        %2518 = vmatprep.subr.bf16.mxu0 0
        %2519 = vmatpush1.bf16.msra.mxu0 %v2209
        %2520 = vmatprep.subr.bf16.mxu0 0
        %2521 = vmatpush1.bf16.msra.mxu0 %v2210
        %2522 = vmatprep.subr.bf16.mxu0 0
        %2523 = vmatpush1.bf16.msra.mxu0 %v2211
        %2524 = vmatprep.subr.bf16.mxu0 0
        %2525 = vmatpush1.bf16.msra.mxu0 %v2212
        %2526 = vmatprep.subr.bf16.mxu0 0
        %2527 = vmatpush1.bf16.msra.mxu0 %v2213
        %2528 = vmatprep.subr.bf16.mxu0 0
        %2529 = vmatpush1.bf16.msra.mxu0 %v2214
        %2530 = vmatprep.subr.bf16.mxu0 0
        %2531 = vmatpush1.bf16.msra.mxu0 %v2215
        %2532 = vmatprep.subr.bf16.mxu0 0
        %2533 = vmatpush1.bf16.msra.mxu0 %v2216
        %2534 = vmatprep.subr.bf16.mxu0 0
        %2535 = vmatpush1.bf16.msra.mxu0 %v2217
        %2536 = vmatprep.subr.bf16.mxu0 0
        %2537 = vmatpush1.bf16.msra.mxu0 %v2218
        %2538 = vmatprep.subr.bf16.mxu0 0
        %2539 = vmatpush1.bf16.msra.mxu0 %v2219
        %2540 = vmatprep.mubr.bf16.mxu0 %v1590
        %2541 = vmatmul.mubr.bf16.gmra.mrb[0].mxu0 %v1576
        %v2542 = vpop.f32.mrb[0].mxu0
        %v2543 = vadd.f32 %v2503, %v2542
        %v2544 = vpop.f32.mrb[0].mxu0
        %v2545 = vpop.f32.mrb[0].mxu0
        %v2546 = vpop.f32.mrb[0].mxu0
        %2547 = vdwg.mxu0
        %2548 = vmatprep.subr.bf16.mxu0 0
        %2549 = vmatpush1.bf16.msra.mxu0 %v2220
        %2550 = vmatprep.subr.bf16.mxu0 0
        %2551 = vmatpush1.bf16.msra.mxu0 %v2221
        %2552 = vmatprep.subr.bf16.mxu0 0
        %2553 = vmatpush1.bf16.msra.mxu0 %v2222
        %2554 = vmatprep.subr.bf16.mxu0 0
        %2555 = vmatpush1.bf16.msra.mxu0 %v2223
        %2556 = vmatprep.subr.bf16.mxu0 0
        %2557 = vmatpush1.bf16.msra.mxu0 %v2224
        %2558 = vmatprep.subr.bf16.mxu0 0
        %2559 = vmatpush1.bf16.msra.mxu0 %v2225
        %2560 = vmatprep.subr.bf16.mxu0 0
        %2561 = vmatpush1.bf16.msra.mxu0 %v2226
        %2562 = vmatprep.subr.bf16.mxu0 0
        %2563 = vmatpush1.bf16.msra.mxu0 %v2227
        %2564 = vmatprep.subr.bf16.mxu0 0
        %2565 = vmatpush1.bf16.msra.mxu0 %v2228
        %2566 = vmatprep.subr.bf16.mxu0 0
        %2567 = vmatpush1.bf16.msra.mxu0 %v2229
        %2568 = vmatprep.subr.bf16.mxu0 0
        %2569 = vmatpush1.bf16.msra.mxu0 %v2230
        %2570 = vmatprep.subr.bf16.mxu0 0
        %2571 = vmatpush1.bf16.msra.mxu0 %v2231
        %2572 = vmatprep.subr.bf16.mxu0 0
        %2573 = vmatpush1.bf16.msra.mxu0 %v2232
        %2574 = vmatprep.subr.bf16.mxu0 0
        %2575 = vmatpush1.bf16.msra.mxu0 %v2233
        %2576 = vmatprep.subr.bf16.mxu0 0
        %2577 = vmatpush1.bf16.msra.mxu0 %v2234
        %2578 = vmatprep.subr.bf16.mxu0 0
        %2579 = vmatpush1.bf16.msra.mxu0 %v2235
        %2580 = vmatprep.mubr.bf16.mxu0 %v1594
        %2581 = vmatmul.mubr.bf16.gmra.mrb[0].mxu0 %v1592
        %v2582 = vpop.f32.mrb[0].mxu0
        %v2583 = vadd.f32 %v2543, %v2582
        %v2584 = vpop.f32.mrb[0].mxu0
        %v2585 = vpop.f32.mrb[0].mxu0
        %v2586 = vpop.f32.mrb[0].mxu0
        %2587 = vdwg.mxu0
        %2588 = vmatprep.subr.bf16.mxu0 0
        %2589 = vmatpush1.bf16.msra.mxu0 %v2236
        %2590 = vmatprep.subr.bf16.mxu0 0
        %2591 = vmatpush1.bf16.msra.mxu0 %v2237
        %2592 = vmatprep.subr.bf16.mxu0 0
        %2593 = vmatpush1.bf16.msra.mxu0 %v2238
        %2594 = vmatprep.subr.bf16.mxu0 0
        %2595 = vmatpush1.bf16.msra.mxu0 %v2239
        %2596 = vmatprep.subr.bf16.mxu0 0
        %2597 = vmatpush1.bf16.msra.mxu0 %v2240
        %2598 = vmatprep.subr.bf16.mxu0 0
        %2599 = vmatpush1.bf16.msra.mxu0 %v2241
        %2600 = vmatprep.subr.bf16.mxu0 0
        %2601 = vmatpush1.bf16.msra.mxu0 %v2242
        %2602 = vmatprep.subr.bf16.mxu0 0
        %2603 = vmatpush1.bf16.msra.mxu0 %v2243
        %2604 = vmatprep.subr.bf16.mxu0 0
        %2605 = vmatpush1.bf16.msra.mxu0 %v2244
        %2606 = vmatprep.subr.bf16.mxu0 0
        %2607 = vmatpush1.bf16.msra.mxu0 %v2245
        %2608 = vmatprep.subr.bf16.mxu0 0
        %2609 = vmatpush1.bf16.msra.mxu0 %v2246
        %2610 = vmatprep.subr.bf16.mxu0 0
        %2611 = vmatpush1.bf16.msra.mxu0 %v2247
        %2612 = vmatprep.subr.bf16.mxu0 0
        %2613 = vmatpush1.bf16.msra.mxu0 %v2248
        %2614 = vmatprep.subr.bf16.mxu0 0
        %2615 = vmatpush1.bf16.msra.mxu0 %v2249
        %2616 = vmatprep.subr.bf16.mxu0 0
        %2617 = vmatpush1.bf16.msra.mxu0 %v2250
        %2618 = vmatprep.subr.bf16.mxu0 0
        %2619 = vmatpush1.bf16.msra.mxu0 %v2251
        %2620 = vmatprep.mubr.bf16.mxu0 %v1632
        %2621 = vmatmul.mubr.bf16.gmra.mrb[0].mxu0 %v1618
        %v2622 = vpop.f32.mrb[0].mxu0
        %v2623 = vadd.f32 %v2583, %v2622
        %v2624 = vpop.f32.mrb[0].mxu0
        %v2625 = vpop.f32.mrb[0].mxu0
        %v2626 = vpop.f32.mrb[0].mxu0
        %2627 = vdwg.mxu0
        %2628 = vmatprep.subr.bf16.mxu0 0
        %2629 = vmatpush1.bf16.msra.mxu0 %v2252
        %2630 = vmatprep.subr.bf16.mxu0 0
        %2631 = vmatpush1.bf16.msra.mxu0 %v2253
        %2632 = vmatprep.subr.bf16.mxu0 0
        %2633 = vmatpush1.bf16.msra.mxu0 %v2254
        %2634 = vmatprep.subr.bf16.mxu0 0
        %2635 = vmatpush1.bf16.msra.mxu0 %v2255
        %2636 = vmatprep.subr.bf16.mxu0 0
        %2637 = vmatpush1.bf16.msra.mxu0 %v2256
        %2638 = vmatprep.subr.bf16.mxu0 0
        %2639 = vmatpush1.bf16.msra.mxu0 %v2257
        %2640 = vmatprep.subr.bf16.mxu0 0
        %2641 = vmatpush1.bf16.msra.mxu0 %v2258
        %2642 = vmatprep.subr.bf16.mxu0 0
        %2643 = vmatpush1.bf16.msra.mxu0 %v2259
        %2644 = vmatprep.subr.bf16.mxu0 0
        %2645 = vmatpush1.bf16.msra.mxu0 %v2260
        %2646 = vmatprep.subr.bf16.mxu0 0
        %2647 = vmatpush1.bf16.msra.mxu0 %v2261
        %2648 = vmatprep.subr.bf16.mxu0 0
        %2649 = vmatpush1.bf16.msra.mxu0 %v2262
        %2650 = vmatprep.subr.bf16.mxu0 0
        %2651 = vmatpush1.bf16.msra.mxu0 %v2263
        %2652 = vmatprep.subr.bf16.mxu0 0
        %2653 = vmatpush1.bf16.msra.mxu0 %v2264
        %2654 = vmatprep.subr.bf16.mxu0 0
        %2655 = vmatpush1.bf16.msra.mxu0 %v2265
        %2656 = vmatprep.subr.bf16.mxu0 0
        %2657 = vmatpush1.bf16.msra.mxu0 %v2266
        %2658 = vmatprep.subr.bf16.mxu0 0
        %2659 = vmatpush1.bf16.msra.mxu0 %v2267
        %2660 = vmatprep.mubr.bf16.mxu0 %v1642
        %2661 = vmatmul.mubr.bf16.gmra.mrb[0].mxu0 %v1640
        %v2662 = vpop.f32.mrb[0].mxu0
        %v2663 = vadd.f32 %v2623, %v2662
        %v2664 = vpop.f32.mrb[0].mxu0
        %v2665 = vpop.f32.mrb[0].mxu0
        %v2666 = vpop.f32.mrb[0].mxu0
        %2667 = vdwg.mxu0
        %2668 = vmatprep.subr.bf16.mxu0 0
        %2669 = vmatpush1.bf16.msra.mxu0 %v2268
        %2670 = vmatprep.subr.bf16.mxu0 0
        %2671 = vmatpush1.bf16.msra.mxu0 %v2269
        %2672 = vmatprep.subr.bf16.mxu0 0
        %2673 = vmatpush1.bf16.msra.mxu0 %v2270
        %2674 = vmatprep.subr.bf16.mxu0 0
        %2675 = vmatpush1.bf16.msra.mxu0 %v2271
        %2676 = vmatprep.subr.bf16.mxu0 0
        %2677 = vmatpush1.bf16.msra.mxu0 %v2272
        %2678 = vmatprep.subr.bf16.mxu0 0
        %2679 = vmatpush1.bf16.msra.mxu0 %v2273
        %2680 = vmatprep.subr.bf16.mxu0 0
        %2681 = vmatpush1.bf16.msra.mxu0 %v2274
        %2682 = vmatprep.subr.bf16.mxu0 0
        %2683 = vmatpush1.bf16.msra.mxu0 %v2275
        %2684 = vmatprep.subr.bf16.mxu0 0
        %2685 = vmatpush1.bf16.msra.mxu0 %v2276
        %2686 = vmatprep.subr.bf16.mxu0 0
        %2687 = vmatpush1.bf16.msra.mxu0 %v2277
        %2688 = vmatprep.subr.bf16.mxu0 0
        %2689 = vmatpush1.bf16.msra.mxu0 %v2278
        %2690 = vmatprep.subr.bf16.mxu0 0
        %2691 = vmatpush1.bf16.msra.mxu0 %v2279
        %2692 = vmatprep.subr.bf16.mxu0 0
        %2693 = vmatpush1.bf16.msra.mxu0 %v2280
        %2694 = vmatprep.subr.bf16.mxu0 0
        %2695 = vmatpush1.bf16.msra.mxu0 %v2281
        %2696 = vmatprep.subr.bf16.mxu0 0
        %2697 = vmatpush1.bf16.msra.mxu0 %v2282
        %2698 = vmatprep.subr.bf16.mxu0 0
        %2699 = vmatpush1.bf16.msra.mxu0 %v2283
        %2700 = vmatprep.mubr.bf16.mxu0 %v1639
        %2701 = vmatmul.mubr.bf16.gmra.mrb[0].mxu0 %v1625
        %v2702 = vpop.f32.mrb[0].mxu0
        %v2703 = vadd.f32 %v2663, %v2702
        %v2704 = vpop.f32.mrb[0].mxu0
        %v2705 = vpop.f32.mrb[0].mxu0
        %v2706 = vpop.f32.mrb[0].mxu0
        %2707 = vdwg.mxu0
        %2708 = vmatprep.subr.bf16.mxu0 0
        %2709 = vmatpush1.bf16.msra.mxu0 %v2284
        %2710 = vmatprep.subr.bf16.mxu0 0
        %2711 = vmatpush1.bf16.msra.mxu0 %v2285
        %2712 = vmatprep.subr.bf16.mxu0 0
        %2713 = vmatpush1.bf16.msra.mxu0 %v2286
        %2714 = vmatprep.subr.bf16.mxu0 0
        %2715 = vmatpush1.bf16.msra.mxu0 %v2287
        %2716 = vmatprep.subr.bf16.mxu0 0
        %2717 = vmatpush1.bf16.msra.mxu0 %v2288
        %2718 = vmatprep.subr.bf16.mxu0 0
        %2719 = vmatpush1.bf16.msra.mxu0 %v2289
        %2720 = vmatprep.subr.bf16.mxu0 0
        %2721 = vmatpush1.bf16.msra.mxu0 %v2290
        %2722 = vmatprep.subr.bf16.mxu0 0
        %2723 = vmatpush1.bf16.msra.mxu0 %v2291
        %2724 = vmatprep.subr.bf16.mxu0 0
        %2725 = vmatpush1.bf16.msra.mxu0 %v2292
        %2726 = vmatprep.subr.bf16.mxu0 0
        %2727 = vmatpush1.bf16.msra.mxu0 %v2293
        %2728 = vmatprep.subr.bf16.mxu0 0
        %2729 = vmatpush1.bf16.msra.mxu0 %v2294
        %2730 = vmatprep.subr.bf16.mxu0 0
        %2731 = vmatpush1.bf16.msra.mxu0 %v2295
        %2732 = vmatprep.subr.bf16.mxu0 0
        %2733 = vmatpush1.bf16.msra.mxu0 %v2296
        %2734 = vmatprep.subr.bf16.mxu0 0
        %2735 = vmatpush1.bf16.msra.mxu0 %v2297
        %2736 = vmatprep.subr.bf16.mxu0 0
        %2737 = vmatpush1.bf16.msra.mxu0 %v2298
        %2738 = vmatprep.subr.bf16.mxu0 0
        %2739 = vmatpush1.bf16.msra.mxu0 %v2299
        %2740 = vmatprep.mubr.bf16.mxu0 %v1643
        %2741 = vmatmul.mubr.bf16.gmra.mrb[0].mxu0 %v1641
        %v2742 = vpop.f32.mrb[0].mxu0
        %v2743 = vadd.f32 %v2703, %v2742
        %v2744 = vpop.f32.mrb[0].mxu0
        %v2745 = vpop.f32.mrb[0].mxu0
        %v2746 = vpop.f32.mrb[0].mxu0
        %2747 = vdwg.mxu0
        %v2748 = vadd.f32 %v1285, %v2743
        %2749 = vst [vmem:[#allocation2] sm:$0x3] %v2748
        %p2750 = scmp.eq.s32.totalorder %s19, 3
        // Predicated region
        $region78: #{apricot_cnn1_forward.11} parent=68 // pred_check
          %p2751 = pneg %p2750
        $region79: #{apricot_cnn1_forward.11} parent=68 // pred_check_branch
          %2753 = sbr.rel (%p2751) target = $region81
        $region80: #{apricot_cnn1_forward.11} parent=68 // pred_region
          %v2754 = vld [vmem:[#allocation2] sm:$0x3]
          %v2755 = vld [vmem:[%s1275] sm:$0x1]
          %v2757 = vlaneseq
          %v2758 = vshrl.u32 %v2757, 7
          %v2759 = vsub.s32 0, %v2758
          %v2760 = vrot.slane %v2755, %v2759
          %v2762 = vadd.f32 %v2754, %v2760
          %v2763 = vmax.f32 %v2762, 0.0
          %v2764 = vpack.c.bf16 %v2763, %v2763
          %2765 = vst [vmem:[%s1278] sm:$0x1] %v2764
        $region81: #{apricot_cnn1_forward.11} parent=68 // pred_fallthru
          _
        %p2766 = scmp.lt.s32.totalorder %s18, 1
        %s2767 = scalar_select %p2766, %s18, 1
        %s2768 = scalar_lea.vmem %s3, %s2767
        // Predicated region
        $region82: #{apricot_cnn1_forward.11} parent=68 // pred_check
          %p2769 = pneg %p124
        $region83: #{apricot_cnn1_forward.11} parent=68 // pred_check_branch
          %2771 = sbr.rel (%p2769) target = $region85
        $region84: #{apricot_cnn1_forward.11} parent=68 // pred_region
          _
        $region85: #{apricot_cnn1_forward.11} parent=68 // pred_fallthru
          _
      $region69: #{apricot_cnn1_forward.11} parent=5 // pred_fallthru
        _
      %p2772 = scmp.le.s32.totalorder 2, %s9
      // Predicated region
      $region86: #{apricot_cnn1_forward.11} parent=5 // pred_check
        %p2773 = pneg %p2772
      $region87: #{apricot_cnn1_forward.11} parent=5 // pred_check_branch
        %2775 = sbr.rel (%p2773) target = $region89
      $region88: #{apricot_cnn1_forward.11} parent=5 // pred_region
        %s2776 = ssub.s32 %s9, 2
        // Predicated region
        $region90: #{apricot_cnn1_forward.11} parent=88 // pred_check
          %p2777 = pneg %p130
        $region91: #{apricot_cnn1_forward.11} parent=88 // pred_check_branch
          %2779 = sbr.rel (%p2777) target = $region93
        $region92: #{apricot_cnn1_forward.11} parent=88 // pred_region
          %p2780 = scmp.lt.s32.totalorder %s20, 1
          %s2781 = scalar_select %p2780, %s20, 1
          %s2782 = scalar_lea.vmem %s3, %s2781
        $region93: #{apricot_cnn1_forward.11} parent=88 // pred_fallthru
          _
      $region89: #{apricot_cnn1_forward.11} parent=5 // pred_fallthru
        _
    $region6: #{apricot_cnn1_forward.11} parent=1 // loop_footer
      %s13 = sadd.s32 1, %s9
    $region7: #{apricot_cnn1_forward.11} parent=1 // loop_footer_branch
      %8 = sbr.rel target = $region3
    $region8: #{apricot_cnn1_forward.11} parent=1 // loop_exit
      _

// kernel: apricot_cnn1_forward.12
$region0: #{apricot_cnn1_forward.12}
  #allocation0 [shape = 'u32[]', space=smem, size = 0x4, offset = 0x4, fixed_abs, tag = 'smem constant byte address 0x4 - core index']
  #allocation1 [shape = 'u32[144,128]{1,0:T(1,128)}', space=vmem, size = 0x12000, scoped, tag = 'internal scratch']
  #allocation2 [shape = 'f32[2,128]{1,0:T(2,128)}', space=vmem, size = 0x400, scoped, tag = 'scratch operand']
  %s0 = inlined_call_operand.vmem [shape: bf16[2,256], index: 0, kind: input, shape index: {}]
  %s1 = inlined_call_operand.vmem [shape: bf16[256,256], index: 1, kind: input, shape index: {}]
  %s2 = inlined_call_operand.vmem [shape: f32[1,256], index: 2, kind: input, shape index: {}]
  %s3 = inlined_call_operand.vmem [shape: bf16[2,256], index: 3, kind: output, shape index: {}]
  %s4 = sld [smem:[#allocation0]]
  $region94: #{apricot_cnn1_forward.12} parent=0
    _
  %s6 = ssub.s32 1, %s4
  %s7 = scalar_select 0, %s6, %s4
  $region1: #{apricot_cnn1_forward.12} parent=0
    #allocation3 [shape = 'u8[131072]{0}', space=vmem, size = 0x20000, scoped, tag = 'input window, operand 1']
    loop: start=0, step=1, limit=4
    $region2: #{apricot_cnn1_forward.12} parent=1 // loop_pre_header
      _
    $region3: #{apricot_cnn1_forward.12} parent=1 // loop_header
      %s9 = sphi 0, %s13
      %p10 = scmp.ge.s32.totalorder %s9, 4
      %s16 = sphi 0, %s28
      %s17 = sphi 0, %s24
      %s18 = sphi 0, %s16
      %s19 = sphi 0, %s17
      %s20 = sphi 0, %s18
      %s21 = sphi 0, %s19
      %s31 = sphi 0, %s33
      %s34 = sphi 0, %s31
      %s35 = sphi 0, %s34
      %s51 = sphi 0, %s35
      %s59 = sphi 0, %s61
      %s62 = sphi 0, %s59
      %s63 = sphi 0, %s62
      %s79 = sphi 0, %s63
      %s85 = sphi 0, %s87
      %s88 = sphi 0, %s85
      %s89 = sphi 0, %s88
      %s105 = sphi 0, %s89
      %s111 = sphi 0, %s113
      %s114 = sphi 0, %s111
      %s115 = sphi 0, %s114
      %s131 = sphi 0, %s115
    $region4: #{apricot_cnn1_forward.12} parent=1 // loop_header_branch
      %12 = sbr.rel (%p10) target = $region8
    $region5: #{apricot_cnn1_forward.12} parent=1 // loop_body
      %s14 = ssub.s32 %s9, 1
      %s15 = ssub.s32 %s9, 2
      %s22 = sadd.s32 1, %s17
      %p23 = scmp.ge.s32.totalorder %s22, 1
      %s24 = scalar_select %p23, 0, %s22
      %s25 = sadd.s32 1, %s16
      %s26 = scalar_select %p23, %s25, %s16
      %p27 = scmp.ge.s32.totalorder %s26, 2
      %s28 = scalar_select %p27, 0, %s26
      %s29 = ssub.s32 %s17, %s24
      %p30 = scmp.eq.s32.totalorder %s29, 0
      %s32 = sadd.s32 %s31, 1
      %s33 = scalar_select %p30, %s31, %s32
      %p36 = pneg %p30
      %p37 = scmp.eq.s32.totalorder %s9, 1
      %p38 = por %p36, %p37
      %p39 = scmp.ne.s32.totalorder %s31, %s34
      %p40 = scmp.eq.s32.totalorder %s9, 0
      %p41 = por %p39, %p40
      %p42 = scmp.ne.s32.totalorder %s31, %s34
      %p43 = scmp.eq.s32.totalorder %s14, 1
      %p44 = por %p42, %p43
      %p45 = scmp.ne.s32.totalorder %s34, %s35
      %p46 = scmp.eq.s32.totalorder %s14, 0
      %p47 = por %p45, %p46
      %p48 = scmp.ne.s32.totalorder %s34, %s35
      %p49 = scmp.eq.s32.totalorder %s15, 1
      %p50 = por %p48, %p49
      %p52 = scmp.ne.s32.totalorder %s35, %s51
      %p53 = scmp.eq.s32.totalorder %s15, 0
      %p54 = por %p52, %p53
      %s55 = ssub.s32 %s17, %s24
      %s56 = ssub.s32 %s16, %s28
      %s57 = sor.u32 %s55, %s56
      %p58 = scmp.eq.s32.totalorder %s57, 0
      %s60 = sadd.s32 %s59, 1
      %s61 = scalar_select %p58, %s59, %s60
      %p64 = pneg %p58
      %p65 = scmp.eq.s32.totalorder %s9, 1
      %p66 = por %p64, %p65
      %p67 = scmp.ne.s32.totalorder %s59, %s62
      %p68 = scmp.eq.s32.totalorder %s9, 0
      %p69 = por %p67, %p68
      %p70 = scmp.ne.s32.totalorder %s59, %s62
      %p71 = scmp.eq.s32.totalorder %s14, 1
      %p72 = por %p70, %p71
      %p73 = scmp.ne.s32.totalorder %s62, %s63
      %p74 = scmp.eq.s32.totalorder %s14, 0
      %p75 = por %p73, %p74
      %p76 = scmp.ne.s32.totalorder %s62, %s63
      %p77 = scmp.eq.s32.totalorder %s15, 1
      %p78 = por %p76, %p77
      %p80 = scmp.ne.s32.totalorder %s63, %s79
      %p81 = scmp.eq.s32.totalorder %s15, 0
      %p82 = por %p80, %p81
      %s83 = ssub.s32 %s16, %s28
      %p84 = scmp.eq.s32.totalorder %s83, 0
      %s86 = sadd.s32 %s85, 1
      %s87 = scalar_select %p84, %s85, %s86
      %p90 = pneg %p84
      %p91 = scmp.eq.s32.totalorder %s9, 1
      %p92 = por %p90, %p91
      %p93 = scmp.ne.s32.totalorder %s85, %s88
      %p94 = scmp.eq.s32.totalorder %s9, 0
      %p95 = por %p93, %p94
      %p96 = scmp.ne.s32.totalorder %s85, %s88
      %p97 = scmp.eq.s32.totalorder %s14, 1
      %p98 = por %p96, %p97
      %p99 = scmp.ne.s32.totalorder %s88, %s89
      %p100 = scmp.eq.s32.totalorder %s14, 0
      %p101 = por %p99, %p100
      %p102 = scmp.ne.s32.totalorder %s88, %s89
      %p103 = scmp.eq.s32.totalorder %s15, 1
      %p104 = por %p102, %p103
      %p106 = scmp.ne.s32.totalorder %s89, %s105
      %p107 = scmp.eq.s32.totalorder %s15, 0
      %p108 = por %p106, %p107
      %s109 = ssub.s32 %s16, %s28
      %p110 = scmp.eq.s32.totalorder %s109, 0
      %s112 = sadd.s32 %s111, 1
      %s113 = scalar_select %p110, %s111, %s112
      %p116 = pneg %p110
      %p117 = scmp.eq.s32.totalorder %s9, 1
      %p118 = por %p116, %p117
      %p119 = scmp.ne.s32.totalorder %s111, %s114
      %p120 = scmp.eq.s32.totalorder %s9, 0
      %p121 = por %p119, %p120
      %p122 = scmp.ne.s32.totalorder %s111, %s114
      %p123 = scmp.eq.s32.totalorder %s14, 1
      %p124 = por %p122, %p123
      %p125 = scmp.ne.s32.totalorder %s114, %s115
      %p126 = scmp.eq.s32.totalorder %s14, 0
      %p127 = por %p125, %p126
      %p128 = scmp.ne.s32.totalorder %s114, %s115
      %p129 = scmp.eq.s32.totalorder %s15, 1
      %p130 = por %p128, %p129
      %p132 = scmp.ne.s32.totalorder %s115, %s131
      %p133 = scmp.eq.s32.totalorder %s15, 0
      %p134 = por %p132, %p133
      %p135 = scmp.le.s32.totalorder 1, %s9
      %p136 = scmp.lt.s32.totalorder %s9, 3
      %p137 = pnand %p135, %p136
      %p138 = pneg %p137
      // Predicated region
      $region9: #{apricot_cnn1_forward.12} parent=5 // pred_check
        _
      $region10: #{apricot_cnn1_forward.12} parent=5 // pred_check_branch
        %140 = sbr.rel (%p137) target = $region12
      $region11: #{apricot_cnn1_forward.12} parent=5 // pred_region
        %s141 = ssub.s32 %s9, 1
        // Predicated region
        $region13: #{apricot_cnn1_forward.12} parent=11 // pred_check
          %p142 = pneg %p47
        $region14: #{apricot_cnn1_forward.12} parent=11 // pred_check_branch
          %144 = sbr.rel (%p142) target = $region16
        $region15: #{apricot_cnn1_forward.12} parent=11 // pred_region
          %s145 = smul.u32 2, %s19
          %p146 = scmp.lt.s32.totalorder %s145, 1
          %s147 = scalar_select %p146, %s145, 1
          %s148 = scalar_lea.vmem %s0, %s147
          %s149 = smul.u32 2, %s19
        $region16: #{apricot_cnn1_forward.12} parent=11 // pred_fallthru
          _
      $region12: #{apricot_cnn1_forward.12} parent=5 // pred_fallthru
        _
      %p150 = scmp.lt.s32.totalorder %s9, 2
      // Predicated region
      $region17: #{apricot_cnn1_forward.12} parent=5 // pred_check
        %p151 = pneg %p150
      $region18: #{apricot_cnn1_forward.12} parent=5 // pred_check_branch
        %153 = sbr.rel (%p151) target = $region20
      $region19: #{apricot_cnn1_forward.12} parent=5 // pred_region
        // Predicated region
        $region21: #{apricot_cnn1_forward.12} parent=19 // pred_check
          %p154 = pneg %p69
        $region22: #{apricot_cnn1_forward.12} parent=19 // pred_check_branch
          %156 = sbr.rel (%p154) target = $region24
        $region23: #{apricot_cnn1_forward.12} parent=19 // pred_region
          %s157 = sand.u32 %s59, 1
          %s158 = sand.u32 %s59, 1
          %s159 = smul.addr %s158, 128
          %s160 = scalar_lea.vmem [#allocation3], %s159
          %s161 = smul.u32 32, %s17
          %s162 = smul.addr %s161, 2
          %s163 = sadd.s32 %s16, %s162
          %s164 = smul.addr %s163, 4
          %s165 = scalar_lea.vmem %s1, %s164
          // Predicated region
          $region25: #{apricot_cnn1_forward.12} parent=23 // pred_check
            _
          $region26: #{apricot_cnn1_forward.12} parent=23 // pred_check_branch
            %167 = sbr.rel (0) target = $region28
          $region27: #{apricot_cnn1_forward.12} parent=23 // pred_region
            // Predicated region
            $region29: #{apricot_cnn1_forward.12} parent=27 // pred_check
              _
            $region30: #{apricot_cnn1_forward.12} parent=27 // pred_check_branch
              %169 = sbr.rel target = $region32
            $region31: #{apricot_cnn1_forward.12} parent=27 // pred_region
              // Predicated region
              $region44: #{apricot_cnn1_forward.12} parent=31 // pred_check
                _
              $region45: #{apricot_cnn1_forward.12} parent=31 // pred_check_branch
                %246 = sbr.rel (0) target = $region47
              $region46: #{apricot_cnn1_forward.12} parent=31 // pred_region
                loop: start=0, step=1, limit=1
                $region48: #{apricot_cnn1_forward.12} parent=46 // loop_pre_header
                  _
                $region49: #{apricot_cnn1_forward.12} parent=46 // loop_header
                  %s248 = sphi 0, %s252
                  %p249 = scmp.ge.s32.totalorder %s248, 1
                  %s253 = sphi %s165, %s165
                  %s254 = sphi %s160, %s160
                $region50: #{apricot_cnn1_forward.12} parent=46 // loop_header_branch
                  %251 = sbr.rel (%p249) target = $region54
                $region51: #{apricot_cnn1_forward.12} parent=46 // loop_body
                  _
                $region52: #{apricot_cnn1_forward.12} parent=46 // loop_footer
                  %s252 = sadd.s32 1, %s248
                $region53: #{apricot_cnn1_forward.12} parent=46 // loop_footer_branch
                  %247 = sbr.rel target = $region49
                $region54: #{apricot_cnn1_forward.12} parent=46 // loop_exit
                  _
                loop: start=0, step=1, limit=1
                $region55: #{apricot_cnn1_forward.12} parent=46 // loop_pre_header
                  _
                $region56: #{apricot_cnn1_forward.12} parent=46 // loop_header
                  %s257 = sphi 0, %s261
                  %p258 = scmp.ge.s32.totalorder %s257, 1
                  %s262 = sphi %s165, %s165
                  %s263 = sphi %s160, %s160
                $region57: #{apricot_cnn1_forward.12} parent=46 // loop_header_branch
                  %260 = sbr.rel (%p258) target = $region61
                $region58: #{apricot_cnn1_forward.12} parent=46 // loop_body
                  %v264 = vld [vmem:[%s262] sm:$0xf]
                  %265 = vst [vmem:[%s263] sm:$0xf] %v264
                  %v266 = vld [vmem:[%s262 + $0x8] sm:$0xf]
                  %267 = vst [vmem:[%s263 + $0x4] sm:$0xf] %v266
                  %v268 = vld [vmem:[%s262 + $0x10] sm:$0xf]
                  %269 = vst [vmem:[%s263 + $0x8] sm:$0xf] %v268
                  %v270 = vld [vmem:[%s262 + $0x18] sm:$0xf]
                  %271 = vst [vmem:[%s263 + $0xc] sm:$0xf] %v270
                  %v272 = vld [vmem:[%s262 + $0x20] sm:$0xf]
                  %273 = vst [vmem:[%s263 + $0x10] sm:$0xf] %v272
                  %v274 = vld [vmem:[%s262 + $0x28] sm:$0xf]
                  %275 = vst [vmem:[%s263 + $0x14] sm:$0xf] %v274
                  %v276 = vld [vmem:[%s262 + $0x30] sm:$0xf]
                  %277 = vst [vmem:[%s263 + $0x18] sm:$0xf] %v276
                  %v278 = vld [vmem:[%s262 + $0x38] sm:$0xf]
                  %279 = vst [vmem:[%s263 + $0x1c] sm:$0xf] %v278
                  %v280 = vld [vmem:[%s262 + $0x40] sm:$0xf]
                  %281 = vst [vmem:[%s263 + $0x20] sm:$0xf] %v280
                  %v282 = vld [vmem:[%s262 + $0x48] sm:$0xf]
                  %283 = vst [vmem:[%s263 + $0x24] sm:$0xf] %v282
                  %v284 = vld [vmem:[%s262 + $0x50] sm:$0xf]
                  %285 = vst [vmem:[%s263 + $0x28] sm:$0xf] %v284
                  %v286 = vld [vmem:[%s262 + $0x58] sm:$0xf]
                  %287 = vst [vmem:[%s263 + $0x2c] sm:$0xf] %v286
                  %v288 = vld [vmem:[%s262 + $0x60] sm:$0xf]
                  %289 = vst [vmem:[%s263 + $0x30] sm:$0xf] %v288
                  %v290 = vld [vmem:[%s262 + $0x68] sm:$0xf]
                  %291 = vst [vmem:[%s263 + $0x34] sm:$0xf] %v290
                  %v292 = vld [vmem:[%s262 + $0x70] sm:$0xf]
                  %293 = vst [vmem:[%s263 + $0x38] sm:$0xf] %v292
                  %v294 = vld [vmem:[%s262 + $0x78] sm:$0xf]
                  %295 = vst [vmem:[%s263 + $0x3c] sm:$0xf] %v294
                  %v296 = vld [vmem:[%s262 + $0x80] sm:$0xf]
                  %297 = vst [vmem:[%s263 + $0x40] sm:$0xf] %v296
                  %v298 = vld [vmem:[%s262 + $0x88] sm:$0xf]
                  %299 = vst [vmem:[%s263 + $0x44] sm:$0xf] %v298
                  %v300 = vld [vmem:[%s262 + $0x90] sm:$0xf]
                  %301 = vst [vmem:[%s263 + $0x48] sm:$0xf] %v300
                  %v302 = vld [vmem:[%s262 + $0x98] sm:$0xf]
                  %303 = vst [vmem:[%s263 + $0x4c] sm:$0xf] %v302
                  %v304 = vld [vmem:[%s262 + $0xa0] sm:$0xf]
                  %305 = vst [vmem:[%s263 + $0x50] sm:$0xf] %v304
                  %v306 = vld [vmem:[%s262 + $0xa8] sm:$0xf]
                  %307 = vst [vmem:[%s263 + $0x54] sm:$0xf] %v306
                  %v308 = vld [vmem:[%s262 + $0xb0] sm:$0xf]
                  %309 = vst [vmem:[%s263 + $0x58] sm:$0xf] %v308
                  %v310 = vld [vmem:[%s262 + $0xb8] sm:$0xf]
                  %311 = vst [vmem:[%s263 + $0x5c] sm:$0xf] %v310
                  %v312 = vld [vmem:[%s262 + $0xc0] sm:$0xf]
                  %313 = vst [vmem:[%s263 + $0x60] sm:$0xf] %v312
                  %v314 = vld [vmem:[%s262 + $0xc8] sm:$0xf]
                  %315 = vst [vmem:[%s263 + $0x64] sm:$0xf] %v314
                  %v316 = vld [vmem:[%s262 + $0xd0] sm:$0xf]
                  %317 = vst [vmem:[%s263 + $0x68] sm:$0xf] %v316
                  %v318 = vld [vmem:[%s262 + $0xd8] sm:$0xf]
                  %319 = vst [vmem:[%s263 + $0x6c] sm:$0xf] %v318
                  %v320 = vld [vmem:[%s262 + $0xe0] sm:$0xf]
                  %321 = vst [vmem:[%s263 + $0x70] sm:$0xf] %v320
                  %v322 = vld [vmem:[%s262 + $0xe8] sm:$0xf]
                  %323 = vst [vmem:[%s263 + $0x74] sm:$0xf] %v322
                  %v324 = vld [vmem:[%s262 + $0xf0] sm:$0xf]
                  %325 = vst [vmem:[%s263 + $0x78] sm:$0xf] %v324
                  %v326 = vld [vmem:[%s262 + $0xf8] sm:$0xf]
                  %327 = vst [vmem:[%s263 + $0x7c] sm:$0xf] %v326
                $region59: #{apricot_cnn1_forward.12} parent=46 // loop_footer
                  %s261 = sadd.s32 1, %s257
                $region60: #{apricot_cnn1_forward.12} parent=46 // loop_footer_branch
                  %256 = sbr.rel target = $region56
                $region61: #{apricot_cnn1_forward.12} parent=46 // loop_exit
                  _
              $region47: #{apricot_cnn1_forward.12} parent=31 // pred_fallthru
                _
            $region32: #{apricot_cnn1_forward.12} parent=27 // pred_fallthru
              _
            // Predicated region
            $region33: #{apricot_cnn1_forward.12} parent=27 // pred_check
              _
            $region34: #{apricot_cnn1_forward.12} parent=27 // pred_check_branch
              %171 = sbr.rel (0) target = $region36
            $region35: #{apricot_cnn1_forward.12} parent=27 // pred_region
              loop: start=0, step=1, limit=1
              $region37: #{apricot_cnn1_forward.12} parent=35 // loop_pre_header
                _
              $region38: #{apricot_cnn1_forward.12} parent=35 // loop_header
                %s174 = sphi 0, %s178
                %p175 = scmp.ge.s32.totalorder %s174, 1
                %s179 = sphi %s165, %s165
                %s180 = sphi %s160, %s160
              $region39: #{apricot_cnn1_forward.12} parent=35 // loop_header_branch
                %177 = sbr.rel (%p175) target = $region43
              $region40: #{apricot_cnn1_forward.12} parent=35 // loop_body
                %v181 = vld [vmem:[%s179] sm:$0xf]
                %182 = vst [vmem:[%s180] sm:$0xf] %v181
                %v183 = vld [vmem:[%s179 + $0x8] sm:$0xf]
                %184 = vst [vmem:[%s180 + $0x4] sm:$0xf] %v183
                %v185 = vld [vmem:[%s179 + $0x10] sm:$0xf]
                %186 = vst [vmem:[%s180 + $0x8] sm:$0xf] %v185
                %v187 = vld [vmem:[%s179 + $0x18] sm:$0xf]
                %188 = vst [vmem:[%s180 + $0xc] sm:$0xf] %v187
                %v189 = vld [vmem:[%s179 + $0x20] sm:$0xf]
                %190 = vst [vmem:[%s180 + $0x10] sm:$0xf] %v189
                %v191 = vld [vmem:[%s179 + $0x28] sm:$0xf]
                %192 = vst [vmem:[%s180 + $0x14] sm:$0xf] %v191
                %v193 = vld [vmem:[%s179 + $0x30] sm:$0xf]
                %194 = vst [vmem:[%s180 + $0x18] sm:$0xf] %v193
                %v195 = vld [vmem:[%s179 + $0x38] sm:$0xf]
                %196 = vst [vmem:[%s180 + $0x1c] sm:$0xf] %v195
                %v197 = vld [vmem:[%s179 + $0x40] sm:$0xf]
                %198 = vst [vmem:[%s180 + $0x20] sm:$0xf] %v197
                %v199 = vld [vmem:[%s179 + $0x48] sm:$0xf]
                %200 = vst [vmem:[%s180 + $0x24] sm:$0xf] %v199
                %v201 = vld [vmem:[%s179 + $0x50] sm:$0xf]
                %202 = vst [vmem:[%s180 + $0x28] sm:$0xf] %v201
                %v203 = vld [vmem:[%s179 + $0x58] sm:$0xf]
                %204 = vst [vmem:[%s180 + $0x2c] sm:$0xf] %v203
                %v205 = vld [vmem:[%s179 + $0x60] sm:$0xf]
                %206 = vst [vmem:[%s180 + $0x30] sm:$0xf] %v205
                %v207 = vld [vmem:[%s179 + $0x68] sm:$0xf]
                %208 = vst [vmem:[%s180 + $0x34] sm:$0xf] %v207
                %v209 = vld [vmem:[%s179 + $0x70] sm:$0xf]
                %210 = vst [vmem:[%s180 + $0x38] sm:$0xf] %v209
                %v211 = vld [vmem:[%s179 + $0x78] sm:$0xf]
                %212 = vst [vmem:[%s180 + $0x3c] sm:$0xf] %v211
                %v213 = vld [vmem:[%s179 + $0x80] sm:$0xf]
                %214 = vst [vmem:[%s180 + $0x40] sm:$0xf] %v213
                %v215 = vld [vmem:[%s179 + $0x88] sm:$0xf]
                %216 = vst [vmem:[%s180 + $0x44] sm:$0xf] %v215
                %v217 = vld [vmem:[%s179 + $0x90] sm:$0xf]
                %218 = vst [vmem:[%s180 + $0x48] sm:$0xf] %v217
                %v219 = vld [vmem:[%s179 + $0x98] sm:$0xf]
                %220 = vst [vmem:[%s180 + $0x4c] sm:$0xf] %v219
                %v221 = vld [vmem:[%s179 + $0xa0] sm:$0xf]
                %222 = vst [vmem:[%s180 + $0x50] sm:$0xf] %v221
                %v223 = vld [vmem:[%s179 + $0xa8] sm:$0xf]
                %224 = vst [vmem:[%s180 + $0x54] sm:$0xf] %v223
                %v225 = vld [vmem:[%s179 + $0xb0] sm:$0xf]
                %226 = vst [vmem:[%s180 + $0x58] sm:$0xf] %v225
                %v227 = vld [vmem:[%s179 + $0xb8] sm:$0xf]
                %228 = vst [vmem:[%s180 + $0x5c] sm:$0xf] %v227
                %v229 = vld [vmem:[%s179 + $0xc0] sm:$0xf]
                %230 = vst [vmem:[%s180 + $0x60] sm:$0xf] %v229
                %v231 = vld [vmem:[%s179 + $0xc8] sm:$0xf]
                %232 = vst [vmem:[%s180 + $0x64] sm:$0xf] %v231
                %v233 = vld [vmem:[%s179 + $0xd0] sm:$0xf]
                %234 = vst [vmem:[%s180 + $0x68] sm:$0xf] %v233
                %v235 = vld [vmem:[%s179 + $0xd8] sm:$0xf]
                %236 = vst [vmem:[%s180 + $0x6c] sm:$0xf] %v235
                %v237 = vld [vmem:[%s179 + $0xe0] sm:$0xf]
                %238 = vst [vmem:[%s180 + $0x70] sm:$0xf] %v237
                %v239 = vld [vmem:[%s179 + $0xe8] sm:$0xf]
                %240 = vst [vmem:[%s180 + $0x74] sm:$0xf] %v239
                %v241 = vld [vmem:[%s179 + $0xf0] sm:$0xf]
                %242 = vst [vmem:[%s180 + $0x78] sm:$0xf] %v241
                %v243 = vld [vmem:[%s179 + $0xf8] sm:$0xf]
                %244 = vst [vmem:[%s180 + $0x7c] sm:$0xf] %v243
              $region41: #{apricot_cnn1_forward.12} parent=35 // loop_footer
                %s178 = sadd.s32 1, %s174
              $region42: #{apricot_cnn1_forward.12} parent=35 // loop_footer_branch
                %173 = sbr.rel target = $region38
              $region43: #{apricot_cnn1_forward.12} parent=35 // loop_exit
                _
            $region36: #{apricot_cnn1_forward.12} parent=27 // pred_fallthru
              _
          $region28: #{apricot_cnn1_forward.12} parent=23 // pred_fallthru
            _
          %328 = vnop
        $region24: #{apricot_cnn1_forward.12} parent=19 // pred_fallthru
          _
        // Predicated region
        $region62: #{apricot_cnn1_forward.12} parent=19 // pred_check
          %p329 = pneg %p95
        $region63: #{apricot_cnn1_forward.12} parent=19 // pred_check_branch
          %331 = sbr.rel (%p329) target = $region65
        $region64: #{apricot_cnn1_forward.12} parent=19 // pred_region
          %p332 = scmp.lt.s32.totalorder %s16, 1
          %s333 = scalar_select %p332, %s16, 1
          %s334 = scalar_lea.vmem %s2, %s333
        $region65: #{apricot_cnn1_forward.12} parent=19 // pred_fallthru
          _
      $region20: #{apricot_cnn1_forward.12} parent=5 // pred_fallthru
        _
      %p335 = scmp.le.s32.totalorder 1, %s9
      %p336 = scmp.lt.s32.totalorder %s9, 3
      %p337 = pnand %p335, %p336
      %p338 = pneg %p337
      // Predicated region
      $region66: #{apricot_cnn1_forward.12} parent=5 // pred_check
        _
      $region67: #{apricot_cnn1_forward.12} parent=5 // pred_check_branch
        %340 = sbr.rel (%p337) target = $region69
      $region68: #{apricot_cnn1_forward.12} parent=5 // pred_region
        %s341 = ssub.s32 %s9, 1
        %s342 = sand.u32 %s62, 1
        %s343 = sand.u32 %s62, 1
        %s344 = smul.addr %s343, 128
        %s345 = scalar_lea.vmem [#allocation3], %s344
        // Predicated region
        $region70: #{apricot_cnn1_forward.12} parent=68 // pred_check
          %p346 = pneg %p75
        $region71: #{apricot_cnn1_forward.12} parent=68 // pred_check_branch
          %348 = sbr.rel (%p346) target = $region73
        $region72: #{apricot_cnn1_forward.12} parent=68 // pred_region
          _
        $region73: #{apricot_cnn1_forward.12} parent=68 // pred_fallthru
          _
        %s349 = smul.u32 2, %s19
        %p350 = scmp.lt.s32.totalorder %s349, 1
        %s351 = scalar_select %p350, %s349, 1
        %s352 = scalar_lea.vmem %s0, %s351
        %p353 = pneg %p47
        %p354 = pneg %p44
        %s355 = sand.u32 %s62, 1
        %s356 = sand.u32 %s62, 1
        %s357 = smul.addr %s356, 128
        %s358 = scalar_lea.vmem [#allocation3], %s357
        %p359 = pneg %p75
        %p360 = pneg %p72
        %p361 = scmp.lt.s32.totalorder %s18, 1
        %s362 = scalar_select %p361, %s18, 1
        %s363 = scalar_lea.vmem %s2, %s362
        %p364 = pneg %p101
        %p365 = pneg %p98
        %p366 = pneg %p127
        %p367 = pneg %p124
        %p368 = scmp.lt.s32.totalorder %s18, 1
        %s369 = scalar_select %p368, %s18, 1
        %s370 = scalar_lea.vmem %s3, %s369
        %s371 = smul.u32 2, %s19
        %p372 = scmp.lt.s32.totalorder %s371, 1
        %s373 = scalar_select %p372, %s371, 1
        %s374 = scalar_lea.vmem %s0, %s373
        %s375 = smul.u32 2, %s19
        %s376 = smul.u32 32, %s19
        %p377 = scmp.lt.s32.totalorder %s18, 1
        %s378 = scalar_select %p377, %s18, 1
        %s379 = scalar_lea.vmem %s2, %s378
        %p380 = scmp.lt.s32.totalorder %s18, 1
        %s381 = scalar_select %p380, %s18, 1
        %s382 = scalar_lea.vmem %s3, %s381
        %p384 = scmp.eq.s32.totalorder %s19, 0
        // Predicated region
        $region74: #{apricot_cnn1_forward.12} parent=68 // pred_check
          %p385 = pneg %p384
        $region75: #{apricot_cnn1_forward.12} parent=68 // pred_check_branch
          %387 = sbr.rel (%p385) target = $region77
        $region76: #{apricot_cnn1_forward.12} parent=68 // pred_region
          %388 = vst [vmem:[#allocation2] sm:$0x3] 0.0
        $region77: #{apricot_cnn1_forward.12} parent=68 // pred_fallthru
          _
        %v389 = vld [vmem:[#allocation2] sm:$0x3]
        %v390 = vld [vmem:[%s374] sm:$0x3]
        %v391 = vld [vmem:[%s345] sm:$0xf]
        %v392 = vld [vmem:[%s345 + $0x4] sm:$0xf]
        %v393 = vld [vmem:[%s345 + $0x8] sm:$0xf]
        %v394 = vld [vmem:[%s345 + $0xc] sm:$0xf]
        %v395 = vld [vmem:[%s345 + $0x10] sm:$0xf]
        %v396 = vld [vmem:[%s345 + $0x14] sm:$0xf]
        %v397 = vld [vmem:[%s345 + $0x18] sm:$0xf]
        %v398 = vld [vmem:[%s345 + $0x1c] sm:$0xf]
        %v399 = vld [vmem:[%s345 + $0x20] sm:$0xf]
        %v400 = vld [vmem:[%s345 + $0x24] sm:$0xf]
        %v401 = vld [vmem:[%s345 + $0x28] sm:$0xf]
        %v402 = vld [vmem:[%s345 + $0x2c] sm:$0xf]
        %v403 = vld [vmem:[%s345 + $0x30] sm:$0xf]
        %v404 = vld [vmem:[%s345 + $0x34] sm:$0xf]
        %v405 = vld [vmem:[%s345 + $0x38] sm:$0xf]
        %v406 = vld [vmem:[%s345 + $0x3c] sm:$0xf]
        %v407 = vld [vmem:[%s345 + $0x40] sm:$0xf]
        %v408 = vld [vmem:[%s345 + $0x44] sm:$0xf]
        %v409 = vld [vmem:[%s345 + $0x48] sm:$0xf]
        %v410 = vld [vmem:[%s345 + $0x4c] sm:$0xf]
        %v411 = vld [vmem:[%s345 + $0x50] sm:$0xf]
        %v412 = vld [vmem:[%s345 + $0x54] sm:$0xf]
        %v413 = vld [vmem:[%s345 + $0x58] sm:$0xf]
        %v414 = vld [vmem:[%s345 + $0x5c] sm:$0xf]
        %v415 = vld [vmem:[%s345 + $0x60] sm:$0xf]
        %v416 = vld [vmem:[%s345 + $0x64] sm:$0xf]
        %v417 = vld [vmem:[%s345 + $0x68] sm:$0xf]
        %v418 = vld [vmem:[%s345 + $0x6c] sm:$0xf]
        %v419 = vld [vmem:[%s345 + $0x70] sm:$0xf]
        %v420 = vld [vmem:[%s345 + $0x74] sm:$0xf]
        %v421 = vld [vmem:[%s345 + $0x78] sm:$0xf]
        %v422 = vld [vmem:[%s345 + $0x7c] sm:$0xf]
        %v425 = vunpack.c.l.s4 1966171168
        %v426 = vunpack.c.0.s8 %v425
        %v427 = vlaneseq
        %v428 = vshrl.u32 %v427, 7
        %v429 = vsub.s32 %v426, %v428
        %v430 = vrot.slane %v390, %v429
        %v431 = vcombine.high %v430, %v430
        %v433 = vunpack.c.l.s4 1966171168
        %v434 = vunpack.c.0.s8 %v433
        %v435 = vlaneseq
        %v436 = vshrl.u32 %v435, 7
        %v437 = vsub.s32 %v434, %v436
        %v438 = vrot.slane %v430, %v437
        %v440 = vunpack.c.l.s4 1966171168
        %v441 = vunpack.c.0.s8 %v440
        %v442 = vlaneseq
        %v443 = vshrl.u32 %v442, 7
        %v444 = vsub.s32 %v441, %v443
        %v445 = vrot.slane %v431, %v444
        %v480 = vunpack.c.l.b16 %v391
        %v481 = vunpack.c.l.b16 %v392
        %v482 = vunpack.c.l.b16 %v393
        %v483 = vunpack.c.l.b16 %v394
        %v484 = vunpack.c.l.b16 %v395
        %v485 = vunpack.c.l.b16 %v396
        %v486 = vunpack.c.l.b16 %v397
        %v487 = vunpack.c.l.b16 %v398
        %v488 = vunpack.c.l.b16 %v399
        %v489 = vunpack.c.l.b16 %v400
        %v490 = vunpack.c.l.b16 %v401
        %v491 = vunpack.c.l.b16 %v402
        %v492 = vunpack.c.l.b16 %v403
        %v493 = vunpack.c.l.b16 %v404
        %v494 = vunpack.c.l.b16 %v405
        %v495 = vunpack.c.l.b16 %v406
        %v496 = vunpack.c.l.b16 %v407
        %v497 = vunpack.c.l.b16 %v408
        %v498 = vunpack.c.l.b16 %v409
        %v499 = vunpack.c.l.b16 %v410
        %v500 = vunpack.c.l.b16 %v411
        %v501 = vunpack.c.l.b16 %v412
        %v502 = vunpack.c.l.b16 %v413
        %v503 = vunpack.c.l.b16 %v414
        %v504 = vunpack.c.l.b16 %v415
        %v505 = vunpack.c.l.b16 %v416
        %v506 = vunpack.c.l.b16 %v417
        %v507 = vunpack.c.l.b16 %v418
        %v508 = vunpack.c.l.b16 %v419
        %v509 = vunpack.c.l.b16 %v420
        %v510 = vunpack.c.l.b16 %v421
        %v511 = vunpack.c.l.b16 %v422
        %v512 = vpack.c.b16 %v481, %v480
        %v513 = vpack.c.b16 %v483, %v482
        %v514 = vpack.c.b16 %v485, %v484
        %v515 = vpack.c.b16 %v487, %v486
        %v516 = vpack.c.b16 %v489, %v488
        %v517 = vpack.c.b16 %v491, %v490
        %v518 = vpack.c.b16 %v493, %v492
        %v519 = vpack.c.b16 %v495, %v494
        %v520 = vpack.c.b16 %v497, %v496
        %v521 = vpack.c.b16 %v499, %v498
        %v522 = vpack.c.b16 %v501, %v500
        %v523 = vpack.c.b16 %v503, %v502
        %v524 = vpack.c.b16 %v505, %v504
        %v525 = vpack.c.b16 %v507, %v506
        %v526 = vpack.c.b16 %v509, %v508
        %v527 = vpack.c.b16 %v511, %v510
        %544 = vmatprep.subr.bf16.mxu0 0
        %545 = vmatpush1.bf16.msra.mxu0 %v512
        %546 = vmatprep.subr.bf16.mxu0 0
        %547 = vmatpush1.bf16.msra.mxu0 %v513
        %548 = vmatprep.subr.bf16.mxu0 0
        %549 = vmatpush1.bf16.msra.mxu0 %v514
        %550 = vmatprep.subr.bf16.mxu0 0
        %551 = vmatpush1.bf16.msra.mxu0 %v515
        %552 = vmatprep.subr.bf16.mxu0 0
        %553 = vmatpush1.bf16.msra.mxu0 %v516
        %554 = vmatprep.subr.bf16.mxu0 0
        %555 = vmatpush1.bf16.msra.mxu0 %v517
        %556 = vmatprep.subr.bf16.mxu0 0
        %557 = vmatpush1.bf16.msra.mxu0 %v518
        %558 = vmatprep.subr.bf16.mxu0 0
        %559 = vmatpush1.bf16.msra.mxu0 %v519
        %560 = vmatprep.subr.bf16.mxu0 0
        %561 = vmatpush1.bf16.msra.mxu0 %v520
        %562 = vmatprep.subr.bf16.mxu0 0
        %563 = vmatpush1.bf16.msra.mxu0 %v521
        %564 = vmatprep.subr.bf16.mxu0 0
        %565 = vmatpush1.bf16.msra.mxu0 %v522
        %566 = vmatprep.subr.bf16.mxu0 0
        %567 = vmatpush1.bf16.msra.mxu0 %v523
        %568 = vmatprep.subr.bf16.mxu0 0
        %569 = vmatpush1.bf16.msra.mxu0 %v524
        %570 = vmatprep.subr.bf16.mxu0 0
        %571 = vmatpush1.bf16.msra.mxu0 %v525
        %572 = vmatprep.subr.bf16.mxu0 0
        %573 = vmatpush1.bf16.msra.mxu0 %v526
        %574 = vmatprep.subr.bf16.mxu0 0
        %575 = vmatpush1.bf16.msra.mxu0 %v527
        %576 = vmatprep.mubr.bf16.mxu0 %v445
        %577 = vmatmul.mubr.bf16.gmra.mrb[0].mxu0 %v438
        %v578 = vpop.f32.mrb[0].mxu0
        %v579 = vadd.f32 0.0, %v578
        %v580 = vpop.f32.mrb[0].mxu0
        %v581 = vpop.f32.mrb[0].mxu0
        %v582 = vpop.f32.mrb[0].mxu0
        %583 = vdwg.mxu0
        %v584 = vadd.f32 %v389, %v579
        %585 = vst [vmem:[#allocation2] sm:$0x3] %v584
        // Predicated region
        $region78: #{apricot_cnn1_forward.12} parent=68 // pred_check
          %p586 = pneg %p384
        $region79: #{apricot_cnn1_forward.12} parent=68 // pred_check_branch
          %588 = sbr.rel (%p586) target = $region81
        $region80: #{apricot_cnn1_forward.12} parent=68 // pred_region
          %v589 = vld [vmem:[#allocation2] sm:$0x3]
          %v590 = vld [vmem:[%s379] sm:$0x1]
          %v592 = vlaneseq
          %v593 = vshrl.u32 %v592, 7
          %v594 = vsub.s32 0, %v593
          %v595 = vrot.slane %v590, %v594
          %v597 = vadd.f32 %v589, %v595
          %v598 = vmax.f32 %v597, 0.0
          %v599 = vpack.c.bf16 %v598, %v598
          %600 = vst [vmem:[%s382] sm:$0x1] %v599
        $region81: #{apricot_cnn1_forward.12} parent=68 // pred_fallthru
          _
        %p601 = scmp.lt.s32.totalorder %s18, 1
        %s602 = scalar_select %p601, %s18, 1
        %s603 = scalar_lea.vmem %s3, %s602
        // Predicated region
        $region82: #{apricot_cnn1_forward.12} parent=68 // pred_check
          %p604 = pneg %p124
        $region83: #{apricot_cnn1_forward.12} parent=68 // pred_check_branch
          %606 = sbr.rel (%p604) target = $region85
        $region84: #{apricot_cnn1_forward.12} parent=68 // pred_region
          _
        $region85: #{apricot_cnn1_forward.12} parent=68 // pred_fallthru
          _
      $region69: #{apricot_cnn1_forward.12} parent=5 // pred_fallthru
        _
      %p607 = scmp.le.s32.totalorder 2, %s9
      // Predicated region
      $region86: #{apricot_cnn1_forward.12} parent=5 // pred_check
        %p608 = pneg %p607
      $region87: #{apricot_cnn1_forward.12} parent=5 // pred_check_branch
        %610 = sbr.rel (%p608) target = $region89
      $region88: #{apricot_cnn1_forward.12} parent=5 // pred_region
        %s611 = ssub.s32 %s9, 2
        // Predicated region
        $region90: #{apricot_cnn1_forward.12} parent=88 // pred_check
          %p612 = pneg %p130
        $region91: #{apricot_cnn1_forward.12} parent=88 // pred_check_branch
          %614 = sbr.rel (%p612) target = $region93
        $region92: #{apricot_cnn1_forward.12} parent=88 // pred_region
          %p615 = scmp.lt.s32.totalorder %s20, 1
          %s616 = scalar_select %p615, %s20, 1
          %s617 = scalar_lea.vmem %s3, %s616
        $region93: #{apricot_cnn1_forward.12} parent=88 // pred_fallthru
          _
      $region89: #{apricot_cnn1_forward.12} parent=5 // pred_fallthru
        _
    $region6: #{apricot_cnn1_forward.12} parent=1 // loop_footer
      %s13 = sadd.s32 1, %s9
    $region7: #{apricot_cnn1_forward.12} parent=1 // loop_footer_branch
      %8 = sbr.rel target = $region3
    $region8: #{apricot_cnn1_forward.12} parent=1 // loop_exit
      _

// kernel: apricot_cnn1_forward.13
$region0: #{apricot_cnn1_forward.13}
  #allocation0 [shape = 'u32[]', space=smem, size = 0x4, offset = 0x4, fixed_abs, tag = 'smem constant byte address 0x4 - core index']
  #allocation1 [shape = 'u32[144,128]{1,0:T(1,128)}', space=vmem, size = 0x12000, scoped, tag = 'internal scratch']
  #allocation2 [shape = 'f32[2,10]{1,0:T(2,128)}', space=vmem, size = 0x400, scoped, tag = 'scratch operand']
  %s0 = inlined_call_operand.vmem [shape: bf16[2,256], index: 0, kind: input, shape index: {}]
  %s1 = inlined_call_operand.vmem [shape: bf16[256,10], index: 1, kind: input, shape index: {}]
  %s2 = inlined_call_operand.vmem [shape: f32[1,10], index: 2, kind: input, shape index: {}]
  %s3 = inlined_call_operand.hbm [shape: f32[2,10], index: 3, kind: output, shape index: {}]
  %s4 = sld [smem:[#allocation0]]
  $region30: #{apricot_cnn1_forward.13} parent=0
    _
  %s6 = ssub.s32 1, %s4
  %s7 = scalar_select 0, %s6, %s4
  $region1: #{apricot_cnn1_forward.13} parent=0
    #allocation3 [shape = 'u8[1024]{0}', space=vmem, size = 0x400, scoped, tag = 'output window, operand 0, single buffered']
    #allocation4 [shape = 's32[1]{0}', space=sflag, size = 0x4, scoped, tag = 'scoped memory for apricot_cnn1_forward.13']
    %8 = vsyncpa [#allocation4], 0
    // Predicated region
    $region2: #{apricot_cnn1_forward.13} parent=1 // pred_check
      _
    $region3: #{apricot_cnn1_forward.13} parent=1 // pred_check_branch
      %10 = sbr.rel (0) target = $region5
    $region4: #{apricot_cnn1_forward.13} parent=1 // pred_region
      _
    $region5: #{apricot_cnn1_forward.13} parent=1 // pred_fallthru
      _
    // Predicated region
    $region6: #{apricot_cnn1_forward.13} parent=1 // pred_check
      _
    $region7: #{apricot_cnn1_forward.13} parent=1 // pred_check_branch
      %12 = sbr.rel (0) target = $region9
    $region8: #{apricot_cnn1_forward.13} parent=1 // pred_region
      _
    $region9: #{apricot_cnn1_forward.13} parent=1 // pred_fallthru
      _
    // Predicated region
    $region10: #{apricot_cnn1_forward.13} parent=1 // pred_check
      _
    $region11: #{apricot_cnn1_forward.13} parent=1 // pred_check_branch
      %14 = sbr.rel (0) target = $region13
    $region12: #{apricot_cnn1_forward.13} parent=1 // pred_region
      _
    $region13: #{apricot_cnn1_forward.13} parent=1 // pred_fallthru
      _
    %p16 = scmp.eq.s32.totalorder 0, 0
    // Predicated region
    $region14: #{apricot_cnn1_forward.13} parent=1 // pred_check
      %p17 = pneg %p16
    $region15: #{apricot_cnn1_forward.13} parent=1 // pred_check_branch
      %19 = sbr.rel (%p17) target = $region17
    $region16: #{apricot_cnn1_forward.13} parent=1 // pred_region
      %vm20 = vcmask 74752
      %21 = vst.msk [vmem:[#allocation2] sm:$0x3] %vm20, 0.0
    $region17: #{apricot_cnn1_forward.13} parent=1 // pred_fallthru
      _
    %v22 = vld [vmem:[#allocation2] sm:$0x3]
    %v23 = vld [vmem:[%s0] sm:$0x3]
    %v24 = vld [vmem:[%s1] sm:$0xf]
    %v25 = vld [vmem:[%s1 + $0x4] sm:$0xf]
    %v26 = vld [vmem:[%s1 + $0x8] sm:$0xf]
    %v27 = vld [vmem:[%s1 + $0xc] sm:$0xf]
    %v28 = vld [vmem:[%s1 + $0x10] sm:$0xf]
    %v29 = vld [vmem:[%s1 + $0x14] sm:$0xf]
    %v30 = vld [vmem:[%s1 + $0x18] sm:$0xf]
    %v31 = vld [vmem:[%s1 + $0x1c] sm:$0xf]
    %v32 = vld [vmem:[%s1 + $0x20] sm:$0xf]
    %v33 = vld [vmem:[%s1 + $0x24] sm:$0xf]
    %v34 = vld [vmem:[%s1 + $0x28] sm:$0xf]
    %v35 = vld [vmem:[%s1 + $0x2c] sm:$0xf]
    %v36 = vld [vmem:[%s1 + $0x30] sm:$0xf]
    %v37 = vld [vmem:[%s1 + $0x34] sm:$0xf]
    %v38 = vld [vmem:[%s1 + $0x38] sm:$0xf]
    %v39 = vld [vmem:[%s1 + $0x3c] sm:$0xf]
    %v40 = vld [vmem:[%s1 + $0x40] sm:$0xf]
    %v41 = vld [vmem:[%s1 + $0x44] sm:$0xf]
    %v42 = vld [vmem:[%s1 + $0x48] sm:$0xf]
    %v43 = vld [vmem:[%s1 + $0x4c] sm:$0xf]
    %v44 = vld [vmem:[%s1 + $0x50] sm:$0xf]
    %v45 = vld [vmem:[%s1 + $0x54] sm:$0xf]
    %v46 = vld [vmem:[%s1 + $0x58] sm:$0xf]
    %v47 = vld [vmem:[%s1 + $0x5c] sm:$0xf]
    %v48 = vld [vmem:[%s1 + $0x60] sm:$0xf]
    %v49 = vld [vmem:[%s1 + $0x64] sm:$0xf]
    %v50 = vld [vmem:[%s1 + $0x68] sm:$0xf]
    %v51 = vld [vmem:[%s1 + $0x6c] sm:$0xf]
    %v52 = vld [vmem:[%s1 + $0x70] sm:$0xf]
    %v53 = vld [vmem:[%s1 + $0x74] sm:$0xf]
    %v54 = vld [vmem:[%s1 + $0x78] sm:$0xf]
    %v55 = vld [vmem:[%s1 + $0x7c] sm:$0xf]
    %v58 = vunpack.c.l.s4 1966171168
    %v59 = vunpack.c.0.s8 %v58
    %v60 = vlaneseq
    %v61 = vshrl.u32 %v60, 7
    %v62 = vsub.s32 %v59, %v61
    %v63 = vrot.slane %v23, %v62
    %v64 = vcombine.high %v63, %v63
    %v66 = vunpack.c.l.s4 1966171168
    %v67 = vunpack.c.0.s8 %v66
    %v68 = vlaneseq
    %v69 = vshrl.u32 %v68, 7
    %v70 = vsub.s32 %v67, %v69
    %v71 = vrot.slane %v63, %v70
    %v73 = vunpack.c.l.s4 1966171168
    %v74 = vunpack.c.0.s8 %v73
    %v75 = vlaneseq
    %v76 = vshrl.u32 %v75, 7
    %v77 = vsub.s32 %v74, %v76
    %v78 = vrot.slane %v64, %v77
    %v113 = vunpack.c.l.b16 %v24
    %v114 = vunpack.c.l.b16 %v25
    %v115 = vunpack.c.l.b16 %v26
    %v116 = vunpack.c.l.b16 %v27
    %v117 = vunpack.c.l.b16 %v28
    %v118 = vunpack.c.l.b16 %v29
    %v119 = vunpack.c.l.b16 %v30
    %v120 = vunpack.c.l.b16 %v31
    %v121 = vunpack.c.l.b16 %v32
    %v122 = vunpack.c.l.b16 %v33
    %v123 = vunpack.c.l.b16 %v34
    %v124 = vunpack.c.l.b16 %v35
    %v125 = vunpack.c.l.b16 %v36
    %v126 = vunpack.c.l.b16 %v37
    %v127 = vunpack.c.l.b16 %v38
    %v128 = vunpack.c.l.b16 %v39
    %v129 = vunpack.c.l.b16 %v40
    %v130 = vunpack.c.l.b16 %v41
    %v131 = vunpack.c.l.b16 %v42
    %v132 = vunpack.c.l.b16 %v43
    %v133 = vunpack.c.l.b16 %v44
    %v134 = vunpack.c.l.b16 %v45
    %v135 = vunpack.c.l.b16 %v46
    %v136 = vunpack.c.l.b16 %v47
    %v137 = vunpack.c.l.b16 %v48
    %v138 = vunpack.c.l.b16 %v49
    %v139 = vunpack.c.l.b16 %v50
    %v140 = vunpack.c.l.b16 %v51
    %v141 = vunpack.c.l.b16 %v52
    %v142 = vunpack.c.l.b16 %v53
    %v143 = vunpack.c.l.b16 %v54
    %v144 = vunpack.c.l.b16 %v55
    %v145 = vpack.c.b16 %v114, %v113
    %v146 = vpack.c.b16 %v116, %v115
    %v147 = vpack.c.b16 %v118, %v117
    %v148 = vpack.c.b16 %v120, %v119
    %v149 = vpack.c.b16 %v122, %v121
    %v150 = vpack.c.b16 %v124, %v123
    %v151 = vpack.c.b16 %v126, %v125
    %v152 = vpack.c.b16 %v128, %v127
    %v153 = vpack.c.b16 %v130, %v129
    %v154 = vpack.c.b16 %v132, %v131
    %v155 = vpack.c.b16 %v134, %v133
    %v156 = vpack.c.b16 %v136, %v135
    %v157 = vpack.c.b16 %v138, %v137
    %v158 = vpack.c.b16 %v140, %v139
    %v159 = vpack.c.b16 %v142, %v141
    %v160 = vpack.c.b16 %v144, %v143
    %177 = vmatprep.subr.bf16.mxu0 0
    %178 = vmatpush1.bf16.msra.mxu0 %v145
    %179 = vmatprep.subr.bf16.mxu0 0
    %180 = vmatpush1.bf16.msra.mxu0 %v146
    %181 = vmatprep.subr.bf16.mxu0 0
    %182 = vmatpush1.bf16.msra.mxu0 %v147
    %183 = vmatprep.subr.bf16.mxu0 0
    %184 = vmatpush1.bf16.msra.mxu0 %v148
    %185 = vmatprep.subr.bf16.mxu0 0
    %186 = vmatpush1.bf16.msra.mxu0 %v149
    %187 = vmatprep.subr.bf16.mxu0 0
    %188 = vmatpush1.bf16.msra.mxu0 %v150
    %189 = vmatprep.subr.bf16.mxu0 0
    %190 = vmatpush1.bf16.msra.mxu0 %v151
    %191 = vmatprep.subr.bf16.mxu0 0
    %192 = vmatpush1.bf16.msra.mxu0 %v152
    %193 = vmatprep.subr.bf16.mxu0 0
    %194 = vmatpush1.bf16.msra.mxu0 %v153
    %195 = vmatprep.subr.bf16.mxu0 0
    %196 = vmatpush1.bf16.msra.mxu0 %v154
    %197 = vmatprep.subr.bf16.mxu0 0
    %198 = vmatpush1.bf16.msra.mxu0 %v155
    %199 = vmatprep.subr.bf16.mxu0 0
    %200 = vmatpush1.bf16.msra.mxu0 %v156
    %201 = vmatprep.subr.bf16.mxu0 0
    %202 = vmatpush1.bf16.msra.mxu0 %v157
    %203 = vmatprep.subr.bf16.mxu0 0
    %204 = vmatpush1.bf16.msra.mxu0 %v158
    %205 = vmatprep.subr.bf16.mxu0 0
    %206 = vmatpush1.bf16.msra.mxu0 %v159
    %207 = vmatprep.subr.bf16.mxu0 0
    %208 = vmatpush1.bf16.msra.mxu0 %v160
    %209 = vmatprep.mubr.bf16.mxu0 %v78
    %210 = vmatmul.mubr.bf16.gmra.mrb[0].mxu0 %v71
    %v211 = vpop.f32.mrb[0].mxu0
    %v212 = vadd.f32 0.0, %v211
    %v213 = vpop.f32.mrb[0].mxu0
    %v214 = vpop.f32.mrb[0].mxu0
    %v215 = vpop.f32.mrb[0].mxu0
    %216 = vdwg.mxu0
    %v217 = vadd.f32 %v22, %v212
    %vm218 = vcmask 74752
    %219 = vst.msk [vmem:[#allocation2] sm:$0x3] %vm218, %v217
    // Predicated region
    $region18: #{apricot_cnn1_forward.13} parent=1 // pred_check
      %p220 = pneg %p16
    $region19: #{apricot_cnn1_forward.13} parent=1 // pred_check_branch
      %222 = sbr.rel (%p220) target = $region21
    $region20: #{apricot_cnn1_forward.13} parent=1 // pred_region
      %v223 = vld [vmem:[#allocation2] sm:$0x3]
      %v224 = vld [vmem:[%s2] sm:$0x1]
      %v226 = vlaneseq
      %v227 = vshrl.u32 %v226, 7
      %v228 = vsub.s32 0, %v227
      %v229 = vrot.slane %v224, %v228
      %v231 = vadd.f32 %v223, %v229
      %232 = vst.msk [vmem:[#allocation3] sm:$0x3] %vm218, %v231
    $region21: #{apricot_cnn1_forward.13} parent=1 // pred_fallthru
      _
    // Predicated region
    $region22: #{apricot_cnn1_forward.13} parent=1 // pred_check
      _
    $region23: #{apricot_cnn1_forward.13} parent=1 // pred_check_branch
      %234 = sbr.rel (0) target = $region25
    $region24: #{apricot_cnn1_forward.13} parent=1 // pred_region
      %s236 = ssub.s32 32, 32
      %237 = vsyncadd [#allocation4], %s236
      %s239 = sshll.u32 [#allocation3], 4
      %s240 = int_to_ptr.vmem [resolvable:$true] %s239
      %242 = dma.vmem_to_hbm [thread:$0]  %s240, 32, %s3, [#allocation4]
    $region25: #{apricot_cnn1_forward.13} parent=1 // pred_fallthru
      _
    // Predicated region
    $region26: #{apricot_cnn1_forward.13} parent=1 // pred_check
      _
    $region27: #{apricot_cnn1_forward.13} parent=1 // pred_check_branch
      %244 = sbr.rel (0) target = $region29
    $region28: #{apricot_cnn1_forward.13} parent=1 // pred_region
      %245 = dma.done [#allocation4], 32
    $region29: #{apricot_cnn1_forward.13} parent=1 // pred_fallthru
      _
    %246 = vsyncpa [#allocation4], 1

</llo_original>
